<compile_context>
chip_gen: v6e
topology: v6e:2x2x1
jax: 0.10.0
libtpu: 0.0.40
codegen_flags: <defaults>
</compile_context>

<pallas_src>
import functools
import math

import jax
import jax.numpy as jnp
from jax.experimental import pallas as pl
from jax.experimental.pallas import tpu as pltpu

# ----------------------------- configuration (small synthetic CLIP) -----------------------------
CFG = dict(
    batch=2, img_channels=3, img_size=16, patch=4,      # 4x4 patches -> 16 tokens + CLS = 17
    vis_width=32, vis_layers=2, vis_heads=2,
    embed_dim=32,
    n_cls=3, n_ctx=4, txt_seq=8,                        # prefix(1) + ctx(4) + suffix(3) = 8
    txt_width=32, txt_layers=2, txt_heads=2,
)

# ----------------------------- in-kernel helpers (trace-time only) -----------------------------


def _mm2(a, b):
    """(M,K) @ (K,N); `a` cast to bf16, `b` already bf16; f32 accumulation on the MXU."""
    return jax.lax.dot_general(
        a.astype(jnp.bfloat16), b,
        dimension_numbers=(((1,), (0,)), ((), ())),
        preferred_element_type=jnp.float32)


def _bmm(a, b):
    """(B,M,K) @ (K,N) -> (B,M,N); activation cast to bf16, weight already bf16."""
    return jax.lax.dot_general(
        a.astype(jnp.bfloat16), b,
        dimension_numbers=(((2,), (0,)), ((), ())),
        preferred_element_type=jnp.float32)


def _bmm_nt(a, b):
    """(B,M,K) @ (B,N,K)^T -> (B,M,N), batched, bf16 operands, f32 accumulation."""
    return jax.lax.dot_general(
        a.astype(jnp.bfloat16), b.astype(jnp.bfloat16),
        dimension_numbers=(((2,), (2,)), ((0,), (0,))),
        preferred_element_type=jnp.float32)


def _bmm_bn(a, b):
    """(B,M,K) @ (B,K,N) -> (B,M,N), batched, bf16 operands, f32 accumulation."""
    return jax.lax.dot_general(
        a.astype(jnp.bfloat16), b.astype(jnp.bfloat16),
        dimension_numbers=(((2,), (1,)), ((0,), (0,))),
        preferred_element_type=jnp.float32)


def _ln_rows(x, g, b, eps=1e-5):
    """LayerNorm over the last (lane) axis, f32; g/b are (1, D) and broadcast."""
    mu = jnp.mean(x, axis=-1, keepdims=True)
    var = jnp.mean(jnp.square(x - mu), axis=-1, keepdims=True)
    return (x - mu) * jax.lax.rsqrt(var + eps) * g + b


def _transformer(x, ln1_g, ln1_b, wqkv, bqkv, wout, bout,
                 ln2_g, ln2_b, w1, b1, w2, b2, *, n_layers, heads, causal):
    """Pre-LN CLIP transformer on a (n_blocks, seq, D) activation.

    Weight Refs are pre-split host-side:
      wqkv: (L*3*heads, D, Dh) bf16    bqkv: (L*3*heads, 1, Dh) f32
      wout: (L*heads, Dh, D)  bf16     bout: (L, 1, D) f32
    Each head's contribution is accumulated directly into the residual (no scratch,
    no sub-128-lane slicing of a fused qkv activation).
    """
    nb, seq, d = x.shape
    dh = wqkv.shape[-1]
    scale = 1.0 / math.sqrt(dh)

    if causal:
        qi = jax.lax.broadcasted_iota(jnp.int32, (seq, seq), 0)
        ki = jax.lax.broadcasted_iota(jnp.int32, (seq, seq), 1)
        mask = jnp.where(ki > qi, jnp.float32(-1e9), jnp.float32(0.0))

    for l in range(n_layers):
        # --- multi-head self-attention ---
        h = _ln_rows(x, ln1_g[l], ln1_b[l])
        for hd in range(heads):
            iq = (l * 3 + 0) * heads + hd
            ik = (l * 3 + 1) * heads + hd
            iv = (l * 3 + 2) * heads + hd
            q = _bmm(h, wqkv[iq]) + bqkv[iq]               # (nb, seq, Dh), lane offset 0
            k = _bmm(h, wqkv[ik]) + bqkv[ik]
            v = _bmm(h, wqkv[iv]) + bqkv[iv]
            sc = _bmm_nt(q, k) * scale                     # (nb, seq, seq)
            if causal:
                sc = sc + mask
            sc = sc - jnp.max(sc, axis=-1, keepdims=True)
            p = jnp.exp(sc)
            p = p * pl.reciprocal(jnp.sum(p, axis=-1, keepdims=True), approx=True)
            # per-head output projected straight into the residual
            x = x + _bmm(_bmm_bn(p, v), wout[l * heads + hd])
        x = x + bout[l]
        # --- MLP (QuickGELU) ---
        h = _ln_rows(x, ln2_g[l], ln2_b[l])
        u = _bmm(h, w1[l]) + b1[l]
        u = u * jax.nn.sigmoid(1.702 * u)
        x = x + _bmm(u, w2[l]) + b2[l]
    return x


# ----------------------------- fused Pallas kernels -----------------------------


def _visual_encoder_kernel(patches_ref, patch_w_ref, cls_tok_ref, pos_rest_ref,
                           ln_pre_g_ref, ln_pre_b_ref,
                           ln1_g, ln1_b, wqkv, bqkv, wout, bout,
                           ln2_g, ln2_b, w1, b1, w2, b2,
                           ln_post_g_ref, ln_post_b_ref, proj_ref,
                           out_ref, *, n_layers, heads):
    # One image per grid step: patch embedding (strided conv as a matmul).
    xp = _mm2(patches_ref[0], patch_w_ref[...])                 # (P, D)
    x = jnp.concatenate([cls_tok_ref[...], xp + pos_rest_ref[...]], axis=0)  # (S, D)
    x = _ln_rows(x, ln_pre_g_ref[...], ln_pre_b_ref[...])[None]              # (1, S, D)
    x = _transformer(x, ln1_g, ln1_b, wqkv, bqkv, wout, bout,
                     ln2_g, ln2_b, w1, b1, w2, b2,
                     n_layers=n_layers, heads=heads, causal=False)
    # CLS token (row 0, sublane-aligned) -> ln_post -> proj
    c = _ln_rows(x[0, 0:1, :], ln_post_g_ref[...], ln_post_b_ref[...])       # (1, D)
    out_ref[...] = _mm2(c, proj_ref[...]).astype(out_ref.dtype)[None]        # (1, 1, E)


def _text_encoder_kernel(x0_ref, img_ref, scale_ref,
                         ln1_g, ln1_b, wqkv, bqkv, wout, bout,
                         ln2_g, ln2_b, w1, b1, w2, b2,
                         ln_f_g_ref, ln_f_b_ref, proj_ref, sel_ref,
                         out_ref, *, n_layers, heads):
    x = _transformer(x0_ref[...], ln1_g, ln1_b, wqkv, bqkv, wout, bout,
                     ln2_g, ln2_b, w1, b1, w2, b2,
                     n_layers=n_layers, heads=heads, causal=True)            # (n_cls, S, D)
    n_cls, seq, d = x.shape
    xl = _ln_rows(x, ln_f_g_ref[...], ln_f_b_ref[...]).reshape(n_cls * seq, d)
    # EOT pooling as an exact 0/1 selection matmul (f32, no bf16 rounding of features).
    pooled = jax.lax.dot_general(sel_ref[...], xl,
                                 dimension_numbers=(((1,), (0,)), ((), ())),
                                 preferred_element_type=jnp.float32)         # (n_cls, D)
    txt = _mm2(pooled, proj_ref[...])                                        # (n_cls, E)
    # Fused CLIP head: normalize both features, scale, img @ txt.T.
    img = img_ref[...]
    img = img * jax.lax.rsqrt(jnp.sum(img * img, axis=-1, keepdims=True))
    txt = txt * jax.lax.rsqrt(jnp.sum(txt * txt, axis=-1, keepdims=True))
    logits = jax.lax.dot_general(img, txt,
                                 dimension_numbers=(((1,), (1,)), ((), ())),
                                 preferred_element_type=jnp.float32)         # (B, n_cls)
    out_ref[...] = (scale_ref[...] * logits).astype(out_ref.dtype)


# ----------------------------- wrappers -----------------------------

_BLOCK_ORDER = ("ln1_g", "ln1_b", "w_qkv", "b_qkv", "w_out", "b_out",
                "ln2_g", "ln2_b", "mlp_w1", "mlp_b1", "mlp_w2", "mlp_b2")


def _const_spec(a):
    """Full-array block with a constant block index (no re-DMA across grid steps)."""
    zeros = (0,) * a.ndim
    return pl.BlockSpec(a.shape, lambda b, _z=zeros: _z)


def encode_image(params, image):
    p = params["visual"]
    B, C, H, W = image.shape
    ph = CFG["patch"]
    nh, nw = H // ph, W // ph
    n_patches = nh * nw
    patch_dim = C * ph * ph
    E = p["proj"].shape[-1]
    # unfold into (B, P, C*ph*ph) patches (layout-only; the matmul happens in-kernel)
    patches = image.reshape(B, C, nh, ph, nw, ph).transpose(0, 2, 4, 1, 3, 5)
    patches = patches.reshape(B, n_patches, patch_dim)
    cls_tok = p["class_emb"] + p["pos_emb"][0:1]                 # (1, D), host-side param prep
    pos_rest = p["pos_emb"][1:]                                  # (P, D)
    stk = p["blocks"]
    operands = (patches, p["patch_w"], cls_tok, pos_rest, p["ln_pre_g"], p["ln_pre_b"],
                *[stk[n] for n in _BLOCK_ORDER],
                p["ln_post_g"], p["ln_post_b"], p["proj"])
    in_specs = [pl.BlockSpec((1, n_patches, patch_dim), lambda b: (b, 0, 0))]
    in_specs += [_const_spec(a) for a in operands[1:]]
    kern = functools.partial(_visual_encoder_kernel,
                             n_layers=CFG["vis_layers"], heads=CFG["vis_heads"])
    out = pl.pallas_call(
        kern,
        out_shape=jax.ShapeDtypeStruct((B, 1, E), jnp.float32),
        grid=(B,),
        in_specs=in_specs,
        out_specs=pl.BlockSpec((1, 1, E), lambda b: (b, 0, 0)),
        compiler_params=pltpu.CompilerParams(dimension_semantics=("parallel",)),
    )(*operands)
    return out.reshape(B, E)


def prompt_learner_forward(params):
    """PromptLearner.forward with class_token_position == 'end' (pure parameter assembly)."""
    p = params["prompt"]
    n_cls = p["token_prefix"].shape[0]
    ctx = jnp.broadcast_to(p["ctx"][None], (n_cls,) + p["ctx"].shape)
    return jnp.concatenate([p["token_prefix"], ctx, p["token_suffix"]], axis=1)


def encode_text_and_logits(params, prompts, tokenized_prompts, image_features, logit_scale_exp):
    """TextEncoder.forward fused with feature normalization + logit computation."""
    p = params["text"]
    n_cls, S, D = prompts.shape
    B = image_features.shape[0]
    x0 = prompts + p["pos_emb"][None]                            # (n_cls, S, D)
    # EOT position (argmax of token ids, like PyTorch) -> exact one-hot selector rows.
    eot = jnp.argmax(tokenized_prompts, axis=-1)
    sel = jax.nn.one_hot(jnp.arange(n_cls) * S + eot, n_cls * S, dtype=jnp.float32)
    stk = p["blocks"]
    kern = functools.partial(_text_encoder_kernel,
                             n_layers=CFG["txt_layers"], heads=CFG["txt_heads"])
    return pl.pallas_call(
        kern,
        out_shape=jax.ShapeDtypeStruct((B, n_cls), jnp.float32),
    )(x0, image_features, logit_scale_exp.reshape(1, 1),
      *[stk[n] for n in _BLOCK_ORDER],
      p["ln_final_g"], p["ln_final_b"], p["text_proj"], sel)


def custom_clip_forward(params, image):
    """CustomCLIP_CLIP.forward(image) -> logits (B, n_cls)."""
    image_features = encode_image(params, image)                 # (B, E), unnormalized
    prompts = prompt_learner_forward(params)                     # (n_cls, S, D)
    return encode_text_and_logits(params, prompts, params["tokenized_prompts"],
                                  image_features, jnp.exp(params["logit_scale"]))


# ----------------------------- deterministic parameter init -----------------------------


def _nrm(key, shape, std):
    return (std * jax.random.normal(key, shape)).astype(jnp.float32)


def _block_params(key, width):
    ks = jax.random.split(key, 4)
    return dict(
        ln1_g=jnp.ones((width,), jnp.float32), ln1_b=jnp.zeros((width,), jnp.float32),
        w_qkv=_nrm(ks[0], (width, 3 * width), width ** -0.5),
        b_qkv=jnp.zeros((3 * width,), jnp.float32),
        w_out=_nrm(ks[1], (width, width), width ** -0.5),
        b_out=jnp.zeros((width,), jnp.float32),
        ln2_g=jnp.ones((width,), jnp.float32), ln2_b=jnp.zeros((width,), jnp.float32),
        mlp_w1=_nrm(ks[2], (width, 4 * width), width ** -0.5),
        mlp_b1=jnp.zeros((4 * width,), jnp.float32),
        mlp_w2=_nrm(ks[3], (4 * width, width), (4 * width) ** -0.5),
        mlp_b2=jnp.zeros((width,), jnp.float32),
    )


def _prep_blocks(blocks, heads):
    """Stack per-layer params and pre-split into per-head kernel-ready layout.

    Matmul weights -> bf16; LN params / biases -> f32.
      w_qkv -> (L*3*heads, D, Dh)   b_qkv -> (L*3*heads, 1, Dh)
      w_out -> (L*heads, Dh, D)     others -> (L, 1, width) / (L, width, 4*width)
    """
    L = len(blocks)
    width = blocks[0]["ln1_g"].shape[0]
    dh = width // heads

    def stk(name):
        return jnp.stack([blk[name] for blk in blocks], axis=0)

    w_qkv = stk("w_qkv").reshape(L, width, 3, heads, dh).transpose(0, 2, 3, 1, 4)
    w_qkv = w_qkv.reshape(L * 3 * heads, width, dh).astype(jnp.bfloat16)
    b_qkv = stk("b_qkv").reshape(L * 3 * heads, 1, dh)
    w_out = stk("w_out").reshape(L * heads, dh, width).astype(jnp.bfloat16)
    return dict(
        ln1_g=stk("ln1_g").reshape(L, 1, width), ln1_b=stk("ln1_b").reshape(L, 1, width),
        w_qkv=w_qkv, b_qkv=b_qkv, w_out=w_out,
        b_out=stk("b_out").reshape(L, 1, width),
        ln2_g=stk("ln2_g").reshape(L, 1, width), ln2_b=stk("ln2_b").reshape(L, 1, width),
        mlp_w1=stk("mlp_w1").astype(jnp.bfloat16),
        mlp_b1=stk("mlp_b1").reshape(L, 1, 4 * width),
        mlp_w2=stk("mlp_w2").astype(jnp.bfloat16),
        mlp_b2=stk("mlp_b2").reshape(L, 1, width),
    )


def init_params(key):
    c = CFG
    keys = jax.random.split(key, 12 + c["vis_layers"] + c["txt_layers"])
    kit = iter(keys)
    patch_dim = c["img_channels"] * c["patch"] * c["patch"]
    n_tokens = (c["img_size"] // c["patch"]) ** 2 + 1
    vw, tw = c["vis_width"], c["txt_width"]

    visual = dict(
        patch_w=_nrm(next(kit), (patch_dim, vw), patch_dim ** -0.5).astype(jnp.bfloat16),
        class_emb=_nrm(next(kit), (1, vw), vw ** -0.5),
        pos_emb=_nrm(next(kit), (n_tokens, vw), vw ** -0.5),
        ln_pre_g=jnp.ones((1, vw), jnp.float32), ln_pre_b=jnp.zeros((1, vw), jnp.float32),
        blocks=_prep_blocks([_block_params(next(kit), vw) for _ in range(c["vis_layers"])],
                            c["vis_heads"]),
        ln_post_g=jnp.ones((1, vw), jnp.float32), ln_post_b=jnp.zeros((1, vw), jnp.float32),
        proj=_nrm(next(kit), (vw, c["embed_dim"]), vw ** -0.5).astype(jnp.bfloat16),
    )
    text = dict(
        pos_emb=_nrm(next(kit), (c["txt_seq"], tw), 0.01),
        blocks=_prep_blocks([_block_params(next(kit), tw) for _ in range(c["txt_layers"])],
                            c["txt_heads"]),
        ln_final_g=jnp.ones((1, tw), jnp.float32), ln_final_b=jnp.zeros((1, tw), jnp.float32),
        text_proj=_nrm(next(kit), (tw, c["embed_dim"]), tw ** -0.5).astype(jnp.bfloat16),
    )
    prompt = dict(
        ctx=_nrm(next(kit), (c["n_ctx"], tw), 0.02),                                  # "a photo of a" ctx
        token_prefix=_nrm(next(kit), (c["n_cls"], 1, tw), 0.02),                      # SOS embedding
        token_suffix=_nrm(next(kit), (c["n_cls"], c["txt_seq"] - 1 - c["n_ctx"], tw), 0.02),
    )
    # TODO(synk): real CLIP tokenization / token_embedding lookup has no in-kernel equivalent;
    # tokenized prompts are synthesized so argmax(-1) marks the per-class EOT position.
    tokenized_prompts = jnp.array(
        [[49406, 1, 2, 3, 4, 10, 49407, 0],
         [49406, 1, 2, 3, 4, 11, 12, 49407],
         [49406, 1, 2, 3, 4, 49407, 0, 0]], dtype=jnp.int32)
    logit_scale = jnp.array(math.log(1.0 / 0.07), jnp.float32)

    return dict(visual=visual, text=text, prompt=prompt,
                tokenized_prompts=tokenized_prompts, logit_scale=logit_scale)


# ----------------------------- main -----------------------------

if __name__ == "__main__":
    root = jax.random.PRNGKey(0)
    pkey, ikey = jax.random.split(root)
    params = init_params(pkey)
    image = jax.random.normal(
        ikey, (CFG["batch"], CFG["img_channels"], CFG["img_size"], CFG["img_size"]), jnp.float32)

    logits = jax.jit(custom_clip_forward)(params, image)
    logits = jax.block_until_ready(logits)
    assert logits.shape == (CFG["batch"], CFG["n_cls"]), logits.shape
    assert bool(jnp.all(jnp.isfinite(logits)))
    print("KERNEL_OK")
</pallas_src>

<mosaic_0001>
module attributes {stable_mosaic.version = 11 : i64} {
  func.func @_visual_encoder_kernel(%arg0: i32, %arg1: memref<1x16x48xf32, #tpu.memory_space<vmem>>, %arg2: memref<48x32xbf16, #tpu.memory_space<vmem>>, %arg3: memref<1x32xf32, #tpu.memory_space<vmem>>, %arg4: memref<16x32xf32, #tpu.memory_space<vmem>>, %arg5: memref<1x32xf32, #tpu.memory_space<vmem>>, %arg6: memref<1x32xf32, #tpu.memory_space<vmem>>, %arg7: memref<2x1x32xf32, #tpu.memory_space<vmem>>, %arg8: memref<2x1x32xf32, #tpu.memory_space<vmem>>, %arg9: memref<12x32x16xbf16, #tpu.memory_space<vmem>>, %arg10: memref<12x1x16xf32, #tpu.memory_space<vmem>>, %arg11: memref<4x16x32xbf16, #tpu.memory_space<vmem>>, %arg12: memref<2x1x32xf32, #tpu.memory_space<vmem>>, %arg13: memref<2x1x32xf32, #tpu.memory_space<vmem>>, %arg14: memref<2x1x32xf32, #tpu.memory_space<vmem>>, %arg15: memref<2x32x128xbf16, #tpu.memory_space<vmem>>, %arg16: memref<2x1x128xf32, #tpu.memory_space<vmem>>, %arg17: memref<2x128x32xbf16, #tpu.memory_space<vmem>>, %arg18: memref<2x1x32xf32, #tpu.memory_space<vmem>>, %arg19: memref<1x32xf32, #tpu.memory_space<vmem>>, %arg20: memref<1x32xf32, #tpu.memory_space<vmem>>, %arg21: memref<32x32xbf16, #tpu.memory_space<vmem>>, %arg22: memref<1x1x32xf32, #tpu.memory_space<vmem>>) attributes {dimension_semantics = [#tpu.dimension_semantics<parallel>], iteration_bounds = array<i64: 2>, scalar_prefetch = 0 : i64, scratch_operands = 0 : i64, tpu.core_type = #tpu.core_type<tc>, window_params = [{transform_indices = @transform_0, window_bounds = array<i64: 1, 16, 48>}, {pipeline_mode = #tpu.pipeline_mode<synchronous>, transform_indices = @transform_1, window_bounds = array<i64: 48, 32>}, {pipeline_mode = #tpu.pipeline_mode<synchronous>, transform_indices = @transform_2, window_bounds = array<i64: 1, 32>}, {pipeline_mode = #tpu.pipeline_mode<synchronous>, transform_indices = @transform_3, window_bounds = array<i64: 16, 32>}, {pipeline_mode = #tpu.pipeline_mode<synchronous>, transform_indices = @transform_4, window_bounds = array<i64: 1, 32>}, {pipeline_mode = #tpu.pipeline_mode<synchronous>, transform_indices = @transform_5, window_bounds = array<i64: 1, 32>}, {pipeline_mode = #tpu.pipeline_mode<synchronous>, transform_indices = @transform_6, window_bounds = array<i64: 2, 1, 32>}, {pipeline_mode = #tpu.pipeline_mode<synchronous>, transform_indices = @transform_7, window_bounds = array<i64: 2, 1, 32>}, {pipeline_mode = #tpu.pipeline_mode<synchronous>, transform_indices = @transform_8, window_bounds = array<i64: 12, 32, 16>}, {pipeline_mode = #tpu.pipeline_mode<synchronous>, transform_indices = @transform_9, window_bounds = array<i64: 12, 1, 16>}, {pipeline_mode = #tpu.pipeline_mode<synchronous>, transform_indices = @transform_10, window_bounds = array<i64: 4, 16, 32>}, {pipeline_mode = #tpu.pipeline_mode<synchronous>, transform_indices = @transform_11, window_bounds = array<i64: 2, 1, 32>}, {pipeline_mode = #tpu.pipeline_mode<synchronous>, transform_indices = @transform_12, window_bounds = array<i64: 2, 1, 32>}, {pipeline_mode = #tpu.pipeline_mode<synchronous>, transform_indices = @transform_13, window_bounds = array<i64: 2, 1, 32>}, {pipeline_mode = #tpu.pipeline_mode<synchronous>, transform_indices = @transform_14, window_bounds = array<i64: 2, 32, 128>}, {pipeline_mode = #tpu.pipeline_mode<synchronous>, transform_indices = @transform_15, window_bounds = array<i64: 2, 1, 128>}, {pipeline_mode = #tpu.pipeline_mode<synchronous>, transform_indices = @transform_16, window_bounds = array<i64: 2, 128, 32>}, {pipeline_mode = #tpu.pipeline_mode<synchronous>, transform_indices = @transform_17, window_bounds = array<i64: 2, 1, 32>}, {pipeline_mode = #tpu.pipeline_mode<synchronous>, transform_indices = @transform_18, window_bounds = array<i64: 1, 32>}, {pipeline_mode = #tpu.pipeline_mode<synchronous>, transform_indices = @transform_19, window_bounds = array<i64: 1, 32>}, {pipeline_mode = #tpu.pipeline_mode<synchronous>, transform_indices = @transform_20, window_bounds = array<i64: 32, 32>}, {transform_indices = @transform_21, window_bounds = array<i64: 1, 1, 32>}]} {
    %c0 = arith.constant 0 : index
    %c0_0 = arith.constant 0 : index
    %c0_1 = arith.constant 0 : index
    %0 = vector.load %arg1[%c0, %c0_0, %c0_1] : memref<1x16x48xf32, #tpu.memory_space<vmem>>, vector<1x16x48xf32>
    %1 = vector.shape_cast %0 : vector<1x16x48xf32> to vector<16x48xf32>
    %c0_2 = arith.constant 0 : index
    %c0_3 = arith.constant 0 : index
    %2 = vector.load %arg2[%c0_2, %c0_3] : memref<48x32xbf16, #tpu.memory_space<vmem>>, vector<48x32xbf16>
    %3 = arith.truncf %1 : vector<16x48xf32> to vector<16x48xbf16>
    %cst = arith.constant dense<0.000000e+00> : vector<16x32xf32>
    %4 = tpu.matmul %3, %2, %cst {dimension_numbers = #tpu.dot_dimension_numbers<[1], [0], [0], [1], [0, 0, 1, 1], [], []>} : vector<16x48xbf16>, vector<48x32xbf16>, vector<16x32xf32> -> vector<16x32xf32>
    %c0_4 = arith.constant 0 : index
    %c0_5 = arith.constant 0 : index
    %5 = vector.load %arg3[%c0_4, %c0_5] : memref<1x32xf32, #tpu.memory_space<vmem>>, vector<1x32xf32>
    %c0_6 = arith.constant 0 : index
    %c0_7 = arith.constant 0 : index
    %6 = vector.load %arg4[%c0_6, %c0_7] : memref<16x32xf32, #tpu.memory_space<vmem>>, vector<16x32xf32>
    %7 = arith.addf %4, %6 : vector<16x32xf32>
    %8 = tpu.concatenate %5, %7 in 0 : vector<1x32xf32>, vector<16x32xf32> -> vector<17x32xf32>
    %c0_8 = arith.constant 0 : index
    %c0_9 = arith.constant 0 : index
    %9 = vector.load %arg5[%c0_8, %c0_9] : memref<1x32xf32, #tpu.memory_space<vmem>>, vector<1x32xf32>
    %c0_10 = arith.constant 0 : index
    %c0_11 = arith.constant 0 : index
    %10 = vector.load %arg6[%c0_10, %c0_11] : memref<1x32xf32, #tpu.memory_space<vmem>>, vector<1x32xf32>
    %cst_12 = arith.constant dense<0.000000e+00> : vector<17xf32>
    %11 = vector.multi_reduction <add>, %8, %cst_12 [1] : vector<17x32xf32> to vector<17xf32>
    %12 = vector.shape_cast %11 : vector<17xf32> to vector<17x1xf32>
    %cst_13 = arith.constant 3.200000e+01 : f32
    %13 = vector.broadcast %cst_13 : f32 to vector<17x1xf32>
    %14 = arith.divf %12, %13 : vector<17x1xf32>
    %15 = vector.broadcast %14 : vector<17x1xf32> to vector<17x32xf32>
    %16 = arith.subf %8, %15 : vector<17x32xf32>
    %17 = arith.mulf %16, %16 : vector<17x32xf32>
    %cst_14 = arith.constant dense<0.000000e+00> : vector<17xf32>
    %18 = vector.multi_reduction <add>, %17, %cst_14 [1] : vector<17x32xf32> to vector<17xf32>
    %19 = vector.shape_cast %18 : vector<17xf32> to vector<17x1xf32>
    %cst_15 = arith.constant 3.200000e+01 : f32
    %20 = vector.broadcast %cst_15 : f32 to vector<17x1xf32>
    %21 = arith.divf %19, %20 : vector<17x1xf32>
    %22 = vector.broadcast %14 : vector<17x1xf32> to vector<17x32xf32>
    %23 = arith.subf %8, %22 : vector<17x32xf32>
    %cst_16 = arith.constant 9.99999974E-6 : f32
    %24 = vector.broadcast %cst_16 : f32 to vector<17x1xf32>
    %25 = arith.addf %21, %24 : vector<17x1xf32>
    %26 = math.rsqrt %25 : vector<17x1xf32>
    %27 = vector.broadcast %26 : vector<17x1xf32> to vector<17x32xf32>
    %28 = arith.mulf %23, %27 : vector<17x32xf32>
    %29 = vector.broadcast %9 : vector<1x32xf32> to vector<17x32xf32>
    %30 = arith.mulf %28, %29 : vector<17x32xf32>
    %31 = vector.broadcast %10 : vector<1x32xf32> to vector<17x32xf32>
    %32 = arith.addf %30, %31 : vector<17x32xf32>
    %33 = vector.shape_cast %32 : vector<17x32xf32> to vector<1x17x32xf32>
    %c0_17 = arith.constant 0 : index
    %c0_18 = arith.constant 0 : index
    %c0_19 = arith.constant 0 : index
    %34 = vector.load %arg7[%c0_17, %c0_18, %c0_19] : memref<2x1x32xf32, #tpu.memory_space<vmem>>, vector<1x1x32xf32>
    %35 = vector.shape_cast %34 : vector<1x1x32xf32> to vector<1x32xf32>
    %c0_20 = arith.constant 0 : index
    %c0_21 = arith.constant 0 : index
    %c0_22 = arith.constant 0 : index
    %36 = vector.load %arg8[%c0_20, %c0_21, %c0_22] : memref<2x1x32xf32, #tpu.memory_space<vmem>>, vector<1x1x32xf32>
    %37 = vector.shape_cast %36 : vector<1x1x32xf32> to vector<1x32xf32>
    %cst_23 = arith.constant dense<0.000000e+00> : vector<1x17xf32>
    %38 = vector.multi_reduction <add>, %33, %cst_23 [2] : vector<1x17x32xf32> to vector<1x17xf32>
    %39 = vector.shape_cast %38 : vector<1x17xf32> to vector<1x17x1xf32>
    %cst_24 = arith.constant 3.200000e+01 : f32
    %40 = vector.broadcast %cst_24 : f32 to vector<1x17x1xf32>
    %41 = arith.divf %39, %40 : vector<1x17x1xf32>
    %42 = vector.broadcast %41 : vector<1x17x1xf32> to vector<1x17x32xf32>
    %43 = arith.subf %33, %42 : vector<1x17x32xf32>
    %44 = arith.mulf %43, %43 : vector<1x17x32xf32>
    %cst_25 = arith.constant dense<0.000000e+00> : vector<1x17xf32>
    %45 = vector.multi_reduction <add>, %44, %cst_25 [2] : vector<1x17x32xf32> to vector<1x17xf32>
    %46 = vector.shape_cast %45 : vector<1x17xf32> to vector<1x17x1xf32>
    %cst_26 = arith.constant 3.200000e+01 : f32
    %47 = vector.broadcast %cst_26 : f32 to vector<1x17x1xf32>
    %48 = arith.divf %46, %47 : vector<1x17x1xf32>
    %49 = vector.broadcast %41 : vector<1x17x1xf32> to vector<1x17x32xf32>
    %50 = arith.subf %33, %49 : vector<1x17x32xf32>
    %cst_27 = arith.constant 9.99999974E-6 : f32
    %51 = vector.broadcast %cst_27 : f32 to vector<1x17x1xf32>
    %52 = arith.addf %48, %51 : vector<1x17x1xf32>
    %53 = math.rsqrt %52 : vector<1x17x1xf32>
    %54 = vector.broadcast %53 : vector<1x17x1xf32> to vector<1x17x32xf32>
    %55 = arith.mulf %50, %54 : vector<1x17x32xf32>
    %56 = vector.shape_cast %35 : vector<1x32xf32> to vector<1x1x32xf32>
    %57 = vector.broadcast %56 : vector<1x1x32xf32> to vector<1x17x32xf32>
    %58 = arith.mulf %55, %57 : vector<1x17x32xf32>
    %59 = vector.shape_cast %37 : vector<1x32xf32> to vector<1x1x32xf32>
    %60 = vector.broadcast %59 : vector<1x1x32xf32> to vector<1x17x32xf32>
    %61 = arith.addf %58, %60 : vector<1x17x32xf32>
    %c0_28 = arith.constant 0 : index
    %c0_29 = arith.constant 0 : index
    %c0_30 = arith.constant 0 : index
    %62 = vector.load %arg9[%c0_28, %c0_29, %c0_30] : memref<12x32x16xbf16, #tpu.memory_space<vmem>>, vector<1x32x16xbf16>
    %63 = vector.shape_cast %62 : vector<1x32x16xbf16> to vector<32x16xbf16>
    %64 = arith.truncf %61 : vector<1x17x32xf32> to vector<1x17x32xbf16>
    %cst_31 = arith.constant dense<0.000000e+00> : vector<1x17x16xf32>
    %65 = tpu.matmul %64, %63, %cst_31 {dimension_numbers = #tpu.dot_dimension_numbers<[2], [0], [0, 1], [1], [0, 0, 0, 1, 1, 1], [], []>} : vector<1x17x32xbf16>, vector<32x16xbf16>, vector<1x17x16xf32> -> vector<1x17x16xf32>
    %c0_32 = arith.constant 0 : index
    %c0_33 = arith.constant 0 : index
    %c0_34 = arith.constant 0 : index
    %66 = vector.load %arg10[%c0_32, %c0_33, %c0_34] : memref<12x1x16xf32, #tpu.memory_space<vmem>>, vector<1x1x16xf32>
    %67 = vector.shape_cast %66 : vector<1x1x16xf32> to vector<1x16xf32>
    %68 = vector.shape_cast %67 : vector<1x16xf32> to vector<1x1x16xf32>
    %69 = vector.broadcast %68 : vector<1x1x16xf32> to vector<1x17x16xf32>
    %70 = arith.addf %65, %69 : vector<1x17x16xf32>
    %c2 = arith.constant 2 : index
    %c0_35 = arith.constant 0 : index
    %c0_36 = arith.constant 0 : index
    %71 = vector.load %arg9[%c2, %c0_35, %c0_36] : memref<12x32x16xbf16, #tpu.memory_space<vmem>>, vector<1x32x16xbf16>
    %72 = vector.shape_cast %71 : vector<1x32x16xbf16> to vector<32x16xbf16>
    %73 = arith.truncf %61 : vector<1x17x32xf32> to vector<1x17x32xbf16>
    %cst_37 = arith.constant dense<0.000000e+00> : vector<1x17x16xf32>
    %74 = tpu.matmul %73, %72, %cst_37 {dimension_numbers = #tpu.dot_dimension_numbers<[2], [0], [0, 1], [1], [0, 0, 0, 1, 1, 1], [], []>} : vector<1x17x32xbf16>, vector<32x16xbf16>, vector<1x17x16xf32> -> vector<1x17x16xf32>
    %c2_38 = arith.constant 2 : index
    %c0_39 = arith.constant 0 : index
    %c0_40 = arith.constant 0 : index
    %75 = vector.load %arg10[%c2_38, %c0_39, %c0_40] : memref<12x1x16xf32, #tpu.memory_space<vmem>>, vector<1x1x16xf32>
    %76 = vector.shape_cast %75 : vector<1x1x16xf32> to vector<1x16xf32>
    %77 = vector.shape_cast %76 : vector<1x16xf32> to vector<1x1x16xf32>
    %78 = vector.broadcast %77 : vector<1x1x16xf32> to vector<1x17x16xf32>
    %79 = arith.addf %74, %78 : vector<1x17x16xf32>
    %c4 = arith.constant 4 : index
    %c0_41 = arith.constant 0 : index
    %c0_42 = arith.constant 0 : index
    %80 = vector.load %arg9[%c4, %c0_41, %c0_42] : memref<12x32x16xbf16, #tpu.memory_space<vmem>>, vector<1x32x16xbf16>
    %81 = vector.shape_cast %80 : vector<1x32x16xbf16> to vector<32x16xbf16>
    %82 = arith.truncf %61 : vector<1x17x32xf32> to vector<1x17x32xbf16>
    %cst_43 = arith.constant dense<0.000000e+00> : vector<1x17x16xf32>
    %83 = tpu.matmul %82, %81, %cst_43 {dimension_numbers = #tpu.dot_dimension_numbers<[2], [0], [0, 1], [1], [0, 0, 0, 1, 1, 1], [], []>} : vector<1x17x32xbf16>, vector<32x16xbf16>, vector<1x17x16xf32> -> vector<1x17x16xf32>
    %c4_44 = arith.constant 4 : index
    %c0_45 = arith.constant 0 : index
    %c0_46 = arith.constant 0 : index
    %84 = vector.load %arg10[%c4_44, %c0_45, %c0_46] : memref<12x1x16xf32, #tpu.memory_space<vmem>>, vector<1x1x16xf32>
    %85 = vector.shape_cast %84 : vector<1x1x16xf32> to vector<1x16xf32>
    %86 = vector.shape_cast %85 : vector<1x16xf32> to vector<1x1x16xf32>
    %87 = vector.broadcast %86 : vector<1x1x16xf32> to vector<1x17x16xf32>
    %88 = arith.addf %83, %87 : vector<1x17x16xf32>
    %89 = arith.truncf %70 : vector<1x17x16xf32> to vector<1x17x16xbf16>
    %90 = arith.truncf %79 : vector<1x17x16xf32> to vector<1x17x16xbf16>
    %cst_47 = arith.constant dense<0.000000e+00> : vector<1x17x17xf32>
    %91 = tpu.matmul %89, %90, %cst_47 {dimension_numbers = #tpu.dot_dimension_numbers<[2], [2], [1], [1], [0, 0, 0, 1, 1, 1], [0], [0]>} : vector<1x17x16xbf16>, vector<1x17x16xbf16>, vector<1x17x17xf32> -> vector<1x17x17xf32>
    %cst_48 = arith.constant 2.500000e-01 : f32
    %92 = vector.broadcast %cst_48 : f32 to vector<1x17x17xf32>
    %93 = arith.mulf %91, %92 : vector<1x17x17xf32>
    %cst_49 = arith.constant dense<0xFF800000> : vector<1x17xf32>
    %94 = vector.multi_reduction <maximumf>, %93, %cst_49 [2] : vector<1x17x17xf32> to vector<1x17xf32>
    %95 = vector.shape_cast %94 : vector<1x17xf32> to vector<1x17x1xf32>
    %96 = vector.broadcast %95 : vector<1x17x1xf32> to vector<1x17x17xf32>
    %97 = arith.subf %93, %96 : vector<1x17x17xf32>
    %98 = math.exp %97 : vector<1x17x17xf32>
    %cst_50 = arith.constant dense<0.000000e+00> : vector<1x17xf32>
    %99 = vector.multi_reduction <add>, %98, %cst_50 [2] : vector<1x17x17xf32> to vector<1x17xf32>
    %100 = vector.shape_cast %99 : vector<1x17xf32> to vector<1x17x1xf32>
    %101 = tpu.reciprocal %100 {approx = true} : vector<1x17x1xf32> -> vector<1x17x1xf32>
    %102 = vector.broadcast %101 : vector<1x17x1xf32> to vector<1x17x17xf32>
    %103 = arith.mulf %98, %102 : vector<1x17x17xf32>
    %104 = arith.truncf %103 : vector<1x17x17xf32> to vector<1x17x17xbf16>
    %105 = arith.truncf %88 : vector<1x17x16xf32> to vector<1x17x16xbf16>
    %cst_51 = arith.constant dense<0.000000e+00> : vector<1x17x16xf32>
    %106 = tpu.matmul %104, %105, %cst_51 {dimension_numbers = #tpu.dot_dimension_numbers<[2], [1], [1], [2], [0, 0, 0, 1, 1, 2], [0], [0]>} : vector<1x17x17xbf16>, vector<1x17x16xbf16>, vector<1x17x16xf32> -> vector<1x17x16xf32>
    %c0_52 = arith.constant 0 : index
    %c0_53 = arith.constant 0 : index
    %c0_54 = arith.constant 0 : index
    %107 = vector.load %arg11[%c0_52, %c0_53, %c0_54] : memref<4x16x32xbf16, #tpu.memory_space<vmem>>, vector<1x16x32xbf16>
    %108 = vector.shape_cast %107 : vector<1x16x32xbf16> to vector<16x32xbf16>
    %109 = arith.truncf %106 : vector<1x17x16xf32> to vector<1x17x16xbf16>
    %cst_55 = arith.constant dense<0.000000e+00> : vector<1x17x32xf32>
    %110 = tpu.matmul %109, %108, %cst_55 {dimension_numbers = #tpu.dot_dimension_numbers<[2], [0], [0, 1], [1], [0, 0, 0, 1, 1, 1], [], []>} : vector<1x17x16xbf16>, vector<16x32xbf16>, vector<1x17x32xf32> -> vector<1x17x32xf32>
    %111 = arith.addf %33, %110 : vector<1x17x32xf32>
    %c1 = arith.constant 1 : index
    %c0_56 = arith.constant 0 : index
    %c0_57 = arith.constant 0 : index
    %112 = vector.load %arg9[%c1, %c0_56, %c0_57] : memref<12x32x16xbf16, #tpu.memory_space<vmem>>, vector<1x32x16xbf16>
    %113 = vector.shape_cast %112 : vector<1x32x16xbf16> to vector<32x16xbf16>
    %114 = arith.truncf %61 : vector<1x17x32xf32> to vector<1x17x32xbf16>
    %cst_58 = arith.constant dense<0.000000e+00> : vector<1x17x16xf32>
    %115 = tpu.matmul %114, %113, %cst_58 {dimension_numbers = #tpu.dot_dimension_numbers<[2], [0], [0, 1], [1], [0, 0, 0, 1, 1, 1], [], []>} : vector<1x17x32xbf16>, vector<32x16xbf16>, vector<1x17x16xf32> -> vector<1x17x16xf32>
    %c1_59 = arith.constant 1 : index
    %c0_60 = arith.constant 0 : index
    %c0_61 = arith.constant 0 : index
    %116 = vector.load %arg10[%c1_59, %c0_60, %c0_61] : memref<12x1x16xf32, #tpu.memory_space<vmem>>, vector<1x1x16xf32>
    %117 = vector.shape_cast %116 : vector<1x1x16xf32> to vector<1x16xf32>
    %118 = vector.shape_cast %117 : vector<1x16xf32> to vector<1x1x16xf32>
    %119 = vector.broadcast %118 : vector<1x1x16xf32> to vector<1x17x16xf32>
    %120 = arith.addf %115, %119 : vector<1x17x16xf32>
    %c3 = arith.constant 3 : index
    %c0_62 = arith.constant 0 : index
    %c0_63 = arith.constant 0 : index
    %121 = vector.load %arg9[%c3, %c0_62, %c0_63] : memref<12x32x16xbf16, #tpu.memory_space<vmem>>, vector<1x32x16xbf16>
    %122 = vector.shape_cast %121 : vector<1x32x16xbf16> to vector<32x16xbf16>
    %123 = arith.truncf %61 : vector<1x17x32xf32> to vector<1x17x32xbf16>
    %cst_64 = arith.constant dense<0.000000e+00> : vector<1x17x16xf32>
    %124 = tpu.matmul %123, %122, %cst_64 {dimension_numbers = #tpu.dot_dimension_numbers<[2], [0], [0, 1], [1], [0, 0, 0, 1, 1, 1], [], []>} : vector<1x17x32xbf16>, vector<32x16xbf16>, vector<1x17x16xf32> -> vector<1x17x16xf32>
    %c3_65 = arith.constant 3 : index
    %c0_66 = arith.constant 0 : index
    %c0_67 = arith.constant 0 : index
    %125 = vector.load %arg10[%c3_65, %c0_66, %c0_67] : memref<12x1x16xf32, #tpu.memory_space<vmem>>, vector<1x1x16xf32>
    %126 = vector.shape_cast %125 : vector<1x1x16xf32> to vector<1x16xf32>
    %127 = vector.shape_cast %126 : vector<1x16xf32> to vector<1x1x16xf32>
    %128 = vector.broadcast %127 : vector<1x1x16xf32> to vector<1x17x16xf32>
    %129 = arith.addf %124, %128 : vector<1x17x16xf32>
    %c5 = arith.constant 5 : index
    %c0_68 = arith.constant 0 : index
    %c0_69 = arith.constant 0 : index
    %130 = vector.load %arg9[%c5, %c0_68, %c0_69] : memref<12x32x16xbf16, #tpu.memory_space<vmem>>, vector<1x32x16xbf16>
    %131 = vector.shape_cast %130 : vector<1x32x16xbf16> to vector<32x16xbf16>
    %132 = arith.truncf %61 : vector<1x17x32xf32> to vector<1x17x32xbf16>
    %cst_70 = arith.constant dense<0.000000e+00> : vector<1x17x16xf32>
    %133 = tpu.matmul %132, %131, %cst_70 {dimension_numbers = #tpu.dot_dimension_numbers<[2], [0], [0, 1], [1], [0, 0, 0, 1, 1, 1], [], []>} : vector<1x17x32xbf16>, vector<32x16xbf16>, vector<1x17x16xf32> -> vector<1x17x16xf32>
    %c5_71 = arith.constant 5 : index
    %c0_72 = arith.constant 0 : index
    %c0_73 = arith.constant 0 : index
    %134 = vector.load %arg10[%c5_71, %c0_72, %c0_73] : memref<12x1x16xf32, #tpu.memory_space<vmem>>, vector<1x1x16xf32>
    %135 = vector.shape_cast %134 : vector<1x1x16xf32> to vector<1x16xf32>
    %136 = vector.shape_cast %135 : vector<1x16xf32> to vector<1x1x16xf32>
    %137 = vector.broadcast %136 : vector<1x1x16xf32> to vector<1x17x16xf32>
    %138 = arith.addf %133, %137 : vector<1x17x16xf32>
    %139 = arith.truncf %120 : vector<1x17x16xf32> to vector<1x17x16xbf16>
    %140 = arith.truncf %129 : vector<1x17x16xf32> to vector<1x17x16xbf16>
    %cst_74 = arith.constant dense<0.000000e+00> : vector<1x17x17xf32>
    %141 = tpu.matmul %139, %140, %cst_74 {dimension_numbers = #tpu.dot_dimension_numbers<[2], [2], [1], [1], [0, 0, 0, 1, 1, 1], [0], [0]>} : vector<1x17x16xbf16>, vector<1x17x16xbf16>, vector<1x17x17xf32> -> vector<1x17x17xf32>
    %cst_75 = arith.constant 2.500000e-01 : f32
    %142 = vector.broadcast %cst_75 : f32 to vector<1x17x17xf32>
    %143 = arith.mulf %141, %142 : vector<1x17x17xf32>
    %cst_76 = arith.constant dense<0xFF800000> : vector<1x17xf32>
    %144 = vector.multi_reduction <maximumf>, %143, %cst_76 [2] : vector<1x17x17xf32> to vector<1x17xf32>
    %145 = vector.shape_cast %144 : vector<1x17xf32> to vector<1x17x1xf32>
    %146 = vector.broadcast %145 : vector<1x17x1xf32> to vector<1x17x17xf32>
    %147 = arith.subf %143, %146 : vector<1x17x17xf32>
    %148 = math.exp %147 : vector<1x17x17xf32>
    %cst_77 = arith.constant dense<0.000000e+00> : vector<1x17xf32>
    %149 = vector.multi_reduction <add>, %148, %cst_77 [2] : vector<1x17x17xf32> to vector<1x17xf32>
    %150 = vector.shape_cast %149 : vector<1x17xf32> to vector<1x17x1xf32>
    %151 = tpu.reciprocal %150 {approx = true} : vector<1x17x1xf32> -> vector<1x17x1xf32>
    %152 = vector.broadcast %151 : vector<1x17x1xf32> to vector<1x17x17xf32>
    %153 = arith.mulf %148, %152 : vector<1x17x17xf32>
    %154 = arith.truncf %153 : vector<1x17x17xf32> to vector<1x17x17xbf16>
    %155 = arith.truncf %138 : vector<1x17x16xf32> to vector<1x17x16xbf16>
    %cst_78 = arith.constant dense<0.000000e+00> : vector<1x17x16xf32>
    %156 = tpu.matmul %154, %155, %cst_78 {dimension_numbers = #tpu.dot_dimension_numbers<[2], [1], [1], [2], [0, 0, 0, 1, 1, 2], [0], [0]>} : vector<1x17x17xbf16>, vector<1x17x16xbf16>, vector<1x17x16xf32> -> vector<1x17x16xf32>
    %c1_79 = arith.constant 1 : index
    %c0_80 = arith.constant 0 : index
    %c0_81 = arith.constant 0 : index
    %157 = vector.load %arg11[%c1_79, %c0_80, %c0_81] : memref<4x16x32xbf16, #tpu.memory_space<vmem>>, vector<1x16x32xbf16>
    %158 = vector.shape_cast %157 : vector<1x16x32xbf16> to vector<16x32xbf16>
    %159 = arith.truncf %156 : vector<1x17x16xf32> to vector<1x17x16xbf16>
    %cst_82 = arith.constant dense<0.000000e+00> : vector<1x17x32xf32>
    %160 = tpu.matmul %159, %158, %cst_82 {dimension_numbers = #tpu.dot_dimension_numbers<[2], [0], [0, 1], [1], [0, 0, 0, 1, 1, 1], [], []>} : vector<1x17x16xbf16>, vector<16x32xbf16>, vector<1x17x32xf32> -> vector<1x17x32xf32>
    %161 = arith.addf %111, %160 : vector<1x17x32xf32>
    %c0_83 = arith.constant 0 : index
    %c0_84 = arith.constant 0 : index
    %c0_85 = arith.constant 0 : index
    %162 = vector.load %arg12[%c0_83, %c0_84, %c0_85] : memref<2x1x32xf32, #tpu.memory_space<vmem>>, vector<1x1x32xf32>
    %163 = vector.shape_cast %162 : vector<1x1x32xf32> to vector<1x32xf32>
    %164 = vector.shape_cast %163 : vector<1x32xf32> to vector<1x1x32xf32>
    %165 = vector.broadcast %164 : vector<1x1x32xf32> to vector<1x17x32xf32>
    %166 = arith.addf %161, %165 : vector<1x17x32xf32>
    %c0_86 = arith.constant 0 : index
    %c0_87 = arith.constant 0 : index
    %c0_88 = arith.constant 0 : index
    %167 = vector.load %arg13[%c0_86, %c0_87, %c0_88] : memref<2x1x32xf32, #tpu.memory_space<vmem>>, vector<1x1x32xf32>
    %168 = vector.shape_cast %167 : vector<1x1x32xf32> to vector<1x32xf32>
    %c0_89 = arith.constant 0 : index
    %c0_90 = arith.constant 0 : index
    %c0_91 = arith.constant 0 : index
    %169 = vector.load %arg14[%c0_89, %c0_90, %c0_91] : memref<2x1x32xf32, #tpu.memory_space<vmem>>, vector<1x1x32xf32>
    %170 = vector.shape_cast %169 : vector<1x1x32xf32> to vector<1x32xf32>
    %cst_92 = arith.constant dense<0.000000e+00> : vector<1x17xf32>
    %171 = vector.multi_reduction <add>, %166, %cst_92 [2] : vector<1x17x32xf32> to vector<1x17xf32>
    %172 = vector.shape_cast %171 : vector<1x17xf32> to vector<1x17x1xf32>
    %cst_93 = arith.constant 3.200000e+01 : f32
    %173 = vector.broadcast %cst_93 : f32 to vector<1x17x1xf32>
    %174 = arith.divf %172, %173 : vector<1x17x1xf32>
    %175 = vector.broadcast %174 : vector<1x17x1xf32> to vector<1x17x32xf32>
    %176 = arith.subf %166, %175 : vector<1x17x32xf32>
    %177 = arith.mulf %176, %176 : vector<1x17x32xf32>
    %cst_94 = arith.constant dense<0.000000e+00> : vector<1x17xf32>
    %178 = vector.multi_reduction <add>, %177, %cst_94 [2] : vector<1x17x32xf32> to vector<1x17xf32>
    %179 = vector.shape_cast %178 : vector<1x17xf32> to vector<1x17x1xf32>
    %cst_95 = arith.constant 3.200000e+01 : f32
    %180 = vector.broadcast %cst_95 : f32 to vector<1x17x1xf32>
    %181 = arith.divf %179, %180 : vector<1x17x1xf32>
    %182 = vector.broadcast %174 : vector<1x17x1xf32> to vector<1x17x32xf32>
    %183 = arith.subf %166, %182 : vector<1x17x32xf32>
    %cst_96 = arith.constant 9.99999974E-6 : f32
    %184 = vector.broadcast %cst_96 : f32 to vector<1x17x1xf32>
    %185 = arith.addf %181, %184 : vector<1x17x1xf32>
    %186 = math.rsqrt %185 : vector<1x17x1xf32>
    %187 = vector.broadcast %186 : vector<1x17x1xf32> to vector<1x17x32xf32>
    %188 = arith.mulf %183, %187 : vector<1x17x32xf32>
    %189 = vector.shape_cast %168 : vector<1x32xf32> to vector<1x1x32xf32>
    %190 = vector.broadcast %189 : vector<1x1x32xf32> to vector<1x17x32xf32>
    %191 = arith.mulf %188, %190 : vector<1x17x32xf32>
    %192 = vector.shape_cast %170 : vector<1x32xf32> to vector<1x1x32xf32>
    %193 = vector.broadcast %192 : vector<1x1x32xf32> to vector<1x17x32xf32>
    %194 = arith.addf %191, %193 : vector<1x17x32xf32>
    %c0_97 = arith.constant 0 : index
    %c0_98 = arith.constant 0 : index
    %c0_99 = arith.constant 0 : index
    %195 = vector.load %arg15[%c0_97, %c0_98, %c0_99] : memref<2x32x128xbf16, #tpu.memory_space<vmem>>, vector<1x32x128xbf16>
    %196 = vector.shape_cast %195 : vector<1x32x128xbf16> to vector<32x128xbf16>
    %197 = arith.truncf %194 : vector<1x17x32xf32> to vector<1x17x32xbf16>
    %cst_100 = arith.constant dense<0.000000e+00> : vector<1x17x128xf32>
    %198 = tpu.matmul %197, %196, %cst_100 {dimension_numbers = #tpu.dot_dimension_numbers<[2], [0], [0, 1], [1], [0, 0, 0, 1, 1, 1], [], []>} : vector<1x17x32xbf16>, vector<32x128xbf16>, vector<1x17x128xf32> -> vector<1x17x128xf32>
    %c0_101 = arith.constant 0 : index
    %c0_102 = arith.constant 0 : index
    %c0_103 = arith.constant 0 : index
    %199 = vector.load %arg16[%c0_101, %c0_102, %c0_103] : memref<2x1x128xf32, #tpu.memory_space<vmem>>, vector<1x1x128xf32>
    %200 = vector.shape_cast %199 : vector<1x1x128xf32> to vector<1x128xf32>
    %201 = vector.shape_cast %200 : vector<1x128xf32> to vector<1x1x128xf32>
    %202 = vector.broadcast %201 : vector<1x1x128xf32> to vector<1x17x128xf32>
    %203 = arith.addf %198, %202 : vector<1x17x128xf32>
    %cst_104 = arith.constant 1.702000e+00 : f32
    %204 = vector.broadcast %cst_104 : f32 to vector<1x17x128xf32>
    %205 = arith.mulf %204, %203 : vector<1x17x128xf32>
    %206 = arith.negf %205 : vector<1x17x128xf32>
    %207 = math.exp %206 : vector<1x17x128xf32>
    %cst_105 = arith.constant 1.000000e+00 : f32
    %208 = vector.broadcast %cst_105 : f32 to vector<1x17x128xf32>
    %209 = arith.addf %208, %207 : vector<1x17x128xf32>
    %210 = arith.divf %208, %209 : vector<1x17x128xf32>
    %211 = arith.mulf %203, %210 : vector<1x17x128xf32>
    %c0_106 = arith.constant 0 : index
    %c0_107 = arith.constant 0 : index
    %c0_108 = arith.constant 0 : index
    %212 = vector.load %arg17[%c0_106, %c0_107, %c0_108] : memref<2x128x32xbf16, #tpu.memory_space<vmem>>, vector<1x128x32xbf16>
    %213 = vector.shape_cast %212 : vector<1x128x32xbf16> to vector<128x32xbf16>
    %214 = arith.truncf %211 : vector<1x17x128xf32> to vector<1x17x128xbf16>
    %cst_109 = arith.constant dense<0.000000e+00> : vector<1x17x32xf32>
    %215 = tpu.matmul %214, %213, %cst_109 {dimension_numbers = #tpu.dot_dimension_numbers<[2], [0], [0, 1], [1], [0, 0, 0, 1, 1, 1], [], []>} : vector<1x17x128xbf16>, vector<128x32xbf16>, vector<1x17x32xf32> -> vector<1x17x32xf32>
    %216 = arith.addf %166, %215 : vector<1x17x32xf32>
    %c0_110 = arith.constant 0 : index
    %c0_111 = arith.constant 0 : index
    %c0_112 = arith.constant 0 : index
    %217 = vector.load %arg18[%c0_110, %c0_111, %c0_112] : memref<2x1x32xf32, #tpu.memory_space<vmem>>, vector<1x1x32xf32>
    %218 = vector.shape_cast %217 : vector<1x1x32xf32> to vector<1x32xf32>
    %219 = vector.shape_cast %218 : vector<1x32xf32> to vector<1x1x32xf32>
    %220 = vector.broadcast %219 : vector<1x1x32xf32> to vector<1x17x32xf32>
    %221 = arith.addf %216, %220 : vector<1x17x32xf32>
    %c1_113 = arith.constant 1 : index
    %c0_114 = arith.constant 0 : index
    %c0_115 = arith.constant 0 : index
    %222 = vector.load %arg7[%c1_113, %c0_114, %c0_115] : memref<2x1x32xf32, #tpu.memory_space<vmem>>, vector<1x1x32xf32>
    %223 = vector.shape_cast %222 : vector<1x1x32xf32> to vector<1x32xf32>
    %c1_116 = arith.constant 1 : index
    %c0_117 = arith.constant 0 : index
    %c0_118 = arith.constant 0 : index
    %224 = vector.load %arg8[%c1_116, %c0_117, %c0_118] : memref<2x1x32xf32, #tpu.memory_space<vmem>>, vector<1x1x32xf32>
    %225 = vector.shape_cast %224 : vector<1x1x32xf32> to vector<1x32xf32>
    %cst_119 = arith.constant dense<0.000000e+00> : vector<1x17xf32>
    %226 = vector.multi_reduction <add>, %221, %cst_119 [2] : vector<1x17x32xf32> to vector<1x17xf32>
    %227 = vector.shape_cast %226 : vector<1x17xf32> to vector<1x17x1xf32>
    %cst_120 = arith.constant 3.200000e+01 : f32
    %228 = vector.broadcast %cst_120 : f32 to vector<1x17x1xf32>
    %229 = arith.divf %227, %228 : vector<1x17x1xf32>
    %230 = vector.broadcast %229 : vector<1x17x1xf32> to vector<1x17x32xf32>
    %231 = arith.subf %221, %230 : vector<1x17x32xf32>
    %232 = arith.mulf %231, %231 : vector<1x17x32xf32>
    %cst_121 = arith.constant dense<0.000000e+00> : vector<1x17xf32>
    %233 = vector.multi_reduction <add>, %232, %cst_121 [2] : vector<1x17x32xf32> to vector<1x17xf32>
    %234 = vector.shape_cast %233 : vector<1x17xf32> to vector<1x17x1xf32>
    %cst_122 = arith.constant 3.200000e+01 : f32
    %235 = vector.broadcast %cst_122 : f32 to vector<1x17x1xf32>
    %236 = arith.divf %234, %235 : vector<1x17x1xf32>
    %237 = vector.broadcast %229 : vector<1x17x1xf32> to vector<1x17x32xf32>
    %238 = arith.subf %221, %237 : vector<1x17x32xf32>
    %cst_123 = arith.constant 9.99999974E-6 : f32
    %239 = vector.broadcast %cst_123 : f32 to vector<1x17x1xf32>
    %240 = arith.addf %236, %239 : vector<1x17x1xf32>
    %241 = math.rsqrt %240 : vector<1x17x1xf32>
    %242 = vector.broadcast %241 : vector<1x17x1xf32> to vector<1x17x32xf32>
    %243 = arith.mulf %238, %242 : vector<1x17x32xf32>
    %244 = vector.shape_cast %223 : vector<1x32xf32> to vector<1x1x32xf32>
    %245 = vector.broadcast %244 : vector<1x1x32xf32> to vector<1x17x32xf32>
    %246 = arith.mulf %243, %245 : vector<1x17x32xf32>
    %247 = vector.shape_cast %225 : vector<1x32xf32> to vector<1x1x32xf32>
    %248 = vector.broadcast %247 : vector<1x1x32xf32> to vector<1x17x32xf32>
    %249 = arith.addf %246, %248 : vector<1x17x32xf32>
    %c6 = arith.constant 6 : index
    %c0_124 = arith.constant 0 : index
    %c0_125 = arith.constant 0 : index
    %250 = vector.load %arg9[%c6, %c0_124, %c0_125] : memref<12x32x16xbf16, #tpu.memory_space<vmem>>, vector<1x32x16xbf16>
    %251 = vector.shape_cast %250 : vector<1x32x16xbf16> to vector<32x16xbf16>
    %252 = arith.truncf %249 : vector<1x17x32xf32> to vector<1x17x32xbf16>
    %cst_126 = arith.constant dense<0.000000e+00> : vector<1x17x16xf32>
    %253 = tpu.matmul %252, %251, %cst_126 {dimension_numbers = #tpu.dot_dimension_numbers<[2], [0], [0, 1], [1], [0, 0, 0, 1, 1, 1], [], []>} : vector<1x17x32xbf16>, vector<32x16xbf16>, vector<1x17x16xf32> -> vector<1x17x16xf32>
    %c6_127 = arith.constant 6 : index
    %c0_128 = arith.constant 0 : index
    %c0_129 = arith.constant 0 : index
    %254 = vector.load %arg10[%c6_127, %c0_128, %c0_129] : memref<12x1x16xf32, #tpu.memory_space<vmem>>, vector<1x1x16xf32>
    %255 = vector.shape_cast %254 : vector<1x1x16xf32> to vector<1x16xf32>
    %256 = vector.shape_cast %255 : vector<1x16xf32> to vector<1x1x16xf32>
    %257 = vector.broadcast %256 : vector<1x1x16xf32> to vector<1x17x16xf32>
    %258 = arith.addf %253, %257 : vector<1x17x16xf32>
    %c8 = arith.constant 8 : index
    %c0_130 = arith.constant 0 : index
    %c0_131 = arith.constant 0 : index
    %259 = vector.load %arg9[%c8, %c0_130, %c0_131] : memref<12x32x16xbf16, #tpu.memory_space<vmem>>, vector<1x32x16xbf16>
    %260 = vector.shape_cast %259 : vector<1x32x16xbf16> to vector<32x16xbf16>
    %261 = arith.truncf %249 : vector<1x17x32xf32> to vector<1x17x32xbf16>
    %cst_132 = arith.constant dense<0.000000e+00> : vector<1x17x16xf32>
    %262 = tpu.matmul %261, %260, %cst_132 {dimension_numbers = #tpu.dot_dimension_numbers<[2], [0], [0, 1], [1], [0, 0, 0, 1, 1, 1], [], []>} : vector<1x17x32xbf16>, vector<32x16xbf16>, vector<1x17x16xf32> -> vector<1x17x16xf32>
    %c8_133 = arith.constant 8 : index
    %c0_134 = arith.constant 0 : index
    %c0_135 = arith.constant 0 : index
    %263 = vector.load %arg10[%c8_133, %c0_134, %c0_135] : memref<12x1x16xf32, #tpu.memory_space<vmem>>, vector<1x1x16xf32>
    %264 = vector.shape_cast %263 : vector<1x1x16xf32> to vector<1x16xf32>
    %265 = vector.shape_cast %264 : vector<1x16xf32> to vector<1x1x16xf32>
    %266 = vector.broadcast %265 : vector<1x1x16xf32> to vector<1x17x16xf32>
    %267 = arith.addf %262, %266 : vector<1x17x16xf32>
    %c10 = arith.constant 10 : index
    %c0_136 = arith.constant 0 : index
    %c0_137 = arith.constant 0 : index
    %268 = vector.load %arg9[%c10, %c0_136, %c0_137] : memref<12x32x16xbf16, #tpu.memory_space<vmem>>, vector<1x32x16xbf16>
    %269 = vector.shape_cast %268 : vector<1x32x16xbf16> to vector<32x16xbf16>
    %270 = arith.truncf %249 : vector<1x17x32xf32> to vector<1x17x32xbf16>
    %cst_138 = arith.constant dense<0.000000e+00> : vector<1x17x16xf32>
    %271 = tpu.matmul %270, %269, %cst_138 {dimension_numbers = #tpu.dot_dimension_numbers<[2], [0], [0, 1], [1], [0, 0, 0, 1, 1, 1], [], []>} : vector<1x17x32xbf16>, vector<32x16xbf16>, vector<1x17x16xf32> -> vector<1x17x16xf32>
    %c10_139 = arith.constant 10 : index
    %c0_140 = arith.constant 0 : index
    %c0_141 = arith.constant 0 : index
    %272 = vector.load %arg10[%c10_139, %c0_140, %c0_141] : memref<12x1x16xf32, #tpu.memory_space<vmem>>, vector<1x1x16xf32>
    %273 = vector.shape_cast %272 : vector<1x1x16xf32> to vector<1x16xf32>
    %274 = vector.shape_cast %273 : vector<1x16xf32> to vector<1x1x16xf32>
    %275 = vector.broadcast %274 : vector<1x1x16xf32> to vector<1x17x16xf32>
    %276 = arith.addf %271, %275 : vector<1x17x16xf32>
    %277 = arith.truncf %258 : vector<1x17x16xf32> to vector<1x17x16xbf16>
    %278 = arith.truncf %267 : vector<1x17x16xf32> to vector<1x17x16xbf16>
    %cst_142 = arith.constant dense<0.000000e+00> : vector<1x17x17xf32>
    %279 = tpu.matmul %277, %278, %cst_142 {dimension_numbers = #tpu.dot_dimension_numbers<[2], [2], [1], [1], [0, 0, 0, 1, 1, 1], [0], [0]>} : vector<1x17x16xbf16>, vector<1x17x16xbf16>, vector<1x17x17xf32> -> vector<1x17x17xf32>
    %cst_143 = arith.constant 2.500000e-01 : f32
    %280 = vector.broadcast %cst_143 : f32 to vector<1x17x17xf32>
    %281 = arith.mulf %279, %280 : vector<1x17x17xf32>
    %cst_144 = arith.constant dense<0xFF800000> : vector<1x17xf32>
    %282 = vector.multi_reduction <maximumf>, %281, %cst_144 [2] : vector<1x17x17xf32> to vector<1x17xf32>
    %283 = vector.shape_cast %282 : vector<1x17xf32> to vector<1x17x1xf32>
    %284 = vector.broadcast %283 : vector<1x17x1xf32> to vector<1x17x17xf32>
    %285 = arith.subf %281, %284 : vector<1x17x17xf32>
    %286 = math.exp %285 : vector<1x17x17xf32>
    %cst_145 = arith.constant dense<0.000000e+00> : vector<1x17xf32>
    %287 = vector.multi_reduction <add>, %286, %cst_145 [2] : vector<1x17x17xf32> to vector<1x17xf32>
    %288 = vector.shape_cast %287 : vector<1x17xf32> to vector<1x17x1xf32>
    %289 = tpu.reciprocal %288 {approx = true} : vector<1x17x1xf32> -> vector<1x17x1xf32>
    %290 = vector.broadcast %289 : vector<1x17x1xf32> to vector<1x17x17xf32>
    %291 = arith.mulf %286, %290 : vector<1x17x17xf32>
    %292 = arith.truncf %291 : vector<1x17x17xf32> to vector<1x17x17xbf16>
    %293 = arith.truncf %276 : vector<1x17x16xf32> to vector<1x17x16xbf16>
    %cst_146 = arith.constant dense<0.000000e+00> : vector<1x17x16xf32>
    %294 = tpu.matmul %292, %293, %cst_146 {dimension_numbers = #tpu.dot_dimension_numbers<[2], [1], [1], [2], [0, 0, 0, 1, 1, 2], [0], [0]>} : vector<1x17x17xbf16>, vector<1x17x16xbf16>, vector<1x17x16xf32> -> vector<1x17x16xf32>
    %c2_147 = arith.constant 2 : index
    %c0_148 = arith.constant 0 : index
    %c0_149 = arith.constant 0 : index
    %295 = vector.load %arg11[%c2_147, %c0_148, %c0_149] : memref<4x16x32xbf16, #tpu.memory_space<vmem>>, vector<1x16x32xbf16>
    %296 = vector.shape_cast %295 : vector<1x16x32xbf16> to vector<16x32xbf16>
    %297 = arith.truncf %294 : vector<1x17x16xf32> to vector<1x17x16xbf16>
    %cst_150 = arith.constant dense<0.000000e+00> : vector<1x17x32xf32>
    %298 = tpu.matmul %297, %296, %cst_150 {dimension_numbers = #tpu.dot_dimension_numbers<[2], [0], [0, 1], [1], [0, 0, 0, 1, 1, 1], [], []>} : vector<1x17x16xbf16>, vector<16x32xbf16>, vector<1x17x32xf32> -> vector<1x17x32xf32>
    %299 = arith.addf %221, %298 : vector<1x17x32xf32>
    %c7 = arith.constant 7 : index
    %c0_151 = arith.constant 0 : index
    %c0_152 = arith.constant 0 : index
    %300 = vector.load %arg9[%c7, %c0_151, %c0_152] : memref<12x32x16xbf16, #tpu.memory_space<vmem>>, vector<1x32x16xbf16>
    %301 = vector.shape_cast %300 : vector<1x32x16xbf16> to vector<32x16xbf16>
    %302 = arith.truncf %249 : vector<1x17x32xf32> to vector<1x17x32xbf16>
    %cst_153 = arith.constant dense<0.000000e+00> : vector<1x17x16xf32>
    %303 = tpu.matmul %302, %301, %cst_153 {dimension_numbers = #tpu.dot_dimension_numbers<[2], [0], [0, 1], [1], [0, 0, 0, 1, 1, 1], [], []>} : vector<1x17x32xbf16>, vector<32x16xbf16>, vector<1x17x16xf32> -> vector<1x17x16xf32>
    %c7_154 = arith.constant 7 : index
    %c0_155 = arith.constant 0 : index
    %c0_156 = arith.constant 0 : index
    %304 = vector.load %arg10[%c7_154, %c0_155, %c0_156] : memref<12x1x16xf32, #tpu.memory_space<vmem>>, vector<1x1x16xf32>
    %305 = vector.shape_cast %304 : vector<1x1x16xf32> to vector<1x16xf32>
    %306 = vector.shape_cast %305 : vector<1x16xf32> to vector<1x1x16xf32>
    %307 = vector.broadcast %306 : vector<1x1x16xf32> to vector<1x17x16xf32>
    %308 = arith.addf %303, %307 : vector<1x17x16xf32>
    %c9 = arith.constant 9 : index
    %c0_157 = arith.constant 0 : index
    %c0_158 = arith.constant 0 : index
    %309 = vector.load %arg9[%c9, %c0_157, %c0_158] : memref<12x32x16xbf16, #tpu.memory_space<vmem>>, vector<1x32x16xbf16>
    %310 = vector.shape_cast %309 : vector<1x32x16xbf16> to vector<32x16xbf16>
    %311 = arith.truncf %249 : vector<1x17x32xf32> to vector<1x17x32xbf16>
    %cst_159 = arith.constant dense<0.000000e+00> : vector<1x17x16xf32>
    %312 = tpu.matmul %311, %310, %cst_159 {dimension_numbers = #tpu.dot_dimension_numbers<[2], [0], [0, 1], [1], [0, 0, 0, 1, 1, 1], [], []>} : vector<1x17x32xbf16>, vector<32x16xbf16>, vector<1x17x16xf32> -> vector<1x17x16xf32>
    %c9_160 = arith.constant 9 : index
    %c0_161 = arith.constant 0 : index
    %c0_162 = arith.constant 0 : index
    %313 = vector.load %arg10[%c9_160, %c0_161, %c0_162] : memref<12x1x16xf32, #tpu.memory_space<vmem>>, vector<1x1x16xf32>
    %314 = vector.shape_cast %313 : vector<1x1x16xf32> to vector<1x16xf32>
    %315 = vector.shape_cast %314 : vector<1x16xf32> to vector<1x1x16xf32>
    %316 = vector.broadcast %315 : vector<1x1x16xf32> to vector<1x17x16xf32>
    %317 = arith.addf %312, %316 : vector<1x17x16xf32>
    %c11 = arith.constant 11 : index
    %c0_163 = arith.constant 0 : index
    %c0_164 = arith.constant 0 : index
    %318 = vector.load %arg9[%c11, %c0_163, %c0_164] : memref<12x32x16xbf16, #tpu.memory_space<vmem>>, vector<1x32x16xbf16>
    %319 = vector.shape_cast %318 : vector<1x32x16xbf16> to vector<32x16xbf16>
    %320 = arith.truncf %249 : vector<1x17x32xf32> to vector<1x17x32xbf16>
    %cst_165 = arith.constant dense<0.000000e+00> : vector<1x17x16xf32>
    %321 = tpu.matmul %320, %319, %cst_165 {dimension_numbers = #tpu.dot_dimension_numbers<[2], [0], [0, 1], [1], [0, 0, 0, 1, 1, 1], [], []>} : vector<1x17x32xbf16>, vector<32x16xbf16>, vector<1x17x16xf32> -> vector<1x17x16xf32>
    %c11_166 = arith.constant 11 : index
    %c0_167 = arith.constant 0 : index
    %c0_168 = arith.constant 0 : index
    %322 = vector.load %arg10[%c11_166, %c0_167, %c0_168] : memref<12x1x16xf32, #tpu.memory_space<vmem>>, vector<1x1x16xf32>
    %323 = vector.shape_cast %322 : vector<1x1x16xf32> to vector<1x16xf32>
    %324 = vector.shape_cast %323 : vector<1x16xf32> to vector<1x1x16xf32>
    %325 = vector.broadcast %324 : vector<1x1x16xf32> to vector<1x17x16xf32>
    %326 = arith.addf %321, %325 : vector<1x17x16xf32>
    %327 = arith.truncf %308 : vector<1x17x16xf32> to vector<1x17x16xbf16>
    %328 = arith.truncf %317 : vector<1x17x16xf32> to vector<1x17x16xbf16>
    %cst_169 = arith.constant dense<0.000000e+00> : vector<1x17x17xf32>
    %329 = tpu.matmul %327, %328, %cst_169 {dimension_numbers = #tpu.dot_dimension_numbers<[2], [2], [1], [1], [0, 0, 0, 1, 1, 1], [0], [0]>} : vector<1x17x16xbf16>, vector<1x17x16xbf16>, vector<1x17x17xf32> -> vector<1x17x17xf32>
    %cst_170 = arith.constant 2.500000e-01 : f32
    %330 = vector.broadcast %cst_170 : f32 to vector<1x17x17xf32>
    %331 = arith.mulf %329, %330 : vector<1x17x17xf32>
    %cst_171 = arith.constant dense<0xFF800000> : vector<1x17xf32>
    %332 = vector.multi_reduction <maximumf>, %331, %cst_171 [2] : vector<1x17x17xf32> to vector<1x17xf32>
    %333 = vector.shape_cast %332 : vector<1x17xf32> to vector<1x17x1xf32>
    %334 = vector.broadcast %333 : vector<1x17x1xf32> to vector<1x17x17xf32>
    %335 = arith.subf %331, %334 : vector<1x17x17xf32>
    %336 = math.exp %335 : vector<1x17x17xf32>
    %cst_172 = arith.constant dense<0.000000e+00> : vector<1x17xf32>
    %337 = vector.multi_reduction <add>, %336, %cst_172 [2] : vector<1x17x17xf32> to vector<1x17xf32>
    %338 = vector.shape_cast %337 : vector<1x17xf32> to vector<1x17x1xf32>
    %339 = tpu.reciprocal %338 {approx = true} : vector<1x17x1xf32> -> vector<1x17x1xf32>
    %340 = vector.broadcast %339 : vector<1x17x1xf32> to vector<1x17x17xf32>
    %341 = arith.mulf %336, %340 : vector<1x17x17xf32>
    %342 = arith.truncf %341 : vector<1x17x17xf32> to vector<1x17x17xbf16>
    %343 = arith.truncf %326 : vector<1x17x16xf32> to vector<1x17x16xbf16>
    %cst_173 = arith.constant dense<0.000000e+00> : vector<1x17x16xf32>
    %344 = tpu.matmul %342, %343, %cst_173 {dimension_numbers = #tpu.dot_dimension_numbers<[2], [1], [1], [2], [0, 0, 0, 1, 1, 2], [0], [0]>} : vector<1x17x17xbf16>, vector<1x17x16xbf16>, vector<1x17x16xf32> -> vector<1x17x16xf32>
    %c3_174 = arith.constant 3 : index
    %c0_175 = arith.constant 0 : index
    %c0_176 = arith.constant 0 : index
    %345 = vector.load %arg11[%c3_174, %c0_175, %c0_176] : memref<4x16x32xbf16, #tpu.memory_space<vmem>>, vector<1x16x32xbf16>
    %346 = vector.shape_cast %345 : vector<1x16x32xbf16> to vector<16x32xbf16>
    %347 = arith.truncf %344 : vector<1x17x16xf32> to vector<1x17x16xbf16>
    %cst_177 = arith.constant dense<0.000000e+00> : vector<1x17x32xf32>
    %348 = tpu.matmul %347, %346, %cst_177 {dimension_numbers = #tpu.dot_dimension_numbers<[2], [0], [0, 1], [1], [0, 0, 0, 1, 1, 1], [], []>} : vector<1x17x16xbf16>, vector<16x32xbf16>, vector<1x17x32xf32> -> vector<1x17x32xf32>
    %349 = arith.addf %299, %348 : vector<1x17x32xf32>
    %c1_178 = arith.constant 1 : index
    %c0_179 = arith.constant 0 : index
    %c0_180 = arith.constant 0 : index
    %350 = vector.load %arg12[%c1_178, %c0_179, %c0_180] : memref<2x1x32xf32, #tpu.memory_space<vmem>>, vector<1x1x32xf32>
    %351 = vector.shape_cast %350 : vector<1x1x32xf32> to vector<1x32xf32>
    %352 = vector.shape_cast %351 : vector<1x32xf32> to vector<1x1x32xf32>
    %353 = vector.broadcast %352 : vector<1x1x32xf32> to vector<1x17x32xf32>
    %354 = arith.addf %349, %353 : vector<1x17x32xf32>
    %c1_181 = arith.constant 1 : index
    %c0_182 = arith.constant 0 : index
    %c0_183 = arith.constant 0 : index
    %355 = vector.load %arg13[%c1_181, %c0_182, %c0_183] : memref<2x1x32xf32, #tpu.memory_space<vmem>>, vector<1x1x32xf32>
    %356 = vector.shape_cast %355 : vector<1x1x32xf32> to vector<1x32xf32>
    %c1_184 = arith.constant 1 : index
    %c0_185 = arith.constant 0 : index
    %c0_186 = arith.constant 0 : index
    %357 = vector.load %arg14[%c1_184, %c0_185, %c0_186] : memref<2x1x32xf32, #tpu.memory_space<vmem>>, vector<1x1x32xf32>
    %358 = vector.shape_cast %357 : vector<1x1x32xf32> to vector<1x32xf32>
    %cst_187 = arith.constant dense<0.000000e+00> : vector<1x17xf32>
    %359 = vector.multi_reduction <add>, %354, %cst_187 [2] : vector<1x17x32xf32> to vector<1x17xf32>
    %360 = vector.shape_cast %359 : vector<1x17xf32> to vector<1x17x1xf32>
    %cst_188 = arith.constant 3.200000e+01 : f32
    %361 = vector.broadcast %cst_188 : f32 to vector<1x17x1xf32>
    %362 = arith.divf %360, %361 : vector<1x17x1xf32>
    %363 = vector.broadcast %362 : vector<1x17x1xf32> to vector<1x17x32xf32>
    %364 = arith.subf %354, %363 : vector<1x17x32xf32>
    %365 = arith.mulf %364, %364 : vector<1x17x32xf32>
    %cst_189 = arith.constant dense<0.000000e+00> : vector<1x17xf32>
    %366 = vector.multi_reduction <add>, %365, %cst_189 [2] : vector<1x17x32xf32> to vector<1x17xf32>
    %367 = vector.shape_cast %366 : vector<1x17xf32> to vector<1x17x1xf32>
    %cst_190 = arith.constant 3.200000e+01 : f32
    %368 = vector.broadcast %cst_190 : f32 to vector<1x17x1xf32>
    %369 = arith.divf %367, %368 : vector<1x17x1xf32>
    %370 = vector.broadcast %362 : vector<1x17x1xf32> to vector<1x17x32xf32>
    %371 = arith.subf %354, %370 : vector<1x17x32xf32>
    %cst_191 = arith.constant 9.99999974E-6 : f32
    %372 = vector.broadcast %cst_191 : f32 to vector<1x17x1xf32>
    %373 = arith.addf %369, %372 : vector<1x17x1xf32>
    %374 = math.rsqrt %373 : vector<1x17x1xf32>
    %375 = vector.broadcast %374 : vector<1x17x1xf32> to vector<1x17x32xf32>
    %376 = arith.mulf %371, %375 : vector<1x17x32xf32>
    %377 = vector.shape_cast %356 : vector<1x32xf32> to vector<1x1x32xf32>
    %378 = vector.broadcast %377 : vector<1x1x32xf32> to vector<1x17x32xf32>
    %379 = arith.mulf %376, %378 : vector<1x17x32xf32>
    %380 = vector.shape_cast %358 : vector<1x32xf32> to vector<1x1x32xf32>
    %381 = vector.broadcast %380 : vector<1x1x32xf32> to vector<1x17x32xf32>
    %382 = arith.addf %379, %381 : vector<1x17x32xf32>
    %c1_192 = arith.constant 1 : index
    %c0_193 = arith.constant 0 : index
    %c0_194 = arith.constant 0 : index
    %383 = vector.load %arg15[%c1_192, %c0_193, %c0_194] : memref<2x32x128xbf16, #tpu.memory_space<vmem>>, vector<1x32x128xbf16>
    %384 = vector.shape_cast %383 : vector<1x32x128xbf16> to vector<32x128xbf16>
    %385 = arith.truncf %382 : vector<1x17x32xf32> to vector<1x17x32xbf16>
    %cst_195 = arith.constant dense<0.000000e+00> : vector<1x17x128xf32>
    %386 = tpu.matmul %385, %384, %cst_195 {dimension_numbers = #tpu.dot_dimension_numbers<[2], [0], [0, 1], [1], [0, 0, 0, 1, 1, 1], [], []>} : vector<1x17x32xbf16>, vector<32x128xbf16>, vector<1x17x128xf32> -> vector<1x17x128xf32>
    %c1_196 = arith.constant 1 : index
    %c0_197 = arith.constant 0 : index
    %c0_198 = arith.constant 0 : index
    %387 = vector.load %arg16[%c1_196, %c0_197, %c0_198] : memref<2x1x128xf32, #tpu.memory_space<vmem>>, vector<1x1x128xf32>
    %388 = vector.shape_cast %387 : vector<1x1x128xf32> to vector<1x128xf32>
    %389 = vector.shape_cast %388 : vector<1x128xf32> to vector<1x1x128xf32>
    %390 = vector.broadcast %389 : vector<1x1x128xf32> to vector<1x17x128xf32>
    %391 = arith.addf %386, %390 : vector<1x17x128xf32>
    %cst_199 = arith.constant 1.702000e+00 : f32
    %392 = vector.broadcast %cst_199 : f32 to vector<1x17x128xf32>
    %393 = arith.mulf %392, %391 : vector<1x17x128xf32>
    %394 = arith.negf %393 : vector<1x17x128xf32>
    %395 = math.exp %394 : vector<1x17x128xf32>
    %cst_200 = arith.constant 1.000000e+00 : f32
    %396 = vector.broadcast %cst_200 : f32 to vector<1x17x128xf32>
    %397 = arith.addf %396, %395 : vector<1x17x128xf32>
    %398 = arith.divf %396, %397 : vector<1x17x128xf32>
    %399 = arith.mulf %391, %398 : vector<1x17x128xf32>
    %c1_201 = arith.constant 1 : index
    %c0_202 = arith.constant 0 : index
    %c0_203 = arith.constant 0 : index
    %400 = vector.load %arg17[%c1_201, %c0_202, %c0_203] : memref<2x128x32xbf16, #tpu.memory_space<vmem>>, vector<1x128x32xbf16>
    %401 = vector.shape_cast %400 : vector<1x128x32xbf16> to vector<128x32xbf16>
    %402 = arith.truncf %399 : vector<1x17x128xf32> to vector<1x17x128xbf16>
    %cst_204 = arith.constant dense<0.000000e+00> : vector<1x17x32xf32>
    %403 = tpu.matmul %402, %401, %cst_204 {dimension_numbers = #tpu.dot_dimension_numbers<[2], [0], [0, 1], [1], [0, 0, 0, 1, 1, 1], [], []>} : vector<1x17x128xbf16>, vector<128x32xbf16>, vector<1x17x32xf32> -> vector<1x17x32xf32>
    %404 = arith.addf %354, %403 : vector<1x17x32xf32>
    %c1_205 = arith.constant 1 : index
    %c0_206 = arith.constant 0 : index
    %c0_207 = arith.constant 0 : index
    %405 = vector.load %arg18[%c1_205, %c0_206, %c0_207] : memref<2x1x32xf32, #tpu.memory_space<vmem>>, vector<1x1x32xf32>
    %406 = vector.shape_cast %405 : vector<1x1x32xf32> to vector<1x32xf32>
    %407 = vector.shape_cast %406 : vector<1x32xf32> to vector<1x1x32xf32>
    %408 = vector.broadcast %407 : vector<1x1x32xf32> to vector<1x17x32xf32>
    %409 = arith.addf %404, %408 : vector<1x17x32xf32>
    %410 = vector.extract_strided_slice %409 {offsets = [0, 0, 0], sizes = [1, 1, 32], strides = [1, 1, 1]} : vector<1x17x32xf32> to vector<1x1x32xf32>
    %411 = vector.shape_cast %410 : vector<1x1x32xf32> to vector<1x32xf32>
    %c0_208 = arith.constant 0 : index
    %c0_209 = arith.constant 0 : index
    %412 = vector.load %arg19[%c0_208, %c0_209] : memref<1x32xf32, #tpu.memory_space<vmem>>, vector<1x32xf32>
    %c0_210 = arith.constant 0 : index
    %c0_211 = arith.constant 0 : index
    %413 = vector.load %arg20[%c0_210, %c0_211] : memref<1x32xf32, #tpu.memory_space<vmem>>, vector<1x32xf32>
    %cst_212 = arith.constant dense<0.000000e+00> : vector<1xf32>
    %414 = vector.multi_reduction <add>, %411, %cst_212 [1] : vector<1x32xf32> to vector<1xf32>
    %415 = vector.shape_cast %414 : vector<1xf32> to vector<1x1xf32>
    %cst_213 = arith.constant 3.200000e+01 : f32
    %416 = vector.broadcast %cst_213 : f32 to vector<1x1xf32>
    %417 = arith.divf %415, %416 : vector<1x1xf32>
    %418 = vector.broadcast %417 : vector<1x1xf32> to vector<1x32xf32>
    %419 = arith.subf %411, %418 : vector<1x32xf32>
    %420 = arith.mulf %419, %419 : vector<1x32xf32>
    %cst_214 = arith.constant dense<0.000000e+00> : vector<1xf32>
    %421 = vector.multi_reduction <add>, %420, %cst_214 [1] : vector<1x32xf32> to vector<1xf32>
    %422 = vector.shape_cast %421 : vector<1xf32> to vector<1x1xf32>
    %cst_215 = arith.constant 3.200000e+01 : f32
    %423 = vector.broadcast %cst_215 : f32 to vector<1x1xf32>
    %424 = arith.divf %422, %423 : vector<1x1xf32>
    %425 = vector.broadcast %417 : vector<1x1xf32> to vector<1x32xf32>
    %426 = arith.subf %411, %425 : vector<1x32xf32>
    %cst_216 = arith.constant 9.99999974E-6 : f32
    %427 = vector.broadcast %cst_216 : f32 to vector<1x1xf32>
    %428 = arith.addf %424, %427 : vector<1x1xf32>
    %429 = math.rsqrt %428 : vector<1x1xf32>
    %430 = vector.broadcast %429 : vector<1x1xf32> to vector<1x32xf32>
    %431 = arith.mulf %426, %430 : vector<1x32xf32>
    %432 = arith.mulf %431, %412 : vector<1x32xf32>
    %433 = arith.addf %432, %413 : vector<1x32xf32>
    %c0_217 = arith.constant 0 : index
    %c0_218 = arith.constant 0 : index
    %434 = vector.load %arg21[%c0_217, %c0_218] : memref<32x32xbf16, #tpu.memory_space<vmem>>, vector<32x32xbf16>
    %435 = arith.truncf %433 : vector<1x32xf32> to vector<1x32xbf16>
    %cst_219 = arith.constant dense<0.000000e+00> : vector<1x32xf32>
    %436 = tpu.matmul %435, %434, %cst_219 {dimension_numbers = #tpu.dot_dimension_numbers<[1], [0], [0], [1], [0, 0, 1, 1], [], []>} : vector<1x32xbf16>, vector<32x32xbf16>, vector<1x32xf32> -> vector<1x32xf32>
    %437 = vector.shape_cast %436 : vector<1x32xf32> to vector<1x1x32xf32>
    %c0_220 = arith.constant 0 : index
    %c0_221 = arith.constant 0 : index
    %c0_222 = arith.constant 0 : index
    %438 = vector.load %arg22[%c0_220, %c0_221, %c0_222] : memref<1x1x32xf32, #tpu.memory_space<vmem>>, vector<1x1x32xf32>
    tpu.vector_store %arg22[%c0_220, %c0_221, %c0_222], %437 {strides = array<i32>} : memref<1x1x32xf32, #tpu.memory_space<vmem>>, vector<1x1x32xf32>,
    return
  }
  func.func @transform_0(%arg0: i32) -> (i32, i32, i32) {
    %c0_i32 = arith.constant 0 : i32
    %c0_i32_0 = arith.constant 0 : i32
    %c0_i32_1 = arith.constant 0 : i32
    return %arg0, %c0_i32, %c0_i32_0 : i32, i32, i32
  }
  func.func @transform_1(%arg0: i32) -> (i32, i32) {
    %c0_i32 = arith.constant 0 : i32
    %c0_i32_0 = arith.constant 0 : i32
    %c0_i32_1 = arith.constant 0 : i32
    return %c0_i32, %c0_i32_0 : i32, i32
  }
  func.func @transform_2(%arg0: i32) -> (i32, i32) {
    %c0_i32 = arith.constant 0 : i32
    %c0_i32_0 = arith.constant 0 : i32
    %c0_i32_1 = arith.constant 0 : i32
    return %c0_i32, %c0_i32_0 : i32, i32
  }
  func.func @transform_3(%arg0: i32) -> (i32, i32) {
    %c0_i32 = arith.constant 0 : i32
    %c0_i32_0 = arith.constant 0 : i32
    %c0_i32_1 = arith.constant 0 : i32
    return %c0_i32, %c0_i32_0 : i32, i32
  }
  func.func @transform_4(%arg0: i32) -> (i32, i32) {
    %c0_i32 = arith.constant 0 : i32
    %c0_i32_0 = arith.constant 0 : i32
    %c0_i32_1 = arith.constant 0 : i32
    return %c0_i32, %c0_i32_0 : i32, i32
  }
  func.func @transform_5(%arg0: i32) -> (i32, i32) {
    %c0_i32 = arith.constant 0 : i32
    %c0_i32_0 = arith.constant 0 : i32
    %c0_i32_1 = arith.constant 0 : i32
    return %c0_i32, %c0_i32_0 : i32, i32
  }
  func.func @transform_6(%arg0: i32) -> (i32, i32, i32) {
    %c0_i32 = arith.constant 0 : i32
    %c0_i32_0 = arith.constant 0 : i32
    %c0_i32_1 = arith.constant 0 : i32
    %c0_i32_2 = arith.constant 0 : i32
    return %c0_i32, %c0_i32_0, %c0_i32_1 : i32, i32, i32
  }
  func.func @transform_7(%arg0: i32) -> (i32, i32, i32) {
    %c0_i32 = arith.constant 0 : i32
    %c0_i32_0 = arith.constant 0 : i32
    %c0_i32_1 = arith.constant 0 : i32
    %c0_i32_2 = arith.constant 0 : i32
    return %c0_i32, %c0_i32_0, %c0_i32_1 : i32, i32, i32
  }
  func.func @transform_8(%arg0: i32) -> (i32, i32, i32) {
    %c0_i32 = arith.constant 0 : i32
    %c0_i32_0 = arith.constant 0 : i32
    %c0_i32_1 = arith.constant 0 : i32
    %c0_i32_2 = arith.constant 0 : i32
    return %c0_i32, %c0_i32_0, %c0_i32_1 : i32, i32, i32
  }
  func.func @transform_9(%arg0: i32) -> (i32, i32, i32) {
    %c0_i32 = arith.constant 0 : i32
    %c0_i32_0 = arith.constant 0 : i32
    %c0_i32_1 = arith.constant 0 : i32
    %c0_i32_2 = arith.constant 0 : i32
    return %c0_i32, %c0_i32_0, %c0_i32_1 : i32, i32, i32
  }
  func.func @transform_10(%arg0: i32) -> (i32, i32, i32) {
    %c0_i32 = arith.constant 0 : i32
    %c0_i32_0 = arith.constant 0 : i32
    %c0_i32_1 = arith.constant 0 : i32
    %c0_i32_2 = arith.constant 0 : i32
    return %c0_i32, %c0_i32_0, %c0_i32_1 : i32, i32, i32
  }
  func.func @transform_11(%arg0: i32) -> (i32, i32, i32) {
    %c0_i32 = arith.constant 0 : i32
    %c0_i32_0 = arith.constant 0 : i32
    %c0_i32_1 = arith.constant 0 : i32
    %c0_i32_2 = arith.constant 0 : i32
    return %c0_i32, %c0_i32_0, %c0_i32_1 : i32, i32, i32
  }
  func.func @transform_12(%arg0: i32) -> (i32, i32, i32) {
    %c0_i32 = arith.constant 0 : i32
    %c0_i32_0 = arith.constant 0 : i32
    %c0_i32_1 = arith.constant 0 : i32
    %c0_i32_2 = arith.constant 0 : i32
    return %c0_i32, %c0_i32_0, %c0_i32_1 : i32, i32, i32
  }
  func.func @transform_13(%arg0: i32) -> (i32, i32, i32) {
    %c0_i32 = arith.constant 0 : i32
    %c0_i32_0 = arith.constant 0 : i32
    %c0_i32_1 = arith.constant 0 : i32
    %c0_i32_2 = arith.constant 0 : i32
    return %c0_i32, %c0_i32_0, %c0_i32_1 : i32, i32, i32
  }
  func.func @transform_14(%arg0: i32) -> (i32, i32, i32) {
    %c0_i32 = arith.constant 0 : i32
    %c0_i32_0 = arith.constant 0 : i32
    %c0_i32_1 = arith.constant 0 : i32
    %c0_i32_2 = arith.constant 0 : i32
    return %c0_i32, %c0_i32_0, %c0_i32_1 : i32, i32, i32
  }
  func.func @transform_15(%arg0: i32) -> (i32, i32, i32) {
    %c0_i32 = arith.constant 0 : i32
    %c0_i32_0 = arith.constant 0 : i32
    %c0_i32_1 = arith.constant 0 : i32
    %c0_i32_2 = arith.constant 0 : i32
    return %c0_i32, %c0_i32_0, %c0_i32_1 : i32, i32, i32
  }
  func.func @transform_16(%arg0: i32) -> (i32, i32, i32) {
    %c0_i32 = arith.constant 0 : i32
    %c0_i32_0 = arith.constant 0 : i32
    %c0_i32_1 = arith.constant 0 : i32
    %c0_i32_2 = arith.constant 0 : i32
    return %c0_i32, %c0_i32_0, %c0_i32_1 : i32, i32, i32
  }
  func.func @transform_17(%arg0: i32) -> (i32, i32, i32) {
    %c0_i32 = arith.constant 0 : i32
    %c0_i32_0 = arith.constant 0 : i32
    %c0_i32_1 = arith.constant 0 : i32
    %c0_i32_2 = arith.constant 0 : i32
    return %c0_i32, %c0_i32_0, %c0_i32_1 : i32, i32, i32
  }
  func.func @transform_18(%arg0: i32) -> (i32, i32) {
    %c0_i32 = arith.constant 0 : i32
    %c0_i32_0 = arith.constant 0 : i32
    %c0_i32_1 = arith.constant 0 : i32
    return %c0_i32, %c0_i32_0 : i32, i32
  }
  func.func @transform_19(%arg0: i32) -> (i32, i32) {
    %c0_i32 = arith.constant 0 : i32
    %c0_i32_0 = arith.constant 0 : i32
    %c0_i32_1 = arith.constant 0 : i32
    return %c0_i32, %c0_i32_0 : i32, i32
  }
  func.func @transform_20(%arg0: i32) -> (i32, i32) {
    %c0_i32 = arith.constant 0 : i32
    %c0_i32_0 = arith.constant 0 : i32
    %c0_i32_1 = arith.constant 0 : i32
    return %c0_i32, %c0_i32_0 : i32, i32
  }
  func.func @transform_21(%arg0: i32) -> (i32, i32, i32) {
    %c0_i32 = arith.constant 0 : i32
    %c0_i32_0 = arith.constant 0 : i32
    %c0_i32_1 = arith.constant 0 : i32
    return %arg0, %c0_i32, %c0_i32_0 : i32, i32, i32
  }
}

module attributes {stable_mosaic.version = 11 : i64} {
  func.func @_text_encoder_kernel(%arg0: memref<3x8x32xf32, #tpu.memory_space<vmem>>, %arg1: memref<2x32xf32, #tpu.memory_space<vmem>>, %arg2: memref<1x1xf32, #tpu.memory_space<vmem>>, %arg3: memref<2x1x32xf32, #tpu.memory_space<vmem>>, %arg4: memref<2x1x32xf32, #tpu.memory_space<vmem>>, %arg5: memref<12x32x16xbf16, #tpu.memory_space<vmem>>, %arg6: memref<12x1x16xf32, #tpu.memory_space<vmem>>, %arg7: memref<4x16x32xbf16, #tpu.memory_space<vmem>>, %arg8: memref<2x1x32xf32, #tpu.memory_space<vmem>>, %arg9: memref<2x1x32xf32, #tpu.memory_space<vmem>>, %arg10: memref<2x1x32xf32, #tpu.memory_space<vmem>>, %arg11: memref<2x32x128xbf16, #tpu.memory_space<vmem>>, %arg12: memref<2x1x128xf32, #tpu.memory_space<vmem>>, %arg13: memref<2x128x32xbf16, #tpu.memory_space<vmem>>, %arg14: memref<2x1x32xf32, #tpu.memory_space<vmem>>, %arg15: memref<1x32xf32, #tpu.memory_space<vmem>>, %arg16: memref<1x32xf32, #tpu.memory_space<vmem>>, %arg17: memref<32x32xbf16, #tpu.memory_space<vmem>>, %arg18: memref<3x24xf32, #tpu.memory_space<vmem>>, %arg19: memref<2x3xf32, #tpu.memory_space<vmem>>) attributes {dimension_semantics = [], scalar_prefetch = 0 : i64, scratch_operands = 0 : i64, tpu.core_type = #tpu.core_type<tc>} {
    %c0 = arith.constant 0 : index
    %c0_0 = arith.constant 0 : index
    %c0_1 = arith.constant 0 : index
    %0 = vector.load %arg0[%c0, %c0_0, %c0_1] : memref<3x8x32xf32, #tpu.memory_space<vmem>>, vector<3x8x32xf32>
    %1 = tpu.iota {dimensions = array<i32: 0>} : vector<8x8xi32>
    %2 = tpu.iota {dimensions = array<i32: 1>} : vector<8x8xi32>
    %3 = arith.cmpi sgt, %2, %1 : vector<8x8xi32>
    %cst = arith.constant -1.000000e+09 : f32
    %cst_2 = arith.constant 0.000000e+00 : f32
    %4 = vector.broadcast %cst : f32 to vector<8x8xf32>
    %5 = vector.broadcast %cst_2 : f32 to vector<8x8xf32>
    %6 = arith.select %3, %4, %5 : vector<8x8xi1>, vector<8x8xf32>
    %c0_3 = arith.constant 0 : index
    %c0_4 = arith.constant 0 : index
    %c0_5 = arith.constant 0 : index
    %7 = vector.load %arg3[%c0_3, %c0_4, %c0_5] : memref<2x1x32xf32, #tpu.memory_space<vmem>>, vector<1x1x32xf32>
    %8 = vector.shape_cast %7 : vector<1x1x32xf32> to vector<1x32xf32>
    %c0_6 = arith.constant 0 : index
    %c0_7 = arith.constant 0 : index
    %c0_8 = arith.constant 0 : index
    %9 = vector.load %arg4[%c0_6, %c0_7, %c0_8] : memref<2x1x32xf32, #tpu.memory_space<vmem>>, vector<1x1x32xf32>
    %10 = vector.shape_cast %9 : vector<1x1x32xf32> to vector<1x32xf32>
    %cst_9 = arith.constant dense<0.000000e+00> : vector<3x8xf32>
    %11 = vector.multi_reduction <add>, %0, %cst_9 [2] : vector<3x8x32xf32> to vector<3x8xf32>
    %12 = vector.shape_cast %11 : vector<3x8xf32> to vector<3x8x1xf32>
    %cst_10 = arith.constant 3.200000e+01 : f32
    %13 = vector.broadcast %cst_10 : f32 to vector<3x8x1xf32>
    %14 = arith.divf %12, %13 : vector<3x8x1xf32>
    %15 = vector.broadcast %14 : vector<3x8x1xf32> to vector<3x8x32xf32>
    %16 = arith.subf %0, %15 : vector<3x8x32xf32>
    %17 = arith.mulf %16, %16 : vector<3x8x32xf32>
    %cst_11 = arith.constant dense<0.000000e+00> : vector<3x8xf32>
    %18 = vector.multi_reduction <add>, %17, %cst_11 [2] : vector<3x8x32xf32> to vector<3x8xf32>
    %19 = vector.shape_cast %18 : vector<3x8xf32> to vector<3x8x1xf32>
    %cst_12 = arith.constant 3.200000e+01 : f32
    %20 = vector.broadcast %cst_12 : f32 to vector<3x8x1xf32>
    %21 = arith.divf %19, %20 : vector<3x8x1xf32>
    %22 = vector.broadcast %14 : vector<3x8x1xf32> to vector<3x8x32xf32>
    %23 = arith.subf %0, %22 : vector<3x8x32xf32>
    %cst_13 = arith.constant 9.99999974E-6 : f32
    %24 = vector.broadcast %cst_13 : f32 to vector<3x8x1xf32>
    %25 = arith.addf %21, %24 : vector<3x8x1xf32>
    %26 = math.rsqrt %25 : vector<3x8x1xf32>
    %27 = vector.broadcast %26 : vector<3x8x1xf32> to vector<3x8x32xf32>
    %28 = arith.mulf %23, %27 : vector<3x8x32xf32>
    %29 = vector.shape_cast %8 : vector<1x32xf32> to vector<1x1x32xf32>
    %30 = vector.broadcast %29 : vector<1x1x32xf32> to vector<3x8x32xf32>
    %31 = arith.mulf %28, %30 : vector<3x8x32xf32>
    %32 = vector.shape_cast %10 : vector<1x32xf32> to vector<1x1x32xf32>
    %33 = vector.broadcast %32 : vector<1x1x32xf32> to vector<3x8x32xf32>
    %34 = arith.addf %31, %33 : vector<3x8x32xf32>
    %c0_14 = arith.constant 0 : index
    %c0_15 = arith.constant 0 : index
    %c0_16 = arith.constant 0 : index
    %35 = vector.load %arg5[%c0_14, %c0_15, %c0_16] : memref<12x32x16xbf16, #tpu.memory_space<vmem>>, vector<1x32x16xbf16>
    %36 = vector.shape_cast %35 : vector<1x32x16xbf16> to vector<32x16xbf16>
    %37 = arith.truncf %34 : vector<3x8x32xf32> to vector<3x8x32xbf16>
    %cst_17 = arith.constant dense<0.000000e+00> : vector<3x8x16xf32>
    %38 = tpu.matmul %37, %36, %cst_17 {dimension_numbers = #tpu.dot_dimension_numbers<[2], [0], [0, 1], [1], [0, 0, 0, 1, 1, 1], [], []>} : vector<3x8x32xbf16>, vector<32x16xbf16>, vector<3x8x16xf32> -> vector<3x8x16xf32>
    %c0_18 = arith.constant 0 : index
    %c0_19 = arith.constant 0 : index
    %c0_20 = arith.constant 0 : index
    %39 = vector.load %arg6[%c0_18, %c0_19, %c0_20] : memref<12x1x16xf32, #tpu.memory_space<vmem>>, vector<1x1x16xf32>
    %40 = vector.shape_cast %39 : vector<1x1x16xf32> to vector<1x16xf32>
    %41 = vector.shape_cast %40 : vector<1x16xf32> to vector<1x1x16xf32>
    %42 = vector.broadcast %41 : vector<1x1x16xf32> to vector<3x8x16xf32>
    %43 = arith.addf %38, %42 : vector<3x8x16xf32>
    %c2 = arith.constant 2 : index
    %c0_21 = arith.constant 0 : index
    %c0_22 = arith.constant 0 : index
    %44 = vector.load %arg5[%c2, %c0_21, %c0_22] : memref<12x32x16xbf16, #tpu.memory_space<vmem>>, vector<1x32x16xbf16>
    %45 = vector.shape_cast %44 : vector<1x32x16xbf16> to vector<32x16xbf16>
    %46 = arith.truncf %34 : vector<3x8x32xf32> to vector<3x8x32xbf16>
    %cst_23 = arith.constant dense<0.000000e+00> : vector<3x8x16xf32>
    %47 = tpu.matmul %46, %45, %cst_23 {dimension_numbers = #tpu.dot_dimension_numbers<[2], [0], [0, 1], [1], [0, 0, 0, 1, 1, 1], [], []>} : vector<3x8x32xbf16>, vector<32x16xbf16>, vector<3x8x16xf32> -> vector<3x8x16xf32>
    %c2_24 = arith.constant 2 : index
    %c0_25 = arith.constant 0 : index
    %c0_26 = arith.constant 0 : index
    %48 = vector.load %arg6[%c2_24, %c0_25, %c0_26] : memref<12x1x16xf32, #tpu.memory_space<vmem>>, vector<1x1x16xf32>
    %49 = vector.shape_cast %48 : vector<1x1x16xf32> to vector<1x16xf32>
    %50 = vector.shape_cast %49 : vector<1x16xf32> to vector<1x1x16xf32>
    %51 = vector.broadcast %50 : vector<1x1x16xf32> to vector<3x8x16xf32>
    %52 = arith.addf %47, %51 : vector<3x8x16xf32>
    %c4 = arith.constant 4 : index
    %c0_27 = arith.constant 0 : index
    %c0_28 = arith.constant 0 : index
    %53 = vector.load %arg5[%c4, %c0_27, %c0_28] : memref<12x32x16xbf16, #tpu.memory_space<vmem>>, vector<1x32x16xbf16>
    %54 = vector.shape_cast %53 : vector<1x32x16xbf16> to vector<32x16xbf16>
    %55 = arith.truncf %34 : vector<3x8x32xf32> to vector<3x8x32xbf16>
    %cst_29 = arith.constant dense<0.000000e+00> : vector<3x8x16xf32>
    %56 = tpu.matmul %55, %54, %cst_29 {dimension_numbers = #tpu.dot_dimension_numbers<[2], [0], [0, 1], [1], [0, 0, 0, 1, 1, 1], [], []>} : vector<3x8x32xbf16>, vector<32x16xbf16>, vector<3x8x16xf32> -> vector<3x8x16xf32>
    %c4_30 = arith.constant 4 : index
    %c0_31 = arith.constant 0 : index
    %c0_32 = arith.constant 0 : index
    %57 = vector.load %arg6[%c4_30, %c0_31, %c0_32] : memref<12x1x16xf32, #tpu.memory_space<vmem>>, vector<1x1x16xf32>
    %58 = vector.shape_cast %57 : vector<1x1x16xf32> to vector<1x16xf32>
    %59 = vector.shape_cast %58 : vector<1x16xf32> to vector<1x1x16xf32>
    %60 = vector.broadcast %59 : vector<1x1x16xf32> to vector<3x8x16xf32>
    %61 = arith.addf %56, %60 : vector<3x8x16xf32>
    %62 = arith.truncf %43 : vector<3x8x16xf32> to vector<3x8x16xbf16>
    %63 = arith.truncf %52 : vector<3x8x16xf32> to vector<3x8x16xbf16>
    %cst_33 = arith.constant dense<0.000000e+00> : vector<3x8x8xf32>
    %64 = tpu.matmul %62, %63, %cst_33 {dimension_numbers = #tpu.dot_dimension_numbers<[2], [2], [1], [1], [0, 0, 0, 1, 1, 1], [0], [0]>} : vector<3x8x16xbf16>, vector<3x8x16xbf16>, vector<3x8x8xf32> -> vector<3x8x8xf32>
    %cst_34 = arith.constant 2.500000e-01 : f32
    %65 = vector.broadcast %cst_34 : f32 to vector<3x8x8xf32>
    %66 = arith.mulf %64, %65 : vector<3x8x8xf32>
    %67 = vector.shape_cast %6 : vector<8x8xf32> to vector<1x8x8xf32>
    %68 = vector.broadcast %67 : vector<1x8x8xf32> to vector<3x8x8xf32>
    %69 = arith.addf %66, %68 : vector<3x8x8xf32>
    %cst_35 = arith.constant dense<0xFF800000> : vector<3x8xf32>
    %70 = vector.multi_reduction <maximumf>, %69, %cst_35 [2] : vector<3x8x8xf32> to vector<3x8xf32>
    %71 = vector.shape_cast %70 : vector<3x8xf32> to vector<3x8x1xf32>
    %72 = vector.broadcast %71 : vector<3x8x1xf32> to vector<3x8x8xf32>
    %73 = arith.subf %69, %72 : vector<3x8x8xf32>
    %74 = math.exp %73 : vector<3x8x8xf32>
    %cst_36 = arith.constant dense<0.000000e+00> : vector<3x8xf32>
    %75 = vector.multi_reduction <add>, %74, %cst_36 [2] : vector<3x8x8xf32> to vector<3x8xf32>
    %76 = vector.shape_cast %75 : vector<3x8xf32> to vector<3x8x1xf32>
    %77 = tpu.reciprocal %76 {approx = true} : vector<3x8x1xf32> -> vector<3x8x1xf32>
    %78 = vector.broadcast %77 : vector<3x8x1xf32> to vector<3x8x8xf32>
    %79 = arith.mulf %74, %78 : vector<3x8x8xf32>
    %80 = arith.truncf %79 : vector<3x8x8xf32> to vector<3x8x8xbf16>
    %81 = arith.truncf %61 : vector<3x8x16xf32> to vector<3x8x16xbf16>
    %cst_37 = arith.constant dense<0.000000e+00> : vector<3x8x16xf32>
    %82 = tpu.matmul %80, %81, %cst_37 {dimension_numbers = #tpu.dot_dimension_numbers<[2], [1], [1], [2], [0, 0, 0, 1, 1, 2], [0], [0]>} : vector<3x8x8xbf16>, vector<3x8x16xbf16>, vector<3x8x16xf32> -> vector<3x8x16xf32>
    %c0_38 = arith.constant 0 : index
    %c0_39 = arith.constant 0 : index
    %c0_40 = arith.constant 0 : index
    %83 = vector.load %arg7[%c0_38, %c0_39, %c0_40] : memref<4x16x32xbf16, #tpu.memory_space<vmem>>, vector<1x16x32xbf16>
    %84 = vector.shape_cast %83 : vector<1x16x32xbf16> to vector<16x32xbf16>
    %85 = arith.truncf %82 : vector<3x8x16xf32> to vector<3x8x16xbf16>
    %cst_41 = arith.constant dense<0.000000e+00> : vector<3x8x32xf32>
    %86 = tpu.matmul %85, %84, %cst_41 {dimension_numbers = #tpu.dot_dimension_numbers<[2], [0], [0, 1], [1], [0, 0, 0, 1, 1, 1], [], []>} : vector<3x8x16xbf16>, vector<16x32xbf16>, vector<3x8x32xf32> -> vector<3x8x32xf32>
    %87 = arith.addf %0, %86 : vector<3x8x32xf32>
    %c1 = arith.constant 1 : index
    %c0_42 = arith.constant 0 : index
    %c0_43 = arith.constant 0 : index
    %88 = vector.load %arg5[%c1, %c0_42, %c0_43] : memref<12x32x16xbf16, #tpu.memory_space<vmem>>, vector<1x32x16xbf16>
    %89 = vector.shape_cast %88 : vector<1x32x16xbf16> to vector<32x16xbf16>
    %90 = arith.truncf %34 : vector<3x8x32xf32> to vector<3x8x32xbf16>
    %cst_44 = arith.constant dense<0.000000e+00> : vector<3x8x16xf32>
    %91 = tpu.matmul %90, %89, %cst_44 {dimension_numbers = #tpu.dot_dimension_numbers<[2], [0], [0, 1], [1], [0, 0, 0, 1, 1, 1], [], []>} : vector<3x8x32xbf16>, vector<32x16xbf16>, vector<3x8x16xf32> -> vector<3x8x16xf32>
    %c1_45 = arith.constant 1 : index
    %c0_46 = arith.constant 0 : index
    %c0_47 = arith.constant 0 : index
    %92 = vector.load %arg6[%c1_45, %c0_46, %c0_47] : memref<12x1x16xf32, #tpu.memory_space<vmem>>, vector<1x1x16xf32>
    %93 = vector.shape_cast %92 : vector<1x1x16xf32> to vector<1x16xf32>
    %94 = vector.shape_cast %93 : vector<1x16xf32> to vector<1x1x16xf32>
    %95 = vector.broadcast %94 : vector<1x1x16xf32> to vector<3x8x16xf32>
    %96 = arith.addf %91, %95 : vector<3x8x16xf32>
    %c3 = arith.constant 3 : index
    %c0_48 = arith.constant 0 : index
    %c0_49 = arith.constant 0 : index
    %97 = vector.load %arg5[%c3, %c0_48, %c0_49] : memref<12x32x16xbf16, #tpu.memory_space<vmem>>, vector<1x32x16xbf16>
    %98 = vector.shape_cast %97 : vector<1x32x16xbf16> to vector<32x16xbf16>
    %99 = arith.truncf %34 : vector<3x8x32xf32> to vector<3x8x32xbf16>
    %cst_50 = arith.constant dense<0.000000e+00> : vector<3x8x16xf32>
    %100 = tpu.matmul %99, %98, %cst_50 {dimension_numbers = #tpu.dot_dimension_numbers<[2], [0], [0, 1], [1], [0, 0, 0, 1, 1, 1], [], []>} : vector<3x8x32xbf16>, vector<32x16xbf16>, vector<3x8x16xf32> -> vector<3x8x16xf32>
    %c3_51 = arith.constant 3 : index
    %c0_52 = arith.constant 0 : index
    %c0_53 = arith.constant 0 : index
    %101 = vector.load %arg6[%c3_51, %c0_52, %c0_53] : memref<12x1x16xf32, #tpu.memory_space<vmem>>, vector<1x1x16xf32>
    %102 = vector.shape_cast %101 : vector<1x1x16xf32> to vector<1x16xf32>
    %103 = vector.shape_cast %102 : vector<1x16xf32> to vector<1x1x16xf32>
    %104 = vector.broadcast %103 : vector<1x1x16xf32> to vector<3x8x16xf32>
    %105 = arith.addf %100, %104 : vector<3x8x16xf32>
    %c5 = arith.constant 5 : index
    %c0_54 = arith.constant 0 : index
    %c0_55 = arith.constant 0 : index
    %106 = vector.load %arg5[%c5, %c0_54, %c0_55] : memref<12x32x16xbf16, #tpu.memory_space<vmem>>, vector<1x32x16xbf16>
    %107 = vector.shape_cast %106 : vector<1x32x16xbf16> to vector<32x16xbf16>
    %108 = arith.truncf %34 : vector<3x8x32xf32> to vector<3x8x32xbf16>
    %cst_56 = arith.constant dense<0.000000e+00> : vector<3x8x16xf32>
    %109 = tpu.matmul %108, %107, %cst_56 {dimension_numbers = #tpu.dot_dimension_numbers<[2], [0], [0, 1], [1], [0, 0, 0, 1, 1, 1], [], []>} : vector<3x8x32xbf16>, vector<32x16xbf16>, vector<3x8x16xf32> -> vector<3x8x16xf32>
    %c5_57 = arith.constant 5 : index
    %c0_58 = arith.constant 0 : index
    %c0_59 = arith.constant 0 : index
    %110 = vector.load %arg6[%c5_57, %c0_58, %c0_59] : memref<12x1x16xf32, #tpu.memory_space<vmem>>, vector<1x1x16xf32>
    %111 = vector.shape_cast %110 : vector<1x1x16xf32> to vector<1x16xf32>
    %112 = vector.shape_cast %111 : vector<1x16xf32> to vector<1x1x16xf32>
    %113 = vector.broadcast %112 : vector<1x1x16xf32> to vector<3x8x16xf32>
    %114 = arith.addf %109, %113 : vector<3x8x16xf32>
    %115 = arith.truncf %96 : vector<3x8x16xf32> to vector<3x8x16xbf16>
    %116 = arith.truncf %105 : vector<3x8x16xf32> to vector<3x8x16xbf16>
    %cst_60 = arith.constant dense<0.000000e+00> : vector<3x8x8xf32>
    %117 = tpu.matmul %115, %116, %cst_60 {dimension_numbers = #tpu.dot_dimension_numbers<[2], [2], [1], [1], [0, 0, 0, 1, 1, 1], [0], [0]>} : vector<3x8x16xbf16>, vector<3x8x16xbf16>, vector<3x8x8xf32> -> vector<3x8x8xf32>
    %cst_61 = arith.constant 2.500000e-01 : f32
    %118 = vector.broadcast %cst_61 : f32 to vector<3x8x8xf32>
    %119 = arith.mulf %117, %118 : vector<3x8x8xf32>
    %120 = vector.shape_cast %6 : vector<8x8xf32> to vector<1x8x8xf32>
    %121 = vector.broadcast %120 : vector<1x8x8xf32> to vector<3x8x8xf32>
    %122 = arith.addf %119, %121 : vector<3x8x8xf32>
    %cst_62 = arith.constant dense<0xFF800000> : vector<3x8xf32>
    %123 = vector.multi_reduction <maximumf>, %122, %cst_62 [2] : vector<3x8x8xf32> to vector<3x8xf32>
    %124 = vector.shape_cast %123 : vector<3x8xf32> to vector<3x8x1xf32>
    %125 = vector.broadcast %124 : vector<3x8x1xf32> to vector<3x8x8xf32>
    %126 = arith.subf %122, %125 : vector<3x8x8xf32>
    %127 = math.exp %126 : vector<3x8x8xf32>
    %cst_63 = arith.constant dense<0.000000e+00> : vector<3x8xf32>
    %128 = vector.multi_reduction <add>, %127, %cst_63 [2] : vector<3x8x8xf32> to vector<3x8xf32>
    %129 = vector.shape_cast %128 : vector<3x8xf32> to vector<3x8x1xf32>
    %130 = tpu.reciprocal %129 {approx = true} : vector<3x8x1xf32> -> vector<3x8x1xf32>
    %131 = vector.broadcast %130 : vector<3x8x1xf32> to vector<3x8x8xf32>
    %132 = arith.mulf %127, %131 : vector<3x8x8xf32>
    %133 = arith.truncf %132 : vector<3x8x8xf32> to vector<3x8x8xbf16>
    %134 = arith.truncf %114 : vector<3x8x16xf32> to vector<3x8x16xbf16>
    %cst_64 = arith.constant dense<0.000000e+00> : vector<3x8x16xf32>
    %135 = tpu.matmul %133, %134, %cst_64 {dimension_numbers = #tpu.dot_dimension_numbers<[2], [1], [1], [2], [0, 0, 0, 1, 1, 2], [0], [0]>} : vector<3x8x8xbf16>, vector<3x8x16xbf16>, vector<3x8x16xf32> -> vector<3x8x16xf32>
    %c1_65 = arith.constant 1 : index
    %c0_66 = arith.constant 0 : index
    %c0_67 = arith.constant 0 : index
    %136 = vector.load %arg7[%c1_65, %c0_66, %c0_67] : memref<4x16x32xbf16, #tpu.memory_space<vmem>>, vector<1x16x32xbf16>
    %137 = vector.shape_cast %136 : vector<1x16x32xbf16> to vector<16x32xbf16>
    %138 = arith.truncf %135 : vector<3x8x16xf32> to vector<3x8x16xbf16>
    %cst_68 = arith.constant dense<0.000000e+00> : vector<3x8x32xf32>
    %139 = tpu.matmul %138, %137, %cst_68 {dimension_numbers = #tpu.dot_dimension_numbers<[2], [0], [0, 1], [1], [0, 0, 0, 1, 1, 1], [], []>} : vector<3x8x16xbf16>, vector<16x32xbf16>, vector<3x8x32xf32> -> vector<3x8x32xf32>
    %140 = arith.addf %87, %139 : vector<3x8x32xf32>
    %c0_69 = arith.constant 0 : index
    %c0_70 = arith.constant 0 : index
    %c0_71 = arith.constant 0 : index
    %141 = vector.load %arg8[%c0_69, %c0_70, %c0_71] : memref<2x1x32xf32, #tpu.memory_space<vmem>>, vector<1x1x32xf32>
    %142 = vector.shape_cast %141 : vector<1x1x32xf32> to vector<1x32xf32>
    %143 = vector.shape_cast %142 : vector<1x32xf32> to vector<1x1x32xf32>
    %144 = vector.broadcast %143 : vector<1x1x32xf32> to vector<3x8x32xf32>
    %145 = arith.addf %140, %144 : vector<3x8x32xf32>
    %c0_72 = arith.constant 0 : index
    %c0_73 = arith.constant 0 : index
    %c0_74 = arith.constant 0 : index
    %146 = vector.load %arg9[%c0_72, %c0_73, %c0_74] : memref<2x1x32xf32, #tpu.memory_space<vmem>>, vector<1x1x32xf32>
    %147 = vector.shape_cast %146 : vector<1x1x32xf32> to vector<1x32xf32>
    %c0_75 = arith.constant 0 : index
    %c0_76 = arith.constant 0 : index
    %c0_77 = arith.constant 0 : index
    %148 = vector.load %arg10[%c0_75, %c0_76, %c0_77] : memref<2x1x32xf32, #tpu.memory_space<vmem>>, vector<1x1x32xf32>
    %149 = vector.shape_cast %148 : vector<1x1x32xf32> to vector<1x32xf32>
    %cst_78 = arith.constant dense<0.000000e+00> : vector<3x8xf32>
    %150 = vector.multi_reduction <add>, %145, %cst_78 [2] : vector<3x8x32xf32> to vector<3x8xf32>
    %151 = vector.shape_cast %150 : vector<3x8xf32> to vector<3x8x1xf32>
    %cst_79 = arith.constant 3.200000e+01 : f32
    %152 = vector.broadcast %cst_79 : f32 to vector<3x8x1xf32>
    %153 = arith.divf %151, %152 : vector<3x8x1xf32>
    %154 = vector.broadcast %153 : vector<3x8x1xf32> to vector<3x8x32xf32>
    %155 = arith.subf %145, %154 : vector<3x8x32xf32>
    %156 = arith.mulf %155, %155 : vector<3x8x32xf32>
    %cst_80 = arith.constant dense<0.000000e+00> : vector<3x8xf32>
    %157 = vector.multi_reduction <add>, %156, %cst_80 [2] : vector<3x8x32xf32> to vector<3x8xf32>
    %158 = vector.shape_cast %157 : vector<3x8xf32> to vector<3x8x1xf32>
    %cst_81 = arith.constant 3.200000e+01 : f32
    %159 = vector.broadcast %cst_81 : f32 to vector<3x8x1xf32>
    %160 = arith.divf %158, %159 : vector<3x8x1xf32>
    %161 = vector.broadcast %153 : vector<3x8x1xf32> to vector<3x8x32xf32>
    %162 = arith.subf %145, %161 : vector<3x8x32xf32>
    %cst_82 = arith.constant 9.99999974E-6 : f32
    %163 = vector.broadcast %cst_82 : f32 to vector<3x8x1xf32>
    %164 = arith.addf %160, %163 : vector<3x8x1xf32>
    %165 = math.rsqrt %164 : vector<3x8x1xf32>
    %166 = vector.broadcast %165 : vector<3x8x1xf32> to vector<3x8x32xf32>
    %167 = arith.mulf %162, %166 : vector<3x8x32xf32>
    %168 = vector.shape_cast %147 : vector<1x32xf32> to vector<1x1x32xf32>
    %169 = vector.broadcast %168 : vector<1x1x32xf32> to vector<3x8x32xf32>
    %170 = arith.mulf %167, %169 : vector<3x8x32xf32>
    %171 = vector.shape_cast %149 : vector<1x32xf32> to vector<1x1x32xf32>
    %172 = vector.broadcast %171 : vector<1x1x32xf32> to vector<3x8x32xf32>
    %173 = arith.addf %170, %172 : vector<3x8x32xf32>
    %c0_83 = arith.constant 0 : index
    %c0_84 = arith.constant 0 : index
    %c0_85 = arith.constant 0 : index
    %174 = vector.load %arg11[%c0_83, %c0_84, %c0_85] : memref<2x32x128xbf16, #tpu.memory_space<vmem>>, vector<1x32x128xbf16>
    %175 = vector.shape_cast %174 : vector<1x32x128xbf16> to vector<32x128xbf16>
    %176 = arith.truncf %173 : vector<3x8x32xf32> to vector<3x8x32xbf16>
    %cst_86 = arith.constant dense<0.000000e+00> : vector<3x8x128xf32>
    %177 = tpu.matmul %176, %175, %cst_86 {dimension_numbers = #tpu.dot_dimension_numbers<[2], [0], [0, 1], [1], [0, 0, 0, 1, 1, 1], [], []>} : vector<3x8x32xbf16>, vector<32x128xbf16>, vector<3x8x128xf32> -> vector<3x8x128xf32>
    %c0_87 = arith.constant 0 : index
    %c0_88 = arith.constant 0 : index
    %c0_89 = arith.constant 0 : index
    %178 = vector.load %arg12[%c0_87, %c0_88, %c0_89] : memref<2x1x128xf32, #tpu.memory_space<vmem>>, vector<1x1x128xf32>
    %179 = vector.shape_cast %178 : vector<1x1x128xf32> to vector<1x128xf32>
    %180 = vector.shape_cast %179 : vector<1x128xf32> to vector<1x1x128xf32>
    %181 = vector.broadcast %180 : vector<1x1x128xf32> to vector<3x8x128xf32>
    %182 = arith.addf %177, %181 : vector<3x8x128xf32>
    %cst_90 = arith.constant 1.702000e+00 : f32
    %183 = vector.broadcast %cst_90 : f32 to vector<3x8x128xf32>
    %184 = arith.mulf %183, %182 : vector<3x8x128xf32>
    %185 = arith.negf %184 : vector<3x8x128xf32>
    %186 = math.exp %185 : vector<3x8x128xf32>
    %cst_91 = arith.constant 1.000000e+00 : f32
    %187 = vector.broadcast %cst_91 : f32 to vector<3x8x128xf32>
    %188 = arith.addf %187, %186 : vector<3x8x128xf32>
    %189 = arith.divf %187, %188 : vector<3x8x128xf32>
    %190 = arith.mulf %182, %189 : vector<3x8x128xf32>
    %c0_92 = arith.constant 0 : index
    %c0_93 = arith.constant 0 : index
    %c0_94 = arith.constant 0 : index
    %191 = vector.load %arg13[%c0_92, %c0_93, %c0_94] : memref<2x128x32xbf16, #tpu.memory_space<vmem>>, vector<1x128x32xbf16>
    %192 = vector.shape_cast %191 : vector<1x128x32xbf16> to vector<128x32xbf16>
    %193 = arith.truncf %190 : vector<3x8x128xf32> to vector<3x8x128xbf16>
    %cst_95 = arith.constant dense<0.000000e+00> : vector<3x8x32xf32>
    %194 = tpu.matmul %193, %192, %cst_95 {dimension_numbers = #tpu.dot_dimension_numbers<[2], [0], [0, 1], [1], [0, 0, 0, 1, 1, 1], [], []>} : vector<3x8x128xbf16>, vector<128x32xbf16>, vector<3x8x32xf32> -> vector<3x8x32xf32>
    %195 = arith.addf %145, %194 : vector<3x8x32xf32>
    %c0_96 = arith.constant 0 : index
    %c0_97 = arith.constant 0 : index
    %c0_98 = arith.constant 0 : index
    %196 = vector.load %arg14[%c0_96, %c0_97, %c0_98] : memref<2x1x32xf32, #tpu.memory_space<vmem>>, vector<1x1x32xf32>
    %197 = vector.shape_cast %196 : vector<1x1x32xf32> to vector<1x32xf32>
    %198 = vector.shape_cast %197 : vector<1x32xf32> to vector<1x1x32xf32>
    %199 = vector.broadcast %198 : vector<1x1x32xf32> to vector<3x8x32xf32>
    %200 = arith.addf %195, %199 : vector<3x8x32xf32>
    %c1_99 = arith.constant 1 : index
    %c0_100 = arith.constant 0 : index
    %c0_101 = arith.constant 0 : index
    %201 = vector.load %arg3[%c1_99, %c0_100, %c0_101] : memref<2x1x32xf32, #tpu.memory_space<vmem>>, vector<1x1x32xf32>
    %202 = vector.shape_cast %201 : vector<1x1x32xf32> to vector<1x32xf32>
    %c1_102 = arith.constant 1 : index
    %c0_103 = arith.constant 0 : index
    %c0_104 = arith.constant 0 : index
    %203 = vector.load %arg4[%c1_102, %c0_103, %c0_104] : memref<2x1x32xf32, #tpu.memory_space<vmem>>, vector<1x1x32xf32>
    %204 = vector.shape_cast %203 : vector<1x1x32xf32> to vector<1x32xf32>
    %cst_105 = arith.constant dense<0.000000e+00> : vector<3x8xf32>
    %205 = vector.multi_reduction <add>, %200, %cst_105 [2] : vector<3x8x32xf32> to vector<3x8xf32>
    %206 = vector.shape_cast %205 : vector<3x8xf32> to vector<3x8x1xf32>
    %cst_106 = arith.constant 3.200000e+01 : f32
    %207 = vector.broadcast %cst_106 : f32 to vector<3x8x1xf32>
    %208 = arith.divf %206, %207 : vector<3x8x1xf32>
    %209 = vector.broadcast %208 : vector<3x8x1xf32> to vector<3x8x32xf32>
    %210 = arith.subf %200, %209 : vector<3x8x32xf32>
    %211 = arith.mulf %210, %210 : vector<3x8x32xf32>
    %cst_107 = arith.constant dense<0.000000e+00> : vector<3x8xf32>
    %212 = vector.multi_reduction <add>, %211, %cst_107 [2] : vector<3x8x32xf32> to vector<3x8xf32>
    %213 = vector.shape_cast %212 : vector<3x8xf32> to vector<3x8x1xf32>
    %cst_108 = arith.constant 3.200000e+01 : f32
    %214 = vector.broadcast %cst_108 : f32 to vector<3x8x1xf32>
    %215 = arith.divf %213, %214 : vector<3x8x1xf32>
    %216 = vector.broadcast %208 : vector<3x8x1xf32> to vector<3x8x32xf32>
    %217 = arith.subf %200, %216 : vector<3x8x32xf32>
    %cst_109 = arith.constant 9.99999974E-6 : f32
    %218 = vector.broadcast %cst_109 : f32 to vector<3x8x1xf32>
    %219 = arith.addf %215, %218 : vector<3x8x1xf32>
    %220 = math.rsqrt %219 : vector<3x8x1xf32>
    %221 = vector.broadcast %220 : vector<3x8x1xf32> to vector<3x8x32xf32>
    %222 = arith.mulf %217, %221 : vector<3x8x32xf32>
    %223 = vector.shape_cast %202 : vector<1x32xf32> to vector<1x1x32xf32>
    %224 = vector.broadcast %223 : vector<1x1x32xf32> to vector<3x8x32xf32>
    %225 = arith.mulf %222, %224 : vector<3x8x32xf32>
    %226 = vector.shape_cast %204 : vector<1x32xf32> to vector<1x1x32xf32>
    %227 = vector.broadcast %226 : vector<1x1x32xf32> to vector<3x8x32xf32>
    %228 = arith.addf %225, %227 : vector<3x8x32xf32>
    %c6 = arith.constant 6 : index
    %c0_110 = arith.constant 0 : index
    %c0_111 = arith.constant 0 : index
    %229 = vector.load %arg5[%c6, %c0_110, %c0_111] : memref<12x32x16xbf16, #tpu.memory_space<vmem>>, vector<1x32x16xbf16>
    %230 = vector.shape_cast %229 : vector<1x32x16xbf16> to vector<32x16xbf16>
    %231 = arith.truncf %228 : vector<3x8x32xf32> to vector<3x8x32xbf16>
    %cst_112 = arith.constant dense<0.000000e+00> : vector<3x8x16xf32>
    %232 = tpu.matmul %231, %230, %cst_112 {dimension_numbers = #tpu.dot_dimension_numbers<[2], [0], [0, 1], [1], [0, 0, 0, 1, 1, 1], [], []>} : vector<3x8x32xbf16>, vector<32x16xbf16>, vector<3x8x16xf32> -> vector<3x8x16xf32>
    %c6_113 = arith.constant 6 : index
    %c0_114 = arith.constant 0 : index
    %c0_115 = arith.constant 0 : index
    %233 = vector.load %arg6[%c6_113, %c0_114, %c0_115] : memref<12x1x16xf32, #tpu.memory_space<vmem>>, vector<1x1x16xf32>
    %234 = vector.shape_cast %233 : vector<1x1x16xf32> to vector<1x16xf32>
    %235 = vector.shape_cast %234 : vector<1x16xf32> to vector<1x1x16xf32>
    %236 = vector.broadcast %235 : vector<1x1x16xf32> to vector<3x8x16xf32>
    %237 = arith.addf %232, %236 : vector<3x8x16xf32>
    %c8 = arith.constant 8 : index
    %c0_116 = arith.constant 0 : index
    %c0_117 = arith.constant 0 : index
    %238 = vector.load %arg5[%c8, %c0_116, %c0_117] : memref<12x32x16xbf16, #tpu.memory_space<vmem>>, vector<1x32x16xbf16>
    %239 = vector.shape_cast %238 : vector<1x32x16xbf16> to vector<32x16xbf16>
    %240 = arith.truncf %228 : vector<3x8x32xf32> to vector<3x8x32xbf16>
    %cst_118 = arith.constant dense<0.000000e+00> : vector<3x8x16xf32>
    %241 = tpu.matmul %240, %239, %cst_118 {dimension_numbers = #tpu.dot_dimension_numbers<[2], [0], [0, 1], [1], [0, 0, 0, 1, 1, 1], [], []>} : vector<3x8x32xbf16>, vector<32x16xbf16>, vector<3x8x16xf32> -> vector<3x8x16xf32>
    %c8_119 = arith.constant 8 : index
    %c0_120 = arith.constant 0 : index
    %c0_121 = arith.constant 0 : index
    %242 = vector.load %arg6[%c8_119, %c0_120, %c0_121] : memref<12x1x16xf32, #tpu.memory_space<vmem>>, vector<1x1x16xf32>
    %243 = vector.shape_cast %242 : vector<1x1x16xf32> to vector<1x16xf32>
    %244 = vector.shape_cast %243 : vector<1x16xf32> to vector<1x1x16xf32>
    %245 = vector.broadcast %244 : vector<1x1x16xf32> to vector<3x8x16xf32>
    %246 = arith.addf %241, %245 : vector<3x8x16xf32>
    %c10 = arith.constant 10 : index
    %c0_122 = arith.constant 0 : index
    %c0_123 = arith.constant 0 : index
    %247 = vector.load %arg5[%c10, %c0_122, %c0_123] : memref<12x32x16xbf16, #tpu.memory_space<vmem>>, vector<1x32x16xbf16>
    %248 = vector.shape_cast %247 : vector<1x32x16xbf16> to vector<32x16xbf16>
    %249 = arith.truncf %228 : vector<3x8x32xf32> to vector<3x8x32xbf16>
    %cst_124 = arith.constant dense<0.000000e+00> : vector<3x8x16xf32>
    %250 = tpu.matmul %249, %248, %cst_124 {dimension_numbers = #tpu.dot_dimension_numbers<[2], [0], [0, 1], [1], [0, 0, 0, 1, 1, 1], [], []>} : vector<3x8x32xbf16>, vector<32x16xbf16>, vector<3x8x16xf32> -> vector<3x8x16xf32>
    %c10_125 = arith.constant 10 : index
    %c0_126 = arith.constant 0 : index
    %c0_127 = arith.constant 0 : index
    %251 = vector.load %arg6[%c10_125, %c0_126, %c0_127] : memref<12x1x16xf32, #tpu.memory_space<vmem>>, vector<1x1x16xf32>
    %252 = vector.shape_cast %251 : vector<1x1x16xf32> to vector<1x16xf32>
    %253 = vector.shape_cast %252 : vector<1x16xf32> to vector<1x1x16xf32>
    %254 = vector.broadcast %253 : vector<1x1x16xf32> to vector<3x8x16xf32>
    %255 = arith.addf %250, %254 : vector<3x8x16xf32>
    %256 = arith.truncf %237 : vector<3x8x16xf32> to vector<3x8x16xbf16>
    %257 = arith.truncf %246 : vector<3x8x16xf32> to vector<3x8x16xbf16>
    %cst_128 = arith.constant dense<0.000000e+00> : vector<3x8x8xf32>
    %258 = tpu.matmul %256, %257, %cst_128 {dimension_numbers = #tpu.dot_dimension_numbers<[2], [2], [1], [1], [0, 0, 0, 1, 1, 1], [0], [0]>} : vector<3x8x16xbf16>, vector<3x8x16xbf16>, vector<3x8x8xf32> -> vector<3x8x8xf32>
    %cst_129 = arith.constant 2.500000e-01 : f32
    %259 = vector.broadcast %cst_129 : f32 to vector<3x8x8xf32>
    %260 = arith.mulf %258, %259 : vector<3x8x8xf32>
    %261 = vector.shape_cast %6 : vector<8x8xf32> to vector<1x8x8xf32>
    %262 = vector.broadcast %261 : vector<1x8x8xf32> to vector<3x8x8xf32>
    %263 = arith.addf %260, %262 : vector<3x8x8xf32>
    %cst_130 = arith.constant dense<0xFF800000> : vector<3x8xf32>
    %264 = vector.multi_reduction <maximumf>, %263, %cst_130 [2] : vector<3x8x8xf32> to vector<3x8xf32>
    %265 = vector.shape_cast %264 : vector<3x8xf32> to vector<3x8x1xf32>
    %266 = vector.broadcast %265 : vector<3x8x1xf32> to vector<3x8x8xf32>
    %267 = arith.subf %263, %266 : vector<3x8x8xf32>
    %268 = math.exp %267 : vector<3x8x8xf32>
    %cst_131 = arith.constant dense<0.000000e+00> : vector<3x8xf32>
    %269 = vector.multi_reduction <add>, %268, %cst_131 [2] : vector<3x8x8xf32> to vector<3x8xf32>
    %270 = vector.shape_cast %269 : vector<3x8xf32> to vector<3x8x1xf32>
    %271 = tpu.reciprocal %270 {approx = true} : vector<3x8x1xf32> -> vector<3x8x1xf32>
    %272 = vector.broadcast %271 : vector<3x8x1xf32> to vector<3x8x8xf32>
    %273 = arith.mulf %268, %272 : vector<3x8x8xf32>
    %274 = arith.truncf %273 : vector<3x8x8xf32> to vector<3x8x8xbf16>
    %275 = arith.truncf %255 : vector<3x8x16xf32> to vector<3x8x16xbf16>
    %cst_132 = arith.constant dense<0.000000e+00> : vector<3x8x16xf32>
    %276 = tpu.matmul %274, %275, %cst_132 {dimension_numbers = #tpu.dot_dimension_numbers<[2], [1], [1], [2], [0, 0, 0, 1, 1, 2], [0], [0]>} : vector<3x8x8xbf16>, vector<3x8x16xbf16>, vector<3x8x16xf32> -> vector<3x8x16xf32>
    %c2_133 = arith.constant 2 : index
    %c0_134 = arith.constant 0 : index
    %c0_135 = arith.constant 0 : index
    %277 = vector.load %arg7[%c2_133, %c0_134, %c0_135] : memref<4x16x32xbf16, #tpu.memory_space<vmem>>, vector<1x16x32xbf16>
    %278 = vector.shape_cast %277 : vector<1x16x32xbf16> to vector<16x32xbf16>
    %279 = arith.truncf %276 : vector<3x8x16xf32> to vector<3x8x16xbf16>
    %cst_136 = arith.constant dense<0.000000e+00> : vector<3x8x32xf32>
    %280 = tpu.matmul %279, %278, %cst_136 {dimension_numbers = #tpu.dot_dimension_numbers<[2], [0], [0, 1], [1], [0, 0, 0, 1, 1, 1], [], []>} : vector<3x8x16xbf16>, vector<16x32xbf16>, vector<3x8x32xf32> -> vector<3x8x32xf32>
    %281 = arith.addf %200, %280 : vector<3x8x32xf32>
    %c7 = arith.constant 7 : index
    %c0_137 = arith.constant 0 : index
    %c0_138 = arith.constant 0 : index
    %282 = vector.load %arg5[%c7, %c0_137, %c0_138] : memref<12x32x16xbf16, #tpu.memory_space<vmem>>, vector<1x32x16xbf16>
    %283 = vector.shape_cast %282 : vector<1x32x16xbf16> to vector<32x16xbf16>
    %284 = arith.truncf %228 : vector<3x8x32xf32> to vector<3x8x32xbf16>
    %cst_139 = arith.constant dense<0.000000e+00> : vector<3x8x16xf32>
    %285 = tpu.matmul %284, %283, %cst_139 {dimension_numbers = #tpu.dot_dimension_numbers<[2], [0], [0, 1], [1], [0, 0, 0, 1, 1, 1], [], []>} : vector<3x8x32xbf16>, vector<32x16xbf16>, vector<3x8x16xf32> -> vector<3x8x16xf32>
    %c7_140 = arith.constant 7 : index
    %c0_141 = arith.constant 0 : index
    %c0_142 = arith.constant 0 : index
    %286 = vector.load %arg6[%c7_140, %c0_141, %c0_142] : memref<12x1x16xf32, #tpu.memory_space<vmem>>, vector<1x1x16xf32>
    %287 = vector.shape_cast %286 : vector<1x1x16xf32> to vector<1x16xf32>
    %288 = vector.shape_cast %287 : vector<1x16xf32> to vector<1x1x16xf32>
    %289 = vector.broadcast %288 : vector<1x1x16xf32> to vector<3x8x16xf32>
    %290 = arith.addf %285, %289 : vector<3x8x16xf32>
    %c9 = arith.constant 9 : index
    %c0_143 = arith.constant 0 : index
    %c0_144 = arith.constant 0 : index
    %291 = vector.load %arg5[%c9, %c0_143, %c0_144] : memref<12x32x16xbf16, #tpu.memory_space<vmem>>, vector<1x32x16xbf16>
    %292 = vector.shape_cast %291 : vector<1x32x16xbf16> to vector<32x16xbf16>
    %293 = arith.truncf %228 : vector<3x8x32xf32> to vector<3x8x32xbf16>
    %cst_145 = arith.constant dense<0.000000e+00> : vector<3x8x16xf32>
    %294 = tpu.matmul %293, %292, %cst_145 {dimension_numbers = #tpu.dot_dimension_numbers<[2], [0], [0, 1], [1], [0, 0, 0, 1, 1, 1], [], []>} : vector<3x8x32xbf16>, vector<32x16xbf16>, vector<3x8x16xf32> -> vector<3x8x16xf32>
    %c9_146 = arith.constant 9 : index
    %c0_147 = arith.constant 0 : index
    %c0_148 = arith.constant 0 : index
    %295 = vector.load %arg6[%c9_146, %c0_147, %c0_148] : memref<12x1x16xf32, #tpu.memory_space<vmem>>, vector<1x1x16xf32>
    %296 = vector.shape_cast %295 : vector<1x1x16xf32> to vector<1x16xf32>
    %297 = vector.shape_cast %296 : vector<1x16xf32> to vector<1x1x16xf32>
    %298 = vector.broadcast %297 : vector<1x1x16xf32> to vector<3x8x16xf32>
    %299 = arith.addf %294, %298 : vector<3x8x16xf32>
    %c11 = arith.constant 11 : index
    %c0_149 = arith.constant 0 : index
    %c0_150 = arith.constant 0 : index
    %300 = vector.load %arg5[%c11, %c0_149, %c0_150] : memref<12x32x16xbf16, #tpu.memory_space<vmem>>, vector<1x32x16xbf16>
    %301 = vector.shape_cast %300 : vector<1x32x16xbf16> to vector<32x16xbf16>
    %302 = arith.truncf %228 : vector<3x8x32xf32> to vector<3x8x32xbf16>
    %cst_151 = arith.constant dense<0.000000e+00> : vector<3x8x16xf32>
    %303 = tpu.matmul %302, %301, %cst_151 {dimension_numbers = #tpu.dot_dimension_numbers<[2], [0], [0, 1], [1], [0, 0, 0, 1, 1, 1], [], []>} : vector<3x8x32xbf16>, vector<32x16xbf16>, vector<3x8x16xf32> -> vector<3x8x16xf32>
    %c11_152 = arith.constant 11 : index
    %c0_153 = arith.constant 0 : index
    %c0_154 = arith.constant 0 : index
    %304 = vector.load %arg6[%c11_152, %c0_153, %c0_154] : memref<12x1x16xf32, #tpu.memory_space<vmem>>, vector<1x1x16xf32>
    %305 = vector.shape_cast %304 : vector<1x1x16xf32> to vector<1x16xf32>
    %306 = vector.shape_cast %305 : vector<1x16xf32> to vector<1x1x16xf32>
    %307 = vector.broadcast %306 : vector<1x1x16xf32> to vector<3x8x16xf32>
    %308 = arith.addf %303, %307 : vector<3x8x16xf32>
    %309 = arith.truncf %290 : vector<3x8x16xf32> to vector<3x8x16xbf16>
    %310 = arith.truncf %299 : vector<3x8x16xf32> to vector<3x8x16xbf16>
    %cst_155 = arith.constant dense<0.000000e+00> : vector<3x8x8xf32>
    %311 = tpu.matmul %309, %310, %cst_155 {dimension_numbers = #tpu.dot_dimension_numbers<[2], [2], [1], [1], [0, 0, 0, 1, 1, 1], [0], [0]>} : vector<3x8x16xbf16>, vector<3x8x16xbf16>, vector<3x8x8xf32> -> vector<3x8x8xf32>
    %cst_156 = arith.constant 2.500000e-01 : f32
    %312 = vector.broadcast %cst_156 : f32 to vector<3x8x8xf32>
    %313 = arith.mulf %311, %312 : vector<3x8x8xf32>
    %314 = vector.shape_cast %6 : vector<8x8xf32> to vector<1x8x8xf32>
    %315 = vector.broadcast %314 : vector<1x8x8xf32> to vector<3x8x8xf32>
    %316 = arith.addf %313, %315 : vector<3x8x8xf32>
    %cst_157 = arith.constant dense<0xFF800000> : vector<3x8xf32>
    %317 = vector.multi_reduction <maximumf>, %316, %cst_157 [2] : vector<3x8x8xf32> to vector<3x8xf32>
    %318 = vector.shape_cast %317 : vector<3x8xf32> to vector<3x8x1xf32>
    %319 = vector.broadcast %318 : vector<3x8x1xf32> to vector<3x8x8xf32>
    %320 = arith.subf %316, %319 : vector<3x8x8xf32>
    %321 = math.exp %320 : vector<3x8x8xf32>
    %cst_158 = arith.constant dense<0.000000e+00> : vector<3x8xf32>
    %322 = vector.multi_reduction <add>, %321, %cst_158 [2] : vector<3x8x8xf32> to vector<3x8xf32>
    %323 = vector.shape_cast %322 : vector<3x8xf32> to vector<3x8x1xf32>
    %324 = tpu.reciprocal %323 {approx = true} : vector<3x8x1xf32> -> vector<3x8x1xf32>
    %325 = vector.broadcast %324 : vector<3x8x1xf32> to vector<3x8x8xf32>
    %326 = arith.mulf %321, %325 : vector<3x8x8xf32>
    %327 = arith.truncf %326 : vector<3x8x8xf32> to vector<3x8x8xbf16>
    %328 = arith.truncf %308 : vector<3x8x16xf32> to vector<3x8x16xbf16>
    %cst_159 = arith.constant dense<0.000000e+00> : vector<3x8x16xf32>
    %329 = tpu.matmul %327, %328, %cst_159 {dimension_numbers = #tpu.dot_dimension_numbers<[2], [1], [1], [2], [0, 0, 0, 1, 1, 2], [0], [0]>} : vector<3x8x8xbf16>, vector<3x8x16xbf16>, vector<3x8x16xf32> -> vector<3x8x16xf32>
    %c3_160 = arith.constant 3 : index
    %c0_161 = arith.constant 0 : index
    %c0_162 = arith.constant 0 : index
    %330 = vector.load %arg7[%c3_160, %c0_161, %c0_162] : memref<4x16x32xbf16, #tpu.memory_space<vmem>>, vector<1x16x32xbf16>
    %331 = vector.shape_cast %330 : vector<1x16x32xbf16> to vector<16x32xbf16>
    %332 = arith.truncf %329 : vector<3x8x16xf32> to vector<3x8x16xbf16>
    %cst_163 = arith.constant dense<0.000000e+00> : vector<3x8x32xf32>
    %333 = tpu.matmul %332, %331, %cst_163 {dimension_numbers = #tpu.dot_dimension_numbers<[2], [0], [0, 1], [1], [0, 0, 0, 1, 1, 1], [], []>} : vector<3x8x16xbf16>, vector<16x32xbf16>, vector<3x8x32xf32> -> vector<3x8x32xf32>
    %334 = arith.addf %281, %333 : vector<3x8x32xf32>
    %c1_164 = arith.constant 1 : index
    %c0_165 = arith.constant 0 : index
    %c0_166 = arith.constant 0 : index
    %335 = vector.load %arg8[%c1_164, %c0_165, %c0_166] : memref<2x1x32xf32, #tpu.memory_space<vmem>>, vector<1x1x32xf32>
    %336 = vector.shape_cast %335 : vector<1x1x32xf32> to vector<1x32xf32>
    %337 = vector.shape_cast %336 : vector<1x32xf32> to vector<1x1x32xf32>
    %338 = vector.broadcast %337 : vector<1x1x32xf32> to vector<3x8x32xf32>
    %339 = arith.addf %334, %338 : vector<3x8x32xf32>
    %c1_167 = arith.constant 1 : index
    %c0_168 = arith.constant 0 : index
    %c0_169 = arith.constant 0 : index
    %340 = vector.load %arg9[%c1_167, %c0_168, %c0_169] : memref<2x1x32xf32, #tpu.memory_space<vmem>>, vector<1x1x32xf32>
    %341 = vector.shape_cast %340 : vector<1x1x32xf32> to vector<1x32xf32>
    %c1_170 = arith.constant 1 : index
    %c0_171 = arith.constant 0 : index
    %c0_172 = arith.constant 0 : index
    %342 = vector.load %arg10[%c1_170, %c0_171, %c0_172] : memref<2x1x32xf32, #tpu.memory_space<vmem>>, vector<1x1x32xf32>
    %343 = vector.shape_cast %342 : vector<1x1x32xf32> to vector<1x32xf32>
    %cst_173 = arith.constant dense<0.000000e+00> : vector<3x8xf32>
    %344 = vector.multi_reduction <add>, %339, %cst_173 [2] : vector<3x8x32xf32> to vector<3x8xf32>
    %345 = vector.shape_cast %344 : vector<3x8xf32> to vector<3x8x1xf32>
    %cst_174 = arith.constant 3.200000e+01 : f32
    %346 = vector.broadcast %cst_174 : f32 to vector<3x8x1xf32>
    %347 = arith.divf %345, %346 : vector<3x8x1xf32>
    %348 = vector.broadcast %347 : vector<3x8x1xf32> to vector<3x8x32xf32>
    %349 = arith.subf %339, %348 : vector<3x8x32xf32>
    %350 = arith.mulf %349, %349 : vector<3x8x32xf32>
    %cst_175 = arith.constant dense<0.000000e+00> : vector<3x8xf32>
    %351 = vector.multi_reduction <add>, %350, %cst_175 [2] : vector<3x8x32xf32> to vector<3x8xf32>
    %352 = vector.shape_cast %351 : vector<3x8xf32> to vector<3x8x1xf32>
    %cst_176 = arith.constant 3.200000e+01 : f32
    %353 = vector.broadcast %cst_176 : f32 to vector<3x8x1xf32>
    %354 = arith.divf %352, %353 : vector<3x8x1xf32>
    %355 = vector.broadcast %347 : vector<3x8x1xf32> to vector<3x8x32xf32>
    %356 = arith.subf %339, %355 : vector<3x8x32xf32>
    %cst_177 = arith.constant 9.99999974E-6 : f32
    %357 = vector.broadcast %cst_177 : f32 to vector<3x8x1xf32>
    %358 = arith.addf %354, %357 : vector<3x8x1xf32>
    %359 = math.rsqrt %358 : vector<3x8x1xf32>
    %360 = vector.broadcast %359 : vector<3x8x1xf32> to vector<3x8x32xf32>
    %361 = arith.mulf %356, %360 : vector<3x8x32xf32>
    %362 = vector.shape_cast %341 : vector<1x32xf32> to vector<1x1x32xf32>
    %363 = vector.broadcast %362 : vector<1x1x32xf32> to vector<3x8x32xf32>
    %364 = arith.mulf %361, %363 : vector<3x8x32xf32>
    %365 = vector.shape_cast %343 : vector<1x32xf32> to vector<1x1x32xf32>
    %366 = vector.broadcast %365 : vector<1x1x32xf32> to vector<3x8x32xf32>
    %367 = arith.addf %364, %366 : vector<3x8x32xf32>
    %c1_178 = arith.constant 1 : index
    %c0_179 = arith.constant 0 : index
    %c0_180 = arith.constant 0 : index
    %368 = vector.load %arg11[%c1_178, %c0_179, %c0_180] : memref<2x32x128xbf16, #tpu.memory_space<vmem>>, vector<1x32x128xbf16>
    %369 = vector.shape_cast %368 : vector<1x32x128xbf16> to vector<32x128xbf16>
    %370 = arith.truncf %367 : vector<3x8x32xf32> to vector<3x8x32xbf16>
    %cst_181 = arith.constant dense<0.000000e+00> : vector<3x8x128xf32>
    %371 = tpu.matmul %370, %369, %cst_181 {dimension_numbers = #tpu.dot_dimension_numbers<[2], [0], [0, 1], [1], [0, 0, 0, 1, 1, 1], [], []>} : vector<3x8x32xbf16>, vector<32x128xbf16>, vector<3x8x128xf32> -> vector<3x8x128xf32>
    %c1_182 = arith.constant 1 : index
    %c0_183 = arith.constant 0 : index
    %c0_184 = arith.constant 0 : index
    %372 = vector.load %arg12[%c1_182, %c0_183, %c0_184] : memref<2x1x128xf32, #tpu.memory_space<vmem>>, vector<1x1x128xf32>
    %373 = vector.shape_cast %372 : vector<1x1x128xf32> to vector<1x128xf32>
    %374 = vector.shape_cast %373 : vector<1x128xf32> to vector<1x1x128xf32>
    %375 = vector.broadcast %374 : vector<1x1x128xf32> to vector<3x8x128xf32>
    %376 = arith.addf %371, %375 : vector<3x8x128xf32>
    %cst_185 = arith.constant 1.702000e+00 : f32
    %377 = vector.broadcast %cst_185 : f32 to vector<3x8x128xf32>
    %378 = arith.mulf %377, %376 : vector<3x8x128xf32>
    %379 = arith.negf %378 : vector<3x8x128xf32>
    %380 = math.exp %379 : vector<3x8x128xf32>
    %cst_186 = arith.constant 1.000000e+00 : f32
    %381 = vector.broadcast %cst_186 : f32 to vector<3x8x128xf32>
    %382 = arith.addf %381, %380 : vector<3x8x128xf32>
    %383 = arith.divf %381, %382 : vector<3x8x128xf32>
    %384 = arith.mulf %376, %383 : vector<3x8x128xf32>
    %c1_187 = arith.constant 1 : index
    %c0_188 = arith.constant 0 : index
    %c0_189 = arith.constant 0 : index
    %385 = vector.load %arg13[%c1_187, %c0_188, %c0_189] : memref<2x128x32xbf16, #tpu.memory_space<vmem>>, vector<1x128x32xbf16>
    %386 = vector.shape_cast %385 : vector<1x128x32xbf16> to vector<128x32xbf16>
    %387 = arith.truncf %384 : vector<3x8x128xf32> to vector<3x8x128xbf16>
    %cst_190 = arith.constant dense<0.000000e+00> : vector<3x8x32xf32>
    %388 = tpu.matmul %387, %386, %cst_190 {dimension_numbers = #tpu.dot_dimension_numbers<[2], [0], [0, 1], [1], [0, 0, 0, 1, 1, 1], [], []>} : vector<3x8x128xbf16>, vector<128x32xbf16>, vector<3x8x32xf32> -> vector<3x8x32xf32>
    %389 = arith.addf %339, %388 : vector<3x8x32xf32>
    %c1_191 = arith.constant 1 : index
    %c0_192 = arith.constant 0 : index
    %c0_193 = arith.constant 0 : index
    %390 = vector.load %arg14[%c1_191, %c0_192, %c0_193] : memref<2x1x32xf32, #tpu.memory_space<vmem>>, vector<1x1x32xf32>
    %391 = vector.shape_cast %390 : vector<1x1x32xf32> to vector<1x32xf32>
    %392 = vector.shape_cast %391 : vector<1x32xf32> to vector<1x1x32xf32>
    %393 = vector.broadcast %392 : vector<1x1x32xf32> to vector<3x8x32xf32>
    %394 = arith.addf %389, %393 : vector<3x8x32xf32>
    %c0_194 = arith.constant 0 : index
    %c0_195 = arith.constant 0 : index
    %395 = vector.load %arg15[%c0_194, %c0_195] : memref<1x32xf32, #tpu.memory_space<vmem>>, vector<1x32xf32>
    %c0_196 = arith.constant 0 : index
    %c0_197 = arith.constant 0 : index
    %396 = vector.load %arg16[%c0_196, %c0_197] : memref<1x32xf32, #tpu.memory_space<vmem>>, vector<1x32xf32>
    %cst_198 = arith.constant dense<0.000000e+00> : vector<3x8xf32>
    %397 = vector.multi_reduction <add>, %394, %cst_198 [2] : vector<3x8x32xf32> to vector<3x8xf32>
    %398 = vector.shape_cast %397 : vector<3x8xf32> to vector<3x8x1xf32>
    %cst_199 = arith.constant 3.200000e+01 : f32
    %399 = vector.broadcast %cst_199 : f32 to vector<3x8x1xf32>
    %400 = arith.divf %398, %399 : vector<3x8x1xf32>
    %401 = vector.broadcast %400 : vector<3x8x1xf32> to vector<3x8x32xf32>
    %402 = arith.subf %394, %401 : vector<3x8x32xf32>
    %403 = arith.mulf %402, %402 : vector<3x8x32xf32>
    %cst_200 = arith.constant dense<0.000000e+00> : vector<3x8xf32>
    %404 = vector.multi_reduction <add>, %403, %cst_200 [2] : vector<3x8x32xf32> to vector<3x8xf32>
    %405 = vector.shape_cast %404 : vector<3x8xf32> to vector<3x8x1xf32>
    %cst_201 = arith.constant 3.200000e+01 : f32
    %406 = vector.broadcast %cst_201 : f32 to vector<3x8x1xf32>
    %407 = arith.divf %405, %406 : vector<3x8x1xf32>
    %408 = vector.broadcast %400 : vector<3x8x1xf32> to vector<3x8x32xf32>
    %409 = arith.subf %394, %408 : vector<3x8x32xf32>
    %cst_202 = arith.constant 9.99999974E-6 : f32
    %410 = vector.broadcast %cst_202 : f32 to vector<3x8x1xf32>
    %411 = arith.addf %407, %410 : vector<3x8x1xf32>
    %412 = math.rsqrt %411 : vector<3x8x1xf32>
    %413 = vector.broadcast %412 : vector<3x8x1xf32> to vector<3x8x32xf32>
    %414 = arith.mulf %409, %413 : vector<3x8x32xf32>
    %415 = vector.shape_cast %395 : vector<1x32xf32> to vector<1x1x32xf32>
    %416 = vector.broadcast %415 : vector<1x1x32xf32> to vector<3x8x32xf32>
    %417 = arith.mulf %414, %416 : vector<3x8x32xf32>
    %418 = vector.shape_cast %396 : vector<1x32xf32> to vector<1x1x32xf32>
    %419 = vector.broadcast %418 : vector<1x1x32xf32> to vector<3x8x32xf32>
    %420 = arith.addf %417, %419 : vector<3x8x32xf32>
    %421 = vector.shape_cast %420 : vector<3x8x32xf32> to vector<24x32xf32>
    %c0_203 = arith.constant 0 : index
    %c0_204 = arith.constant 0 : index
    %422 = vector.load %arg18[%c0_203, %c0_204] : memref<3x24xf32, #tpu.memory_space<vmem>>, vector<3x24xf32>
    %cst_205 = arith.constant dense<0.000000e+00> : vector<3x32xf32>
    %423 = tpu.matmul %422, %421, %cst_205 {dimension_numbers = #tpu.dot_dimension_numbers<[1], [0], [0], [1], [0, 0, 1, 1], [], []>} : vector<3x24xf32>, vector<24x32xf32>, vector<3x32xf32> -> vector<3x32xf32>
    %c0_206 = arith.constant 0 : index
    %c0_207 = arith.constant 0 : index
    %424 = vector.load %arg17[%c0_206, %c0_207] : memref<32x32xbf16, #tpu.memory_space<vmem>>, vector<32x32xbf16>
    %425 = arith.truncf %423 : vector<3x32xf32> to vector<3x32xbf16>
    %cst_208 = arith.constant dense<0.000000e+00> : vector<3x32xf32>
    %426 = tpu.matmul %425, %424, %cst_208 {dimension_numbers = #tpu.dot_dimension_numbers<[1], [0], [0], [1], [0, 0, 1, 1], [], []>} : vector<3x32xbf16>, vector<32x32xbf16>, vector<3x32xf32> -> vector<3x32xf32>
    %c0_209 = arith.constant 0 : index
    %c0_210 = arith.constant 0 : index
    %427 = vector.load %arg1[%c0_209, %c0_210] : memref<2x32xf32, #tpu.memory_space<vmem>>, vector<2x32xf32>
    %428 = arith.mulf %427, %427 : vector<2x32xf32>
    %cst_211 = arith.constant dense<0.000000e+00> : vector<2xf32>
    %429 = vector.multi_reduction <add>, %428, %cst_211 [1] : vector<2x32xf32> to vector<2xf32>
    %430 = vector.shape_cast %429 : vector<2xf32> to vector<2x1xf32>
    %431 = math.rsqrt %430 : vector<2x1xf32>
    %432 = vector.broadcast %431 : vector<2x1xf32> to vector<2x32xf32>
    %433 = arith.mulf %427, %432 : vector<2x32xf32>
    %434 = arith.mulf %426, %426 : vector<3x32xf32>
    %cst_212 = arith.constant dense<0.000000e+00> : vector<3xf32>
    %435 = vector.multi_reduction <add>, %434, %cst_212 [1] : vector<3x32xf32> to vector<3xf32>
    %436 = vector.shape_cast %435 : vector<3xf32> to vector<3x1xf32>
    %437 = math.rsqrt %436 : vector<3x1xf32>
    %438 = vector.broadcast %437 : vector<3x1xf32> to vector<3x32xf32>
    %439 = arith.mulf %426, %438 : vector<3x32xf32>
    %cst_213 = arith.constant dense<0.000000e+00> : vector<2x3xf32>
    %440 = tpu.matmul %433, %439, %cst_213 {dimension_numbers = #tpu.dot_dimension_numbers<[1], [1], [0], [0], [0, 0, 1, 0], [], []>} : vector<2x32xf32>, vector<3x32xf32>, vector<2x3xf32> -> vector<2x3xf32>
    %c0_214 = arith.constant 0 : index
    %c0_215 = arith.constant 0 : index
    %441 = vector.load %arg2[%c0_214, %c0_215] : memref<1x1xf32, #tpu.memory_space<vmem>>, vector<1x1xf32>
    %442 = vector.broadcast %441 : vector<1x1xf32> to vector<2x3xf32>
    %443 = arith.mulf %442, %440 : vector<2x3xf32>
    %c0_216 = arith.constant 0 : index
    %c0_217 = arith.constant 0 : index
    %444 = vector.load %arg19[%c0_216, %c0_217] : memref<2x3xf32, #tpu.memory_space<vmem>>, vector<2x3xf32>
    tpu.vector_store %arg19[%c0_216, %c0_217], %443 {strides = array<i32>} : memref<2x3xf32, #tpu.memory_space<vmem>>, vector<2x3xf32>,
    return
  }
}

</mosaic_0001>

<llo_original>
// kernel: custom_clip_forward.2
$region0: #{custom_clip_forward.2}
  #allocation0 [shape = 'u32[]', space=smem, size = 0x4, offset = 0x4, fixed_abs, tag = 'smem constant byte address 0x4 - core index']
  #allocation1 [shape = 'u32[144,128]{1,0:T(1,128)}', space=vmem, size = 0x12000, scoped, tag = 'internal scratch']
  %s0 = inlined_call_operand.vmem [shape: f32[2,16,48], index: 0, kind: input, shape index: {}]
  %s1 = inlined_call_operand.vmem [shape: bf16[48,32], index: 1, kind: input, shape index: {}]
  %s2 = inlined_call_operand.vmem [shape: f32[1,32], index: 2, kind: input, shape index: {}]
  %s3 = inlined_call_operand.vmem [shape: f32[16,32], index: 3, kind: input, shape index: {}]
  %s4 = inlined_call_operand.vmem [shape: f32[1,32], index: 4, kind: input, shape index: {}]
  %s5 = inlined_call_operand.vmem [shape: f32[1,32], index: 5, kind: input, shape index: {}]
  %s6 = inlined_call_operand.vmem [shape: f32[2,1,32], index: 6, kind: input, shape index: {}]
  %s7 = inlined_call_operand.vmem [shape: f32[2,1,32], index: 7, kind: input, shape index: {}]
  %s8 = inlined_call_operand.vmem [shape: bf16[12,32,16], index: 8, kind: input, shape index: {}]
  %s9 = inlined_call_operand.vmem [shape: f32[12,1,16], index: 9, kind: input, shape index: {}]
  %s10 = inlined_call_operand.vmem [shape: bf16[4,16,32], index: 10, kind: input, shape index: {}]
  %s11 = inlined_call_operand.vmem [shape: f32[2,1,32], index: 11, kind: input, shape index: {}]
  %s12 = inlined_call_operand.vmem [shape: f32[2,1,32], index: 12, kind: input, shape index: {}]
  %s13 = inlined_call_operand.vmem [shape: f32[2,1,32], index: 13, kind: input, shape index: {}]
  %s14 = inlined_call_operand.vmem [shape: bf16[2,32,128], index: 14, kind: input, shape index: {}]
  %s15 = inlined_call_operand.vmem [shape: f32[2,1,128], index: 15, kind: input, shape index: {}]
  %s16 = inlined_call_operand.vmem [shape: bf16[2,128,32], index: 16, kind: input, shape index: {}]
  %s17 = inlined_call_operand.vmem [shape: f32[2,1,32], index: 17, kind: input, shape index: {}]
  %s18 = inlined_call_operand.vmem [shape: f32[1,32], index: 18, kind: input, shape index: {}]
  %s19 = inlined_call_operand.vmem [shape: f32[1,32], index: 19, kind: input, shape index: {}]
  %s20 = inlined_call_operand.vmem [shape: bf16[32,32], index: 20, kind: input, shape index: {}]
  %s21 = inlined_call_operand.vmem [shape: f32[2,1,32], index: 21, kind: output, shape index: {}]
  %s22 = sld [smem:[#allocation0]]
  $region117: #{custom_clip_forward.2} parent=0
    _
  %s24 = ssub.s32 1, %s22
  %s25 = scalar_select 0, %s24, %s22
  loop: start=0, step=1, limit=4
  $region2: #{custom_clip_forward.2} parent=0 // loop_pre_header
    _
  $region3: #{custom_clip_forward.2} parent=0 // loop_header
    %s27 = sphi 0, %s31
    %p28 = scmp.ge.s32.totalorder %s27, 4
    %s37 = sphi 0, %s39
    %s40 = sphi 0, %s37
    %s41 = sphi 0, %s40
    %s57 = sphi 0, %s41
    %s61 = sphi 0, %s61
    %s63 = sphi 0, %s61
    %s64 = sphi 0, %s63
    %s78 = sphi 0, %s64
    %s82 = sphi 0, %s82
    %s84 = sphi 0, %s82
    %s85 = sphi 0, %s84
    %s99 = sphi 0, %s85
    %s103 = sphi 0, %s103
    %s105 = sphi 0, %s103
    %s106 = sphi 0, %s105
    %s120 = sphi 0, %s106
    %s124 = sphi 0, %s124
    %s126 = sphi 0, %s124
    %s127 = sphi 0, %s126
    %s141 = sphi 0, %s127
    %s145 = sphi 0, %s145
    %s147 = sphi 0, %s145
    %s148 = sphi 0, %s147
    %s162 = sphi 0, %s148
    %s166 = sphi 0, %s166
    %s168 = sphi 0, %s166
    %s169 = sphi 0, %s168
    %s183 = sphi 0, %s169
    %s187 = sphi 0, %s187
    %s189 = sphi 0, %s187
    %s190 = sphi 0, %s189
    %s204 = sphi 0, %s190
    %s208 = sphi 0, %s208
    %s210 = sphi 0, %s208
    %s211 = sphi 0, %s210
    %s225 = sphi 0, %s211
    %s229 = sphi 0, %s229
    %s231 = sphi 0, %s229
    %s232 = sphi 0, %s231
    %s246 = sphi 0, %s232
    %s250 = sphi 0, %s250
    %s252 = sphi 0, %s250
    %s253 = sphi 0, %s252
    %s267 = sphi 0, %s253
    %s271 = sphi 0, %s271
    %s273 = sphi 0, %s271
    %s274 = sphi 0, %s273
    %s288 = sphi 0, %s274
    %s292 = sphi 0, %s292
    %s294 = sphi 0, %s292
    %s295 = sphi 0, %s294
    %s309 = sphi 0, %s295
    %s313 = sphi 0, %s313
    %s315 = sphi 0, %s313
    %s316 = sphi 0, %s315
    %s330 = sphi 0, %s316
    %s334 = sphi 0, %s334
    %s336 = sphi 0, %s334
    %s337 = sphi 0, %s336
    %s351 = sphi 0, %s337
    %s355 = sphi 0, %s355
    %s357 = sphi 0, %s355
    %s358 = sphi 0, %s357
    %s372 = sphi 0, %s358
    %s376 = sphi 0, %s376
    %s378 = sphi 0, %s376
    %s379 = sphi 0, %s378
    %s393 = sphi 0, %s379
    %s397 = sphi 0, %s397
    %s399 = sphi 0, %s397
    %s400 = sphi 0, %s399
    %s414 = sphi 0, %s400
    %s418 = sphi 0, %s418
    %s420 = sphi 0, %s418
    %s421 = sphi 0, %s420
    %s435 = sphi 0, %s421
    %s439 = sphi 0, %s439
    %s441 = sphi 0, %s439
    %s442 = sphi 0, %s441
    %s456 = sphi 0, %s442
    %s460 = sphi 0, %s460
    %s462 = sphi 0, %s460
    %s463 = sphi 0, %s462
    %s477 = sphi 0, %s463
    %s483 = sphi 0, %s485
    %s486 = sphi 0, %s483
    %s487 = sphi 0, %s486
    %s503 = sphi 0, %s487
  $region4: #{custom_clip_forward.2} parent=0 // loop_header_branch
    %30 = sbr.rel (%p28) target = $region8
  $region5: #{custom_clip_forward.2} parent=0 // loop_body
    %s32 = ssub.s32 %s27, 1
    %s33 = ssub.s32 %s27, 2
    %s34 = sadd.s32 %s27, 1
    %s35 = ssub.s32 %s27, %s34
    %p36 = scmp.eq.s32.totalorder %s35, 0
    %s38 = sadd.s32 %s37, 1
    %s39 = scalar_select %p36, %s37, %s38
    %p42 = pneg %p36
    %p43 = scmp.eq.s32.totalorder %s27, 1
    %p44 = por %p42, %p43
    %p45 = scmp.ne.s32.totalorder %s37, %s40
    %p46 = scmp.eq.s32.totalorder %s27, 0
    %p47 = por %p45, %p46
    %p48 = scmp.ne.s32.totalorder %s37, %s40
    %p49 = scmp.eq.s32.totalorder %s32, 1
    %p50 = por %p48, %p49
    %p51 = scmp.ne.s32.totalorder %s40, %s41
    %p52 = scmp.eq.s32.totalorder %s32, 0
    %p53 = por %p51, %p52
    %p54 = scmp.ne.s32.totalorder %s40, %s41
    %p55 = scmp.eq.s32.totalorder %s33, 1
    %p56 = por %p54, %p55
    %p58 = scmp.ne.s32.totalorder %s41, %s57
    %p59 = scmp.eq.s32.totalorder %s33, 0
    %p60 = por %p58, %p59
    %s62 = sadd.s32 %s61, 1
    %p65 = scmp.eq.s32.totalorder %s27, 1
    %p66 = scmp.ne.s32.totalorder %s61, %s63
    %p67 = scmp.eq.s32.totalorder %s27, 0
    %p68 = por %p66, %p67
    %p69 = scmp.ne.s32.totalorder %s61, %s63
    %p70 = scmp.eq.s32.totalorder %s32, 1
    %p71 = por %p69, %p70
    %p72 = scmp.ne.s32.totalorder %s63, %s64
    %p73 = scmp.eq.s32.totalorder %s32, 0
    %p74 = por %p72, %p73
    %p75 = scmp.ne.s32.totalorder %s63, %s64
    %p76 = scmp.eq.s32.totalorder %s33, 1
    %p77 = por %p75, %p76
    %p79 = scmp.ne.s32.totalorder %s64, %s78
    %p80 = scmp.eq.s32.totalorder %s33, 0
    %p81 = por %p79, %p80
    %s83 = sadd.s32 %s82, 1
    %p86 = scmp.eq.s32.totalorder %s27, 1
    %p87 = scmp.ne.s32.totalorder %s82, %s84
    %p88 = scmp.eq.s32.totalorder %s27, 0
    %p89 = por %p87, %p88
    %p90 = scmp.ne.s32.totalorder %s82, %s84
    %p91 = scmp.eq.s32.totalorder %s32, 1
    %p92 = por %p90, %p91
    %p93 = scmp.ne.s32.totalorder %s84, %s85
    %p94 = scmp.eq.s32.totalorder %s32, 0
    %p95 = por %p93, %p94
    %p96 = scmp.ne.s32.totalorder %s84, %s85
    %p97 = scmp.eq.s32.totalorder %s33, 1
    %p98 = por %p96, %p97
    %p100 = scmp.ne.s32.totalorder %s85, %s99
    %p101 = scmp.eq.s32.totalorder %s33, 0
    %p102 = por %p100, %p101
    %s104 = sadd.s32 %s103, 1
    %p107 = scmp.eq.s32.totalorder %s27, 1
    %p108 = scmp.ne.s32.totalorder %s103, %s105
    %p109 = scmp.eq.s32.totalorder %s27, 0
    %p110 = por %p108, %p109
    %p111 = scmp.ne.s32.totalorder %s103, %s105
    %p112 = scmp.eq.s32.totalorder %s32, 1
    %p113 = por %p111, %p112
    %p114 = scmp.ne.s32.totalorder %s105, %s106
    %p115 = scmp.eq.s32.totalorder %s32, 0
    %p116 = por %p114, %p115
    %p117 = scmp.ne.s32.totalorder %s105, %s106
    %p118 = scmp.eq.s32.totalorder %s33, 1
    %p119 = por %p117, %p118
    %p121 = scmp.ne.s32.totalorder %s106, %s120
    %p122 = scmp.eq.s32.totalorder %s33, 0
    %p123 = por %p121, %p122
    %s125 = sadd.s32 %s124, 1
    %p128 = scmp.eq.s32.totalorder %s27, 1
    %p129 = scmp.ne.s32.totalorder %s124, %s126
    %p130 = scmp.eq.s32.totalorder %s27, 0
    %p131 = por %p129, %p130
    %p132 = scmp.ne.s32.totalorder %s124, %s126
    %p133 = scmp.eq.s32.totalorder %s32, 1
    %p134 = por %p132, %p133
    %p135 = scmp.ne.s32.totalorder %s126, %s127
    %p136 = scmp.eq.s32.totalorder %s32, 0
    %p137 = por %p135, %p136
    %p138 = scmp.ne.s32.totalorder %s126, %s127
    %p139 = scmp.eq.s32.totalorder %s33, 1
    %p140 = por %p138, %p139
    %p142 = scmp.ne.s32.totalorder %s127, %s141
    %p143 = scmp.eq.s32.totalorder %s33, 0
    %p144 = por %p142, %p143
    %s146 = sadd.s32 %s145, 1
    %p149 = scmp.eq.s32.totalorder %s27, 1
    %p150 = scmp.ne.s32.totalorder %s145, %s147
    %p151 = scmp.eq.s32.totalorder %s27, 0
    %p152 = por %p150, %p151
    %p153 = scmp.ne.s32.totalorder %s145, %s147
    %p154 = scmp.eq.s32.totalorder %s32, 1
    %p155 = por %p153, %p154
    %p156 = scmp.ne.s32.totalorder %s147, %s148
    %p157 = scmp.eq.s32.totalorder %s32, 0
    %p158 = por %p156, %p157
    %p159 = scmp.ne.s32.totalorder %s147, %s148
    %p160 = scmp.eq.s32.totalorder %s33, 1
    %p161 = por %p159, %p160
    %p163 = scmp.ne.s32.totalorder %s148, %s162
    %p164 = scmp.eq.s32.totalorder %s33, 0
    %p165 = por %p163, %p164
    %s167 = sadd.s32 %s166, 1
    %p170 = scmp.eq.s32.totalorder %s27, 1
    %p171 = scmp.ne.s32.totalorder %s166, %s168
    %p172 = scmp.eq.s32.totalorder %s27, 0
    %p173 = por %p171, %p172
    %p174 = scmp.ne.s32.totalorder %s166, %s168
    %p175 = scmp.eq.s32.totalorder %s32, 1
    %p176 = por %p174, %p175
    %p177 = scmp.ne.s32.totalorder %s168, %s169
    %p178 = scmp.eq.s32.totalorder %s32, 0
    %p179 = por %p177, %p178
    %p180 = scmp.ne.s32.totalorder %s168, %s169
    %p181 = scmp.eq.s32.totalorder %s33, 1
    %p182 = por %p180, %p181
    %p184 = scmp.ne.s32.totalorder %s169, %s183
    %p185 = scmp.eq.s32.totalorder %s33, 0
    %p186 = por %p184, %p185
    %s188 = sadd.s32 %s187, 1
    %p191 = scmp.eq.s32.totalorder %s27, 1
    %p192 = scmp.ne.s32.totalorder %s187, %s189
    %p193 = scmp.eq.s32.totalorder %s27, 0
    %p194 = por %p192, %p193
    %p195 = scmp.ne.s32.totalorder %s187, %s189
    %p196 = scmp.eq.s32.totalorder %s32, 1
    %p197 = por %p195, %p196
    %p198 = scmp.ne.s32.totalorder %s189, %s190
    %p199 = scmp.eq.s32.totalorder %s32, 0
    %p200 = por %p198, %p199
    %p201 = scmp.ne.s32.totalorder %s189, %s190
    %p202 = scmp.eq.s32.totalorder %s33, 1
    %p203 = por %p201, %p202
    %p205 = scmp.ne.s32.totalorder %s190, %s204
    %p206 = scmp.eq.s32.totalorder %s33, 0
    %p207 = por %p205, %p206
    %s209 = sadd.s32 %s208, 1
    %p212 = scmp.eq.s32.totalorder %s27, 1
    %p213 = scmp.ne.s32.totalorder %s208, %s210
    %p214 = scmp.eq.s32.totalorder %s27, 0
    %p215 = por %p213, %p214
    %p216 = scmp.ne.s32.totalorder %s208, %s210
    %p217 = scmp.eq.s32.totalorder %s32, 1
    %p218 = por %p216, %p217
    %p219 = scmp.ne.s32.totalorder %s210, %s211
    %p220 = scmp.eq.s32.totalorder %s32, 0
    %p221 = por %p219, %p220
    %p222 = scmp.ne.s32.totalorder %s210, %s211
    %p223 = scmp.eq.s32.totalorder %s33, 1
    %p224 = por %p222, %p223
    %p226 = scmp.ne.s32.totalorder %s211, %s225
    %p227 = scmp.eq.s32.totalorder %s33, 0
    %p228 = por %p226, %p227
    %s230 = sadd.s32 %s229, 1
    %p233 = scmp.eq.s32.totalorder %s27, 1
    %p234 = scmp.ne.s32.totalorder %s229, %s231
    %p235 = scmp.eq.s32.totalorder %s27, 0
    %p236 = por %p234, %p235
    %p237 = scmp.ne.s32.totalorder %s229, %s231
    %p238 = scmp.eq.s32.totalorder %s32, 1
    %p239 = por %p237, %p238
    %p240 = scmp.ne.s32.totalorder %s231, %s232
    %p241 = scmp.eq.s32.totalorder %s32, 0
    %p242 = por %p240, %p241
    %p243 = scmp.ne.s32.totalorder %s231, %s232
    %p244 = scmp.eq.s32.totalorder %s33, 1
    %p245 = por %p243, %p244
    %p247 = scmp.ne.s32.totalorder %s232, %s246
    %p248 = scmp.eq.s32.totalorder %s33, 0
    %p249 = por %p247, %p248
    %s251 = sadd.s32 %s250, 1
    %p254 = scmp.eq.s32.totalorder %s27, 1
    %p255 = scmp.ne.s32.totalorder %s250, %s252
    %p256 = scmp.eq.s32.totalorder %s27, 0
    %p257 = por %p255, %p256
    %p258 = scmp.ne.s32.totalorder %s250, %s252
    %p259 = scmp.eq.s32.totalorder %s32, 1
    %p260 = por %p258, %p259
    %p261 = scmp.ne.s32.totalorder %s252, %s253
    %p262 = scmp.eq.s32.totalorder %s32, 0
    %p263 = por %p261, %p262
    %p264 = scmp.ne.s32.totalorder %s252, %s253
    %p265 = scmp.eq.s32.totalorder %s33, 1
    %p266 = por %p264, %p265
    %p268 = scmp.ne.s32.totalorder %s253, %s267
    %p269 = scmp.eq.s32.totalorder %s33, 0
    %p270 = por %p268, %p269
    %s272 = sadd.s32 %s271, 1
    %p275 = scmp.eq.s32.totalorder %s27, 1
    %p276 = scmp.ne.s32.totalorder %s271, %s273
    %p277 = scmp.eq.s32.totalorder %s27, 0
    %p278 = por %p276, %p277
    %p279 = scmp.ne.s32.totalorder %s271, %s273
    %p280 = scmp.eq.s32.totalorder %s32, 1
    %p281 = por %p279, %p280
    %p282 = scmp.ne.s32.totalorder %s273, %s274
    %p283 = scmp.eq.s32.totalorder %s32, 0
    %p284 = por %p282, %p283
    %p285 = scmp.ne.s32.totalorder %s273, %s274
    %p286 = scmp.eq.s32.totalorder %s33, 1
    %p287 = por %p285, %p286
    %p289 = scmp.ne.s32.totalorder %s274, %s288
    %p290 = scmp.eq.s32.totalorder %s33, 0
    %p291 = por %p289, %p290
    %s293 = sadd.s32 %s292, 1
    %p296 = scmp.eq.s32.totalorder %s27, 1
    %p297 = scmp.ne.s32.totalorder %s292, %s294
    %p298 = scmp.eq.s32.totalorder %s27, 0
    %p299 = por %p297, %p298
    %p300 = scmp.ne.s32.totalorder %s292, %s294
    %p301 = scmp.eq.s32.totalorder %s32, 1
    %p302 = por %p300, %p301
    %p303 = scmp.ne.s32.totalorder %s294, %s295
    %p304 = scmp.eq.s32.totalorder %s32, 0
    %p305 = por %p303, %p304
    %p306 = scmp.ne.s32.totalorder %s294, %s295
    %p307 = scmp.eq.s32.totalorder %s33, 1
    %p308 = por %p306, %p307
    %p310 = scmp.ne.s32.totalorder %s295, %s309
    %p311 = scmp.eq.s32.totalorder %s33, 0
    %p312 = por %p310, %p311
    %s314 = sadd.s32 %s313, 1
    %p317 = scmp.eq.s32.totalorder %s27, 1
    %p318 = scmp.ne.s32.totalorder %s313, %s315
    %p319 = scmp.eq.s32.totalorder %s27, 0
    %p320 = por %p318, %p319
    %p321 = scmp.ne.s32.totalorder %s313, %s315
    %p322 = scmp.eq.s32.totalorder %s32, 1
    %p323 = por %p321, %p322
    %p324 = scmp.ne.s32.totalorder %s315, %s316
    %p325 = scmp.eq.s32.totalorder %s32, 0
    %p326 = por %p324, %p325
    %p327 = scmp.ne.s32.totalorder %s315, %s316
    %p328 = scmp.eq.s32.totalorder %s33, 1
    %p329 = por %p327, %p328
    %p331 = scmp.ne.s32.totalorder %s316, %s330
    %p332 = scmp.eq.s32.totalorder %s33, 0
    %p333 = por %p331, %p332
    %s335 = sadd.s32 %s334, 1
    %p338 = scmp.eq.s32.totalorder %s27, 1
    %p339 = scmp.ne.s32.totalorder %s334, %s336
    %p340 = scmp.eq.s32.totalorder %s27, 0
    %p341 = por %p339, %p340
    %p342 = scmp.ne.s32.totalorder %s334, %s336
    %p343 = scmp.eq.s32.totalorder %s32, 1
    %p344 = por %p342, %p343
    %p345 = scmp.ne.s32.totalorder %s336, %s337
    %p346 = scmp.eq.s32.totalorder %s32, 0
    %p347 = por %p345, %p346
    %p348 = scmp.ne.s32.totalorder %s336, %s337
    %p349 = scmp.eq.s32.totalorder %s33, 1
    %p350 = por %p348, %p349
    %p352 = scmp.ne.s32.totalorder %s337, %s351
    %p353 = scmp.eq.s32.totalorder %s33, 0
    %p354 = por %p352, %p353
    %s356 = sadd.s32 %s355, 1
    %p359 = scmp.eq.s32.totalorder %s27, 1
    %p360 = scmp.ne.s32.totalorder %s355, %s357
    %p361 = scmp.eq.s32.totalorder %s27, 0
    %p362 = por %p360, %p361
    %p363 = scmp.ne.s32.totalorder %s355, %s357
    %p364 = scmp.eq.s32.totalorder %s32, 1
    %p365 = por %p363, %p364
    %p366 = scmp.ne.s32.totalorder %s357, %s358
    %p367 = scmp.eq.s32.totalorder %s32, 0
    %p368 = por %p366, %p367
    %p369 = scmp.ne.s32.totalorder %s357, %s358
    %p370 = scmp.eq.s32.totalorder %s33, 1
    %p371 = por %p369, %p370
    %p373 = scmp.ne.s32.totalorder %s358, %s372
    %p374 = scmp.eq.s32.totalorder %s33, 0
    %p375 = por %p373, %p374
    %s377 = sadd.s32 %s376, 1
    %p380 = scmp.eq.s32.totalorder %s27, 1
    %p381 = scmp.ne.s32.totalorder %s376, %s378
    %p382 = scmp.eq.s32.totalorder %s27, 0
    %p383 = por %p381, %p382
    %p384 = scmp.ne.s32.totalorder %s376, %s378
    %p385 = scmp.eq.s32.totalorder %s32, 1
    %p386 = por %p384, %p385
    %p387 = scmp.ne.s32.totalorder %s378, %s379
    %p388 = scmp.eq.s32.totalorder %s32, 0
    %p389 = por %p387, %p388
    %p390 = scmp.ne.s32.totalorder %s378, %s379
    %p391 = scmp.eq.s32.totalorder %s33, 1
    %p392 = por %p390, %p391
    %p394 = scmp.ne.s32.totalorder %s379, %s393
    %p395 = scmp.eq.s32.totalorder %s33, 0
    %p396 = por %p394, %p395
    %s398 = sadd.s32 %s397, 1
    %p401 = scmp.eq.s32.totalorder %s27, 1
    %p402 = scmp.ne.s32.totalorder %s397, %s399
    %p403 = scmp.eq.s32.totalorder %s27, 0
    %p404 = por %p402, %p403
    %p405 = scmp.ne.s32.totalorder %s397, %s399
    %p406 = scmp.eq.s32.totalorder %s32, 1
    %p407 = por %p405, %p406
    %p408 = scmp.ne.s32.totalorder %s399, %s400
    %p409 = scmp.eq.s32.totalorder %s32, 0
    %p410 = por %p408, %p409
    %p411 = scmp.ne.s32.totalorder %s399, %s400
    %p412 = scmp.eq.s32.totalorder %s33, 1
    %p413 = por %p411, %p412
    %p415 = scmp.ne.s32.totalorder %s400, %s414
    %p416 = scmp.eq.s32.totalorder %s33, 0
    %p417 = por %p415, %p416
    %s419 = sadd.s32 %s418, 1
    %p422 = scmp.eq.s32.totalorder %s27, 1
    %p423 = scmp.ne.s32.totalorder %s418, %s420
    %p424 = scmp.eq.s32.totalorder %s27, 0
    %p425 = por %p423, %p424
    %p426 = scmp.ne.s32.totalorder %s418, %s420
    %p427 = scmp.eq.s32.totalorder %s32, 1
    %p428 = por %p426, %p427
    %p429 = scmp.ne.s32.totalorder %s420, %s421
    %p430 = scmp.eq.s32.totalorder %s32, 0
    %p431 = por %p429, %p430
    %p432 = scmp.ne.s32.totalorder %s420, %s421
    %p433 = scmp.eq.s32.totalorder %s33, 1
    %p434 = por %p432, %p433
    %p436 = scmp.ne.s32.totalorder %s421, %s435
    %p437 = scmp.eq.s32.totalorder %s33, 0
    %p438 = por %p436, %p437
    %s440 = sadd.s32 %s439, 1
    %p443 = scmp.eq.s32.totalorder %s27, 1
    %p444 = scmp.ne.s32.totalorder %s439, %s441
    %p445 = scmp.eq.s32.totalorder %s27, 0
    %p446 = por %p444, %p445
    %p447 = scmp.ne.s32.totalorder %s439, %s441
    %p448 = scmp.eq.s32.totalorder %s32, 1
    %p449 = por %p447, %p448
    %p450 = scmp.ne.s32.totalorder %s441, %s442
    %p451 = scmp.eq.s32.totalorder %s32, 0
    %p452 = por %p450, %p451
    %p453 = scmp.ne.s32.totalorder %s441, %s442
    %p454 = scmp.eq.s32.totalorder %s33, 1
    %p455 = por %p453, %p454
    %p457 = scmp.ne.s32.totalorder %s442, %s456
    %p458 = scmp.eq.s32.totalorder %s33, 0
    %p459 = por %p457, %p458
    %s461 = sadd.s32 %s460, 1
    %p464 = scmp.eq.s32.totalorder %s27, 1
    %p465 = scmp.ne.s32.totalorder %s460, %s462
    %p466 = scmp.eq.s32.totalorder %s27, 0
    %p467 = por %p465, %p466
    %p468 = scmp.ne.s32.totalorder %s460, %s462
    %p469 = scmp.eq.s32.totalorder %s32, 1
    %p470 = por %p468, %p469
    %p471 = scmp.ne.s32.totalorder %s462, %s463
    %p472 = scmp.eq.s32.totalorder %s32, 0
    %p473 = por %p471, %p472
    %p474 = scmp.ne.s32.totalorder %s462, %s463
    %p475 = scmp.eq.s32.totalorder %s33, 1
    %p476 = por %p474, %p475
    %p478 = scmp.ne.s32.totalorder %s463, %s477
    %p479 = scmp.eq.s32.totalorder %s33, 0
    %p480 = por %p478, %p479
    %s481 = ssub.s32 %s27, %s34
    %p482 = scmp.eq.s32.totalorder %s481, 0
    %s484 = sadd.s32 %s483, 1
    %s485 = scalar_select %p482, %s483, %s484
    %p488 = pneg %p482
    %p489 = scmp.eq.s32.totalorder %s27, 1
    %p490 = por %p488, %p489
    %p491 = scmp.ne.s32.totalorder %s483, %s486
    %p492 = scmp.eq.s32.totalorder %s27, 0
    %p493 = por %p491, %p492
    %p494 = scmp.ne.s32.totalorder %s483, %s486
    %p495 = scmp.eq.s32.totalorder %s32, 1
    %p496 = por %p494, %p495
    %p497 = scmp.ne.s32.totalorder %s486, %s487
    %p498 = scmp.eq.s32.totalorder %s32, 0
    %p499 = por %p497, %p498
    %p500 = scmp.ne.s32.totalorder %s486, %s487
    %p501 = scmp.eq.s32.totalorder %s33, 1
    %p502 = por %p500, %p501
    %p504 = scmp.ne.s32.totalorder %s487, %s503
    %p505 = scmp.eq.s32.totalorder %s33, 0
    %p506 = por %p504, %p505
    %p507 = scmp.le.s32.totalorder 1, %s27
    %p508 = scmp.lt.s32.totalorder %s27, 3
    %p509 = pnand %p507, %p508
    %p510 = pneg %p509
    // Predicated region
    $region9: #{custom_clip_forward.2} parent=5 // pred_check
      _
    $region10: #{custom_clip_forward.2} parent=5 // pred_check_branch
      %512 = sbr.rel (%p509) target = $region12
    $region11: #{custom_clip_forward.2} parent=5 // pred_region
      %s513 = ssub.s32 %s27, 1
      // Predicated region
      $region13: #{custom_clip_forward.2} parent=11 // pred_check
        %p514 = pneg %p74
      $region14: #{custom_clip_forward.2} parent=11 // pred_check_branch
        %516 = sbr.rel (%p514) target = $region16
      $region15: #{custom_clip_forward.2} parent=11 // pred_region
        _
      $region16: #{custom_clip_forward.2} parent=11 // pred_fallthru
        _
      // Predicated region
      $region17: #{custom_clip_forward.2} parent=11 // pred_check
        %p517 = pneg %p95
      $region18: #{custom_clip_forward.2} parent=11 // pred_check_branch
        %519 = sbr.rel (%p517) target = $region20
      $region19: #{custom_clip_forward.2} parent=11 // pred_region
        _
      $region20: #{custom_clip_forward.2} parent=11 // pred_fallthru
        _
      // Predicated region
      $region21: #{custom_clip_forward.2} parent=11 // pred_check
        %p520 = pneg %p116
      $region22: #{custom_clip_forward.2} parent=11 // pred_check_branch
        %522 = sbr.rel (%p520) target = $region24
      $region23: #{custom_clip_forward.2} parent=11 // pred_region
        _
      $region24: #{custom_clip_forward.2} parent=11 // pred_fallthru
        _
      // Predicated region
      $region25: #{custom_clip_forward.2} parent=11 // pred_check
        %p523 = pneg %p137
      $region26: #{custom_clip_forward.2} parent=11 // pred_check_branch
        %525 = sbr.rel (%p523) target = $region28
      $region27: #{custom_clip_forward.2} parent=11 // pred_region
        _
      $region28: #{custom_clip_forward.2} parent=11 // pred_fallthru
        _
      // Predicated region
      $region29: #{custom_clip_forward.2} parent=11 // pred_check
        %p526 = pneg %p158
      $region30: #{custom_clip_forward.2} parent=11 // pred_check_branch
        %528 = sbr.rel (%p526) target = $region32
      $region31: #{custom_clip_forward.2} parent=11 // pred_region
        _
      $region32: #{custom_clip_forward.2} parent=11 // pred_fallthru
        _
      // Predicated region
      $region33: #{custom_clip_forward.2} parent=11 // pred_check
        %p529 = pneg %p179
      $region34: #{custom_clip_forward.2} parent=11 // pred_check_branch
        %531 = sbr.rel (%p529) target = $region36
      $region35: #{custom_clip_forward.2} parent=11 // pred_region
        _
      $region36: #{custom_clip_forward.2} parent=11 // pred_fallthru
        _
      // Predicated region
      $region37: #{custom_clip_forward.2} parent=11 // pred_check
        %p532 = pneg %p200
      $region38: #{custom_clip_forward.2} parent=11 // pred_check_branch
        %534 = sbr.rel (%p532) target = $region40
      $region39: #{custom_clip_forward.2} parent=11 // pred_region
        _
      $region40: #{custom_clip_forward.2} parent=11 // pred_fallthru
        _
      // Predicated region
      $region41: #{custom_clip_forward.2} parent=11 // pred_check
        %p535 = pneg %p221
      $region42: #{custom_clip_forward.2} parent=11 // pred_check_branch
        %537 = sbr.rel (%p535) target = $region44
      $region43: #{custom_clip_forward.2} parent=11 // pred_region
        _
      $region44: #{custom_clip_forward.2} parent=11 // pred_fallthru
        _
      // Predicated region
      $region45: #{custom_clip_forward.2} parent=11 // pred_check
        %p538 = pneg %p242
      $region46: #{custom_clip_forward.2} parent=11 // pred_check_branch
        %540 = sbr.rel (%p538) target = $region48
      $region47: #{custom_clip_forward.2} parent=11 // pred_region
        _
      $region48: #{custom_clip_forward.2} parent=11 // pred_fallthru
        _
      // Predicated region
      $region49: #{custom_clip_forward.2} parent=11 // pred_check
        %p541 = pneg %p263
      $region50: #{custom_clip_forward.2} parent=11 // pred_check_branch
        %543 = sbr.rel (%p541) target = $region52
      $region51: #{custom_clip_forward.2} parent=11 // pred_region
        _
      $region52: #{custom_clip_forward.2} parent=11 // pred_fallthru
        _
      // Predicated region
      $region53: #{custom_clip_forward.2} parent=11 // pred_check
        %p544 = pneg %p284
      $region54: #{custom_clip_forward.2} parent=11 // pred_check_branch
        %546 = sbr.rel (%p544) target = $region56
      $region55: #{custom_clip_forward.2} parent=11 // pred_region
        _
      $region56: #{custom_clip_forward.2} parent=11 // pred_fallthru
        _
      // Predicated region
      $region57: #{custom_clip_forward.2} parent=11 // pred_check
        %p547 = pneg %p305
      $region58: #{custom_clip_forward.2} parent=11 // pred_check_branch
        %549 = sbr.rel (%p547) target = $region60
      $region59: #{custom_clip_forward.2} parent=11 // pred_region
        _
      $region60: #{custom_clip_forward.2} parent=11 // pred_fallthru
        _
      // Predicated region
      $region61: #{custom_clip_forward.2} parent=11 // pred_check
        %p550 = pneg %p326
      $region62: #{custom_clip_forward.2} parent=11 // pred_check_branch
        %552 = sbr.rel (%p550) target = $region64
      $region63: #{custom_clip_forward.2} parent=11 // pred_region
        _
      $region64: #{custom_clip_forward.2} parent=11 // pred_fallthru
        _
      // Predicated region
      $region65: #{custom_clip_forward.2} parent=11 // pred_check
        %p553 = pneg %p347
      $region66: #{custom_clip_forward.2} parent=11 // pred_check_branch
        %555 = sbr.rel (%p553) target = $region68
      $region67: #{custom_clip_forward.2} parent=11 // pred_region
        _
      $region68: #{custom_clip_forward.2} parent=11 // pred_fallthru
        _
      // Predicated region
      $region69: #{custom_clip_forward.2} parent=11 // pred_check
        %p556 = pneg %p368
      $region70: #{custom_clip_forward.2} parent=11 // pred_check_branch
        %558 = sbr.rel (%p556) target = $region72
      $region71: #{custom_clip_forward.2} parent=11 // pred_region
        _
      $region72: #{custom_clip_forward.2} parent=11 // pred_fallthru
        _
      // Predicated region
      $region73: #{custom_clip_forward.2} parent=11 // pred_check
        %p559 = pneg %p389
      $region74: #{custom_clip_forward.2} parent=11 // pred_check_branch
        %561 = sbr.rel (%p559) target = $region76
      $region75: #{custom_clip_forward.2} parent=11 // pred_region
        _
      $region76: #{custom_clip_forward.2} parent=11 // pred_fallthru
        _
      // Predicated region
      $region77: #{custom_clip_forward.2} parent=11 // pred_check
        %p562 = pneg %p410
      $region78: #{custom_clip_forward.2} parent=11 // pred_check_branch
        %564 = sbr.rel (%p562) target = $region80
      $region79: #{custom_clip_forward.2} parent=11 // pred_region
        _
      $region80: #{custom_clip_forward.2} parent=11 // pred_fallthru
        _
      // Predicated region
      $region81: #{custom_clip_forward.2} parent=11 // pred_check
        %p565 = pneg %p431
      $region82: #{custom_clip_forward.2} parent=11 // pred_check_branch
        %567 = sbr.rel (%p565) target = $region84
      $region83: #{custom_clip_forward.2} parent=11 // pred_region
        _
      $region84: #{custom_clip_forward.2} parent=11 // pred_fallthru
        _
      // Predicated region
      $region85: #{custom_clip_forward.2} parent=11 // pred_check
        %p568 = pneg %p452
      $region86: #{custom_clip_forward.2} parent=11 // pred_check_branch
        %570 = sbr.rel (%p568) target = $region88
      $region87: #{custom_clip_forward.2} parent=11 // pred_region
        _
      $region88: #{custom_clip_forward.2} parent=11 // pred_fallthru
        _
      // Predicated region
      $region89: #{custom_clip_forward.2} parent=11 // pred_check
        %p571 = pneg %p473
      $region90: #{custom_clip_forward.2} parent=11 // pred_check_branch
        %573 = sbr.rel (%p571) target = $region92
      $region91: #{custom_clip_forward.2} parent=11 // pred_region
        _
      $region92: #{custom_clip_forward.2} parent=11 // pred_fallthru
        _
    $region12: #{custom_clip_forward.2} parent=5 // pred_fallthru
      _
    %p574 = scmp.lt.s32.totalorder %s27, 2
    // Predicated region
    $region93: #{custom_clip_forward.2} parent=5 // pred_check
      %p575 = pneg %p574
    $region94: #{custom_clip_forward.2} parent=5 // pred_check_branch
      %577 = sbr.rel (%p575) target = $region96
    $region95: #{custom_clip_forward.2} parent=5 // pred_region
      // Predicated region
      $region97: #{custom_clip_forward.2} parent=95 // pred_check
        %p578 = pneg %p47
      $region98: #{custom_clip_forward.2} parent=95 // pred_check_branch
        %580 = sbr.rel (%p578) target = $region100
      $region99: #{custom_clip_forward.2} parent=95 // pred_region
        %p581 = scmp.lt.s32.totalorder %s27, 1
        %s582 = scalar_select %p581, %s27, 1
        %s583 = smul.addr %s582, 2
        %s584 = smul.addr %s583, 8
        %s585 = scalar_lea.vmem %s0, %s584
      $region100: #{custom_clip_forward.2} parent=95 // pred_fallthru
        _
    $region96: #{custom_clip_forward.2} parent=5 // pred_fallthru
      _
    %p586 = scmp.le.s32.totalorder 1, %s27
    %p587 = scmp.lt.s32.totalorder %s27, 3
    %p588 = pnand %p586, %p587
    %p589 = pneg %p588
    // Predicated region
    $region101: #{custom_clip_forward.2} parent=5 // pred_check
      _
    $region102: #{custom_clip_forward.2} parent=5 // pred_check_branch
      %591 = sbr.rel (%p588) target = $region104
    $region103: #{custom_clip_forward.2} parent=5 // pred_region
      %s592 = ssub.s32 %s27, 1
      %p593 = scmp.lt.s32.totalorder %s32, 1
      %s594 = scalar_select %p593, %s32, 1
      %s595 = smul.addr %s594, 2
      %s596 = smul.addr %s595, 8
      %s597 = scalar_lea.vmem %s0, %s596
      %p598 = pneg %p53
      %p599 = pneg %p50
      %p600 = pneg %p74
      %p601 = pneg %p71
      %p602 = pneg %p95
      %p603 = pneg %p92
      %p604 = pneg %p116
      %p605 = pneg %p113
      %p606 = pneg %p137
      %p607 = pneg %p134
      %p608 = pneg %p158
      %p609 = pneg %p155
      %p610 = pneg %p179
      %p611 = pneg %p176
      %p612 = pneg %p200
      %p613 = pneg %p197
      %p614 = pneg %p221
      %p615 = pneg %p218
      %p616 = pneg %p242
      %p617 = pneg %p239
      %p618 = pneg %p263
      %p619 = pneg %p260
      %p620 = pneg %p284
      %p621 = pneg %p281
      %p622 = pneg %p305
      %p623 = pneg %p302
      %p624 = pneg %p326
      %p625 = pneg %p323
      %p626 = pneg %p347
      %p627 = pneg %p344
      %p628 = pneg %p368
      %p629 = pneg %p365
      %p630 = pneg %p389
      %p631 = pneg %p386
      %p632 = pneg %p410
      %p633 = pneg %p407
      %p634 = pneg %p431
      %p635 = pneg %p428
      %p636 = pneg %p452
      %p637 = pneg %p449
      %p638 = pneg %p473
      %p639 = pneg %p470
      %p640 = pneg %p499
      %p641 = pneg %p496
      %p642 = scmp.lt.s32.totalorder %s32, 1
      %s643 = scalar_select %p642, %s32, 1
      %s644 = scalar_lea.vmem %s21, %s643
      %p645 = scmp.lt.s32.totalorder %s32, 1
      %s646 = scalar_select %p645, %s32, 1
      %s647 = smul.addr %s646, 2
      %s648 = smul.addr %s647, 8
      %s649 = scalar_lea.vmem %s0, %s648
      %p650 = scmp.lt.s32.totalorder %s32, 1
      %s651 = scalar_select %p650, %s32, 1
      %s652 = scalar_lea.vmem %s21, %s651
      %v654 = vld [vmem:[%s649] sm:$0xff]
      %v655 = vld [vmem:[%s649 + $0x8] sm:$0xff]
      %v656 = vld [vmem:[%s1] sm:$0xf]
      %v657 = vld [vmem:[%s1 + $0x4] sm:$0xf]
      %v658 = vld [vmem:[%s1 + $0x8] sm:$0xf]
      %v659 = vld [vmem:[%s1 + $0xc] sm:$0xf]
      %v660 = vld [vmem:[%s1 + $0x10] sm:$0xf]
      %v661 = vld [vmem:[%s1 + $0x14] sm:$0xf]
      %v662 = vpack.c.bf16 %v655, %v654
      %v663 = vld [vmem:[%s2] sm:$0x1]
      %v664 = vld [vmem:[%s3] sm:$0xff]
      %v665 = vld [vmem:[%s3 + $0x8] sm:$0xff]
      %v672 = vunpack.c.l.b16 %v656
      %v673 = vunpack.c.l.b16 %v657
      %v674 = vunpack.c.l.b16 %v658
      %v675 = vunpack.c.l.b16 %v659
      %v676 = vunpack.c.l.b16 %v660
      %v677 = vunpack.c.l.b16 %v661
      %v678 = vpack.c.b16 %v673, %v672
      %v679 = vpack.c.b16 %v675, %v674
      %v680 = vpack.c.b16 %v677, %v676
      %vm684 = vcmask 392192
      %v686 = vsel %vm684, %v662, 0
      %688 = vmatprep.subr.bf16.mxu0 0
      %689 = vmatpush1.bf16.msra.mxu0 0
      %690 = vmatprep.subr.bf16.mxu0 0
      %691 = vmatpush1.bf16.msra.mxu0 0
      %692 = vmatprep.subr.bf16.mxu0 0
      %693 = vmatpush1.bf16.msra.mxu0 0
      %694 = vmatprep.subr.bf16.mxu0 0
      %695 = vmatpush1.bf16.msra.mxu0 0
      %696 = vmatprep.subr.bf16.mxu0 0
      %697 = vmatpush1.bf16.msra.mxu0 0
      %698 = vmatprep.subr.bf16.mxu0 0
      %699 = vmatpush1.bf16.msra.mxu0 %v680
      %700 = vmatprep.subr.bf16.mxu0 0
      %701 = vmatpush1.bf16.msra.mxu0 %v679
      %702 = vmatprep.subr.bf16.mxu0 0
      %703 = vmatpush1.bf16.msra.mxu0 %v678
      %704 = vmatprep.subr.bf16.mxu0 0
      %705 = vmatpush2.bf16.msra.mxu0 0
      %706 = vmatprep.subr.bf16.mxu0 0
      %707 = vmatpush2.bf16.msra.mxu0 0
      %708 = vmatprep.subr.bf16.mxu0 0
      %709 = vmatpush2.bf16.msra.mxu0 0
      %710 = vmatprep.subr.bf16.mxu0 0
      %711 = vmatpush2.bf16.msra.mxu0 0
      %712 = vmatprep.subr.bf16.mxu0 0
      %713 = vmatpush2.bf16.msra.mxu0 0
      %714 = vmatprep.subr.bf16.mxu0 0
      %715 = vmatpush2.bf16.msra.mxu0 0
      %716 = vmatprep.subr.bf16.mxu0 0
      %717 = vmatpush2.bf16.msra.mxu0 0
      %718 = vmatprep.subr.bf16.mxu0 0
      %719 = vmatpush2.bf16.msra.mxu0 0
      %720 = vmatprep.mubr.bf16.mxu0 0
      %721 = vmatmul.mubr.bf16.gmra.mxu0 %v686
      %v722 = vpop.f32.mrf.mxu0
      %v723 = vadd.f32 %v664, %v722
      %v724 = vpop.f32.mrf.mxu0
      %v725 = vpop.f32.mrf.mxu0
      %v726 = vadd.f32 %v665, %v725
      %v727 = vpop.f32.mrf.mxu0
      %728 = vdwg.mxu0
      %vm731 = vcmask 1040384
      %v732 = vrot.slane %v723, 7
      %v733 = vrot.slane %v726, 7
      %v734 = vsel %vm731, %v732, %v733
      %v738 = vsel %vm731, %v663, %v732
      %v739 = vld [vmem:[%s4] sm:$0x1]
      %v740 = vld [vmem:[%s5] sm:$0x1]
      %vm741 = vcmask 261120
      %v742 = vsel %vm741, %v738, 0.0
      %743 = vadd.xlane.f32.xlu0 %v742
      %v744 = vpop.xlane.xlu0 %743
      %v745 = vsel %vm741, %v734, 0.0
      %746 = vadd.xlane.f32.xlu0 %v745
      %v747 = vpop.xlane.xlu0 %746
      %vm748 = vcmask 253952
      %v749 = vsel %vm748, %v733, 0.0
      %750 = vadd.xlane.f32.xlu0 %v749
      %v751 = vpop.xlane.xlu0 %750
      %v752 = vrcp.pop 32.0
      %v753 = vmul.f32 %v744, %v752
      %v754 = vmul.f32 %v747, %v752
      %v755 = vmul.f32 %v751, %v752
      %v756 = vsub.f32 %v738, %v753
      %v757 = vsub.f32 %v734, %v754
      %v758 = vsub.f32 %v733, %v755
      %v759 = vmul.f32 %v756, %v756
      %v760 = vmul.f32 %v757, %v757
      %v761 = vmul.f32 %v758, %v758
      %v762 = vsel %vm741, %v759, 0.0
      %763 = vadd.xlane.f32.xlu0 %v762
      %v764 = vpop.xlane.xlu0 %763
      %v765 = vsel %vm741, %v760, 0.0
      %766 = vadd.xlane.f32.xlu0 %v765
      %v767 = vpop.xlane.xlu0 %766
      %v768 = vsel %vm748, %v761, 0.0
      %769 = vadd.xlane.f32.xlu0 %v768
      %v770 = vpop.xlane.xlu0 %769
      %v771 = vmul.f32 %v764, %v752
      %v772 = vmul.f32 %v767, %v752
      %v773 = vmul.f32 %v770, %v752
      %v774 = vadd.f32 %v771, 1e-05
      %v775 = vadd.f32 %v772, 1e-05
      %v776 = vadd.f32 %v773, 1e-05
      %v777 = vrsqrt.pop %v774
      %v778 = vrsqrt.pop %v775
      %v779 = vrsqrt.pop %v776
      %v780 = vmul.f32 %v756, %v777
      %v781 = vmul.f32 %v757, %v778
      %v782 = vmul.f32 %v758, %v779
      %v784 = vlaneseq
      %v785 = vshrl.u32 %v784, 7
      %v786 = vsub.s32 0, %v785
      %v787 = vrot.slane %v739, %v786
      %v789 = vmul.f32 %v780, %v787
      %v790 = vmul.f32 %v781, %v787
      %v791 = vmul.f32 %v782, %v787
      %v793 = vlaneseq
      %v794 = vshrl.u32 %v793, 7
      %v795 = vsub.s32 0, %v794
      %v796 = vrot.slane %v740, %v795
      %v798 = vadd.f32 %v789, %v796
      %v799 = vadd.f32 %v790, %v796
      %v800 = vadd.f32 %v791, %v796
      %v801 = vld [vmem:[%s6] sm:$0x1]
      %v802 = vld [vmem:[%s7] sm:$0x1]
      %v803 = vsel %vm741, %v798, 0.0
      %804 = vadd.xlane.f32.xlu0 %v803
      %v805 = vpop.xlane.xlu0 %804
      %v806 = vsel %vm741, %v799, 0.0
      %807 = vadd.xlane.f32.xlu0 %v806
      %v808 = vpop.xlane.xlu0 %807
      %v809 = vsel %vm748, %v800, 0.0
      %810 = vadd.xlane.f32.xlu0 %v809
      %v811 = vpop.xlane.xlu0 %810
      %v812 = vmul.f32 %v805, %v752
      %v813 = vmul.f32 %v808, %v752
      %v814 = vmul.f32 %v811, %v752
      %v815 = vsub.f32 %v798, %v812
      %v816 = vsub.f32 %v799, %v813
      %v817 = vsub.f32 %v800, %v814
      %v818 = vmul.f32 %v815, %v815
      %v819 = vmul.f32 %v816, %v816
      %v820 = vmul.f32 %v817, %v817
      %v821 = vsel %vm741, %v818, 0.0
      %822 = vadd.xlane.f32.xlu0 %v821
      %v823 = vpop.xlane.xlu0 %822
      %v824 = vsel %vm741, %v819, 0.0
      %825 = vadd.xlane.f32.xlu0 %v824
      %v826 = vpop.xlane.xlu0 %825
      %v827 = vsel %vm748, %v820, 0.0
      %828 = vadd.xlane.f32.xlu0 %v827
      %v829 = vpop.xlane.xlu0 %828
      %v830 = vmul.f32 %v823, %v752
      %v831 = vmul.f32 %v826, %v752
      %v832 = vmul.f32 %v829, %v752
      %v833 = vadd.f32 %v830, 1e-05
      %v834 = vadd.f32 %v831, 1e-05
      %v835 = vadd.f32 %v832, 1e-05
      %v836 = vrsqrt.pop %v833
      %v837 = vrsqrt.pop %v834
      %v838 = vrsqrt.pop %v835
      %v839 = vmul.f32 %v815, %v836
      %v840 = vmul.f32 %v816, %v837
      %v841 = vmul.f32 %v817, %v838
      %v843 = vlaneseq
      %v844 = vshrl.u32 %v843, 7
      %v845 = vsub.s32 0, %v844
      %v846 = vrot.slane %v801, %v845
      %v848 = vmul.f32 %v839, %v846
      %v849 = vmul.f32 %v840, %v846
      %v850 = vmul.f32 %v841, %v846
      %v852 = vlaneseq
      %v853 = vshrl.u32 %v852, 7
      %v854 = vsub.s32 0, %v853
      %v855 = vrot.slane %v802, %v854
      %v857 = vadd.f32 %v848, %v855
      %v858 = vadd.f32 %v849, %v855
      %v859 = vadd.f32 %v850, %v855
      %v860 = vld [vmem:[%s8] sm:$0xf]
      %v861 = vld [vmem:[%s8 + $0x4] sm:$0xf]
      %v862 = vld [vmem:[%s8 + $0x8] sm:$0xf]
      %v863 = vld [vmem:[%s8 + $0xc] sm:$0xf]
      %v864 = vpack.c.bf16 %v858, %v857
      %v865 = vpack.c.bf16 %v859, %v859
      %v866 = vld [vmem:[%s9] sm:$0x1]
      %v868 = vlaneseq
      %v869 = vshrl.u32 %v868, 7
      %v870 = vsub.s32 0, %v869
      %v871 = vrot.slane %v866, %v870
      %v877 = vunpack.c.l.b16 %v860
      %v878 = vunpack.c.l.b16 %v861
      %v879 = vunpack.c.l.b16 %v862
      %v880 = vunpack.c.l.b16 %v863
      %v881 = vpack.c.b16 %v878, %v877
      %v882 = vpack.c.b16 %v880, %v879
      %v886 = vsel %vm741, %v864, 0
      %v889 = vsel %vm741, %v865, 0
      %891 = vmatprep.subr.bf16.mxu0 0
      %892 = vmatpush1.bf16.msra.mxu0 0
      %893 = vmatprep.subr.bf16.mxu0 0
      %894 = vmatpush1.bf16.msra.mxu0 0
      %895 = vmatprep.subr.bf16.mxu0 0
      %896 = vmatpush1.bf16.msra.mxu0 0
      %897 = vmatprep.subr.bf16.mxu0 0
      %898 = vmatpush1.bf16.msra.mxu0 0
      %899 = vmatprep.subr.bf16.mxu0 0
      %900 = vmatpush1.bf16.msra.mxu0 0
      %901 = vmatprep.subr.bf16.mxu0 0
      %902 = vmatpush1.bf16.msra.mxu0 0
      %903 = vmatprep.subr.bf16.mxu0 0
      %904 = vmatpush1.bf16.msra.mxu0 %v882
      %905 = vmatprep.subr.bf16.mxu0 0
      %906 = vmatpush1.bf16.msra.mxu0 %v881
      %907 = vmatprep.subr.bf16.mxu0 0
      %908 = vmatpush2.bf16.msra.mxu0 0
      %909 = vmatprep.subr.bf16.mxu0 0
      %910 = vmatpush2.bf16.msra.mxu0 0
      %911 = vmatprep.subr.bf16.mxu0 0
      %912 = vmatpush2.bf16.msra.mxu0 0
      %913 = vmatprep.subr.bf16.mxu0 0
      %914 = vmatpush2.bf16.msra.mxu0 0
      %915 = vmatprep.subr.bf16.mxu0 0
      %916 = vmatpush2.bf16.msra.mxu0 0
      %917 = vmatprep.subr.bf16.mxu0 0
      %918 = vmatpush2.bf16.msra.mxu0 0
      %919 = vmatprep.subr.bf16.mxu0 0
      %920 = vmatpush2.bf16.msra.mxu0 0
      %921 = vmatprep.subr.bf16.mxu0 0
      %922 = vmatpush2.bf16.msra.mxu0 0
      %923 = vmatprep.mubr.bf16.mxu0 0
      %924 = vmatmul.mubr.bf16.gmra.mxu0 %v886
      %v925 = vpop.f32.mrf.mxu0
      %v926 = vadd.f32 %v871, %v925
      %v927 = vpop.f32.mrf.mxu0
      %v928 = vpop.f32.mrf.mxu0
      %v929 = vadd.f32 %v871, %v928
      %v930 = vpop.f32.mrf.mxu0
      %931 = vmatprep.mubr.bf16.mxu0 0
      %932 = vmatmul.mubr.bf16.gmra.mxu0 %v889
      %v933 = vpop.f32.mrf.mxu0
      %v934 = vadd.f32 %v871, %v933
      %v935 = vpop.f32.mrf.mxu0
      %v936 = vpop.f32.mrf.mxu0
      %v937 = vpop.f32.mrf.mxu0
      %938 = vdwg.mxu0
      %s939 = scalar_lea.vmem %s8, 32
      %v940 = vld [vmem:[%s939] sm:$0xf]
      %v941 = vld [vmem:[%s939 + $0x4] sm:$0xf]
      %v942 = vld [vmem:[%s939 + $0x8] sm:$0xf]
      %v943 = vld [vmem:[%s939 + $0xc] sm:$0xf]
      %s944 = scalar_lea.vmem %s9, 2
      %v945 = vld [vmem:[%s944] sm:$0x1]
      %v947 = vlaneseq
      %v948 = vshrl.u32 %v947, 7
      %v949 = vsub.s32 0, %v948
      %v950 = vrot.slane %v945, %v949
      %v956 = vunpack.c.l.b16 %v940
      %v957 = vunpack.c.l.b16 %v941
      %v958 = vunpack.c.l.b16 %v942
      %v959 = vunpack.c.l.b16 %v943
      %v960 = vpack.c.b16 %v957, %v956
      %v961 = vpack.c.b16 %v959, %v958
      %964 = vmatprep.subr.bf16.mxu0 0
      %965 = vmatpush1.bf16.msra.mxu0 0
      %966 = vmatprep.subr.bf16.mxu0 0
      %967 = vmatpush1.bf16.msra.mxu0 0
      %968 = vmatprep.subr.bf16.mxu0 0
      %969 = vmatpush1.bf16.msra.mxu0 0
      %970 = vmatprep.subr.bf16.mxu0 0
      %971 = vmatpush1.bf16.msra.mxu0 0
      %972 = vmatprep.subr.bf16.mxu0 0
      %973 = vmatpush1.bf16.msra.mxu0 0
      %974 = vmatprep.subr.bf16.mxu0 0
      %975 = vmatpush1.bf16.msra.mxu0 0
      %976 = vmatprep.subr.bf16.mxu0 0
      %977 = vmatpush1.bf16.msra.mxu0 %v961
      %978 = vmatprep.subr.bf16.mxu0 0
      %979 = vmatpush1.bf16.msra.mxu0 %v960
      %980 = vmatprep.subr.bf16.mxu0 0
      %981 = vmatpush2.bf16.msra.mxu0 0
      %982 = vmatprep.subr.bf16.mxu0 0
      %983 = vmatpush2.bf16.msra.mxu0 0
      %984 = vmatprep.subr.bf16.mxu0 0
      %985 = vmatpush2.bf16.msra.mxu0 0
      %986 = vmatprep.subr.bf16.mxu0 0
      %987 = vmatpush2.bf16.msra.mxu0 0
      %988 = vmatprep.subr.bf16.mxu0 0
      %989 = vmatpush2.bf16.msra.mxu0 0
      %990 = vmatprep.subr.bf16.mxu0 0
      %991 = vmatpush2.bf16.msra.mxu0 0
      %992 = vmatprep.subr.bf16.mxu0 0
      %993 = vmatpush2.bf16.msra.mxu0 0
      %994 = vmatprep.subr.bf16.mxu0 0
      %995 = vmatpush2.bf16.msra.mxu0 0
      %996 = vmatprep.mubr.bf16.mxu0 0
      %997 = vmatmul.mubr.bf16.gmra.mxu0 %v886
      %v998 = vpop.f32.mrf.mxu0
      %v999 = vadd.f32 %v950, %v998
      %v1000 = vpop.f32.mrf.mxu0
      %v1001 = vpop.f32.mrf.mxu0
      %v1002 = vadd.f32 %v950, %v1001
      %v1003 = vpop.f32.mrf.mxu0
      %1004 = vmatprep.mubr.bf16.mxu0 0
      %1005 = vmatmul.mubr.bf16.gmra.mxu0 %v889
      %v1006 = vpop.f32.mrf.mxu0
      %v1007 = vadd.f32 %v950, %v1006
      %v1008 = vpop.f32.mrf.mxu0
      %v1009 = vpop.f32.mrf.mxu0
      %v1010 = vpop.f32.mrf.mxu0
      %1011 = vdwg.mxu0
      %s1012 = scalar_lea.vmem %s8, 64
      %v1013 = vld [vmem:[%s1012] sm:$0xf]
      %v1014 = vld [vmem:[%s1012 + $0x4] sm:$0xf]
      %v1015 = vld [vmem:[%s1012 + $0x8] sm:$0xf]
      %v1016 = vld [vmem:[%s1012 + $0xc] sm:$0xf]
      %s1017 = scalar_lea.vmem %s9, 4
      %v1018 = vld [vmem:[%s1017] sm:$0x1]
      %v1020 = vlaneseq
      %v1021 = vshrl.u32 %v1020, 7
      %v1022 = vsub.s32 0, %v1021
      %v1023 = vrot.slane %v1018, %v1022
      %v1029 = vunpack.c.l.b16 %v1013
      %v1030 = vunpack.c.l.b16 %v1014
      %v1031 = vunpack.c.l.b16 %v1015
      %v1032 = vunpack.c.l.b16 %v1016
      %v1033 = vpack.c.b16 %v1030, %v1029
      %v1034 = vpack.c.b16 %v1032, %v1031
      %1037 = vmatprep.subr.bf16.mxu0 0
      %1038 = vmatpush1.bf16.msra.mxu0 0
      %1039 = vmatprep.subr.bf16.mxu0 0
      %1040 = vmatpush1.bf16.msra.mxu0 0
      %1041 = vmatprep.subr.bf16.mxu0 0
      %1042 = vmatpush1.bf16.msra.mxu0 0
      %1043 = vmatprep.subr.bf16.mxu0 0
      %1044 = vmatpush1.bf16.msra.mxu0 0
      %1045 = vmatprep.subr.bf16.mxu0 0
      %1046 = vmatpush1.bf16.msra.mxu0 0
      %1047 = vmatprep.subr.bf16.mxu0 0
      %1048 = vmatpush1.bf16.msra.mxu0 0
      %1049 = vmatprep.subr.bf16.mxu0 0
      %1050 = vmatpush1.bf16.msra.mxu0 %v1034
      %1051 = vmatprep.subr.bf16.mxu0 0
      %1052 = vmatpush1.bf16.msra.mxu0 %v1033
      %1053 = vmatprep.subr.bf16.mxu0 0
      %1054 = vmatpush2.bf16.msra.mxu0 0
      %1055 = vmatprep.subr.bf16.mxu0 0
      %1056 = vmatpush2.bf16.msra.mxu0 0
      %1057 = vmatprep.subr.bf16.mxu0 0
      %1058 = vmatpush2.bf16.msra.mxu0 0
      %1059 = vmatprep.subr.bf16.mxu0 0
      %1060 = vmatpush2.bf16.msra.mxu0 0
      %1061 = vmatprep.subr.bf16.mxu0 0
      %1062 = vmatpush2.bf16.msra.mxu0 0
      %1063 = vmatprep.subr.bf16.mxu0 0
      %1064 = vmatpush2.bf16.msra.mxu0 0
      %1065 = vmatprep.subr.bf16.mxu0 0
      %1066 = vmatpush2.bf16.msra.mxu0 0
      %1067 = vmatprep.subr.bf16.mxu0 0
      %1068 = vmatpush2.bf16.msra.mxu0 0
      %1069 = vmatprep.mubr.bf16.mxu0 0
      %1070 = vmatmul.mubr.bf16.gmra.mxu0 %v886
      %v1071 = vpop.f32.mrf.mxu0
      %v1072 = vadd.f32 %v1023, %v1071
      %v1073 = vpop.f32.mrf.mxu0
      %v1074 = vpop.f32.mrf.mxu0
      %v1075 = vadd.f32 %v1023, %v1074
      %v1076 = vpop.f32.mrf.mxu0
      %1077 = vmatprep.mubr.bf16.mxu0 0
      %1078 = vmatmul.mubr.bf16.gmra.mxu0 %v889
      %v1079 = vpop.f32.mrf.mxu0
      %v1080 = vadd.f32 %v1023, %v1079
      %v1081 = vpop.f32.mrf.mxu0
      %v1082 = vpop.f32.mrf.mxu0
      %v1083 = vpop.f32.mrf.mxu0
      %1084 = vdwg.mxu0
      %v1085 = vpack.c.bf16 %v929, %v926
      %v1086 = vpack.c.bf16 %v934, %v934
      %v1087 = vpack.c.bf16 %v1002, %v999
      %v1088 = vpack.c.bf16 %v1007, %v1007
      %vm1089 = vcmask 130048
      %v1091 = vsel %vm1089, %v1085, 0
      %v1094 = vsel %vm1089, %v1086, 0
      %v1097 = vsel %vm1089, %v1087, 0
      %v1100 = vsel %vm1089, %v1088, 0
      %1102 = vmatprep.subr.bf16.mxu0 0
      %1103 = vmatpush1.bf16.xpose.msra.mxu0 0
      %1104 = vmatprep.subr.bf16.mxu0 0
      %1105 = vmatpush1.bf16.xpose.msra.mxu0 0
      %1106 = vmatprep.subr.bf16.mxu0 0
      %1107 = vmatpush1.bf16.xpose.msra.mxu0 0
      %1108 = vmatprep.subr.bf16.mxu0 0
      %1109 = vmatpush1.bf16.xpose.msra.mxu0 0
      %1110 = vmatprep.subr.bf16.mxu0 0
      %1111 = vmatpush1.bf16.xpose.msra.mxu0 0
      %1112 = vmatprep.subr.bf16.mxu0 0
      %1113 = vmatpush1.bf16.xpose.msra.mxu0 0
      %1114 = vmatprep.subr.bf16.mxu0 0
      %1115 = vmatpush1.bf16.xpose.msra.mxu0 %v1100
      %1116 = vmatprep.subr.bf16.mxu0 0
      %1117 = vmatpush1.bf16.xpose.msra.mxu0 %v1097
      %1118 = vmatprep.subr.bf16.mxu0 0
      %1119 = vmatpush2.bf16.xpose.msra.mxu0 0
      %1120 = vmatprep.subr.bf16.mxu0 0
      %1121 = vmatpush2.bf16.xpose.msra.mxu0 0
      %1122 = vmatprep.subr.bf16.mxu0 0
      %1123 = vmatpush2.bf16.xpose.msra.mxu0 0
      %1124 = vmatprep.subr.bf16.mxu0 0
      %1125 = vmatpush2.bf16.xpose.msra.mxu0 0
      %1126 = vmatprep.subr.bf16.mxu0 0
      %1127 = vmatpush2.bf16.xpose.msra.mxu0 0
      %1128 = vmatprep.subr.bf16.mxu0 0
      %1129 = vmatpush2.bf16.xpose.msra.mxu0 0
      %1130 = vmatprep.subr.bf16.mxu0 0
      %1131 = vmatpush2.bf16.xpose.msra.mxu0 0
      %1132 = vmatprep.subr.bf16.mxu0 0
      %1133 = vmatpush2.bf16.xpose.msra.mxu0 0
      %1134 = vmatprep.mubr.bf16.mxu0 0
      %1135 = vmatmul.mubr.bf16.gmra.mxu0 %v1091
      %v1136 = vpop.f32.mrf.mxu0
      %v1137 = vadd.f32 0.0, %v1136
      %v1138 = vpop.f32.mrf.mxu0
      %v1139 = vpop.f32.mrf.mxu0
      %v1140 = vadd.f32 0.0, %v1139
      %v1141 = vpop.f32.mrf.mxu0
      %1142 = vmatprep.mubr.bf16.mxu0 0
      %1143 = vmatmul.mubr.bf16.gmra.mxu0 %v1094
      %v1144 = vpop.f32.mrf.mxu0
      %v1145 = vadd.f32 0.0, %v1144
      %v1146 = vpop.f32.mrf.mxu0
      %v1147 = vpop.f32.mrf.mxu0
      %v1148 = vpop.f32.mrf.mxu0
      %1149 = vdwg.mxu0
      %v1150 = vmul.f32 %v1137, 0.25
      %v1151 = vmul.f32 %v1140, 0.25
      %v1152 = vmul.f32 %v1145, 0.25
      %vm1153 = vcmask 138240
      %v1154 = vsel %vm1153, %v1150, -inf
      %1155 = vmax.xlane.f32.xlu0 %v1154
      %v1156 = vpop.xlane.xlu0 %1155
      %v1157 = vsel %vm1153, %v1151, -inf
      %1158 = vmax.xlane.f32.xlu0 %v1157
      %v1159 = vpop.xlane.xlu0 %1158
      %vm1160 = vcmask 131072
      %v1161 = vsel %vm1160, %v1152, -inf
      %1162 = vmax.xlane.f32.xlu0 %v1161
      %v1163 = vpop.xlane.xlu0 %1162
      %v1164 = vsub.f32 %v1150, %v1156
      %v1165 = vsub.f32 %v1151, %v1159
      %v1166 = vsub.f32 %v1152, %v1163
      %v1167 = vmul.f32 %v1164, 1.442695
      %v1168 = vpow.pop %v1167
      %v1169 = vmul.f32 %v1165, 1.442695
      %v1170 = vpow.pop %v1169
      %v1171 = vmul.f32 %v1166, 1.442695
      %v1172 = vpow.pop %v1171
      %v1173 = vsel %vm1153, %v1168, 0.0
      %1174 = vadd.xlane.f32.xlu0 %v1173
      %v1175 = vpop.xlane.xlu0 %1174
      %v1176 = vsel %vm1153, %v1170, 0.0
      %1177 = vadd.xlane.f32.xlu0 %v1176
      %v1178 = vpop.xlane.xlu0 %1177
      %v1179 = vsel %vm1160, %v1172, 0.0
      %1180 = vadd.xlane.f32.xlu0 %v1179
      %v1181 = vpop.xlane.xlu0 %1180
      %v1182 = vrcp.pop %v1175
      %v1183 = vrcp.pop %v1178
      %v1184 = vrcp.pop %v1181
      %v1185 = vmul.f32 %v1168, %v1182
      %v1186 = vmul.f32 %v1170, %v1183
      %v1187 = vmul.f32 %v1172, %v1184
      %v1188 = vpack.c.bf16 %v1186, %v1185
      %v1189 = vpack.c.bf16 %v1187, %v1187
      %v1190 = vpack.c.bf16 %v1075, %v1072
      %v1191 = vpack.c.bf16 %v1080, %v1080
      %v1193 = vsel %vm1153, %v1188, 0
      %v1196 = vsel %vm1153, %v1189, 0
      %v1198 = vsel 0, 4294967295, 65535
      %v1199 = vsel %vm731, %v1198, 0
      %v1201 = vand.u32 %v1191, %v1199
      %1203 = vmatprep.subr.bf16.mxu0 0
      %1204 = vmatpush1.bf16.msra.mxu0 0
      %1205 = vmatprep.subr.bf16.mxu0 0
      %1206 = vmatpush1.bf16.msra.mxu0 0
      %1207 = vmatprep.subr.bf16.mxu0 0
      %1208 = vmatpush1.bf16.msra.mxu0 0
      %1209 = vmatprep.subr.bf16.mxu0 0
      %1210 = vmatpush1.bf16.msra.mxu0 0
      %1211 = vmatprep.subr.bf16.mxu0 0
      %1212 = vmatpush1.bf16.msra.mxu0 0
      %1213 = vmatprep.subr.bf16.mxu0 0
      %1214 = vmatpush1.bf16.msra.mxu0 0
      %1215 = vmatprep.subr.bf16.mxu0 0
      %1216 = vmatpush1.bf16.msra.mxu0 %v1201
      %1217 = vmatprep.subr.bf16.mxu0 0
      %1218 = vmatpush1.bf16.msra.mxu0 %v1190
      %1219 = vmatprep.subr.bf16.mxu0 0
      %1220 = vmatpush2.bf16.msra.mxu0 0
      %1221 = vmatprep.subr.bf16.mxu0 0
      %1222 = vmatpush2.bf16.msra.mxu0 0
      %1223 = vmatprep.subr.bf16.mxu0 0
      %1224 = vmatpush2.bf16.msra.mxu0 0
      %1225 = vmatprep.subr.bf16.mxu0 0
      %1226 = vmatpush2.bf16.msra.mxu0 0
      %1227 = vmatprep.subr.bf16.mxu0 0
      %1228 = vmatpush2.bf16.msra.mxu0 0
      %1229 = vmatprep.subr.bf16.mxu0 0
      %1230 = vmatpush2.bf16.msra.mxu0 0
      %1231 = vmatprep.subr.bf16.mxu0 0
      %1232 = vmatpush2.bf16.msra.mxu0 0
      %1233 = vmatprep.subr.bf16.mxu0 0
      %1234 = vmatpush2.bf16.msra.mxu0 0
      %1235 = vmatprep.mubr.bf16.mxu0 0
      %1236 = vmatmul.mubr.bf16.gmra.mxu0 %v1193
      %v1237 = vpop.f32.mrf.mxu0
      %v1238 = vadd.f32 0.0, %v1237
      %v1239 = vpop.f32.mrf.mxu0
      %v1240 = vpop.f32.mrf.mxu0
      %v1241 = vadd.f32 0.0, %v1240
      %v1242 = vpop.f32.mrf.mxu0
      %1243 = vmatprep.mubr.bf16.mxu0 0
      %1244 = vmatmul.mubr.bf16.gmra.mxu0 %v1196
      %v1245 = vpop.f32.mrf.mxu0
      %v1246 = vadd.f32 0.0, %v1245
      %v1247 = vpop.f32.mrf.mxu0
      %v1248 = vpop.f32.mrf.mxu0
      %v1249 = vpop.f32.mrf.mxu0
      %1250 = vdwg.mxu0
      %v1251 = vld [vmem:[%s10] sm:$0xf]
      %v1252 = vld [vmem:[%s10 + $0x4] sm:$0xf]
      %v1253 = vpack.c.bf16 %v1241, %v1238
      %v1254 = vpack.c.bf16 %v1246, %v1246
      %v1257 = vunpack.c.l.b16 %v1251
      %v1258 = vunpack.c.l.b16 %v1252
      %v1259 = vpack.c.b16 %v1258, %v1257
      %v1262 = vsel %vm1089, %v1253, 0
      %v1265 = vsel %vm1089, %v1254, 0
      %1267 = vmatprep.subr.bf16.mxu0 0
      %1268 = vmatpush1.bf16.msra.mxu0 0
      %1269 = vmatprep.subr.bf16.mxu0 0
      %1270 = vmatpush1.bf16.msra.mxu0 0
      %1271 = vmatprep.subr.bf16.mxu0 0
      %1272 = vmatpush1.bf16.msra.mxu0 0
      %1273 = vmatprep.subr.bf16.mxu0 0
      %1274 = vmatpush1.bf16.msra.mxu0 0
      %1275 = vmatprep.subr.bf16.mxu0 0
      %1276 = vmatpush1.bf16.msra.mxu0 0
      %1277 = vmatprep.subr.bf16.mxu0 0
      %1278 = vmatpush1.bf16.msra.mxu0 0
      %1279 = vmatprep.subr.bf16.mxu0 0
      %1280 = vmatpush1.bf16.msra.mxu0 0
      %1281 = vmatprep.subr.bf16.mxu0 0
      %1282 = vmatpush1.bf16.msra.mxu0 %v1259
      %1283 = vmatprep.subr.bf16.mxu0 0
      %1284 = vmatpush2.bf16.msra.mxu0 0
      %1285 = vmatprep.subr.bf16.mxu0 0
      %1286 = vmatpush2.bf16.msra.mxu0 0
      %1287 = vmatprep.subr.bf16.mxu0 0
      %1288 = vmatpush2.bf16.msra.mxu0 0
      %1289 = vmatprep.subr.bf16.mxu0 0
      %1290 = vmatpush2.bf16.msra.mxu0 0
      %1291 = vmatprep.subr.bf16.mxu0 0
      %1292 = vmatpush2.bf16.msra.mxu0 0
      %1293 = vmatprep.subr.bf16.mxu0 0
      %1294 = vmatpush2.bf16.msra.mxu0 0
      %1295 = vmatprep.subr.bf16.mxu0 0
      %1296 = vmatpush2.bf16.msra.mxu0 0
      %1297 = vmatprep.subr.bf16.mxu0 0
      %1298 = vmatpush2.bf16.msra.mxu0 0
      %1299 = vmatprep.mubr.bf16.mxu0 0
      %1300 = vmatmul.mubr.bf16.gmra.mxu0 %v1262
      %v1301 = vpop.f32.mrf.mxu0
      %v1302 = vadd.f32 0.0, %v1301
      %v1303 = vpop.f32.mrf.mxu0
      %v1304 = vpop.f32.mrf.mxu0
      %v1305 = vadd.f32 0.0, %v1304
      %v1306 = vpop.f32.mrf.mxu0
      %1307 = vmatprep.mubr.bf16.mxu0 0
      %1308 = vmatmul.mubr.bf16.gmra.mxu0 %v1265
      %v1309 = vpop.f32.mrf.mxu0
      %v1310 = vadd.f32 0.0, %v1309
      %v1311 = vpop.f32.mrf.mxu0
      %v1312 = vpop.f32.mrf.mxu0
      %v1313 = vpop.f32.mrf.mxu0
      %1314 = vdwg.mxu0
      %v1315 = vadd.f32 %v798, %v1302
      %v1316 = vadd.f32 %v799, %v1305
      %v1317 = vadd.f32 %v800, %v1310
      %s1318 = scalar_lea.vmem %s8, 16
      %v1319 = vld [vmem:[%s1318] sm:$0xf]
      %v1320 = vld [vmem:[%s1318 + $0x4] sm:$0xf]
      %v1321 = vld [vmem:[%s1318 + $0x8] sm:$0xf]
      %v1322 = vld [vmem:[%s1318 + $0xc] sm:$0xf]
      %s1323 = scalar_lea.vmem %s9, 1
      %v1324 = vld [vmem:[%s1323] sm:$0x1]
      %v1326 = vlaneseq
      %v1327 = vshrl.u32 %v1326, 7
      %v1328 = vsub.s32 0, %v1327
      %v1329 = vrot.slane %v1324, %v1328
      %v1335 = vunpack.c.l.b16 %v1319
      %v1336 = vunpack.c.l.b16 %v1320
      %v1337 = vunpack.c.l.b16 %v1321
      %v1338 = vunpack.c.l.b16 %v1322
      %v1339 = vpack.c.b16 %v1336, %v1335
      %v1340 = vpack.c.b16 %v1338, %v1337
      %1343 = vmatprep.subr.bf16.mxu0 0
      %1344 = vmatpush1.bf16.msra.mxu0 0
      %1345 = vmatprep.subr.bf16.mxu0 0
      %1346 = vmatpush1.bf16.msra.mxu0 0
      %1347 = vmatprep.subr.bf16.mxu0 0
      %1348 = vmatpush1.bf16.msra.mxu0 0
      %1349 = vmatprep.subr.bf16.mxu0 0
      %1350 = vmatpush1.bf16.msra.mxu0 0
      %1351 = vmatprep.subr.bf16.mxu0 0
      %1352 = vmatpush1.bf16.msra.mxu0 0
      %1353 = vmatprep.subr.bf16.mxu0 0
      %1354 = vmatpush1.bf16.msra.mxu0 0
      %1355 = vmatprep.subr.bf16.mxu0 0
      %1356 = vmatpush1.bf16.msra.mxu0 %v1340
      %1357 = vmatprep.subr.bf16.mxu0 0
      %1358 = vmatpush1.bf16.msra.mxu0 %v1339
      %1359 = vmatprep.subr.bf16.mxu0 0
      %1360 = vmatpush2.bf16.msra.mxu0 0
      %1361 = vmatprep.subr.bf16.mxu0 0
      %1362 = vmatpush2.bf16.msra.mxu0 0
      %1363 = vmatprep.subr.bf16.mxu0 0
      %1364 = vmatpush2.bf16.msra.mxu0 0
      %1365 = vmatprep.subr.bf16.mxu0 0
      %1366 = vmatpush2.bf16.msra.mxu0 0
      %1367 = vmatprep.subr.bf16.mxu0 0
      %1368 = vmatpush2.bf16.msra.mxu0 0
      %1369 = vmatprep.subr.bf16.mxu0 0
      %1370 = vmatpush2.bf16.msra.mxu0 0
      %1371 = vmatprep.subr.bf16.mxu0 0
      %1372 = vmatpush2.bf16.msra.mxu0 0
      %1373 = vmatprep.subr.bf16.mxu0 0
      %1374 = vmatpush2.bf16.msra.mxu0 0
      %1375 = vmatprep.mubr.bf16.mxu0 0
      %1376 = vmatmul.mubr.bf16.gmra.mxu0 %v886
      %v1377 = vpop.f32.mrf.mxu0
      %v1378 = vadd.f32 %v1329, %v1377
      %v1379 = vpop.f32.mrf.mxu0
      %v1380 = vpop.f32.mrf.mxu0
      %v1381 = vadd.f32 %v1329, %v1380
      %v1382 = vpop.f32.mrf.mxu0
      %1383 = vmatprep.mubr.bf16.mxu0 0
      %1384 = vmatmul.mubr.bf16.gmra.mxu0 %v889
      %v1385 = vpop.f32.mrf.mxu0
      %v1386 = vadd.f32 %v1329, %v1385
      %v1387 = vpop.f32.mrf.mxu0
      %v1388 = vpop.f32.mrf.mxu0
      %v1389 = vpop.f32.mrf.mxu0
      %1390 = vdwg.mxu0
      %s1391 = scalar_lea.vmem %s8, 48
      %v1392 = vld [vmem:[%s1391] sm:$0xf]
      %v1393 = vld [vmem:[%s1391 + $0x4] sm:$0xf]
      %v1394 = vld [vmem:[%s1391 + $0x8] sm:$0xf]
      %v1395 = vld [vmem:[%s1391 + $0xc] sm:$0xf]
      %s1396 = scalar_lea.vmem %s9, 3
      %v1397 = vld [vmem:[%s1396] sm:$0x1]
      %v1399 = vlaneseq
      %v1400 = vshrl.u32 %v1399, 7
      %v1401 = vsub.s32 0, %v1400
      %v1402 = vrot.slane %v1397, %v1401
      %v1408 = vunpack.c.l.b16 %v1392
      %v1409 = vunpack.c.l.b16 %v1393
      %v1410 = vunpack.c.l.b16 %v1394
      %v1411 = vunpack.c.l.b16 %v1395
      %v1412 = vpack.c.b16 %v1409, %v1408
      %v1413 = vpack.c.b16 %v1411, %v1410
      %1416 = vmatprep.subr.bf16.mxu0 0
      %1417 = vmatpush1.bf16.msra.mxu0 0
      %1418 = vmatprep.subr.bf16.mxu0 0
      %1419 = vmatpush1.bf16.msra.mxu0 0
      %1420 = vmatprep.subr.bf16.mxu0 0
      %1421 = vmatpush1.bf16.msra.mxu0 0
      %1422 = vmatprep.subr.bf16.mxu0 0
      %1423 = vmatpush1.bf16.msra.mxu0 0
      %1424 = vmatprep.subr.bf16.mxu0 0
      %1425 = vmatpush1.bf16.msra.mxu0 0
      %1426 = vmatprep.subr.bf16.mxu0 0
      %1427 = vmatpush1.bf16.msra.mxu0 0
      %1428 = vmatprep.subr.bf16.mxu0 0
      %1429 = vmatpush1.bf16.msra.mxu0 %v1413
      %1430 = vmatprep.subr.bf16.mxu0 0
      %1431 = vmatpush1.bf16.msra.mxu0 %v1412
      %1432 = vmatprep.subr.bf16.mxu0 0
      %1433 = vmatpush2.bf16.msra.mxu0 0
      %1434 = vmatprep.subr.bf16.mxu0 0
      %1435 = vmatpush2.bf16.msra.mxu0 0
      %1436 = vmatprep.subr.bf16.mxu0 0
      %1437 = vmatpush2.bf16.msra.mxu0 0
      %1438 = vmatprep.subr.bf16.mxu0 0
      %1439 = vmatpush2.bf16.msra.mxu0 0
      %1440 = vmatprep.subr.bf16.mxu0 0
      %1441 = vmatpush2.bf16.msra.mxu0 0
      %1442 = vmatprep.subr.bf16.mxu0 0
      %1443 = vmatpush2.bf16.msra.mxu0 0
      %1444 = vmatprep.subr.bf16.mxu0 0
      %1445 = vmatpush2.bf16.msra.mxu0 0
      %1446 = vmatprep.subr.bf16.mxu0 0
      %1447 = vmatpush2.bf16.msra.mxu0 0
      %1448 = vmatprep.mubr.bf16.mxu0 0
      %1449 = vmatmul.mubr.bf16.gmra.mxu0 %v886
      %v1450 = vpop.f32.mrf.mxu0
      %v1451 = vadd.f32 %v1402, %v1450
      %v1452 = vpop.f32.mrf.mxu0
      %v1453 = vpop.f32.mrf.mxu0
      %v1454 = vadd.f32 %v1402, %v1453
      %v1455 = vpop.f32.mrf.mxu0
      %1456 = vmatprep.mubr.bf16.mxu0 0
      %1457 = vmatmul.mubr.bf16.gmra.mxu0 %v889
      %v1458 = vpop.f32.mrf.mxu0
      %v1459 = vadd.f32 %v1402, %v1458
      %v1460 = vpop.f32.mrf.mxu0
      %v1461 = vpop.f32.mrf.mxu0
      %v1462 = vpop.f32.mrf.mxu0
      %1463 = vdwg.mxu0
      %s1464 = scalar_lea.vmem %s8, 80
      %v1465 = vld [vmem:[%s1464] sm:$0xf]
      %v1466 = vld [vmem:[%s1464 + $0x4] sm:$0xf]
      %v1467 = vld [vmem:[%s1464 + $0x8] sm:$0xf]
      %v1468 = vld [vmem:[%s1464 + $0xc] sm:$0xf]
      %s1469 = scalar_lea.vmem %s9, 5
      %v1470 = vld [vmem:[%s1469] sm:$0x1]
      %v1472 = vlaneseq
      %v1473 = vshrl.u32 %v1472, 7
      %v1474 = vsub.s32 0, %v1473
      %v1475 = vrot.slane %v1470, %v1474
      %v1481 = vunpack.c.l.b16 %v1465
      %v1482 = vunpack.c.l.b16 %v1466
      %v1483 = vunpack.c.l.b16 %v1467
      %v1484 = vunpack.c.l.b16 %v1468
      %v1485 = vpack.c.b16 %v1482, %v1481
      %v1486 = vpack.c.b16 %v1484, %v1483
      %1489 = vmatprep.subr.bf16.mxu0 0
      %1490 = vmatpush1.bf16.msra.mxu0 0
      %1491 = vmatprep.subr.bf16.mxu0 0
      %1492 = vmatpush1.bf16.msra.mxu0 0
      %1493 = vmatprep.subr.bf16.mxu0 0
      %1494 = vmatpush1.bf16.msra.mxu0 0
      %1495 = vmatprep.subr.bf16.mxu0 0
      %1496 = vmatpush1.bf16.msra.mxu0 0
      %1497 = vmatprep.subr.bf16.mxu0 0
      %1498 = vmatpush1.bf16.msra.mxu0 0
      %1499 = vmatprep.subr.bf16.mxu0 0
      %1500 = vmatpush1.bf16.msra.mxu0 0
      %1501 = vmatprep.subr.bf16.mxu0 0
      %1502 = vmatpush1.bf16.msra.mxu0 %v1486
      %1503 = vmatprep.subr.bf16.mxu0 0
      %1504 = vmatpush1.bf16.msra.mxu0 %v1485
      %1505 = vmatprep.subr.bf16.mxu0 0
      %1506 = vmatpush2.bf16.msra.mxu0 0
      %1507 = vmatprep.subr.bf16.mxu0 0
      %1508 = vmatpush2.bf16.msra.mxu0 0
      %1509 = vmatprep.subr.bf16.mxu0 0
      %1510 = vmatpush2.bf16.msra.mxu0 0
      %1511 = vmatprep.subr.bf16.mxu0 0
      %1512 = vmatpush2.bf16.msra.mxu0 0
      %1513 = vmatprep.subr.bf16.mxu0 0
      %1514 = vmatpush2.bf16.msra.mxu0 0
      %1515 = vmatprep.subr.bf16.mxu0 0
      %1516 = vmatpush2.bf16.msra.mxu0 0
      %1517 = vmatprep.subr.bf16.mxu0 0
      %1518 = vmatpush2.bf16.msra.mxu0 0
      %1519 = vmatprep.subr.bf16.mxu0 0
      %1520 = vmatpush2.bf16.msra.mxu0 0
      %1521 = vmatprep.mubr.bf16.mxu0 0
      %1522 = vmatmul.mubr.bf16.gmra.mxu0 %v886
      %v1523 = vpop.f32.mrf.mxu0
      %v1524 = vadd.f32 %v1475, %v1523
      %v1525 = vpop.f32.mrf.mxu0
      %v1526 = vpop.f32.mrf.mxu0
      %v1527 = vadd.f32 %v1475, %v1526
      %v1528 = vpop.f32.mrf.mxu0
      %1529 = vmatprep.mubr.bf16.mxu0 0
      %1530 = vmatmul.mubr.bf16.gmra.mxu0 %v889
      %v1531 = vpop.f32.mrf.mxu0
      %v1532 = vadd.f32 %v1475, %v1531
      %v1533 = vpop.f32.mrf.mxu0
      %v1534 = vpop.f32.mrf.mxu0
      %v1535 = vpop.f32.mrf.mxu0
      %1536 = vdwg.mxu0
      %v1537 = vpack.c.bf16 %v1381, %v1378
      %v1538 = vpack.c.bf16 %v1386, %v1386
      %v1539 = vpack.c.bf16 %v1454, %v1451
      %v1540 = vpack.c.bf16 %v1459, %v1459
      %v1542 = vsel %vm1089, %v1537, 0
      %v1545 = vsel %vm1089, %v1538, 0
      %v1548 = vsel %vm1089, %v1539, 0
      %v1551 = vsel %vm1089, %v1540, 0
      %1553 = vmatprep.subr.bf16.mxu0 0
      %1554 = vmatpush1.bf16.xpose.msra.mxu0 0
      %1555 = vmatprep.subr.bf16.mxu0 0
      %1556 = vmatpush1.bf16.xpose.msra.mxu0 0
      %1557 = vmatprep.subr.bf16.mxu0 0
      %1558 = vmatpush1.bf16.xpose.msra.mxu0 0
      %1559 = vmatprep.subr.bf16.mxu0 0
      %1560 = vmatpush1.bf16.xpose.msra.mxu0 0
      %1561 = vmatprep.subr.bf16.mxu0 0
      %1562 = vmatpush1.bf16.xpose.msra.mxu0 0
      %1563 = vmatprep.subr.bf16.mxu0 0
      %1564 = vmatpush1.bf16.xpose.msra.mxu0 0
      %1565 = vmatprep.subr.bf16.mxu0 0
      %1566 = vmatpush1.bf16.xpose.msra.mxu0 %v1551
      %1567 = vmatprep.subr.bf16.mxu0 0
      %1568 = vmatpush1.bf16.xpose.msra.mxu0 %v1548
      %1569 = vmatprep.subr.bf16.mxu0 0
      %1570 = vmatpush2.bf16.xpose.msra.mxu0 0
      %1571 = vmatprep.subr.bf16.mxu0 0
      %1572 = vmatpush2.bf16.xpose.msra.mxu0 0
      %1573 = vmatprep.subr.bf16.mxu0 0
      %1574 = vmatpush2.bf16.xpose.msra.mxu0 0
      %1575 = vmatprep.subr.bf16.mxu0 0
      %1576 = vmatpush2.bf16.xpose.msra.mxu0 0
      %1577 = vmatprep.subr.bf16.mxu0 0
      %1578 = vmatpush2.bf16.xpose.msra.mxu0 0
      %1579 = vmatprep.subr.bf16.mxu0 0
      %1580 = vmatpush2.bf16.xpose.msra.mxu0 0
      %1581 = vmatprep.subr.bf16.mxu0 0
      %1582 = vmatpush2.bf16.xpose.msra.mxu0 0
      %1583 = vmatprep.subr.bf16.mxu0 0
      %1584 = vmatpush2.bf16.xpose.msra.mxu0 0
      %1585 = vmatprep.mubr.bf16.mxu0 0
      %1586 = vmatmul.mubr.bf16.gmra.mxu0 %v1542
      %v1587 = vpop.f32.mrf.mxu0
      %v1588 = vadd.f32 0.0, %v1587
      %v1589 = vpop.f32.mrf.mxu0
      %v1590 = vpop.f32.mrf.mxu0
      %v1591 = vadd.f32 0.0, %v1590
      %v1592 = vpop.f32.mrf.mxu0
      %1593 = vmatprep.mubr.bf16.mxu0 0
      %1594 = vmatmul.mubr.bf16.gmra.mxu0 %v1545
      %v1595 = vpop.f32.mrf.mxu0
      %v1596 = vadd.f32 0.0, %v1595
      %v1597 = vpop.f32.mrf.mxu0
      %v1598 = vpop.f32.mrf.mxu0
      %v1599 = vpop.f32.mrf.mxu0
      %1600 = vdwg.mxu0
      %v1601 = vmul.f32 %v1588, 0.25
      %v1602 = vmul.f32 %v1591, 0.25
      %v1603 = vmul.f32 %v1596, 0.25
      %v1604 = vsel %vm1153, %v1601, -inf
      %1605 = vmax.xlane.f32.xlu0 %v1604
      %v1606 = vpop.xlane.xlu0 %1605
      %v1607 = vsel %vm1153, %v1602, -inf
      %1608 = vmax.xlane.f32.xlu0 %v1607
      %v1609 = vpop.xlane.xlu0 %1608
      %v1610 = vsel %vm1160, %v1603, -inf
      %1611 = vmax.xlane.f32.xlu0 %v1610
      %v1612 = vpop.xlane.xlu0 %1611
      %v1613 = vsub.f32 %v1601, %v1606
      %v1614 = vsub.f32 %v1602, %v1609
      %v1615 = vsub.f32 %v1603, %v1612
      %v1616 = vmul.f32 %v1613, 1.442695
      %v1617 = vpow.pop %v1616
      %v1618 = vmul.f32 %v1614, 1.442695
      %v1619 = vpow.pop %v1618
      %v1620 = vmul.f32 %v1615, 1.442695
      %v1621 = vpow.pop %v1620
      %v1622 = vsel %vm1153, %v1617, 0.0
      %1623 = vadd.xlane.f32.xlu0 %v1622
      %v1624 = vpop.xlane.xlu0 %1623
      %v1625 = vsel %vm1153, %v1619, 0.0
      %1626 = vadd.xlane.f32.xlu0 %v1625
      %v1627 = vpop.xlane.xlu0 %1626
      %v1628 = vsel %vm1160, %v1621, 0.0
      %1629 = vadd.xlane.f32.xlu0 %v1628
      %v1630 = vpop.xlane.xlu0 %1629
      %v1631 = vrcp.pop %v1624
      %v1632 = vrcp.pop %v1627
      %v1633 = vrcp.pop %v1630
      %v1634 = vmul.f32 %v1617, %v1631
      %v1635 = vmul.f32 %v1619, %v1632
      %v1636 = vmul.f32 %v1621, %v1633
      %v1637 = vpack.c.bf16 %v1635, %v1634
      %v1638 = vpack.c.bf16 %v1636, %v1636
      %v1639 = vpack.c.bf16 %v1527, %v1524
      %v1640 = vpack.c.bf16 %v1532, %v1532
      %v1642 = vsel %vm1153, %v1637, 0
      %v1645 = vsel %vm1153, %v1638, 0
      %v1648 = vand.u32 %v1640, %v1199
      %1650 = vmatprep.subr.bf16.mxu0 0
      %1651 = vmatpush1.bf16.msra.mxu0 0
      %1652 = vmatprep.subr.bf16.mxu0 0
      %1653 = vmatpush1.bf16.msra.mxu0 0
      %1654 = vmatprep.subr.bf16.mxu0 0
      %1655 = vmatpush1.bf16.msra.mxu0 0
      %1656 = vmatprep.subr.bf16.mxu0 0
      %1657 = vmatpush1.bf16.msra.mxu0 0
      %1658 = vmatprep.subr.bf16.mxu0 0
      %1659 = vmatpush1.bf16.msra.mxu0 0
      %1660 = vmatprep.subr.bf16.mxu0 0
      %1661 = vmatpush1.bf16.msra.mxu0 0
      %1662 = vmatprep.subr.bf16.mxu0 0
      %1663 = vmatpush1.bf16.msra.mxu0 %v1648
      %1664 = vmatprep.subr.bf16.mxu0 0
      %1665 = vmatpush1.bf16.msra.mxu0 %v1639
      %1666 = vmatprep.subr.bf16.mxu0 0
      %1667 = vmatpush2.bf16.msra.mxu0 0
      %1668 = vmatprep.subr.bf16.mxu0 0
      %1669 = vmatpush2.bf16.msra.mxu0 0
      %1670 = vmatprep.subr.bf16.mxu0 0
      %1671 = vmatpush2.bf16.msra.mxu0 0
      %1672 = vmatprep.subr.bf16.mxu0 0
      %1673 = vmatpush2.bf16.msra.mxu0 0
      %1674 = vmatprep.subr.bf16.mxu0 0
      %1675 = vmatpush2.bf16.msra.mxu0 0
      %1676 = vmatprep.subr.bf16.mxu0 0
      %1677 = vmatpush2.bf16.msra.mxu0 0
      %1678 = vmatprep.subr.bf16.mxu0 0
      %1679 = vmatpush2.bf16.msra.mxu0 0
      %1680 = vmatprep.subr.bf16.mxu0 0
      %1681 = vmatpush2.bf16.msra.mxu0 0
      %1682 = vmatprep.mubr.bf16.mxu0 0
      %1683 = vmatmul.mubr.bf16.gmra.mxu0 %v1642
      %v1684 = vpop.f32.mrf.mxu0
      %v1685 = vadd.f32 0.0, %v1684
      %v1686 = vpop.f32.mrf.mxu0
      %v1687 = vpop.f32.mrf.mxu0
      %v1688 = vadd.f32 0.0, %v1687
      %v1689 = vpop.f32.mrf.mxu0
      %1690 = vmatprep.mubr.bf16.mxu0 0
      %1691 = vmatmul.mubr.bf16.gmra.mxu0 %v1645
      %v1692 = vpop.f32.mrf.mxu0
      %v1693 = vadd.f32 0.0, %v1692
      %v1694 = vpop.f32.mrf.mxu0
      %v1695 = vpop.f32.mrf.mxu0
      %v1696 = vpop.f32.mrf.mxu0
      %1697 = vdwg.mxu0
      %s1698 = scalar_lea.vmem %s10, 8
      %v1699 = vld [vmem:[%s1698] sm:$0xf]
      %v1700 = vld [vmem:[%s1698 + $0x4] sm:$0xf]
      %v1701 = vpack.c.bf16 %v1688, %v1685
      %v1702 = vpack.c.bf16 %v1693, %v1693
      %v1705 = vunpack.c.l.b16 %v1699
      %v1706 = vunpack.c.l.b16 %v1700
      %v1707 = vpack.c.b16 %v1706, %v1705
      %v1710 = vsel %vm1089, %v1701, 0
      %v1713 = vsel %vm1089, %v1702, 0
      %1715 = vmatprep.subr.bf16.mxu0 0
      %1716 = vmatpush1.bf16.msra.mxu0 0
      %1717 = vmatprep.subr.bf16.mxu0 0
      %1718 = vmatpush1.bf16.msra.mxu0 0
      %1719 = vmatprep.subr.bf16.mxu0 0
      %1720 = vmatpush1.bf16.msra.mxu0 0
      %1721 = vmatprep.subr.bf16.mxu0 0
      %1722 = vmatpush1.bf16.msra.mxu0 0
      %1723 = vmatprep.subr.bf16.mxu0 0
      %1724 = vmatpush1.bf16.msra.mxu0 0
      %1725 = vmatprep.subr.bf16.mxu0 0
      %1726 = vmatpush1.bf16.msra.mxu0 0
      %1727 = vmatprep.subr.bf16.mxu0 0
      %1728 = vmatpush1.bf16.msra.mxu0 0
      %1729 = vmatprep.subr.bf16.mxu0 0
      %1730 = vmatpush1.bf16.msra.mxu0 %v1707
      %1731 = vmatprep.subr.bf16.mxu0 0
      %1732 = vmatpush2.bf16.msra.mxu0 0
      %1733 = vmatprep.subr.bf16.mxu0 0
      %1734 = vmatpush2.bf16.msra.mxu0 0
      %1735 = vmatprep.subr.bf16.mxu0 0
      %1736 = vmatpush2.bf16.msra.mxu0 0
      %1737 = vmatprep.subr.bf16.mxu0 0
      %1738 = vmatpush2.bf16.msra.mxu0 0
      %1739 = vmatprep.subr.bf16.mxu0 0
      %1740 = vmatpush2.bf16.msra.mxu0 0
      %1741 = vmatprep.subr.bf16.mxu0 0
      %1742 = vmatpush2.bf16.msra.mxu0 0
      %1743 = vmatprep.subr.bf16.mxu0 0
      %1744 = vmatpush2.bf16.msra.mxu0 0
      %1745 = vmatprep.subr.bf16.mxu0 0
      %1746 = vmatpush2.bf16.msra.mxu0 0
      %1747 = vmatprep.mubr.bf16.mxu0 0
      %1748 = vmatmul.mubr.bf16.gmra.mxu0 %v1710
      %v1749 = vpop.f32.mrf.mxu0
      %v1750 = vadd.f32 0.0, %v1749
      %v1751 = vpop.f32.mrf.mxu0
      %v1752 = vpop.f32.mrf.mxu0
      %v1753 = vadd.f32 0.0, %v1752
      %v1754 = vpop.f32.mrf.mxu0
      %1755 = vmatprep.mubr.bf16.mxu0 0
      %1756 = vmatmul.mubr.bf16.gmra.mxu0 %v1713
      %v1757 = vpop.f32.mrf.mxu0
      %v1758 = vadd.f32 0.0, %v1757
      %v1759 = vpop.f32.mrf.mxu0
      %v1760 = vpop.f32.mrf.mxu0
      %v1761 = vpop.f32.mrf.mxu0
      %1762 = vdwg.mxu0
      %v1763 = vadd.f32 %v1315, %v1750
      %v1764 = vadd.f32 %v1316, %v1753
      %v1765 = vadd.f32 %v1317, %v1758
      %v1766 = vld [vmem:[%s11] sm:$0x1]
      %v1768 = vlaneseq
      %v1769 = vshrl.u32 %v1768, 7
      %v1770 = vsub.s32 0, %v1769
      %v1771 = vrot.slane %v1766, %v1770
      %v1773 = vadd.f32 %v1763, %v1771
      %v1774 = vadd.f32 %v1764, %v1771
      %v1775 = vadd.f32 %v1765, %v1771
      %v1776 = vld [vmem:[%s12] sm:$0x1]
      %v1777 = vld [vmem:[%s13] sm:$0x1]
      %v1778 = vsel %vm741, %v1773, 0.0
      %1779 = vadd.xlane.f32.xlu0 %v1778
      %v1780 = vpop.xlane.xlu0 %1779
      %v1781 = vsel %vm741, %v1774, 0.0
      %1782 = vadd.xlane.f32.xlu0 %v1781
      %v1783 = vpop.xlane.xlu0 %1782
      %v1784 = vsel %vm748, %v1775, 0.0
      %1785 = vadd.xlane.f32.xlu0 %v1784
      %v1786 = vpop.xlane.xlu0 %1785
      %v1787 = vmul.f32 %v1780, %v752
      %v1788 = vmul.f32 %v1783, %v752
      %v1789 = vmul.f32 %v1786, %v752
      %v1790 = vsub.f32 %v1773, %v1787
      %v1791 = vsub.f32 %v1774, %v1788
      %v1792 = vsub.f32 %v1775, %v1789
      %v1793 = vmul.f32 %v1790, %v1790
      %v1794 = vmul.f32 %v1791, %v1791
      %v1795 = vmul.f32 %v1792, %v1792
      %v1796 = vsel %vm741, %v1793, 0.0
      %1797 = vadd.xlane.f32.xlu0 %v1796
      %v1798 = vpop.xlane.xlu0 %1797
      %v1799 = vsel %vm741, %v1794, 0.0
      %1800 = vadd.xlane.f32.xlu0 %v1799
      %v1801 = vpop.xlane.xlu0 %1800
      %v1802 = vsel %vm748, %v1795, 0.0
      %1803 = vadd.xlane.f32.xlu0 %v1802
      %v1804 = vpop.xlane.xlu0 %1803
      %v1805 = vmul.f32 %v1798, %v752
      %v1806 = vmul.f32 %v1801, %v752
      %v1807 = vmul.f32 %v1804, %v752
      %v1808 = vadd.f32 %v1805, 1e-05
      %v1809 = vadd.f32 %v1806, 1e-05
      %v1810 = vadd.f32 %v1807, 1e-05
      %v1811 = vrsqrt.pop %v1808
      %v1812 = vrsqrt.pop %v1809
      %v1813 = vrsqrt.pop %v1810
      %v1814 = vmul.f32 %v1790, %v1811
      %v1815 = vmul.f32 %v1791, %v1812
      %v1816 = vmul.f32 %v1792, %v1813
      %v1818 = vlaneseq
      %v1819 = vshrl.u32 %v1818, 7
      %v1820 = vsub.s32 0, %v1819
      %v1821 = vrot.slane %v1776, %v1820
      %v1823 = vmul.f32 %v1814, %v1821
      %v1824 = vmul.f32 %v1815, %v1821
      %v1825 = vmul.f32 %v1816, %v1821
      %v1827 = vlaneseq
      %v1828 = vshrl.u32 %v1827, 7
      %v1829 = vsub.s32 0, %v1828
      %v1830 = vrot.slane %v1777, %v1829
      %v1832 = vadd.f32 %v1823, %v1830
      %v1833 = vadd.f32 %v1824, %v1830
      %v1834 = vadd.f32 %v1825, %v1830
      %v1835 = vld [vmem:[%s14] sm:$0xf]
      %v1836 = vld [vmem:[%s14 + $0x4] sm:$0xf]
      %v1837 = vld [vmem:[%s14 + $0x8] sm:$0xf]
      %v1838 = vld [vmem:[%s14 + $0xc] sm:$0xf]
      %v1839 = vpack.c.bf16 %v1833, %v1832
      %v1840 = vpack.c.bf16 %v1834, %v1834
      %v1841 = vld [vmem:[%s15] sm:$0x1]
      %v1843 = vlaneseq
      %v1844 = vshrl.u32 %v1843, 7
      %v1845 = vsub.s32 0, %v1844
      %v1846 = vrot.slane %v1841, %v1845
      %v1852 = vunpack.c.l.b16 %v1835
      %v1853 = vunpack.c.l.b16 %v1836
      %v1854 = vunpack.c.l.b16 %v1837
      %v1855 = vunpack.c.l.b16 %v1838
      %v1856 = vpack.c.b16 %v1853, %v1852
      %v1857 = vpack.c.b16 %v1855, %v1854
      %v1861 = vsel %vm741, %v1839, 0
      %v1864 = vsel %vm741, %v1840, 0
      %1866 = vmatprep.subr.bf16.mxu0 0
      %1867 = vmatpush1.bf16.msra.mxu0 0
      %1868 = vmatprep.subr.bf16.mxu0 0
      %1869 = vmatpush1.bf16.msra.mxu0 0
      %1870 = vmatprep.subr.bf16.mxu0 0
      %1871 = vmatpush1.bf16.msra.mxu0 0
      %1872 = vmatprep.subr.bf16.mxu0 0
      %1873 = vmatpush1.bf16.msra.mxu0 0
      %1874 = vmatprep.subr.bf16.mxu0 0
      %1875 = vmatpush1.bf16.msra.mxu0 0
      %1876 = vmatprep.subr.bf16.mxu0 0
      %1877 = vmatpush1.bf16.msra.mxu0 0
      %1878 = vmatprep.subr.bf16.mxu0 0
      %1879 = vmatpush1.bf16.msra.mxu0 %v1857
      %1880 = vmatprep.subr.bf16.mxu0 0
      %1881 = vmatpush1.bf16.msra.mxu0 %v1856
      %1882 = vmatprep.subr.bf16.mxu0 0
      %1883 = vmatpush2.bf16.msra.mxu0 0
      %1884 = vmatprep.subr.bf16.mxu0 0
      %1885 = vmatpush2.bf16.msra.mxu0 0
      %1886 = vmatprep.subr.bf16.mxu0 0
      %1887 = vmatpush2.bf16.msra.mxu0 0
      %1888 = vmatprep.subr.bf16.mxu0 0
      %1889 = vmatpush2.bf16.msra.mxu0 0
      %1890 = vmatprep.subr.bf16.mxu0 0
      %1891 = vmatpush2.bf16.msra.mxu0 0
      %1892 = vmatprep.subr.bf16.mxu0 0
      %1893 = vmatpush2.bf16.msra.mxu0 0
      %1894 = vmatprep.subr.bf16.mxu0 0
      %1895 = vmatpush2.bf16.msra.mxu0 0
      %1896 = vmatprep.subr.bf16.mxu0 0
      %1897 = vmatpush2.bf16.msra.mxu0 0
      %1898 = vmatprep.mubr.bf16.mxu0 0
      %1899 = vmatmul.mubr.bf16.gmra.mxu0 %v1861
      %v1900 = vpop.f32.mrf.mxu0
      %v1901 = vadd.f32 %v1846, %v1900
      %v1902 = vpop.f32.mrf.mxu0
      %v1903 = vpop.f32.mrf.mxu0
      %v1904 = vadd.f32 %v1846, %v1903
      %v1905 = vpop.f32.mrf.mxu0
      %1906 = vmatprep.mubr.bf16.mxu0 0
      %1907 = vmatmul.mubr.bf16.gmra.mxu0 %v1864
      %v1908 = vpop.f32.mrf.mxu0
      %v1909 = vadd.f32 %v1846, %v1908
      %v1910 = vpop.f32.mrf.mxu0
      %v1911 = vpop.f32.mrf.mxu0
      %v1912 = vpop.f32.mrf.mxu0
      %1913 = vdwg.mxu0
      %v1914 = vmul.f32 %v1901, 1.702
      %v1915 = vmul.f32 %v1904, 1.702
      %v1916 = vmul.f32 %v1909, 1.702
      %v1917 = vxor.u32 %v1914, 2147483648
      %v1918 = vxor.u32 %v1915, 2147483648
      %v1919 = vxor.u32 %v1916, 2147483648
      %v1920 = vmul.f32 %v1917, 1.442695
      %v1921 = vpow.pop %v1920
      %v1922 = vmul.f32 %v1918, 1.442695
      %v1923 = vpow.pop %v1922
      %v1924 = vmul.f32 %v1919, 1.442695
      %v1925 = vpow.pop %v1924
      %v1926 = vadd.f32 %v1921, 1.0
      %v1927 = vadd.f32 %v1923, 1.0
      %v1928 = vadd.f32 %v1925, 1.0
      %v1929 = vrcp.pop %v1926
      %v1930 = vmul.f32 1.0, %v1929
      %v1931 = vrcp.pop %v1927
      %v1932 = vmul.f32 1.0, %v1931
      %v1933 = vrcp.pop %v1928
      %v1934 = vmul.f32 1.0, %v1933
      %v1935 = vmul.f32 %v1901, %v1930
      %v1936 = vmul.f32 %v1904, %v1932
      %v1937 = vmul.f32 %v1909, %v1934
      %v1938 = vld [vmem:[%s16] sm:$0xf]
      %v1939 = vld [vmem:[%s16 + $0x4] sm:$0xf]
      %v1940 = vld [vmem:[%s16 + $0x8] sm:$0xf]
      %v1941 = vld [vmem:[%s16 + $0xc] sm:$0xf]
      %v1942 = vld [vmem:[%s16 + $0x10] sm:$0xf]
      %v1943 = vld [vmem:[%s16 + $0x14] sm:$0xf]
      %v1944 = vld [vmem:[%s16 + $0x18] sm:$0xf]
      %v1945 = vld [vmem:[%s16 + $0x1c] sm:$0xf]
      %v1946 = vld [vmem:[%s16 + $0x20] sm:$0xf]
      %v1947 = vld [vmem:[%s16 + $0x24] sm:$0xf]
      %v1948 = vld [vmem:[%s16 + $0x28] sm:$0xf]
      %v1949 = vld [vmem:[%s16 + $0x2c] sm:$0xf]
      %v1950 = vld [vmem:[%s16 + $0x30] sm:$0xf]
      %v1951 = vld [vmem:[%s16 + $0x34] sm:$0xf]
      %v1952 = vld [vmem:[%s16 + $0x38] sm:$0xf]
      %v1953 = vld [vmem:[%s16 + $0x3c] sm:$0xf]
      %v1954 = vpack.c.bf16 %v1936, %v1935
      %v1955 = vpack.c.bf16 %v1937, %v1937
      %v1972 = vunpack.c.l.b16 %v1938
      %v1973 = vunpack.c.l.b16 %v1939
      %v1974 = vunpack.c.l.b16 %v1940
      %v1975 = vunpack.c.l.b16 %v1941
      %v1976 = vunpack.c.l.b16 %v1942
      %v1977 = vunpack.c.l.b16 %v1943
      %v1978 = vunpack.c.l.b16 %v1944
      %v1979 = vunpack.c.l.b16 %v1945
      %v1980 = vunpack.c.l.b16 %v1946
      %v1981 = vunpack.c.l.b16 %v1947
      %v1982 = vunpack.c.l.b16 %v1948
      %v1983 = vunpack.c.l.b16 %v1949
      %v1984 = vunpack.c.l.b16 %v1950
      %v1985 = vunpack.c.l.b16 %v1951
      %v1986 = vunpack.c.l.b16 %v1952
      %v1987 = vunpack.c.l.b16 %v1953
      %v1988 = vpack.c.b16 %v1973, %v1972
      %v1989 = vpack.c.b16 %v1975, %v1974
      %v1990 = vpack.c.b16 %v1977, %v1976
      %v1991 = vpack.c.b16 %v1979, %v1978
      %v1992 = vpack.c.b16 %v1981, %v1980
      %v1993 = vpack.c.b16 %v1983, %v1982
      %v1994 = vpack.c.b16 %v1985, %v1984
      %v1995 = vpack.c.b16 %v1987, %v1986
      %2004 = vmatprep.subr.bf16.mxu0 0
      %2005 = vmatpush1.bf16.msra.mxu0 %v1995
      %2006 = vmatprep.subr.bf16.mxu0 0
      %2007 = vmatpush1.bf16.msra.mxu0 %v1994
      %2008 = vmatprep.subr.bf16.mxu0 0
      %2009 = vmatpush1.bf16.msra.mxu0 %v1993
      %2010 = vmatprep.subr.bf16.mxu0 0
      %2011 = vmatpush1.bf16.msra.mxu0 %v1992
      %2012 = vmatprep.subr.bf16.mxu0 0
      %2013 = vmatpush1.bf16.msra.mxu0 %v1991
      %2014 = vmatprep.subr.bf16.mxu0 0
      %2015 = vmatpush1.bf16.msra.mxu0 %v1990
      %2016 = vmatprep.subr.bf16.mxu0 0
      %2017 = vmatpush1.bf16.msra.mxu0 %v1989
      %2018 = vmatprep.subr.bf16.mxu0 0
      %2019 = vmatpush1.bf16.msra.mxu0 %v1988
      %2020 = vmatprep.subr.bf16.mxu0 0
      %2021 = vmatpush2.bf16.msra.mxu0 0
      %2022 = vmatprep.subr.bf16.mxu0 0
      %2023 = vmatpush2.bf16.msra.mxu0 0
      %2024 = vmatprep.subr.bf16.mxu0 0
      %2025 = vmatpush2.bf16.msra.mxu0 0
      %2026 = vmatprep.subr.bf16.mxu0 0
      %2027 = vmatpush2.bf16.msra.mxu0 0
      %2028 = vmatprep.subr.bf16.mxu0 0
      %2029 = vmatpush2.bf16.msra.mxu0 0
      %2030 = vmatprep.subr.bf16.mxu0 0
      %2031 = vmatpush2.bf16.msra.mxu0 0
      %2032 = vmatprep.subr.bf16.mxu0 0
      %2033 = vmatpush2.bf16.msra.mxu0 0
      %2034 = vmatprep.subr.bf16.mxu0 0
      %2035 = vmatpush2.bf16.msra.mxu0 0
      %2036 = vmatprep.mubr.bf16.mxu0 0
      %2037 = vmatmul.mubr.bf16.gmra.mxu0 %v1954
      %v2038 = vpop.f32.mrf.mxu0
      %v2039 = vadd.f32 0.0, %v2038
      %v2040 = vpop.f32.mrf.mxu0
      %v2041 = vpop.f32.mrf.mxu0
      %v2042 = vadd.f32 0.0, %v2041
      %v2043 = vpop.f32.mrf.mxu0
      %2044 = vmatprep.mubr.bf16.mxu0 0
      %2045 = vmatmul.mubr.bf16.gmra.mxu0 %v1955
      %v2046 = vpop.f32.mrf.mxu0
      %v2047 = vadd.f32 0.0, %v2046
      %v2048 = vpop.f32.mrf.mxu0
      %v2049 = vpop.f32.mrf.mxu0
      %v2050 = vpop.f32.mrf.mxu0
      %2051 = vdwg.mxu0
      %v2052 = vadd.f32 %v1773, %v2039
      %v2053 = vadd.f32 %v1774, %v2042
      %v2054 = vadd.f32 %v1775, %v2047
      %v2055 = vld [vmem:[%s17] sm:$0x1]
      %v2057 = vlaneseq
      %v2058 = vshrl.u32 %v2057, 7
      %v2059 = vsub.s32 0, %v2058
      %v2060 = vrot.slane %v2055, %v2059
      %v2062 = vadd.f32 %v2052, %v2060
      %v2063 = vadd.f32 %v2053, %v2060
      %v2064 = vadd.f32 %v2054, %v2060
      %s2065 = scalar_lea.vmem %s6, 1
      %v2066 = vld [vmem:[%s2065] sm:$0x1]
      %s2067 = scalar_lea.vmem %s7, 1
      %v2068 = vld [vmem:[%s2067] sm:$0x1]
      %v2069 = vsel %vm741, %v2062, 0.0
      %2070 = vadd.xlane.f32.xlu0 %v2069
      %v2071 = vpop.xlane.xlu0 %2070
      %v2072 = vsel %vm741, %v2063, 0.0
      %2073 = vadd.xlane.f32.xlu0 %v2072
      %v2074 = vpop.xlane.xlu0 %2073
      %v2075 = vsel %vm748, %v2064, 0.0
      %2076 = vadd.xlane.f32.xlu0 %v2075
      %v2077 = vpop.xlane.xlu0 %2076
      %v2078 = vmul.f32 %v2071, %v752
      %v2079 = vmul.f32 %v2074, %v752
      %v2080 = vmul.f32 %v2077, %v752
      %v2081 = vsub.f32 %v2062, %v2078
      %v2082 = vsub.f32 %v2063, %v2079
      %v2083 = vsub.f32 %v2064, %v2080
      %v2084 = vmul.f32 %v2081, %v2081
      %v2085 = vmul.f32 %v2082, %v2082
      %v2086 = vmul.f32 %v2083, %v2083
      %v2087 = vsel %vm741, %v2084, 0.0
      %2088 = vadd.xlane.f32.xlu0 %v2087
      %v2089 = vpop.xlane.xlu0 %2088
      %v2090 = vsel %vm741, %v2085, 0.0
      %2091 = vadd.xlane.f32.xlu0 %v2090
      %v2092 = vpop.xlane.xlu0 %2091
      %v2093 = vsel %vm748, %v2086, 0.0
      %2094 = vadd.xlane.f32.xlu0 %v2093
      %v2095 = vpop.xlane.xlu0 %2094
      %v2096 = vmul.f32 %v2089, %v752
      %v2097 = vmul.f32 %v2092, %v752
      %v2098 = vmul.f32 %v2095, %v752
      %v2099 = vadd.f32 %v2096, 1e-05
      %v2100 = vadd.f32 %v2097, 1e-05
      %v2101 = vadd.f32 %v2098, 1e-05
      %v2102 = vrsqrt.pop %v2099
      %v2103 = vrsqrt.pop %v2100
      %v2104 = vrsqrt.pop %v2101
      %v2105 = vmul.f32 %v2081, %v2102
      %v2106 = vmul.f32 %v2082, %v2103
      %v2107 = vmul.f32 %v2083, %v2104
      %v2109 = vlaneseq
      %v2110 = vshrl.u32 %v2109, 7
      %v2111 = vsub.s32 0, %v2110
      %v2112 = vrot.slane %v2066, %v2111
      %v2114 = vmul.f32 %v2105, %v2112
      %v2115 = vmul.f32 %v2106, %v2112
      %v2116 = vmul.f32 %v2107, %v2112
      %v2118 = vlaneseq
      %v2119 = vshrl.u32 %v2118, 7
      %v2120 = vsub.s32 0, %v2119
      %v2121 = vrot.slane %v2068, %v2120
      %v2123 = vadd.f32 %v2114, %v2121
      %v2124 = vadd.f32 %v2115, %v2121
      %v2125 = vadd.f32 %v2116, %v2121
      %s2126 = scalar_lea.vmem %s8, 96
      %v2127 = vld [vmem:[%s2126] sm:$0xf]
      %v2128 = vld [vmem:[%s2126 + $0x4] sm:$0xf]
      %v2129 = vld [vmem:[%s2126 + $0x8] sm:$0xf]
      %v2130 = vld [vmem:[%s2126 + $0xc] sm:$0xf]
      %v2131 = vpack.c.bf16 %v2124, %v2123
      %v2132 = vpack.c.bf16 %v2125, %v2125
      %s2133 = scalar_lea.vmem %s9, 6
      %v2134 = vld [vmem:[%s2133] sm:$0x1]
      %v2136 = vlaneseq
      %v2137 = vshrl.u32 %v2136, 7
      %v2138 = vsub.s32 0, %v2137
      %v2139 = vrot.slane %v2134, %v2138
      %v2145 = vunpack.c.l.b16 %v2127
      %v2146 = vunpack.c.l.b16 %v2128
      %v2147 = vunpack.c.l.b16 %v2129
      %v2148 = vunpack.c.l.b16 %v2130
      %v2149 = vpack.c.b16 %v2146, %v2145
      %v2150 = vpack.c.b16 %v2148, %v2147
      %v2154 = vsel %vm741, %v2131, 0
      %v2157 = vsel %vm741, %v2132, 0
      %2159 = vmatprep.subr.bf16.mxu0 0
      %2160 = vmatpush1.bf16.msra.mxu0 0
      %2161 = vmatprep.subr.bf16.mxu0 0
      %2162 = vmatpush1.bf16.msra.mxu0 0
      %2163 = vmatprep.subr.bf16.mxu0 0
      %2164 = vmatpush1.bf16.msra.mxu0 0
      %2165 = vmatprep.subr.bf16.mxu0 0
      %2166 = vmatpush1.bf16.msra.mxu0 0
      %2167 = vmatprep.subr.bf16.mxu0 0
      %2168 = vmatpush1.bf16.msra.mxu0 0
      %2169 = vmatprep.subr.bf16.mxu0 0
      %2170 = vmatpush1.bf16.msra.mxu0 0
      %2171 = vmatprep.subr.bf16.mxu0 0
      %2172 = vmatpush1.bf16.msra.mxu0 %v2150
      %2173 = vmatprep.subr.bf16.mxu0 0
      %2174 = vmatpush1.bf16.msra.mxu0 %v2149
      %2175 = vmatprep.subr.bf16.mxu0 0
      %2176 = vmatpush2.bf16.msra.mxu0 0
      %2177 = vmatprep.subr.bf16.mxu0 0
      %2178 = vmatpush2.bf16.msra.mxu0 0
      %2179 = vmatprep.subr.bf16.mxu0 0
      %2180 = vmatpush2.bf16.msra.mxu0 0
      %2181 = vmatprep.subr.bf16.mxu0 0
      %2182 = vmatpush2.bf16.msra.mxu0 0
      %2183 = vmatprep.subr.bf16.mxu0 0
      %2184 = vmatpush2.bf16.msra.mxu0 0
      %2185 = vmatprep.subr.bf16.mxu0 0
      %2186 = vmatpush2.bf16.msra.mxu0 0
      %2187 = vmatprep.subr.bf16.mxu0 0
      %2188 = vmatpush2.bf16.msra.mxu0 0
      %2189 = vmatprep.subr.bf16.mxu0 0
      %2190 = vmatpush2.bf16.msra.mxu0 0
      %2191 = vmatprep.mubr.bf16.mxu0 0
      %2192 = vmatmul.mubr.bf16.gmra.mxu0 %v2154
      %v2193 = vpop.f32.mrf.mxu0
      %v2194 = vadd.f32 %v2139, %v2193
      %v2195 = vpop.f32.mrf.mxu0
      %v2196 = vpop.f32.mrf.mxu0
      %v2197 = vadd.f32 %v2139, %v2196
      %v2198 = vpop.f32.mrf.mxu0
      %2199 = vmatprep.mubr.bf16.mxu0 0
      %2200 = vmatmul.mubr.bf16.gmra.mxu0 %v2157
      %v2201 = vpop.f32.mrf.mxu0
      %v2202 = vadd.f32 %v2139, %v2201
      %v2203 = vpop.f32.mrf.mxu0
      %v2204 = vpop.f32.mrf.mxu0
      %v2205 = vpop.f32.mrf.mxu0
      %2206 = vdwg.mxu0
      %s2207 = scalar_lea.vmem %s8, 128
      %v2208 = vld [vmem:[%s2207] sm:$0xf]
      %v2209 = vld [vmem:[%s2207 + $0x4] sm:$0xf]
      %v2210 = vld [vmem:[%s2207 + $0x8] sm:$0xf]
      %v2211 = vld [vmem:[%s2207 + $0xc] sm:$0xf]
      %s2212 = scalar_lea.vmem %s9, 8
      %v2213 = vld [vmem:[%s2212] sm:$0x1]
      %v2215 = vlaneseq
      %v2216 = vshrl.u32 %v2215, 7
      %v2217 = vsub.s32 0, %v2216
      %v2218 = vrot.slane %v2213, %v2217
      %v2224 = vunpack.c.l.b16 %v2208
      %v2225 = vunpack.c.l.b16 %v2209
      %v2226 = vunpack.c.l.b16 %v2210
      %v2227 = vunpack.c.l.b16 %v2211
      %v2228 = vpack.c.b16 %v2225, %v2224
      %v2229 = vpack.c.b16 %v2227, %v2226
      %2232 = vmatprep.subr.bf16.mxu0 0
      %2233 = vmatpush1.bf16.msra.mxu0 0
      %2234 = vmatprep.subr.bf16.mxu0 0
      %2235 = vmatpush1.bf16.msra.mxu0 0
      %2236 = vmatprep.subr.bf16.mxu0 0
      %2237 = vmatpush1.bf16.msra.mxu0 0
      %2238 = vmatprep.subr.bf16.mxu0 0
      %2239 = vmatpush1.bf16.msra.mxu0 0
      %2240 = vmatprep.subr.bf16.mxu0 0
      %2241 = vmatpush1.bf16.msra.mxu0 0
      %2242 = vmatprep.subr.bf16.mxu0 0
      %2243 = vmatpush1.bf16.msra.mxu0 0
      %2244 = vmatprep.subr.bf16.mxu0 0
      %2245 = vmatpush1.bf16.msra.mxu0 %v2229
      %2246 = vmatprep.subr.bf16.mxu0 0
      %2247 = vmatpush1.bf16.msra.mxu0 %v2228
      %2248 = vmatprep.subr.bf16.mxu0 0
      %2249 = vmatpush2.bf16.msra.mxu0 0
      %2250 = vmatprep.subr.bf16.mxu0 0
      %2251 = vmatpush2.bf16.msra.mxu0 0
      %2252 = vmatprep.subr.bf16.mxu0 0
      %2253 = vmatpush2.bf16.msra.mxu0 0
      %2254 = vmatprep.subr.bf16.mxu0 0
      %2255 = vmatpush2.bf16.msra.mxu0 0
      %2256 = vmatprep.subr.bf16.mxu0 0
      %2257 = vmatpush2.bf16.msra.mxu0 0
      %2258 = vmatprep.subr.bf16.mxu0 0
      %2259 = vmatpush2.bf16.msra.mxu0 0
      %2260 = vmatprep.subr.bf16.mxu0 0
      %2261 = vmatpush2.bf16.msra.mxu0 0
      %2262 = vmatprep.subr.bf16.mxu0 0
      %2263 = vmatpush2.bf16.msra.mxu0 0
      %2264 = vmatprep.mubr.bf16.mxu0 0
      %2265 = vmatmul.mubr.bf16.gmra.mxu0 %v2154
      %v2266 = vpop.f32.mrf.mxu0
      %v2267 = vadd.f32 %v2218, %v2266
      %v2268 = vpop.f32.mrf.mxu0
      %v2269 = vpop.f32.mrf.mxu0
      %v2270 = vadd.f32 %v2218, %v2269
      %v2271 = vpop.f32.mrf.mxu0
      %2272 = vmatprep.mubr.bf16.mxu0 0
      %2273 = vmatmul.mubr.bf16.gmra.mxu0 %v2157
      %v2274 = vpop.f32.mrf.mxu0
      %v2275 = vadd.f32 %v2218, %v2274
      %v2276 = vpop.f32.mrf.mxu0
      %v2277 = vpop.f32.mrf.mxu0
      %v2278 = vpop.f32.mrf.mxu0
      %2279 = vdwg.mxu0
      %s2280 = scalar_lea.vmem %s8, 160
      %v2281 = vld [vmem:[%s2280] sm:$0xf]
      %v2282 = vld [vmem:[%s2280 + $0x4] sm:$0xf]
      %v2283 = vld [vmem:[%s2280 + $0x8] sm:$0xf]
      %v2284 = vld [vmem:[%s2280 + $0xc] sm:$0xf]
      %s2285 = scalar_lea.vmem %s9, 10
      %v2286 = vld [vmem:[%s2285] sm:$0x1]
      %v2288 = vlaneseq
      %v2289 = vshrl.u32 %v2288, 7
      %v2290 = vsub.s32 0, %v2289
      %v2291 = vrot.slane %v2286, %v2290
      %v2297 = vunpack.c.l.b16 %v2281
      %v2298 = vunpack.c.l.b16 %v2282
      %v2299 = vunpack.c.l.b16 %v2283
      %v2300 = vunpack.c.l.b16 %v2284
      %v2301 = vpack.c.b16 %v2298, %v2297
      %v2302 = vpack.c.b16 %v2300, %v2299
      %2305 = vmatprep.subr.bf16.mxu0 0
      %2306 = vmatpush1.bf16.msra.mxu0 0
      %2307 = vmatprep.subr.bf16.mxu0 0
      %2308 = vmatpush1.bf16.msra.mxu0 0
      %2309 = vmatprep.subr.bf16.mxu0 0
      %2310 = vmatpush1.bf16.msra.mxu0 0
      %2311 = vmatprep.subr.bf16.mxu0 0
      %2312 = vmatpush1.bf16.msra.mxu0 0
      %2313 = vmatprep.subr.bf16.mxu0 0
      %2314 = vmatpush1.bf16.msra.mxu0 0
      %2315 = vmatprep.subr.bf16.mxu0 0
      %2316 = vmatpush1.bf16.msra.mxu0 0
      %2317 = vmatprep.subr.bf16.mxu0 0
      %2318 = vmatpush1.bf16.msra.mxu0 %v2302
      %2319 = vmatprep.subr.bf16.mxu0 0
      %2320 = vmatpush1.bf16.msra.mxu0 %v2301
      %2321 = vmatprep.subr.bf16.mxu0 0
      %2322 = vmatpush2.bf16.msra.mxu0 0
      %2323 = vmatprep.subr.bf16.mxu0 0
      %2324 = vmatpush2.bf16.msra.mxu0 0
      %2325 = vmatprep.subr.bf16.mxu0 0
      %2326 = vmatpush2.bf16.msra.mxu0 0
      %2327 = vmatprep.subr.bf16.mxu0 0
      %2328 = vmatpush2.bf16.msra.mxu0 0
      %2329 = vmatprep.subr.bf16.mxu0 0
      %2330 = vmatpush2.bf16.msra.mxu0 0
      %2331 = vmatprep.subr.bf16.mxu0 0
      %2332 = vmatpush2.bf16.msra.mxu0 0
      %2333 = vmatprep.subr.bf16.mxu0 0
      %2334 = vmatpush2.bf16.msra.mxu0 0
      %2335 = vmatprep.subr.bf16.mxu0 0
      %2336 = vmatpush2.bf16.msra.mxu0 0
      %2337 = vmatprep.mubr.bf16.mxu0 0
      %2338 = vmatmul.mubr.bf16.gmra.mxu0 %v2154
      %v2339 = vpop.f32.mrf.mxu0
      %v2340 = vadd.f32 %v2291, %v2339
      %v2341 = vpop.f32.mrf.mxu0
      %v2342 = vpop.f32.mrf.mxu0
      %v2343 = vadd.f32 %v2291, %v2342
      %v2344 = vpop.f32.mrf.mxu0
      %2345 = vmatprep.mubr.bf16.mxu0 0
      %2346 = vmatmul.mubr.bf16.gmra.mxu0 %v2157
      %v2347 = vpop.f32.mrf.mxu0
      %v2348 = vadd.f32 %v2291, %v2347
      %v2349 = vpop.f32.mrf.mxu0
      %v2350 = vpop.f32.mrf.mxu0
      %v2351 = vpop.f32.mrf.mxu0
      %2352 = vdwg.mxu0
      %v2353 = vpack.c.bf16 %v2197, %v2194
      %v2354 = vpack.c.bf16 %v2202, %v2202
      %v2355 = vpack.c.bf16 %v2270, %v2267
      %v2356 = vpack.c.bf16 %v2275, %v2275
      %v2358 = vsel %vm1089, %v2353, 0
      %v2361 = vsel %vm1089, %v2354, 0
      %v2364 = vsel %vm1089, %v2355, 0
      %v2367 = vsel %vm1089, %v2356, 0
      %2369 = vmatprep.subr.bf16.mxu0 0
      %2370 = vmatpush1.bf16.xpose.msra.mxu0 0
      %2371 = vmatprep.subr.bf16.mxu0 0
      %2372 = vmatpush1.bf16.xpose.msra.mxu0 0
      %2373 = vmatprep.subr.bf16.mxu0 0
      %2374 = vmatpush1.bf16.xpose.msra.mxu0 0
      %2375 = vmatprep.subr.bf16.mxu0 0
      %2376 = vmatpush1.bf16.xpose.msra.mxu0 0
      %2377 = vmatprep.subr.bf16.mxu0 0
      %2378 = vmatpush1.bf16.xpose.msra.mxu0 0
      %2379 = vmatprep.subr.bf16.mxu0 0
      %2380 = vmatpush1.bf16.xpose.msra.mxu0 0
      %2381 = vmatprep.subr.bf16.mxu0 0
      %2382 = vmatpush1.bf16.xpose.msra.mxu0 %v2367
      %2383 = vmatprep.subr.bf16.mxu0 0
      %2384 = vmatpush1.bf16.xpose.msra.mxu0 %v2364
      %2385 = vmatprep.subr.bf16.mxu0 0
      %2386 = vmatpush2.bf16.xpose.msra.mxu0 0
      %2387 = vmatprep.subr.bf16.mxu0 0
      %2388 = vmatpush2.bf16.xpose.msra.mxu0 0
      %2389 = vmatprep.subr.bf16.mxu0 0
      %2390 = vmatpush2.bf16.xpose.msra.mxu0 0
      %2391 = vmatprep.subr.bf16.mxu0 0
      %2392 = vmatpush2.bf16.xpose.msra.mxu0 0
      %2393 = vmatprep.subr.bf16.mxu0 0
      %2394 = vmatpush2.bf16.xpose.msra.mxu0 0
      %2395 = vmatprep.subr.bf16.mxu0 0
      %2396 = vmatpush2.bf16.xpose.msra.mxu0 0
      %2397 = vmatprep.subr.bf16.mxu0 0
      %2398 = vmatpush2.bf16.xpose.msra.mxu0 0
      %2399 = vmatprep.subr.bf16.mxu0 0
      %2400 = vmatpush2.bf16.xpose.msra.mxu0 0
      %2401 = vmatprep.mubr.bf16.mxu0 0
      %2402 = vmatmul.mubr.bf16.gmra.mxu0 %v2358
      %v2403 = vpop.f32.mrf.mxu0
      %v2404 = vadd.f32 0.0, %v2403
      %v2405 = vpop.f32.mrf.mxu0
      %v2406 = vpop.f32.mrf.mxu0
      %v2407 = vadd.f32 0.0, %v2406
      %v2408 = vpop.f32.mrf.mxu0
      %2409 = vmatprep.mubr.bf16.mxu0 0
      %2410 = vmatmul.mubr.bf16.gmra.mxu0 %v2361
      %v2411 = vpop.f32.mrf.mxu0
      %v2412 = vadd.f32 0.0, %v2411
      %v2413 = vpop.f32.mrf.mxu0
      %v2414 = vpop.f32.mrf.mxu0
      %v2415 = vpop.f32.mrf.mxu0
      %2416 = vdwg.mxu0
      %v2417 = vmul.f32 %v2404, 0.25
      %v2418 = vmul.f32 %v2407, 0.25
      %v2419 = vmul.f32 %v2412, 0.25
      %v2420 = vsel %vm1153, %v2417, -inf
      %2421 = vmax.xlane.f32.xlu0 %v2420
      %v2422 = vpop.xlane.xlu0 %2421
      %v2423 = vsel %vm1153, %v2418, -inf
      %2424 = vmax.xlane.f32.xlu0 %v2423
      %v2425 = vpop.xlane.xlu0 %2424
      %v2426 = vsel %vm1160, %v2419, -inf
      %2427 = vmax.xlane.f32.xlu0 %v2426
      %v2428 = vpop.xlane.xlu0 %2427
      %v2429 = vsub.f32 %v2417, %v2422
      %v2430 = vsub.f32 %v2418, %v2425
      %v2431 = vsub.f32 %v2419, %v2428
      %v2432 = vmul.f32 %v2429, 1.442695
      %v2433 = vpow.pop %v2432
      %v2434 = vmul.f32 %v2430, 1.442695
      %v2435 = vpow.pop %v2434
      %v2436 = vmul.f32 %v2431, 1.442695
      %v2437 = vpow.pop %v2436
      %v2438 = vsel %vm1153, %v2433, 0.0
      %2439 = vadd.xlane.f32.xlu0 %v2438
      %v2440 = vpop.xlane.xlu0 %2439
      %v2441 = vsel %vm1153, %v2435, 0.0
      %2442 = vadd.xlane.f32.xlu0 %v2441
      %v2443 = vpop.xlane.xlu0 %2442
      %v2444 = vsel %vm1160, %v2437, 0.0
      %2445 = vadd.xlane.f32.xlu0 %v2444
      %v2446 = vpop.xlane.xlu0 %2445
      %v2447 = vrcp.pop %v2440
      %v2448 = vrcp.pop %v2443
      %v2449 = vrcp.pop %v2446
      %v2450 = vmul.f32 %v2433, %v2447
      %v2451 = vmul.f32 %v2435, %v2448
      %v2452 = vmul.f32 %v2437, %v2449
      %v2453 = vpack.c.bf16 %v2451, %v2450
      %v2454 = vpack.c.bf16 %v2452, %v2452
      %v2455 = vpack.c.bf16 %v2343, %v2340
      %v2456 = vpack.c.bf16 %v2348, %v2348
      %v2458 = vsel %vm1153, %v2453, 0
      %v2461 = vsel %vm1153, %v2454, 0
      %v2464 = vand.u32 %v2456, %v1199
      %2466 = vmatprep.subr.bf16.mxu0 0
      %2467 = vmatpush1.bf16.msra.mxu0 0
      %2468 = vmatprep.subr.bf16.mxu0 0
      %2469 = vmatpush1.bf16.msra.mxu0 0
      %2470 = vmatprep.subr.bf16.mxu0 0
      %2471 = vmatpush1.bf16.msra.mxu0 0
      %2472 = vmatprep.subr.bf16.mxu0 0
      %2473 = vmatpush1.bf16.msra.mxu0 0
      %2474 = vmatprep.subr.bf16.mxu0 0
      %2475 = vmatpush1.bf16.msra.mxu0 0
      %2476 = vmatprep.subr.bf16.mxu0 0
      %2477 = vmatpush1.bf16.msra.mxu0 0
      %2478 = vmatprep.subr.bf16.mxu0 0
      %2479 = vmatpush1.bf16.msra.mxu0 %v2464
      %2480 = vmatprep.subr.bf16.mxu0 0
      %2481 = vmatpush1.bf16.msra.mxu0 %v2455
      %2482 = vmatprep.subr.bf16.mxu0 0
      %2483 = vmatpush2.bf16.msra.mxu0 0
      %2484 = vmatprep.subr.bf16.mxu0 0
      %2485 = vmatpush2.bf16.msra.mxu0 0
      %2486 = vmatprep.subr.bf16.mxu0 0
      %2487 = vmatpush2.bf16.msra.mxu0 0
      %2488 = vmatprep.subr.bf16.mxu0 0
      %2489 = vmatpush2.bf16.msra.mxu0 0
      %2490 = vmatprep.subr.bf16.mxu0 0
      %2491 = vmatpush2.bf16.msra.mxu0 0
      %2492 = vmatprep.subr.bf16.mxu0 0
      %2493 = vmatpush2.bf16.msra.mxu0 0
      %2494 = vmatprep.subr.bf16.mxu0 0
      %2495 = vmatpush2.bf16.msra.mxu0 0
      %2496 = vmatprep.subr.bf16.mxu0 0
      %2497 = vmatpush2.bf16.msra.mxu0 0
      %2498 = vmatprep.mubr.bf16.mxu0 0
      %2499 = vmatmul.mubr.bf16.gmra.mxu0 %v2458
      %v2500 = vpop.f32.mrf.mxu0
      %v2501 = vadd.f32 0.0, %v2500
      %v2502 = vpop.f32.mrf.mxu0
      %v2503 = vpop.f32.mrf.mxu0
      %v2504 = vadd.f32 0.0, %v2503
      %v2505 = vpop.f32.mrf.mxu0
      %2506 = vmatprep.mubr.bf16.mxu0 0
      %2507 = vmatmul.mubr.bf16.gmra.mxu0 %v2461
      %v2508 = vpop.f32.mrf.mxu0
      %v2509 = vadd.f32 0.0, %v2508
      %v2510 = vpop.f32.mrf.mxu0
      %v2511 = vpop.f32.mrf.mxu0
      %v2512 = vpop.f32.mrf.mxu0
      %2513 = vdwg.mxu0
      %s2514 = scalar_lea.vmem %s10, 16
      %v2515 = vld [vmem:[%s2514] sm:$0xf]
      %v2516 = vld [vmem:[%s2514 + $0x4] sm:$0xf]
      %v2517 = vpack.c.bf16 %v2504, %v2501
      %v2518 = vpack.c.bf16 %v2509, %v2509
      %v2521 = vunpack.c.l.b16 %v2515
      %v2522 = vunpack.c.l.b16 %v2516
      %v2523 = vpack.c.b16 %v2522, %v2521
      %v2526 = vsel %vm1089, %v2517, 0
      %v2529 = vsel %vm1089, %v2518, 0
      %2531 = vmatprep.subr.bf16.mxu0 0
      %2532 = vmatpush1.bf16.msra.mxu0 0
      %2533 = vmatprep.subr.bf16.mxu0 0
      %2534 = vmatpush1.bf16.msra.mxu0 0
      %2535 = vmatprep.subr.bf16.mxu0 0
      %2536 = vmatpush1.bf16.msra.mxu0 0
      %2537 = vmatprep.subr.bf16.mxu0 0
      %2538 = vmatpush1.bf16.msra.mxu0 0
      %2539 = vmatprep.subr.bf16.mxu0 0
      %2540 = vmatpush1.bf16.msra.mxu0 0
      %2541 = vmatprep.subr.bf16.mxu0 0
      %2542 = vmatpush1.bf16.msra.mxu0 0
      %2543 = vmatprep.subr.bf16.mxu0 0
      %2544 = vmatpush1.bf16.msra.mxu0 0
      %2545 = vmatprep.subr.bf16.mxu0 0
      %2546 = vmatpush1.bf16.msra.mxu0 %v2523
      %2547 = vmatprep.subr.bf16.mxu0 0
      %2548 = vmatpush2.bf16.msra.mxu0 0
      %2549 = vmatprep.subr.bf16.mxu0 0
      %2550 = vmatpush2.bf16.msra.mxu0 0
      %2551 = vmatprep.subr.bf16.mxu0 0
      %2552 = vmatpush2.bf16.msra.mxu0 0
      %2553 = vmatprep.subr.bf16.mxu0 0
      %2554 = vmatpush2.bf16.msra.mxu0 0
      %2555 = vmatprep.subr.bf16.mxu0 0
      %2556 = vmatpush2.bf16.msra.mxu0 0
      %2557 = vmatprep.subr.bf16.mxu0 0
      %2558 = vmatpush2.bf16.msra.mxu0 0
      %2559 = vmatprep.subr.bf16.mxu0 0
      %2560 = vmatpush2.bf16.msra.mxu0 0
      %2561 = vmatprep.subr.bf16.mxu0 0
      %2562 = vmatpush2.bf16.msra.mxu0 0
      %2563 = vmatprep.mubr.bf16.mxu0 0
      %2564 = vmatmul.mubr.bf16.gmra.mxu0 %v2526
      %v2565 = vpop.f32.mrf.mxu0
      %v2566 = vadd.f32 0.0, %v2565
      %v2567 = vpop.f32.mrf.mxu0
      %v2568 = vpop.f32.mrf.mxu0
      %v2569 = vadd.f32 0.0, %v2568
      %v2570 = vpop.f32.mrf.mxu0
      %2571 = vmatprep.mubr.bf16.mxu0 0
      %2572 = vmatmul.mubr.bf16.gmra.mxu0 %v2529
      %v2573 = vpop.f32.mrf.mxu0
      %v2574 = vadd.f32 0.0, %v2573
      %v2575 = vpop.f32.mrf.mxu0
      %v2576 = vpop.f32.mrf.mxu0
      %v2577 = vpop.f32.mrf.mxu0
      %2578 = vdwg.mxu0
      %v2579 = vadd.f32 %v2062, %v2566
      %v2580 = vadd.f32 %v2063, %v2569
      %v2581 = vadd.f32 %v2064, %v2574
      %s2582 = scalar_lea.vmem %s8, 112
      %v2583 = vld [vmem:[%s2582] sm:$0xf]
      %v2584 = vld [vmem:[%s2582 + $0x4] sm:$0xf]
      %v2585 = vld [vmem:[%s2582 + $0x8] sm:$0xf]
      %v2586 = vld [vmem:[%s2582 + $0xc] sm:$0xf]
      %s2587 = scalar_lea.vmem %s9, 7
      %v2588 = vld [vmem:[%s2587] sm:$0x1]
      %v2590 = vlaneseq
      %v2591 = vshrl.u32 %v2590, 7
      %v2592 = vsub.s32 0, %v2591
      %v2593 = vrot.slane %v2588, %v2592
      %v2599 = vunpack.c.l.b16 %v2583
      %v2600 = vunpack.c.l.b16 %v2584
      %v2601 = vunpack.c.l.b16 %v2585
      %v2602 = vunpack.c.l.b16 %v2586
      %v2603 = vpack.c.b16 %v2600, %v2599
      %v2604 = vpack.c.b16 %v2602, %v2601
      %2607 = vmatprep.subr.bf16.mxu0 0
      %2608 = vmatpush1.bf16.msra.mxu0 0
      %2609 = vmatprep.subr.bf16.mxu0 0
      %2610 = vmatpush1.bf16.msra.mxu0 0
      %2611 = vmatprep.subr.bf16.mxu0 0
      %2612 = vmatpush1.bf16.msra.mxu0 0
      %2613 = vmatprep.subr.bf16.mxu0 0
      %2614 = vmatpush1.bf16.msra.mxu0 0
      %2615 = vmatprep.subr.bf16.mxu0 0
      %2616 = vmatpush1.bf16.msra.mxu0 0
      %2617 = vmatprep.subr.bf16.mxu0 0
      %2618 = vmatpush1.bf16.msra.mxu0 0
      %2619 = vmatprep.subr.bf16.mxu0 0
      %2620 = vmatpush1.bf16.msra.mxu0 %v2604
      %2621 = vmatprep.subr.bf16.mxu0 0
      %2622 = vmatpush1.bf16.msra.mxu0 %v2603
      %2623 = vmatprep.subr.bf16.mxu0 0
      %2624 = vmatpush2.bf16.msra.mxu0 0
      %2625 = vmatprep.subr.bf16.mxu0 0
      %2626 = vmatpush2.bf16.msra.mxu0 0
      %2627 = vmatprep.subr.bf16.mxu0 0
      %2628 = vmatpush2.bf16.msra.mxu0 0
      %2629 = vmatprep.subr.bf16.mxu0 0
      %2630 = vmatpush2.bf16.msra.mxu0 0
      %2631 = vmatprep.subr.bf16.mxu0 0
      %2632 = vmatpush2.bf16.msra.mxu0 0
      %2633 = vmatprep.subr.bf16.mxu0 0
      %2634 = vmatpush2.bf16.msra.mxu0 0
      %2635 = vmatprep.subr.bf16.mxu0 0
      %2636 = vmatpush2.bf16.msra.mxu0 0
      %2637 = vmatprep.subr.bf16.mxu0 0
      %2638 = vmatpush2.bf16.msra.mxu0 0
      %2639 = vmatprep.mubr.bf16.mxu0 0
      %2640 = vmatmul.mubr.bf16.gmra.mxu0 %v2154
      %v2641 = vpop.f32.mrf.mxu0
      %v2642 = vadd.f32 %v2593, %v2641
      %v2643 = vpop.f32.mrf.mxu0
      %v2644 = vpop.f32.mrf.mxu0
      %v2645 = vadd.f32 %v2593, %v2644
      %v2646 = vpop.f32.mrf.mxu0
      %2647 = vmatprep.mubr.bf16.mxu0 0
      %2648 = vmatmul.mubr.bf16.gmra.mxu0 %v2157
      %v2649 = vpop.f32.mrf.mxu0
      %v2650 = vadd.f32 %v2593, %v2649
      %v2651 = vpop.f32.mrf.mxu0
      %v2652 = vpop.f32.mrf.mxu0
      %v2653 = vpop.f32.mrf.mxu0
      %2654 = vdwg.mxu0
      %s2655 = scalar_lea.vmem %s8, 144
      %v2656 = vld [vmem:[%s2655] sm:$0xf]
      %v2657 = vld [vmem:[%s2655 + $0x4] sm:$0xf]
      %v2658 = vld [vmem:[%s2655 + $0x8] sm:$0xf]
      %v2659 = vld [vmem:[%s2655 + $0xc] sm:$0xf]
      %s2660 = scalar_lea.vmem %s9, 9
      %v2661 = vld [vmem:[%s2660] sm:$0x1]
      %v2663 = vlaneseq
      %v2664 = vshrl.u32 %v2663, 7
      %v2665 = vsub.s32 0, %v2664
      %v2666 = vrot.slane %v2661, %v2665
      %v2672 = vunpack.c.l.b16 %v2656
      %v2673 = vunpack.c.l.b16 %v2657
      %v2674 = vunpack.c.l.b16 %v2658
      %v2675 = vunpack.c.l.b16 %v2659
      %v2676 = vpack.c.b16 %v2673, %v2672
      %v2677 = vpack.c.b16 %v2675, %v2674
      %2680 = vmatprep.subr.bf16.mxu0 0
      %2681 = vmatpush1.bf16.msra.mxu0 0
      %2682 = vmatprep.subr.bf16.mxu0 0
      %2683 = vmatpush1.bf16.msra.mxu0 0
      %2684 = vmatprep.subr.bf16.mxu0 0
      %2685 = vmatpush1.bf16.msra.mxu0 0
      %2686 = vmatprep.subr.bf16.mxu0 0
      %2687 = vmatpush1.bf16.msra.mxu0 0
      %2688 = vmatprep.subr.bf16.mxu0 0
      %2689 = vmatpush1.bf16.msra.mxu0 0
      %2690 = vmatprep.subr.bf16.mxu0 0
      %2691 = vmatpush1.bf16.msra.mxu0 0
      %2692 = vmatprep.subr.bf16.mxu0 0
      %2693 = vmatpush1.bf16.msra.mxu0 %v2677
      %2694 = vmatprep.subr.bf16.mxu0 0
      %2695 = vmatpush1.bf16.msra.mxu0 %v2676
      %2696 = vmatprep.subr.bf16.mxu0 0
      %2697 = vmatpush2.bf16.msra.mxu0 0
      %2698 = vmatprep.subr.bf16.mxu0 0
      %2699 = vmatpush2.bf16.msra.mxu0 0
      %2700 = vmatprep.subr.bf16.mxu0 0
      %2701 = vmatpush2.bf16.msra.mxu0 0
      %2702 = vmatprep.subr.bf16.mxu0 0
      %2703 = vmatpush2.bf16.msra.mxu0 0
      %2704 = vmatprep.subr.bf16.mxu0 0
      %2705 = vmatpush2.bf16.msra.mxu0 0
      %2706 = vmatprep.subr.bf16.mxu0 0
      %2707 = vmatpush2.bf16.msra.mxu0 0
      %2708 = vmatprep.subr.bf16.mxu0 0
      %2709 = vmatpush2.bf16.msra.mxu0 0
      %2710 = vmatprep.subr.bf16.mxu0 0
      %2711 = vmatpush2.bf16.msra.mxu0 0
      %2712 = vmatprep.mubr.bf16.mxu0 0
      %2713 = vmatmul.mubr.bf16.gmra.mxu0 %v2154
      %v2714 = vpop.f32.mrf.mxu0
      %v2715 = vadd.f32 %v2666, %v2714
      %v2716 = vpop.f32.mrf.mxu0
      %v2717 = vpop.f32.mrf.mxu0
      %v2718 = vadd.f32 %v2666, %v2717
      %v2719 = vpop.f32.mrf.mxu0
      %2720 = vmatprep.mubr.bf16.mxu0 0
      %2721 = vmatmul.mubr.bf16.gmra.mxu0 %v2157
      %v2722 = vpop.f32.mrf.mxu0
      %v2723 = vadd.f32 %v2666, %v2722
      %v2724 = vpop.f32.mrf.mxu0
      %v2725 = vpop.f32.mrf.mxu0
      %v2726 = vpop.f32.mrf.mxu0
      %2727 = vdwg.mxu0
      %s2728 = scalar_lea.vmem %s8, 176
      %v2729 = vld [vmem:[%s2728] sm:$0xf]
      %v2730 = vld [vmem:[%s2728 + $0x4] sm:$0xf]
      %v2731 = vld [vmem:[%s2728 + $0x8] sm:$0xf]
      %v2732 = vld [vmem:[%s2728 + $0xc] sm:$0xf]
      %s2733 = scalar_lea.vmem %s9, 11
      %v2734 = vld [vmem:[%s2733] sm:$0x1]
      %v2736 = vlaneseq
      %v2737 = vshrl.u32 %v2736, 7
      %v2738 = vsub.s32 0, %v2737
      %v2739 = vrot.slane %v2734, %v2738
      %v2745 = vunpack.c.l.b16 %v2729
      %v2746 = vunpack.c.l.b16 %v2730
      %v2747 = vunpack.c.l.b16 %v2731
      %v2748 = vunpack.c.l.b16 %v2732
      %v2749 = vpack.c.b16 %v2746, %v2745
      %v2750 = vpack.c.b16 %v2748, %v2747
      %2753 = vmatprep.subr.bf16.mxu0 0
      %2754 = vmatpush1.bf16.msra.mxu0 0
      %2755 = vmatprep.subr.bf16.mxu0 0
      %2756 = vmatpush1.bf16.msra.mxu0 0
      %2757 = vmatprep.subr.bf16.mxu0 0
      %2758 = vmatpush1.bf16.msra.mxu0 0
      %2759 = vmatprep.subr.bf16.mxu0 0
      %2760 = vmatpush1.bf16.msra.mxu0 0
      %2761 = vmatprep.subr.bf16.mxu0 0
      %2762 = vmatpush1.bf16.msra.mxu0 0
      %2763 = vmatprep.subr.bf16.mxu0 0
      %2764 = vmatpush1.bf16.msra.mxu0 0
      %2765 = vmatprep.subr.bf16.mxu0 0
      %2766 = vmatpush1.bf16.msra.mxu0 %v2750
      %2767 = vmatprep.subr.bf16.mxu0 0
      %2768 = vmatpush1.bf16.msra.mxu0 %v2749
      %2769 = vmatprep.subr.bf16.mxu0 0
      %2770 = vmatpush2.bf16.msra.mxu0 0
      %2771 = vmatprep.subr.bf16.mxu0 0
      %2772 = vmatpush2.bf16.msra.mxu0 0
      %2773 = vmatprep.subr.bf16.mxu0 0
      %2774 = vmatpush2.bf16.msra.mxu0 0
      %2775 = vmatprep.subr.bf16.mxu0 0
      %2776 = vmatpush2.bf16.msra.mxu0 0
      %2777 = vmatprep.subr.bf16.mxu0 0
      %2778 = vmatpush2.bf16.msra.mxu0 0
      %2779 = vmatprep.subr.bf16.mxu0 0
      %2780 = vmatpush2.bf16.msra.mxu0 0
      %2781 = vmatprep.subr.bf16.mxu0 0
      %2782 = vmatpush2.bf16.msra.mxu0 0
      %2783 = vmatprep.subr.bf16.mxu0 0
      %2784 = vmatpush2.bf16.msra.mxu0 0
      %2785 = vmatprep.mubr.bf16.mxu0 0
      %2786 = vmatmul.mubr.bf16.gmra.mxu0 %v2154
      %v2787 = vpop.f32.mrf.mxu0
      %v2788 = vadd.f32 %v2739, %v2787
      %v2789 = vpop.f32.mrf.mxu0
      %v2790 = vpop.f32.mrf.mxu0
      %v2791 = vadd.f32 %v2739, %v2790
      %v2792 = vpop.f32.mrf.mxu0
      %2793 = vmatprep.mubr.bf16.mxu0 0
      %2794 = vmatmul.mubr.bf16.gmra.mxu0 %v2157
      %v2795 = vpop.f32.mrf.mxu0
      %v2796 = vadd.f32 %v2739, %v2795
      %v2797 = vpop.f32.mrf.mxu0
      %v2798 = vpop.f32.mrf.mxu0
      %v2799 = vpop.f32.mrf.mxu0
      %2800 = vdwg.mxu0
      %v2801 = vpack.c.bf16 %v2645, %v2642
      %v2802 = vpack.c.bf16 %v2650, %v2650
      %v2803 = vpack.c.bf16 %v2718, %v2715
      %v2804 = vpack.c.bf16 %v2723, %v2723
      %v2806 = vsel %vm1089, %v2801, 0
      %v2809 = vsel %vm1089, %v2802, 0
      %v2812 = vsel %vm1089, %v2803, 0
      %v2815 = vsel %vm1089, %v2804, 0
      %2817 = vmatprep.subr.bf16.mxu0 0
      %2818 = vmatpush1.bf16.xpose.msra.mxu0 0
      %2819 = vmatprep.subr.bf16.mxu0 0
      %2820 = vmatpush1.bf16.xpose.msra.mxu0 0
      %2821 = vmatprep.subr.bf16.mxu0 0
      %2822 = vmatpush1.bf16.xpose.msra.mxu0 0
      %2823 = vmatprep.subr.bf16.mxu0 0
      %2824 = vmatpush1.bf16.xpose.msra.mxu0 0
      %2825 = vmatprep.subr.bf16.mxu0 0
      %2826 = vmatpush1.bf16.xpose.msra.mxu0 0
      %2827 = vmatprep.subr.bf16.mxu0 0
      %2828 = vmatpush1.bf16.xpose.msra.mxu0 0
      %2829 = vmatprep.subr.bf16.mxu0 0
      %2830 = vmatpush1.bf16.xpose.msra.mxu0 %v2815
      %2831 = vmatprep.subr.bf16.mxu0 0
      %2832 = vmatpush1.bf16.xpose.msra.mxu0 %v2812
      %2833 = vmatprep.subr.bf16.mxu0 0
      %2834 = vmatpush2.bf16.xpose.msra.mxu0 0
      %2835 = vmatprep.subr.bf16.mxu0 0
      %2836 = vmatpush2.bf16.xpose.msra.mxu0 0
      %2837 = vmatprep.subr.bf16.mxu0 0
      %2838 = vmatpush2.bf16.xpose.msra.mxu0 0
      %2839 = vmatprep.subr.bf16.mxu0 0
      %2840 = vmatpush2.bf16.xpose.msra.mxu0 0
      %2841 = vmatprep.subr.bf16.mxu0 0
      %2842 = vmatpush2.bf16.xpose.msra.mxu0 0
      %2843 = vmatprep.subr.bf16.mxu0 0
      %2844 = vmatpush2.bf16.xpose.msra.mxu0 0
      %2845 = vmatprep.subr.bf16.mxu0 0
      %2846 = vmatpush2.bf16.xpose.msra.mxu0 0
      %2847 = vmatprep.subr.bf16.mxu0 0
      %2848 = vmatpush2.bf16.xpose.msra.mxu0 0
      %2849 = vmatprep.mubr.bf16.mxu0 0
      %2850 = vmatmul.mubr.bf16.gmra.mxu0 %v2806
      %v2851 = vpop.f32.mrf.mxu0
      %v2852 = vadd.f32 0.0, %v2851
      %v2853 = vpop.f32.mrf.mxu0
      %v2854 = vpop.f32.mrf.mxu0
      %v2855 = vadd.f32 0.0, %v2854
      %v2856 = vpop.f32.mrf.mxu0
      %2857 = vmatprep.mubr.bf16.mxu0 0
      %2858 = vmatmul.mubr.bf16.gmra.mxu0 %v2809
      %v2859 = vpop.f32.mrf.mxu0
      %v2860 = vadd.f32 0.0, %v2859
      %v2861 = vpop.f32.mrf.mxu0
      %v2862 = vpop.f32.mrf.mxu0
      %v2863 = vpop.f32.mrf.mxu0
      %2864 = vdwg.mxu0
      %v2865 = vmul.f32 %v2852, 0.25
      %v2866 = vmul.f32 %v2855, 0.25
      %v2867 = vmul.f32 %v2860, 0.25
      %v2868 = vsel %vm1153, %v2865, -inf
      %2869 = vmax.xlane.f32.xlu0 %v2868
      %v2870 = vpop.xlane.xlu0 %2869
      %v2871 = vsel %vm1153, %v2866, -inf
      %2872 = vmax.xlane.f32.xlu0 %v2871
      %v2873 = vpop.xlane.xlu0 %2872
      %v2874 = vsel %vm1160, %v2867, -inf
      %2875 = vmax.xlane.f32.xlu0 %v2874
      %v2876 = vpop.xlane.xlu0 %2875
      %v2877 = vsub.f32 %v2865, %v2870
      %v2878 = vsub.f32 %v2866, %v2873
      %v2879 = vsub.f32 %v2867, %v2876
      %v2880 = vmul.f32 %v2877, 1.442695
      %v2881 = vpow.pop %v2880
      %v2882 = vmul.f32 %v2878, 1.442695
      %v2883 = vpow.pop %v2882
      %v2884 = vmul.f32 %v2879, 1.442695
      %v2885 = vpow.pop %v2884
      %v2886 = vsel %vm1153, %v2881, 0.0
      %2887 = vadd.xlane.f32.xlu0 %v2886
      %v2888 = vpop.xlane.xlu0 %2887
      %v2889 = vsel %vm1153, %v2883, 0.0
      %2890 = vadd.xlane.f32.xlu0 %v2889
      %v2891 = vpop.xlane.xlu0 %2890
      %v2892 = vsel %vm1160, %v2885, 0.0
      %2893 = vadd.xlane.f32.xlu0 %v2892
      %v2894 = vpop.xlane.xlu0 %2893
      %v2895 = vrcp.pop %v2888
      %v2896 = vrcp.pop %v2891
      %v2897 = vrcp.pop %v2894
      %v2898 = vmul.f32 %v2881, %v2895
      %v2899 = vmul.f32 %v2883, %v2896
      %v2900 = vmul.f32 %v2885, %v2897
      %v2901 = vpack.c.bf16 %v2899, %v2898
      %v2902 = vpack.c.bf16 %v2900, %v2900
      %v2903 = vpack.c.bf16 %v2791, %v2788
      %v2904 = vpack.c.bf16 %v2796, %v2796
      %v2906 = vsel %vm1153, %v2901, 0
      %v2909 = vsel %vm1153, %v2902, 0
      %v2912 = vand.u32 %v2904, %v1199
      %2914 = vmatprep.subr.bf16.mxu0 0
      %2915 = vmatpush1.bf16.msra.mxu0 0
      %2916 = vmatprep.subr.bf16.mxu0 0
      %2917 = vmatpush1.bf16.msra.mxu0 0
      %2918 = vmatprep.subr.bf16.mxu0 0
      %2919 = vmatpush1.bf16.msra.mxu0 0
      %2920 = vmatprep.subr.bf16.mxu0 0
      %2921 = vmatpush1.bf16.msra.mxu0 0
      %2922 = vmatprep.subr.bf16.mxu0 0
      %2923 = vmatpush1.bf16.msra.mxu0 0
      %2924 = vmatprep.subr.bf16.mxu0 0
      %2925 = vmatpush1.bf16.msra.mxu0 0
      %2926 = vmatprep.subr.bf16.mxu0 0
      %2927 = vmatpush1.bf16.msra.mxu0 %v2912
      %2928 = vmatprep.subr.bf16.mxu0 0
      %2929 = vmatpush1.bf16.msra.mxu0 %v2903
      %2930 = vmatprep.subr.bf16.mxu0 0
      %2931 = vmatpush2.bf16.msra.mxu0 0
      %2932 = vmatprep.subr.bf16.mxu0 0
      %2933 = vmatpush2.bf16.msra.mxu0 0
      %2934 = vmatprep.subr.bf16.mxu0 0
      %2935 = vmatpush2.bf16.msra.mxu0 0
      %2936 = vmatprep.subr.bf16.mxu0 0
      %2937 = vmatpush2.bf16.msra.mxu0 0
      %2938 = vmatprep.subr.bf16.mxu0 0
      %2939 = vmatpush2.bf16.msra.mxu0 0
      %2940 = vmatprep.subr.bf16.mxu0 0
      %2941 = vmatpush2.bf16.msra.mxu0 0
      %2942 = vmatprep.subr.bf16.mxu0 0
      %2943 = vmatpush2.bf16.msra.mxu0 0
      %2944 = vmatprep.subr.bf16.mxu0 0
      %2945 = vmatpush2.bf16.msra.mxu0 0
      %2946 = vmatprep.mubr.bf16.mxu0 0
      %2947 = vmatmul.mubr.bf16.gmra.mxu0 %v2906
      %v2948 = vpop.f32.mrf.mxu0
      %v2949 = vadd.f32 0.0, %v2948
      %v2950 = vpop.f32.mrf.mxu0
      %v2951 = vpop.f32.mrf.mxu0
      %v2952 = vadd.f32 0.0, %v2951
      %v2953 = vpop.f32.mrf.mxu0
      %2954 = vmatprep.mubr.bf16.mxu0 0
      %2955 = vmatmul.mubr.bf16.gmra.mxu0 %v2909
      %v2956 = vpop.f32.mrf.mxu0
      %v2957 = vadd.f32 0.0, %v2956
      %v2958 = vpop.f32.mrf.mxu0
      %v2959 = vpop.f32.mrf.mxu0
      %v2960 = vpop.f32.mrf.mxu0
      %2961 = vdwg.mxu0
      %s2962 = scalar_lea.vmem %s10, 24
      %v2963 = vld [vmem:[%s2962] sm:$0xf]
      %v2964 = vld [vmem:[%s2962 + $0x4] sm:$0xf]
      %v2965 = vpack.c.bf16 %v2952, %v2949
      %v2966 = vpack.c.bf16 %v2957, %v2957
      %v2969 = vunpack.c.l.b16 %v2963
      %v2970 = vunpack.c.l.b16 %v2964
      %v2971 = vpack.c.b16 %v2970, %v2969
      %v2974 = vsel %vm1089, %v2965, 0
      %v2977 = vsel %vm1089, %v2966, 0
      %2979 = vmatprep.subr.bf16.mxu0 0
      %2980 = vmatpush1.bf16.msra.mxu0 0
      %2981 = vmatprep.subr.bf16.mxu0 0
      %2982 = vmatpush1.bf16.msra.mxu0 0
      %2983 = vmatprep.subr.bf16.mxu0 0
      %2984 = vmatpush1.bf16.msra.mxu0 0
      %2985 = vmatprep.subr.bf16.mxu0 0
      %2986 = vmatpush1.bf16.msra.mxu0 0
      %2987 = vmatprep.subr.bf16.mxu0 0
      %2988 = vmatpush1.bf16.msra.mxu0 0
      %2989 = vmatprep.subr.bf16.mxu0 0
      %2990 = vmatpush1.bf16.msra.mxu0 0
      %2991 = vmatprep.subr.bf16.mxu0 0
      %2992 = vmatpush1.bf16.msra.mxu0 0
      %2993 = vmatprep.subr.bf16.mxu0 0
      %2994 = vmatpush1.bf16.msra.mxu0 %v2971
      %2995 = vmatprep.subr.bf16.mxu0 0
      %2996 = vmatpush2.bf16.msra.mxu0 0
      %2997 = vmatprep.subr.bf16.mxu0 0
      %2998 = vmatpush2.bf16.msra.mxu0 0
      %2999 = vmatprep.subr.bf16.mxu0 0
      %3000 = vmatpush2.bf16.msra.mxu0 0
      %3001 = vmatprep.subr.bf16.mxu0 0
      %3002 = vmatpush2.bf16.msra.mxu0 0
      %3003 = vmatprep.subr.bf16.mxu0 0
      %3004 = vmatpush2.bf16.msra.mxu0 0
      %3005 = vmatprep.subr.bf16.mxu0 0
      %3006 = vmatpush2.bf16.msra.mxu0 0
      %3007 = vmatprep.subr.bf16.mxu0 0
      %3008 = vmatpush2.bf16.msra.mxu0 0
      %3009 = vmatprep.subr.bf16.mxu0 0
      %3010 = vmatpush2.bf16.msra.mxu0 0
      %3011 = vmatprep.mubr.bf16.mxu0 0
      %3012 = vmatmul.mubr.bf16.gmra.mxu0 %v2974
      %v3013 = vpop.f32.mrf.mxu0
      %v3014 = vadd.f32 0.0, %v3013
      %v3015 = vpop.f32.mrf.mxu0
      %v3016 = vpop.f32.mrf.mxu0
      %v3017 = vadd.f32 0.0, %v3016
      %v3018 = vpop.f32.mrf.mxu0
      %3019 = vmatprep.mubr.bf16.mxu0 0
      %3020 = vmatmul.mubr.bf16.gmra.mxu0 %v2977
      %v3021 = vpop.f32.mrf.mxu0
      %v3022 = vadd.f32 0.0, %v3021
      %v3023 = vpop.f32.mrf.mxu0
      %v3024 = vpop.f32.mrf.mxu0
      %v3025 = vpop.f32.mrf.mxu0
      %3026 = vdwg.mxu0
      %v3027 = vadd.f32 %v2579, %v3014
      %v3028 = vadd.f32 %v2580, %v3017
      %v3029 = vadd.f32 %v2581, %v3022
      %s3030 = scalar_lea.vmem %s11, 1
      %v3031 = vld [vmem:[%s3030] sm:$0x1]
      %v3033 = vlaneseq
      %v3034 = vshrl.u32 %v3033, 7
      %v3035 = vsub.s32 0, %v3034
      %v3036 = vrot.slane %v3031, %v3035
      %v3038 = vadd.f32 %v3027, %v3036
      %v3039 = vadd.f32 %v3028, %v3036
      %v3040 = vadd.f32 %v3029, %v3036
      %s3041 = scalar_lea.vmem %s12, 1
      %v3042 = vld [vmem:[%s3041] sm:$0x1]
      %s3043 = scalar_lea.vmem %s13, 1
      %v3044 = vld [vmem:[%s3043] sm:$0x1]
      %v3045 = vsel %vm741, %v3038, 0.0
      %3046 = vadd.xlane.f32.xlu0 %v3045
      %v3047 = vpop.xlane.xlu0 %3046
      %v3048 = vsel %vm741, %v3039, 0.0
      %3049 = vadd.xlane.f32.xlu0 %v3048
      %v3050 = vpop.xlane.xlu0 %3049
      %v3051 = vsel %vm748, %v3040, 0.0
      %3052 = vadd.xlane.f32.xlu0 %v3051
      %v3053 = vpop.xlane.xlu0 %3052
      %v3054 = vmul.f32 %v3047, %v752
      %v3055 = vmul.f32 %v3050, %v752
      %v3056 = vmul.f32 %v3053, %v752
      %v3057 = vsub.f32 %v3038, %v3054
      %v3058 = vsub.f32 %v3039, %v3055
      %v3059 = vsub.f32 %v3040, %v3056
      %v3060 = vmul.f32 %v3057, %v3057
      %v3061 = vmul.f32 %v3058, %v3058
      %v3062 = vmul.f32 %v3059, %v3059
      %v3063 = vsel %vm741, %v3060, 0.0
      %3064 = vadd.xlane.f32.xlu0 %v3063
      %v3065 = vpop.xlane.xlu0 %3064
      %v3066 = vsel %vm741, %v3061, 0.0
      %3067 = vadd.xlane.f32.xlu0 %v3066
      %v3068 = vpop.xlane.xlu0 %3067
      %v3069 = vsel %vm748, %v3062, 0.0
      %3070 = vadd.xlane.f32.xlu0 %v3069
      %v3071 = vpop.xlane.xlu0 %3070
      %v3072 = vmul.f32 %v3065, %v752
      %v3073 = vmul.f32 %v3068, %v752
      %v3074 = vmul.f32 %v3071, %v752
      %v3075 = vadd.f32 %v3072, 1e-05
      %v3076 = vadd.f32 %v3073, 1e-05
      %v3077 = vadd.f32 %v3074, 1e-05
      %v3078 = vrsqrt.pop %v3075
      %v3079 = vrsqrt.pop %v3076
      %v3080 = vrsqrt.pop %v3077
      %v3081 = vmul.f32 %v3057, %v3078
      %v3082 = vmul.f32 %v3058, %v3079
      %v3083 = vmul.f32 %v3059, %v3080
      %v3085 = vlaneseq
      %v3086 = vshrl.u32 %v3085, 7
      %v3087 = vsub.s32 0, %v3086
      %v3088 = vrot.slane %v3042, %v3087
      %v3090 = vmul.f32 %v3081, %v3088
      %v3091 = vmul.f32 %v3082, %v3088
      %v3092 = vmul.f32 %v3083, %v3088
      %v3094 = vlaneseq
      %v3095 = vshrl.u32 %v3094, 7
      %v3096 = vsub.s32 0, %v3095
      %v3097 = vrot.slane %v3044, %v3096
      %v3099 = vadd.f32 %v3090, %v3097
      %v3100 = vadd.f32 %v3091, %v3097
      %v3101 = vadd.f32 %v3092, %v3097
      %s3102 = scalar_lea.vmem %s14, 16
      %v3103 = vld [vmem:[%s3102] sm:$0xf]
      %v3104 = vld [vmem:[%s3102 + $0x4] sm:$0xf]
      %v3105 = vld [vmem:[%s3102 + $0x8] sm:$0xf]
      %v3106 = vld [vmem:[%s3102 + $0xc] sm:$0xf]
      %v3107 = vpack.c.bf16 %v3100, %v3099
      %v3108 = vpack.c.bf16 %v3101, %v3101
      %s3109 = scalar_lea.vmem %s15, 1
      %v3110 = vld [vmem:[%s3109] sm:$0x1]
      %v3112 = vlaneseq
      %v3113 = vshrl.u32 %v3112, 7
      %v3114 = vsub.s32 0, %v3113
      %v3115 = vrot.slane %v3110, %v3114
      %v3121 = vunpack.c.l.b16 %v3103
      %v3122 = vunpack.c.l.b16 %v3104
      %v3123 = vunpack.c.l.b16 %v3105
      %v3124 = vunpack.c.l.b16 %v3106
      %v3125 = vpack.c.b16 %v3122, %v3121
      %v3126 = vpack.c.b16 %v3124, %v3123
      %v3130 = vsel %vm741, %v3107, 0
      %v3133 = vsel %vm741, %v3108, 0
      %3135 = vmatprep.subr.bf16.mxu0 0
      %3136 = vmatpush1.bf16.msra.mxu0 0
      %3137 = vmatprep.subr.bf16.mxu0 0
      %3138 = vmatpush1.bf16.msra.mxu0 0
      %3139 = vmatprep.subr.bf16.mxu0 0
      %3140 = vmatpush1.bf16.msra.mxu0 0
      %3141 = vmatprep.subr.bf16.mxu0 0
      %3142 = vmatpush1.bf16.msra.mxu0 0
      %3143 = vmatprep.subr.bf16.mxu0 0
      %3144 = vmatpush1.bf16.msra.mxu0 0
      %3145 = vmatprep.subr.bf16.mxu0 0
      %3146 = vmatpush1.bf16.msra.mxu0 0
      %3147 = vmatprep.subr.bf16.mxu0 0
      %3148 = vmatpush1.bf16.msra.mxu0 %v3126
      %3149 = vmatprep.subr.bf16.mxu0 0
      %3150 = vmatpush1.bf16.msra.mxu0 %v3125
      %3151 = vmatprep.subr.bf16.mxu0 0
      %3152 = vmatpush2.bf16.msra.mxu0 0
      %3153 = vmatprep.subr.bf16.mxu0 0
      %3154 = vmatpush2.bf16.msra.mxu0 0
      %3155 = vmatprep.subr.bf16.mxu0 0
      %3156 = vmatpush2.bf16.msra.mxu0 0
      %3157 = vmatprep.subr.bf16.mxu0 0
      %3158 = vmatpush2.bf16.msra.mxu0 0
      %3159 = vmatprep.subr.bf16.mxu0 0
      %3160 = vmatpush2.bf16.msra.mxu0 0
      %3161 = vmatprep.subr.bf16.mxu0 0
      %3162 = vmatpush2.bf16.msra.mxu0 0
      %3163 = vmatprep.subr.bf16.mxu0 0
      %3164 = vmatpush2.bf16.msra.mxu0 0
      %3165 = vmatprep.subr.bf16.mxu0 0
      %3166 = vmatpush2.bf16.msra.mxu0 0
      %3167 = vmatprep.mubr.bf16.mxu0 0
      %3168 = vmatmul.mubr.bf16.gmra.mxu0 %v3130
      %v3169 = vpop.f32.mrf.mxu0
      %v3170 = vadd.f32 %v3115, %v3169
      %v3171 = vpop.f32.mrf.mxu0
      %v3172 = vpop.f32.mrf.mxu0
      %v3173 = vadd.f32 %v3115, %v3172
      %v3174 = vpop.f32.mrf.mxu0
      %3175 = vmatprep.mubr.bf16.mxu0 0
      %3176 = vmatmul.mubr.bf16.gmra.mxu0 %v3133
      %v3177 = vpop.f32.mrf.mxu0
      %v3178 = vadd.f32 %v3115, %v3177
      %v3179 = vpop.f32.mrf.mxu0
      %v3180 = vpop.f32.mrf.mxu0
      %v3181 = vpop.f32.mrf.mxu0
      %3182 = vdwg.mxu0
      %v3183 = vmul.f32 %v3170, 1.702
      %v3184 = vmul.f32 %v3173, 1.702
      %v3185 = vmul.f32 %v3178, 1.702
      %v3186 = vxor.u32 %v3183, 2147483648
      %v3187 = vxor.u32 %v3184, 2147483648
      %v3188 = vxor.u32 %v3185, 2147483648
      %v3189 = vmul.f32 %v3186, 1.442695
      %v3190 = vpow.pop %v3189
      %v3191 = vmul.f32 %v3187, 1.442695
      %v3192 = vpow.pop %v3191
      %v3193 = vmul.f32 %v3188, 1.442695
      %v3194 = vpow.pop %v3193
      %v3195 = vadd.f32 %v3190, 1.0
      %v3196 = vadd.f32 %v3192, 1.0
      %v3197 = vadd.f32 %v3194, 1.0
      %v3198 = vrcp.pop %v3195
      %v3199 = vmul.f32 1.0, %v3198
      %v3200 = vrcp.pop %v3196
      %v3201 = vmul.f32 1.0, %v3200
      %v3202 = vrcp.pop %v3197
      %v3203 = vmul.f32 1.0, %v3202
      %v3204 = vmul.f32 %v3170, %v3199
      %v3205 = vmul.f32 %v3173, %v3201
      %v3206 = vmul.f32 %v3178, %v3203
      %s3207 = scalar_lea.vmem %s16, 64
      %v3208 = vld [vmem:[%s3207] sm:$0xf]
      %v3209 = vld [vmem:[%s3207 + $0x4] sm:$0xf]
      %v3210 = vld [vmem:[%s3207 + $0x8] sm:$0xf]
      %v3211 = vld [vmem:[%s3207 + $0xc] sm:$0xf]
      %v3212 = vld [vmem:[%s3207 + $0x10] sm:$0xf]
      %v3213 = vld [vmem:[%s3207 + $0x14] sm:$0xf]
      %v3214 = vld [vmem:[%s3207 + $0x18] sm:$0xf]
      %v3215 = vld [vmem:[%s3207 + $0x1c] sm:$0xf]
      %v3216 = vld [vmem:[%s3207 + $0x20] sm:$0xf]
      %v3217 = vld [vmem:[%s3207 + $0x24] sm:$0xf]
      %v3218 = vld [vmem:[%s3207 + $0x28] sm:$0xf]
      %v3219 = vld [vmem:[%s3207 + $0x2c] sm:$0xf]
      %v3220 = vld [vmem:[%s3207 + $0x30] sm:$0xf]
      %v3221 = vld [vmem:[%s3207 + $0x34] sm:$0xf]
      %v3222 = vld [vmem:[%s3207 + $0x38] sm:$0xf]
      %v3223 = vld [vmem:[%s3207 + $0x3c] sm:$0xf]
      %v3224 = vpack.c.bf16 %v3205, %v3204
      %v3225 = vpack.c.bf16 %v3206, %v3206
      %v3242 = vunpack.c.l.b16 %v3208
      %v3243 = vunpack.c.l.b16 %v3209
      %v3244 = vunpack.c.l.b16 %v3210
      %v3245 = vunpack.c.l.b16 %v3211
      %v3246 = vunpack.c.l.b16 %v3212
      %v3247 = vunpack.c.l.b16 %v3213
      %v3248 = vunpack.c.l.b16 %v3214
      %v3249 = vunpack.c.l.b16 %v3215
      %v3250 = vunpack.c.l.b16 %v3216
      %v3251 = vunpack.c.l.b16 %v3217
      %v3252 = vunpack.c.l.b16 %v3218
      %v3253 = vunpack.c.l.b16 %v3219
      %v3254 = vunpack.c.l.b16 %v3220
      %v3255 = vunpack.c.l.b16 %v3221
      %v3256 = vunpack.c.l.b16 %v3222
      %v3257 = vunpack.c.l.b16 %v3223
      %v3258 = vpack.c.b16 %v3243, %v3242
      %v3259 = vpack.c.b16 %v3245, %v3244
      %v3260 = vpack.c.b16 %v3247, %v3246
      %v3261 = vpack.c.b16 %v3249, %v3248
      %v3262 = vpack.c.b16 %v3251, %v3250
      %v3263 = vpack.c.b16 %v3253, %v3252
      %v3264 = vpack.c.b16 %v3255, %v3254
      %v3265 = vpack.c.b16 %v3257, %v3256
      %3274 = vmatprep.subr.bf16.mxu0 0
      %3275 = vmatpush1.bf16.msra.mxu0 %v3265
      %3276 = vmatprep.subr.bf16.mxu0 0
      %3277 = vmatpush1.bf16.msra.mxu0 %v3264
      %3278 = vmatprep.subr.bf16.mxu0 0
      %3279 = vmatpush1.bf16.msra.mxu0 %v3263
      %3280 = vmatprep.subr.bf16.mxu0 0
      %3281 = vmatpush1.bf16.msra.mxu0 %v3262
      %3282 = vmatprep.subr.bf16.mxu0 0
      %3283 = vmatpush1.bf16.msra.mxu0 %v3261
      %3284 = vmatprep.subr.bf16.mxu0 0
      %3285 = vmatpush1.bf16.msra.mxu0 %v3260
      %3286 = vmatprep.subr.bf16.mxu0 0
      %3287 = vmatpush1.bf16.msra.mxu0 %v3259
      %3288 = vmatprep.subr.bf16.mxu0 0
      %3289 = vmatpush1.bf16.msra.mxu0 %v3258
      %3290 = vmatprep.subr.bf16.mxu0 0
      %3291 = vmatpush2.bf16.msra.mxu0 0
      %3292 = vmatprep.subr.bf16.mxu0 0
      %3293 = vmatpush2.bf16.msra.mxu0 0
      %3294 = vmatprep.subr.bf16.mxu0 0
      %3295 = vmatpush2.bf16.msra.mxu0 0
      %3296 = vmatprep.subr.bf16.mxu0 0
      %3297 = vmatpush2.bf16.msra.mxu0 0
      %3298 = vmatprep.subr.bf16.mxu0 0
      %3299 = vmatpush2.bf16.msra.mxu0 0
      %3300 = vmatprep.subr.bf16.mxu0 0
      %3301 = vmatpush2.bf16.msra.mxu0 0
      %3302 = vmatprep.subr.bf16.mxu0 0
      %3303 = vmatpush2.bf16.msra.mxu0 0
      %3304 = vmatprep.subr.bf16.mxu0 0
      %3305 = vmatpush2.bf16.msra.mxu0 0
      %3306 = vmatprep.mubr.bf16.mxu0 0
      %3307 = vmatmul.mubr.bf16.gmra.mxu0 %v3224
      %v3308 = vpop.f32.mrf.mxu0
      %v3309 = vadd.f32 0.0, %v3308
      %v3310 = vpop.f32.mrf.mxu0
      %v3311 = vpop.f32.mrf.mxu0
      %v3312 = vpop.f32.mrf.mxu0
      %3313 = vmatprep.mubr.bf16.mxu0 0
      %3314 = vmatmul.mubr.bf16.gmra.mxu0 %v3225
      %v3315 = vpop.f32.mrf.mxu0
      %v3316 = vpop.f32.mrf.mxu0
      %v3317 = vpop.f32.mrf.mxu0
      %v3318 = vpop.f32.mrf.mxu0
      %3319 = vdwg.mxu0
      %v3320 = vadd.f32 %v3038, %v3309
      %s3321 = scalar_lea.vmem %s17, 1
      %v3322 = vld [vmem:[%s3321] sm:$0x1]
      %v3324 = vlaneseq
      %v3325 = vshrl.u32 %v3324, 7
      %v3326 = vsub.s32 0, %v3325
      %v3327 = vrot.slane %v3322, %v3326
      %v3329 = vadd.f32 %v3320, %v3327
      %v3330 = vld [vmem:[%s18] sm:$0x1]
      %v3331 = vld [vmem:[%s19] sm:$0x1]
      %v3332 = vsel %vm748, %v3329, 0.0
      %3333 = vadd.xlane.f32.xlu0 %v3332
      %v3334 = vpop.xlane.xlu0 %3333
      %v3335 = vmul.f32 %v3334, %v752
      %v3336 = vsub.f32 %v3329, %v3335
      %v3337 = vmul.f32 %v3336, %v3336
      %v3338 = vsel %vm748, %v3337, 0.0
      %3339 = vadd.xlane.f32.xlu0 %v3338
      %v3340 = vpop.xlane.xlu0 %3339
      %v3341 = vmul.f32 %v3340, %v752
      %v3342 = vadd.f32 %v3341, 1e-05
      %v3343 = vrsqrt.pop %v3342
      %v3344 = vmul.f32 %v3336, %v3343
      %v3345 = vmul.f32 %v3344, %v3330
      %v3346 = vadd.f32 %v3345, %v3331
      %v3347 = vld [vmem:[%s20] sm:$0xf]
      %v3348 = vld [vmem:[%s20 + $0x4] sm:$0xf]
      %v3349 = vld [vmem:[%s20 + $0x8] sm:$0xf]
      %v3350 = vld [vmem:[%s20 + $0xc] sm:$0xf]
      %v3351 = vpack.c.bf16 %v3346, %v3346
      %v3356 = vunpack.c.l.b16 %v3347
      %v3357 = vunpack.c.l.b16 %v3348
      %v3358 = vunpack.c.l.b16 %v3349
      %v3359 = vunpack.c.l.b16 %v3350
      %v3360 = vpack.c.b16 %v3357, %v3356
      %v3361 = vpack.c.b16 %v3359, %v3358
      %v3365 = vsel %vm741, %v3351, 0
      %3367 = vmatprep.subr.bf16.mxu0 0
      %3368 = vmatpush1.bf16.msra.mxu0 0
      %3369 = vmatprep.subr.bf16.mxu0 0
      %3370 = vmatpush1.bf16.msra.mxu0 0
      %3371 = vmatprep.subr.bf16.mxu0 0
      %3372 = vmatpush1.bf16.msra.mxu0 0
      %3373 = vmatprep.subr.bf16.mxu0 0
      %3374 = vmatpush1.bf16.msra.mxu0 0
      %3375 = vmatprep.subr.bf16.mxu0 0
      %3376 = vmatpush1.bf16.msra.mxu0 0
      %3377 = vmatprep.subr.bf16.mxu0 0
      %3378 = vmatpush1.bf16.msra.mxu0 0
      %3379 = vmatprep.subr.bf16.mxu0 0
      %3380 = vmatpush1.bf16.msra.mxu0 %v3361
      %3381 = vmatprep.subr.bf16.mxu0 0
      %3382 = vmatpush1.bf16.msra.mxu0 %v3360
      %3383 = vmatprep.subr.bf16.mxu0 0
      %3384 = vmatpush2.bf16.msra.mxu0 0
      %3385 = vmatprep.subr.bf16.mxu0 0
      %3386 = vmatpush2.bf16.msra.mxu0 0
      %3387 = vmatprep.subr.bf16.mxu0 0
      %3388 = vmatpush2.bf16.msra.mxu0 0
      %3389 = vmatprep.subr.bf16.mxu0 0
      %3390 = vmatpush2.bf16.msra.mxu0 0
      %3391 = vmatprep.subr.bf16.mxu0 0
      %3392 = vmatpush2.bf16.msra.mxu0 0
      %3393 = vmatprep.subr.bf16.mxu0 0
      %3394 = vmatpush2.bf16.msra.mxu0 0
      %3395 = vmatprep.subr.bf16.mxu0 0
      %3396 = vmatpush2.bf16.msra.mxu0 0
      %3397 = vmatprep.subr.bf16.mxu0 0
      %3398 = vmatpush2.bf16.msra.mxu0 0
      %3399 = vmatprep.mubr.bf16.mxu0 0
      %3400 = vmatmul.mubr.bf16.gmra.mxu0 %v3365
      %v3401 = vpop.f32.mrf.mxu0
      %v3402 = vadd.f32 0.0, %v3401
      %v3403 = vpop.f32.mrf.mxu0
      %v3404 = vpop.f32.mrf.mxu0
      %v3405 = vpop.f32.mrf.mxu0
      %3406 = vdwg.mxu0
      %3407 = vst.msk [vmem:[%s652] sm:$0x1] %vm748, %v3402
      %p3408 = scmp.lt.s32.totalorder %s32, 1
      %s3409 = scalar_select %p3408, %s32, 1
      %s3410 = scalar_lea.vmem %s21, %s3409
      // Predicated region
      $region105: #{custom_clip_forward.2} parent=103 // pred_check
        %p3411 = pneg %p496
      $region106: #{custom_clip_forward.2} parent=103 // pred_check_branch
        %3413 = sbr.rel (%p3411) target = $region108
      $region107: #{custom_clip_forward.2} parent=103 // pred_region
        _
      $region108: #{custom_clip_forward.2} parent=103 // pred_fallthru
        _
    $region104: #{custom_clip_forward.2} parent=5 // pred_fallthru
      _
    %p3414 = scmp.le.s32.totalorder 2, %s27
    // Predicated region
    $region109: #{custom_clip_forward.2} parent=5 // pred_check
      %p3415 = pneg %p3414
    $region110: #{custom_clip_forward.2} parent=5 // pred_check_branch
      %3417 = sbr.rel (%p3415) target = $region112
    $region111: #{custom_clip_forward.2} parent=5 // pred_region
      %s3418 = ssub.s32 %s27, 2
      // Predicated region
      $region113: #{custom_clip_forward.2} parent=111 // pred_check
        %p3419 = pneg %p502
      $region114: #{custom_clip_forward.2} parent=111 // pred_check_branch
        %3421 = sbr.rel (%p3419) target = $region116
      $region115: #{custom_clip_forward.2} parent=111 // pred_region
        %p3422 = scmp.lt.s32.totalorder %s33, 1
        %s3423 = scalar_select %p3422, %s33, 1
        %s3424 = scalar_lea.vmem %s21, %s3423
      $region116: #{custom_clip_forward.2} parent=111 // pred_fallthru
        _
    $region112: #{custom_clip_forward.2} parent=5 // pred_fallthru
      _
  $region6: #{custom_clip_forward.2} parent=0 // loop_footer
    %s31 = sadd.s32 1, %s27
  $region7: #{custom_clip_forward.2} parent=0 // loop_footer_branch
    %26 = sbr.rel target = $region3
  $region8: #{custom_clip_forward.2} parent=0 // loop_exit
    _

// kernel: custom_clip_forward.3
$region0: #{custom_clip_forward.3}
  #allocation0 [shape = 'u32[]', space=smem, size = 0x4, offset = 0x4, fixed_abs, tag = 'smem constant byte address 0x4 - core index']
  #allocation1 [shape = 'u32[144,128]{1,0:T(1,128)}', space=vmem, size = 0x12000, scoped, tag = 'internal scratch']
  #allocation2 [shape = 'f32[1,1]{1,0:T(1,128)S(1)}', space=vmem, size = 0x200, scoped, tag = 'scoped memory for custom_clip_forward.3']
  %s0 = inlined_call_operand.vmem [shape: f32[3,8,32], index: 0, kind: input, shape index: {}]
  %s1 = inlined_call_operand.vmem [shape: f32[2,32], index: 1, kind: input, shape index: {}]
  %s2 = inlined_call_operand.<no memory space> [shape: f32[1,1], index: 2, kind: input, shape index: {}]
  %s3 = inlined_call_operand.vmem [shape: f32[2,1,32], index: 3, kind: input, shape index: {}]
  %s4 = inlined_call_operand.vmem [shape: f32[2,1,32], index: 4, kind: input, shape index: {}]
  %s5 = inlined_call_operand.vmem [shape: bf16[12,32,16], index: 5, kind: input, shape index: {}]
  %s6 = inlined_call_operand.vmem [shape: f32[12,1,16], index: 6, kind: input, shape index: {}]
  %s7 = inlined_call_operand.vmem [shape: bf16[4,16,32], index: 7, kind: input, shape index: {}]
  %s8 = inlined_call_operand.vmem [shape: f32[2,1,32], index: 8, kind: input, shape index: {}]
  %s9 = inlined_call_operand.vmem [shape: f32[2,1,32], index: 9, kind: input, shape index: {}]
  %s10 = inlined_call_operand.vmem [shape: f32[2,1,32], index: 10, kind: input, shape index: {}]
  %s11 = inlined_call_operand.vmem [shape: bf16[2,32,128], index: 11, kind: input, shape index: {}]
  %s12 = inlined_call_operand.vmem [shape: f32[2,1,128], index: 12, kind: input, shape index: {}]
  %s13 = inlined_call_operand.vmem [shape: bf16[2,128,32], index: 13, kind: input, shape index: {}]
  %s14 = inlined_call_operand.vmem [shape: f32[2,1,32], index: 14, kind: input, shape index: {}]
  %s15 = inlined_call_operand.vmem [shape: f32[1,32], index: 15, kind: input, shape index: {}]
  %s16 = inlined_call_operand.vmem [shape: f32[1,32], index: 16, kind: input, shape index: {}]
  %s17 = inlined_call_operand.vmem [shape: bf16[32,32], index: 17, kind: input, shape index: {}]
  %s18 = inlined_call_operand.vmem [shape: f32[3,24], index: 18, kind: input, shape index: {}]
  %s19 = inlined_call_operand.hbm [shape: f32[2,3], index: 19, kind: output, shape index: {}]
  %s20 = sld [smem:[#allocation0]]
  $region86: #{custom_clip_forward.3} parent=0
    _
  %s22 = ssub.s32 1, %s20
  %s23 = scalar_select 0, %s22, %s20
  %v24 = vstv %s2
  %25 = vst [vmem:[#allocation2] sm:$0x1] %v24
  $region1: #{custom_clip_forward.3} parent=0
    #allocation3 [shape = 'u8[1024]{0}', space=vmem, size = 0x400, scoped, tag = 'output window, operand 0, single buffered']
    #allocation4 [shape = 's32[1]{0}', space=sflag, size = 0x4, scoped, tag = 'scoped memory for custom_clip_forward.3']
    %26 = vsyncpa [#allocation4], 0
    // Predicated region
    $region2: #{custom_clip_forward.3} parent=1 // pred_check
      _
    $region3: #{custom_clip_forward.3} parent=1 // pred_check_branch
      %28 = sbr.rel (0) target = $region5
    $region4: #{custom_clip_forward.3} parent=1 // pred_region
      _
    $region5: #{custom_clip_forward.3} parent=1 // pred_fallthru
      _
    // Predicated region
    $region6: #{custom_clip_forward.3} parent=1 // pred_check
      _
    $region7: #{custom_clip_forward.3} parent=1 // pred_check_branch
      %30 = sbr.rel (0) target = $region9
    $region8: #{custom_clip_forward.3} parent=1 // pred_region
      _
    $region9: #{custom_clip_forward.3} parent=1 // pred_fallthru
      _
    // Predicated region
    $region10: #{custom_clip_forward.3} parent=1 // pred_check
      _
    $region11: #{custom_clip_forward.3} parent=1 // pred_check_branch
      %32 = sbr.rel (0) target = $region13
    $region12: #{custom_clip_forward.3} parent=1 // pred_region
      _
    $region13: #{custom_clip_forward.3} parent=1 // pred_fallthru
      _
    // Predicated region
    $region14: #{custom_clip_forward.3} parent=1 // pred_check
      _
    $region15: #{custom_clip_forward.3} parent=1 // pred_check_branch
      %34 = sbr.rel (0) target = $region17
    $region16: #{custom_clip_forward.3} parent=1 // pred_region
      _
    $region17: #{custom_clip_forward.3} parent=1 // pred_fallthru
      _
    // Predicated region
    $region18: #{custom_clip_forward.3} parent=1 // pred_check
      _
    $region19: #{custom_clip_forward.3} parent=1 // pred_check_branch
      %36 = sbr.rel (0) target = $region21
    $region20: #{custom_clip_forward.3} parent=1 // pred_region
      _
    $region21: #{custom_clip_forward.3} parent=1 // pred_fallthru
      _
    // Predicated region
    $region22: #{custom_clip_forward.3} parent=1 // pred_check
      _
    $region23: #{custom_clip_forward.3} parent=1 // pred_check_branch
      %38 = sbr.rel (0) target = $region25
    $region24: #{custom_clip_forward.3} parent=1 // pred_region
      _
    $region25: #{custom_clip_forward.3} parent=1 // pred_fallthru
      _
    // Predicated region
    $region26: #{custom_clip_forward.3} parent=1 // pred_check
      _
    $region27: #{custom_clip_forward.3} parent=1 // pred_check_branch
      %40 = sbr.rel (0) target = $region29
    $region28: #{custom_clip_forward.3} parent=1 // pred_region
      _
    $region29: #{custom_clip_forward.3} parent=1 // pred_fallthru
      _
    // Predicated region
    $region30: #{custom_clip_forward.3} parent=1 // pred_check
      _
    $region31: #{custom_clip_forward.3} parent=1 // pred_check_branch
      %42 = sbr.rel (0) target = $region33
    $region32: #{custom_clip_forward.3} parent=1 // pred_region
      _
    $region33: #{custom_clip_forward.3} parent=1 // pred_fallthru
      _
    // Predicated region
    $region34: #{custom_clip_forward.3} parent=1 // pred_check
      _
    $region35: #{custom_clip_forward.3} parent=1 // pred_check_branch
      %44 = sbr.rel (0) target = $region37
    $region36: #{custom_clip_forward.3} parent=1 // pred_region
      _
    $region37: #{custom_clip_forward.3} parent=1 // pred_fallthru
      _
    // Predicated region
    $region38: #{custom_clip_forward.3} parent=1 // pred_check
      _
    $region39: #{custom_clip_forward.3} parent=1 // pred_check_branch
      %46 = sbr.rel (0) target = $region41
    $region40: #{custom_clip_forward.3} parent=1 // pred_region
      _
    $region41: #{custom_clip_forward.3} parent=1 // pred_fallthru
      _
    // Predicated region
    $region42: #{custom_clip_forward.3} parent=1 // pred_check
      _
    $region43: #{custom_clip_forward.3} parent=1 // pred_check_branch
      %48 = sbr.rel (0) target = $region45
    $region44: #{custom_clip_forward.3} parent=1 // pred_region
      _
    $region45: #{custom_clip_forward.3} parent=1 // pred_fallthru
      _
    // Predicated region
    $region46: #{custom_clip_forward.3} parent=1 // pred_check
      _
    $region47: #{custom_clip_forward.3} parent=1 // pred_check_branch
      %50 = sbr.rel (0) target = $region49
    $region48: #{custom_clip_forward.3} parent=1 // pred_region
      _
    $region49: #{custom_clip_forward.3} parent=1 // pred_fallthru
      _
    // Predicated region
    $region50: #{custom_clip_forward.3} parent=1 // pred_check
      _
    $region51: #{custom_clip_forward.3} parent=1 // pred_check_branch
      %52 = sbr.rel (0) target = $region53
    $region52: #{custom_clip_forward.3} parent=1 // pred_region
      _
    $region53: #{custom_clip_forward.3} parent=1 // pred_fallthru
      _
    // Predicated region
    $region54: #{custom_clip_forward.3} parent=1 // pred_check
      _
    $region55: #{custom_clip_forward.3} parent=1 // pred_check_branch
      %54 = sbr.rel (0) target = $region57
    $region56: #{custom_clip_forward.3} parent=1 // pred_region
      _
    $region57: #{custom_clip_forward.3} parent=1 // pred_fallthru
      _
    // Predicated region
    $region58: #{custom_clip_forward.3} parent=1 // pred_check
      _
    $region59: #{custom_clip_forward.3} parent=1 // pred_check_branch
      %56 = sbr.rel (0) target = $region61
    $region60: #{custom_clip_forward.3} parent=1 // pred_region
      _
    $region61: #{custom_clip_forward.3} parent=1 // pred_fallthru
      _
    // Predicated region
    $region62: #{custom_clip_forward.3} parent=1 // pred_check
      _
    $region63: #{custom_clip_forward.3} parent=1 // pred_check_branch
      %58 = sbr.rel (0) target = $region65
    $region64: #{custom_clip_forward.3} parent=1 // pred_region
      _
    $region65: #{custom_clip_forward.3} parent=1 // pred_fallthru
      _
    // Predicated region
    $region66: #{custom_clip_forward.3} parent=1 // pred_check
      _
    $region67: #{custom_clip_forward.3} parent=1 // pred_check_branch
      %60 = sbr.rel (0) target = $region69
    $region68: #{custom_clip_forward.3} parent=1 // pred_region
      _
    $region69: #{custom_clip_forward.3} parent=1 // pred_fallthru
      _
    // Predicated region
    $region70: #{custom_clip_forward.3} parent=1 // pred_check
      _
    $region71: #{custom_clip_forward.3} parent=1 // pred_check_branch
      %62 = sbr.rel (0) target = $region73
    $region72: #{custom_clip_forward.3} parent=1 // pred_region
      _
    $region73: #{custom_clip_forward.3} parent=1 // pred_fallthru
      _
    // Predicated region
    $region74: #{custom_clip_forward.3} parent=1 // pred_check
      _
    $region75: #{custom_clip_forward.3} parent=1 // pred_check_branch
      %64 = sbr.rel (0) target = $region77
    $region76: #{custom_clip_forward.3} parent=1 // pred_region
      _
    $region77: #{custom_clip_forward.3} parent=1 // pred_fallthru
      _
    %v66 = vld [vmem:[%s0] sm:$0xff]
    %v67 = vld [vmem:[%s0 + $0x8] sm:$0xff]
    %v68 = vld [vmem:[%s0 + $0x10] sm:$0xff]
    %v69 = vlaneseq
    %v70 = vshrl.u32 %v69, 7
    %v71 = vlaneseq
    %v72 = vand.u32 %v71, 127
    %vm73 = vcmp.gt.s32.totalorder %v72, %v70
    %v74 = vsel %vm73, -1e+09, 0.0
    %v75 = vld [vmem:[%s3] sm:$0x1]
    %v76 = vld [vmem:[%s4] sm:$0x1]
    %vm77 = vcmask 261120
    %v78 = vsel %vm77, %v66, 0.0
    %79 = vadd.xlane.f32.xlu0 %v78
    %v80 = vpop.xlane.xlu0 %79
    %v81 = vsel %vm77, %v67, 0.0
    %82 = vadd.xlane.f32.xlu0 %v81
    %v83 = vpop.xlane.xlu0 %82
    %v84 = vsel %vm77, %v68, 0.0
    %85 = vadd.xlane.f32.xlu0 %v84
    %v86 = vpop.xlane.xlu0 %85
    %v87 = vrcp.pop 32.0
    %v88 = vmul.f32 %v80, %v87
    %v89 = vmul.f32 %v83, %v87
    %v90 = vmul.f32 %v86, %v87
    %v91 = vsub.f32 %v66, %v88
    %v92 = vsub.f32 %v67, %v89
    %v93 = vsub.f32 %v68, %v90
    %v94 = vmul.f32 %v91, %v91
    %v95 = vmul.f32 %v92, %v92
    %v96 = vmul.f32 %v93, %v93
    %v97 = vsel %vm77, %v94, 0.0
    %98 = vadd.xlane.f32.xlu0 %v97
    %v99 = vpop.xlane.xlu0 %98
    %v100 = vsel %vm77, %v95, 0.0
    %101 = vadd.xlane.f32.xlu0 %v100
    %v102 = vpop.xlane.xlu0 %101
    %v103 = vsel %vm77, %v96, 0.0
    %104 = vadd.xlane.f32.xlu0 %v103
    %v105 = vpop.xlane.xlu0 %104
    %v106 = vmul.f32 %v99, %v87
    %v107 = vmul.f32 %v102, %v87
    %v108 = vmul.f32 %v105, %v87
    %v109 = vadd.f32 %v106, 1e-05
    %v110 = vadd.f32 %v107, 1e-05
    %v111 = vadd.f32 %v108, 1e-05
    %v112 = vrsqrt.pop %v109
    %v113 = vrsqrt.pop %v110
    %v114 = vrsqrt.pop %v111
    %v115 = vmul.f32 %v91, %v112
    %v116 = vmul.f32 %v92, %v113
    %v117 = vmul.f32 %v93, %v114
    %v119 = vlaneseq
    %v120 = vshrl.u32 %v119, 7
    %v121 = vsub.s32 0, %v120
    %v122 = vrot.slane %v75, %v121
    %v124 = vmul.f32 %v115, %v122
    %v125 = vmul.f32 %v116, %v122
    %v126 = vmul.f32 %v117, %v122
    %v128 = vlaneseq
    %v129 = vshrl.u32 %v128, 7
    %v130 = vsub.s32 0, %v129
    %v131 = vrot.slane %v76, %v130
    %v133 = vadd.f32 %v124, %v131
    %v134 = vadd.f32 %v125, %v131
    %v135 = vadd.f32 %v126, %v131
    %v136 = vld [vmem:[%s5] sm:$0xf]
    %v137 = vld [vmem:[%s5 + $0x4] sm:$0xf]
    %v138 = vld [vmem:[%s5 + $0x8] sm:$0xf]
    %v139 = vld [vmem:[%s5 + $0xc] sm:$0xf]
    %v140 = vpack.c.bf16 %v133, %v133
    %v141 = vpack.c.bf16 %v134, %v134
    %v142 = vpack.c.bf16 %v135, %v135
    %v143 = vld [vmem:[%s6] sm:$0x1]
    %v145 = vlaneseq
    %v146 = vshrl.u32 %v145, 7
    %v147 = vsub.s32 0, %v146
    %v148 = vrot.slane %v143, %v147
    %v153 = vunpack.c.l.b16 %v140
    %v154 = vunpack.c.l.b16 %v141
    %v155 = vunpack.c.l.b16 %v142
    %v156 = vpack.c.b16 %v154, %v153
    %v157 = vpack.c.b16 %v155, %v155
    %v162 = vunpack.c.l.b16 %v136
    %v163 = vunpack.c.l.b16 %v137
    %v164 = vunpack.c.l.b16 %v138
    %v165 = vunpack.c.l.b16 %v139
    %v166 = vpack.c.b16 %v163, %v162
    %v167 = vpack.c.b16 %v165, %v164
    %v171 = vsel %vm77, %v156, 0
    %v174 = vsel %vm77, %v157, 0
    %176 = vmatprep.subr.bf16.mxu0 0
    %177 = vmatpush1.bf16.msra.mxu0 0
    %178 = vmatprep.subr.bf16.mxu0 0
    %179 = vmatpush1.bf16.msra.mxu0 0
    %180 = vmatprep.subr.bf16.mxu0 0
    %181 = vmatpush1.bf16.msra.mxu0 0
    %182 = vmatprep.subr.bf16.mxu0 0
    %183 = vmatpush1.bf16.msra.mxu0 0
    %184 = vmatprep.subr.bf16.mxu0 0
    %185 = vmatpush1.bf16.msra.mxu0 0
    %186 = vmatprep.subr.bf16.mxu0 0
    %187 = vmatpush1.bf16.msra.mxu0 0
    %188 = vmatprep.subr.bf16.mxu0 0
    %189 = vmatpush1.bf16.msra.mxu0 %v167
    %190 = vmatprep.subr.bf16.mxu0 0
    %191 = vmatpush1.bf16.msra.mxu0 %v166
    %192 = vmatprep.subr.bf16.mxu0 0
    %193 = vmatpush2.bf16.msra.mxu0 0
    %194 = vmatprep.subr.bf16.mxu0 0
    %195 = vmatpush2.bf16.msra.mxu0 0
    %196 = vmatprep.subr.bf16.mxu0 0
    %197 = vmatpush2.bf16.msra.mxu0 0
    %198 = vmatprep.subr.bf16.mxu0 0
    %199 = vmatpush2.bf16.msra.mxu0 0
    %200 = vmatprep.subr.bf16.mxu0 0
    %201 = vmatpush2.bf16.msra.mxu0 0
    %202 = vmatprep.subr.bf16.mxu0 0
    %203 = vmatpush2.bf16.msra.mxu0 0
    %204 = vmatprep.subr.bf16.mxu0 0
    %205 = vmatpush2.bf16.msra.mxu0 0
    %206 = vmatprep.subr.bf16.mxu0 0
    %207 = vmatpush2.bf16.msra.mxu0 0
    %208 = vmatprep.mubr.bf16.mxu0 0
    %209 = vmatmul.mubr.bf16.gmra.mxu0 %v171
    %v210 = vpop.f32.mrf.mxu0
    %v211 = vadd.f32 %v148, %v210
    %v212 = vpop.f32.mrf.mxu0
    %v213 = vpop.f32.mrf.mxu0
    %v214 = vadd.f32 %v148, %v213
    %v215 = vpop.f32.mrf.mxu0
    %216 = vmatprep.mubr.bf16.mxu0 0
    %217 = vmatmul.mubr.bf16.gmra.mxu0 %v174
    %v218 = vpop.f32.mrf.mxu0
    %v219 = vadd.f32 %v148, %v218
    %v220 = vpop.f32.mrf.mxu0
    %v221 = vpop.f32.mrf.mxu0
    %v222 = vpop.f32.mrf.mxu0
    %223 = vdwg.mxu0
    %s224 = scalar_lea.vmem %s5, 32
    %v225 = vld [vmem:[%s224] sm:$0xf]
    %v226 = vld [vmem:[%s224 + $0x4] sm:$0xf]
    %v227 = vld [vmem:[%s224 + $0x8] sm:$0xf]
    %v228 = vld [vmem:[%s224 + $0xc] sm:$0xf]
    %s229 = scalar_lea.vmem %s6, 2
    %v230 = vld [vmem:[%s229] sm:$0x1]
    %v232 = vlaneseq
    %v233 = vshrl.u32 %v232, 7
    %v234 = vsub.s32 0, %v233
    %v235 = vrot.slane %v230, %v234
    %v241 = vunpack.c.l.b16 %v225
    %v242 = vunpack.c.l.b16 %v226
    %v243 = vunpack.c.l.b16 %v227
    %v244 = vunpack.c.l.b16 %v228
    %v245 = vpack.c.b16 %v242, %v241
    %v246 = vpack.c.b16 %v244, %v243
    %249 = vmatprep.subr.bf16.mxu0 0
    %250 = vmatpush1.bf16.msra.mxu0 0
    %251 = vmatprep.subr.bf16.mxu0 0
    %252 = vmatpush1.bf16.msra.mxu0 0
    %253 = vmatprep.subr.bf16.mxu0 0
    %254 = vmatpush1.bf16.msra.mxu0 0
    %255 = vmatprep.subr.bf16.mxu0 0
    %256 = vmatpush1.bf16.msra.mxu0 0
    %257 = vmatprep.subr.bf16.mxu0 0
    %258 = vmatpush1.bf16.msra.mxu0 0
    %259 = vmatprep.subr.bf16.mxu0 0
    %260 = vmatpush1.bf16.msra.mxu0 0
    %261 = vmatprep.subr.bf16.mxu0 0
    %262 = vmatpush1.bf16.msra.mxu0 %v246
    %263 = vmatprep.subr.bf16.mxu0 0
    %264 = vmatpush1.bf16.msra.mxu0 %v245
    %265 = vmatprep.subr.bf16.mxu0 0
    %266 = vmatpush2.bf16.msra.mxu0 0
    %267 = vmatprep.subr.bf16.mxu0 0
    %268 = vmatpush2.bf16.msra.mxu0 0
    %269 = vmatprep.subr.bf16.mxu0 0
    %270 = vmatpush2.bf16.msra.mxu0 0
    %271 = vmatprep.subr.bf16.mxu0 0
    %272 = vmatpush2.bf16.msra.mxu0 0
    %273 = vmatprep.subr.bf16.mxu0 0
    %274 = vmatpush2.bf16.msra.mxu0 0
    %275 = vmatprep.subr.bf16.mxu0 0
    %276 = vmatpush2.bf16.msra.mxu0 0
    %277 = vmatprep.subr.bf16.mxu0 0
    %278 = vmatpush2.bf16.msra.mxu0 0
    %279 = vmatprep.subr.bf16.mxu0 0
    %280 = vmatpush2.bf16.msra.mxu0 0
    %281 = vmatprep.mubr.bf16.mxu0 0
    %282 = vmatmul.mubr.bf16.gmra.mxu0 %v171
    %v283 = vpop.f32.mrf.mxu0
    %v284 = vadd.f32 %v235, %v283
    %v285 = vpop.f32.mrf.mxu0
    %v286 = vpop.f32.mrf.mxu0
    %v287 = vadd.f32 %v235, %v286
    %v288 = vpop.f32.mrf.mxu0
    %289 = vmatprep.mubr.bf16.mxu0 0
    %290 = vmatmul.mubr.bf16.gmra.mxu0 %v174
    %v291 = vpop.f32.mrf.mxu0
    %v292 = vadd.f32 %v235, %v291
    %v293 = vpop.f32.mrf.mxu0
    %v294 = vpop.f32.mrf.mxu0
    %v295 = vpop.f32.mrf.mxu0
    %296 = vdwg.mxu0
    %s297 = scalar_lea.vmem %s5, 64
    %v298 = vld [vmem:[%s297] sm:$0xf]
    %v299 = vld [vmem:[%s297 + $0x4] sm:$0xf]
    %v300 = vld [vmem:[%s297 + $0x8] sm:$0xf]
    %v301 = vld [vmem:[%s297 + $0xc] sm:$0xf]
    %s302 = scalar_lea.vmem %s6, 4
    %v303 = vld [vmem:[%s302] sm:$0x1]
    %v305 = vlaneseq
    %v306 = vshrl.u32 %v305, 7
    %v307 = vsub.s32 0, %v306
    %v308 = vrot.slane %v303, %v307
    %v314 = vunpack.c.l.b16 %v298
    %v315 = vunpack.c.l.b16 %v299
    %v316 = vunpack.c.l.b16 %v300
    %v317 = vunpack.c.l.b16 %v301
    %v318 = vpack.c.b16 %v315, %v314
    %v319 = vpack.c.b16 %v317, %v316
    %322 = vmatprep.subr.bf16.mxu0 0
    %323 = vmatpush1.bf16.msra.mxu0 0
    %324 = vmatprep.subr.bf16.mxu0 0
    %325 = vmatpush1.bf16.msra.mxu0 0
    %326 = vmatprep.subr.bf16.mxu0 0
    %327 = vmatpush1.bf16.msra.mxu0 0
    %328 = vmatprep.subr.bf16.mxu0 0
    %329 = vmatpush1.bf16.msra.mxu0 0
    %330 = vmatprep.subr.bf16.mxu0 0
    %331 = vmatpush1.bf16.msra.mxu0 0
    %332 = vmatprep.subr.bf16.mxu0 0
    %333 = vmatpush1.bf16.msra.mxu0 0
    %334 = vmatprep.subr.bf16.mxu0 0
    %335 = vmatpush1.bf16.msra.mxu0 %v319
    %336 = vmatprep.subr.bf16.mxu0 0
    %337 = vmatpush1.bf16.msra.mxu0 %v318
    %338 = vmatprep.subr.bf16.mxu0 0
    %339 = vmatpush2.bf16.msra.mxu0 0
    %340 = vmatprep.subr.bf16.mxu0 0
    %341 = vmatpush2.bf16.msra.mxu0 0
    %342 = vmatprep.subr.bf16.mxu0 0
    %343 = vmatpush2.bf16.msra.mxu0 0
    %344 = vmatprep.subr.bf16.mxu0 0
    %345 = vmatpush2.bf16.msra.mxu0 0
    %346 = vmatprep.subr.bf16.mxu0 0
    %347 = vmatpush2.bf16.msra.mxu0 0
    %348 = vmatprep.subr.bf16.mxu0 0
    %349 = vmatpush2.bf16.msra.mxu0 0
    %350 = vmatprep.subr.bf16.mxu0 0
    %351 = vmatpush2.bf16.msra.mxu0 0
    %352 = vmatprep.subr.bf16.mxu0 0
    %353 = vmatpush2.bf16.msra.mxu0 0
    %354 = vmatprep.mubr.bf16.mxu0 0
    %355 = vmatmul.mubr.bf16.gmra.mxu0 %v171
    %v356 = vpop.f32.mrf.mxu0
    %v357 = vadd.f32 %v308, %v356
    %v358 = vpop.f32.mrf.mxu0
    %v359 = vpop.f32.mrf.mxu0
    %v360 = vadd.f32 %v308, %v359
    %v361 = vpop.f32.mrf.mxu0
    %362 = vmatprep.mubr.bf16.mxu0 0
    %363 = vmatmul.mubr.bf16.gmra.mxu0 %v174
    %v364 = vpop.f32.mrf.mxu0
    %v365 = vadd.f32 %v308, %v364
    %v366 = vpop.f32.mrf.mxu0
    %v367 = vpop.f32.mrf.mxu0
    %v368 = vpop.f32.mrf.mxu0
    %369 = vdwg.mxu0
    %v370 = vpack.c.bf16 %v211, %v211
    %v371 = vpack.c.bf16 %v214, %v214
    %v372 = vpack.c.bf16 %v219, %v219
    %v373 = vpack.c.bf16 %v284, %v284
    %v374 = vpack.c.bf16 %v287, %v287
    %v375 = vpack.c.bf16 %v292, %v292
    %vm376 = vcmask 130048
    %v378 = vsel %vm376, %v370, 0
    %v381 = vsel %vm376, %v373, 0
    %383 = vmatprep.subr.bf16.mxu0 0
    %384 = vmatpush1.bf16.xpose.msra.mxu0 0
    %385 = vmatprep.subr.bf16.mxu0 0
    %386 = vmatpush1.bf16.xpose.msra.mxu0 0
    %387 = vmatprep.subr.bf16.mxu0 0
    %388 = vmatpush1.bf16.xpose.msra.mxu0 0
    %389 = vmatprep.subr.bf16.mxu0 0
    %390 = vmatpush1.bf16.xpose.msra.mxu0 0
    %391 = vmatprep.subr.bf16.mxu0 0
    %392 = vmatpush1.bf16.xpose.msra.mxu0 0
    %393 = vmatprep.subr.bf16.mxu0 0
    %394 = vmatpush1.bf16.xpose.msra.mxu0 0
    %395 = vmatprep.subr.bf16.mxu0 0
    %396 = vmatpush1.bf16.xpose.msra.mxu0 0
    %397 = vmatprep.subr.bf16.mxu0 0
    %398 = vmatpush1.bf16.xpose.msra.mxu0 %v381
    %399 = vmatprep.subr.bf16.mxu0 0
    %400 = vmatpush2.bf16.xpose.msra.mxu0 0
    %401 = vmatprep.subr.bf16.mxu0 0
    %402 = vmatpush2.bf16.xpose.msra.mxu0 0
    %403 = vmatprep.subr.bf16.mxu0 0
    %404 = vmatpush2.bf16.xpose.msra.mxu0 0
    %405 = vmatprep.subr.bf16.mxu0 0
    %406 = vmatpush2.bf16.xpose.msra.mxu0 0
    %407 = vmatprep.subr.bf16.mxu0 0
    %408 = vmatpush2.bf16.xpose.msra.mxu0 0
    %409 = vmatprep.subr.bf16.mxu0 0
    %410 = vmatpush2.bf16.xpose.msra.mxu0 0
    %411 = vmatprep.subr.bf16.mxu0 0
    %412 = vmatpush2.bf16.xpose.msra.mxu0 0
    %413 = vmatprep.subr.bf16.mxu0 0
    %414 = vmatpush2.bf16.xpose.msra.mxu0 0
    %415 = vmatprep.mubr.bf16.mxu0 0
    %416 = vmatmul.mubr.bf16.gmra.mxu0 %v378
    %v417 = vpop.f32.mrf.mxu0
    %v418 = vadd.f32 0.0, %v417
    %v419 = vpop.f32.mrf.mxu0
    %v420 = vpop.f32.mrf.mxu0
    %v421 = vpop.f32.mrf.mxu0
    %422 = vdwg.mxu0
    %v424 = vsel %vm376, %v371, 0
    %v427 = vsel %vm376, %v374, 0
    %429 = vmatprep.subr.bf16.mxu0 0
    %430 = vmatpush1.bf16.xpose.msra.mxu0 0
    %431 = vmatprep.subr.bf16.mxu0 0
    %432 = vmatpush1.bf16.xpose.msra.mxu0 0
    %433 = vmatprep.subr.bf16.mxu0 0
    %434 = vmatpush1.bf16.xpose.msra.mxu0 0
    %435 = vmatprep.subr.bf16.mxu0 0
    %436 = vmatpush1.bf16.xpose.msra.mxu0 0
    %437 = vmatprep.subr.bf16.mxu0 0
    %438 = vmatpush1.bf16.xpose.msra.mxu0 0
    %439 = vmatprep.subr.bf16.mxu0 0
    %440 = vmatpush1.bf16.xpose.msra.mxu0 0
    %441 = vmatprep.subr.bf16.mxu0 0
    %442 = vmatpush1.bf16.xpose.msra.mxu0 0
    %443 = vmatprep.subr.bf16.mxu0 0
    %444 = vmatpush1.bf16.xpose.msra.mxu0 %v427
    %445 = vmatprep.subr.bf16.mxu0 0
    %446 = vmatpush2.bf16.xpose.msra.mxu0 0
    %447 = vmatprep.subr.bf16.mxu0 0
    %448 = vmatpush2.bf16.xpose.msra.mxu0 0
    %449 = vmatprep.subr.bf16.mxu0 0
    %450 = vmatpush2.bf16.xpose.msra.mxu0 0
    %451 = vmatprep.subr.bf16.mxu0 0
    %452 = vmatpush2.bf16.xpose.msra.mxu0 0
    %453 = vmatprep.subr.bf16.mxu0 0
    %454 = vmatpush2.bf16.xpose.msra.mxu0 0
    %455 = vmatprep.subr.bf16.mxu0 0
    %456 = vmatpush2.bf16.xpose.msra.mxu0 0
    %457 = vmatprep.subr.bf16.mxu0 0
    %458 = vmatpush2.bf16.xpose.msra.mxu0 0
    %459 = vmatprep.subr.bf16.mxu0 0
    %460 = vmatpush2.bf16.xpose.msra.mxu0 0
    %461 = vmatprep.mubr.bf16.mxu0 0
    %462 = vmatmul.mubr.bf16.gmra.mxu0 %v424
    %v463 = vpop.f32.mrf.mxu0
    %v464 = vadd.f32 0.0, %v463
    %v465 = vpop.f32.mrf.mxu0
    %v466 = vpop.f32.mrf.mxu0
    %v467 = vpop.f32.mrf.mxu0
    %468 = vdwg.mxu0
    %v470 = vsel %vm376, %v372, 0
    %v473 = vsel %vm376, %v375, 0
    %475 = vmatprep.subr.bf16.mxu0 0
    %476 = vmatpush1.bf16.xpose.msra.mxu0 0
    %477 = vmatprep.subr.bf16.mxu0 0
    %478 = vmatpush1.bf16.xpose.msra.mxu0 0
    %479 = vmatprep.subr.bf16.mxu0 0
    %480 = vmatpush1.bf16.xpose.msra.mxu0 0
    %481 = vmatprep.subr.bf16.mxu0 0
    %482 = vmatpush1.bf16.xpose.msra.mxu0 0
    %483 = vmatprep.subr.bf16.mxu0 0
    %484 = vmatpush1.bf16.xpose.msra.mxu0 0
    %485 = vmatprep.subr.bf16.mxu0 0
    %486 = vmatpush1.bf16.xpose.msra.mxu0 0
    %487 = vmatprep.subr.bf16.mxu0 0
    %488 = vmatpush1.bf16.xpose.msra.mxu0 0
    %489 = vmatprep.subr.bf16.mxu0 0
    %490 = vmatpush1.bf16.xpose.msra.mxu0 %v473
    %491 = vmatprep.subr.bf16.mxu0 0
    %492 = vmatpush2.bf16.xpose.msra.mxu0 0
    %493 = vmatprep.subr.bf16.mxu0 0
    %494 = vmatpush2.bf16.xpose.msra.mxu0 0
    %495 = vmatprep.subr.bf16.mxu0 0
    %496 = vmatpush2.bf16.xpose.msra.mxu0 0
    %497 = vmatprep.subr.bf16.mxu0 0
    %498 = vmatpush2.bf16.xpose.msra.mxu0 0
    %499 = vmatprep.subr.bf16.mxu0 0
    %500 = vmatpush2.bf16.xpose.msra.mxu0 0
    %501 = vmatprep.subr.bf16.mxu0 0
    %502 = vmatpush2.bf16.xpose.msra.mxu0 0
    %503 = vmatprep.subr.bf16.mxu0 0
    %504 = vmatpush2.bf16.xpose.msra.mxu0 0
    %505 = vmatprep.subr.bf16.mxu0 0
    %506 = vmatpush2.bf16.xpose.msra.mxu0 0
    %507 = vmatprep.mubr.bf16.mxu0 0
    %508 = vmatmul.mubr.bf16.gmra.mxu0 %v470
    %v509 = vpop.f32.mrf.mxu0
    %v510 = vadd.f32 0.0, %v509
    %v511 = vpop.f32.mrf.mxu0
    %v512 = vpop.f32.mrf.mxu0
    %v513 = vpop.f32.mrf.mxu0
    %514 = vdwg.mxu0
    %v515 = vmul.f32 %v418, 0.25
    %v516 = vmul.f32 %v464, 0.25
    %v517 = vmul.f32 %v510, 0.25
    %v518 = vadd.f32 %v515, %v74
    %v519 = vadd.f32 %v516, %v74
    %v520 = vadd.f32 %v517, %v74
    %vm521 = vcmask 64512
    %v522 = vsel %vm521, %v518, -inf
    %523 = vmax.xlane.f32.xlu0 %v522
    %v524 = vpop.xlane.xlu0 %523
    %v525 = vsel %vm521, %v519, -inf
    %526 = vmax.xlane.f32.xlu0 %v525
    %v527 = vpop.xlane.xlu0 %526
    %v528 = vsel %vm521, %v520, -inf
    %529 = vmax.xlane.f32.xlu0 %v528
    %v530 = vpop.xlane.xlu0 %529
    %v531 = vsub.f32 %v518, %v524
    %v532 = vsub.f32 %v519, %v527
    %v533 = vsub.f32 %v520, %v530
    %v534 = vmul.f32 %v531, 1.442695
    %v535 = vpow.pop %v534
    %v536 = vmul.f32 %v532, 1.442695
    %v537 = vpow.pop %v536
    %v538 = vmul.f32 %v533, 1.442695
    %v539 = vpow.pop %v538
    %v540 = vsel %vm521, %v535, 0.0
    %541 = vadd.xlane.f32.xlu0 %v540
    %v542 = vpop.xlane.xlu0 %541
    %v543 = vsel %vm521, %v537, 0.0
    %544 = vadd.xlane.f32.xlu0 %v543
    %v545 = vpop.xlane.xlu0 %544
    %v546 = vsel %vm521, %v539, 0.0
    %547 = vadd.xlane.f32.xlu0 %v546
    %v548 = vpop.xlane.xlu0 %547
    %v549 = vrcp.pop %v542
    %v550 = vrcp.pop %v545
    %v551 = vrcp.pop %v548
    %v552 = vmul.f32 %v535, %v549
    %v553 = vmul.f32 %v537, %v550
    %v554 = vmul.f32 %v539, %v551
    %v555 = vpack.c.bf16 %v552, %v552
    %v556 = vpack.c.bf16 %v553, %v553
    %v557 = vpack.c.bf16 %v554, %v554
    %v558 = vpack.c.bf16 %v357, %v357
    %v559 = vpack.c.bf16 %v360, %v360
    %v560 = vpack.c.bf16 %v365, %v365
    %v562 = vsel %vm521, %v555, 0
    %vm564 = vcmask 1043456
    %v566 = vsel %vm564, %v558, 0
    %568 = vmatprep.subr.bf16.mxu0 0
    %569 = vmatpush1.bf16.msra.mxu0 0
    %570 = vmatprep.subr.bf16.mxu0 0
    %571 = vmatpush1.bf16.msra.mxu0 0
    %572 = vmatprep.subr.bf16.mxu0 0
    %573 = vmatpush1.bf16.msra.mxu0 0
    %574 = vmatprep.subr.bf16.mxu0 0
    %575 = vmatpush1.bf16.msra.mxu0 0
    %576 = vmatprep.subr.bf16.mxu0 0
    %577 = vmatpush1.bf16.msra.mxu0 0
    %578 = vmatprep.subr.bf16.mxu0 0
    %579 = vmatpush1.bf16.msra.mxu0 0
    %580 = vmatprep.subr.bf16.mxu0 0
    %581 = vmatpush1.bf16.msra.mxu0 0
    %582 = vmatprep.subr.bf16.mxu0 0
    %583 = vmatpush1.bf16.msra.mxu0 %v566
    %584 = vmatprep.subr.bf16.mxu0 0
    %585 = vmatpush2.bf16.msra.mxu0 0
    %586 = vmatprep.subr.bf16.mxu0 0
    %587 = vmatpush2.bf16.msra.mxu0 0
    %588 = vmatprep.subr.bf16.mxu0 0
    %589 = vmatpush2.bf16.msra.mxu0 0
    %590 = vmatprep.subr.bf16.mxu0 0
    %591 = vmatpush2.bf16.msra.mxu0 0
    %592 = vmatprep.subr.bf16.mxu0 0
    %593 = vmatpush2.bf16.msra.mxu0 0
    %594 = vmatprep.subr.bf16.mxu0 0
    %595 = vmatpush2.bf16.msra.mxu0 0
    %596 = vmatprep.subr.bf16.mxu0 0
    %597 = vmatpush2.bf16.msra.mxu0 0
    %598 = vmatprep.subr.bf16.mxu0 0
    %599 = vmatpush2.bf16.msra.mxu0 0
    %600 = vmatprep.mubr.bf16.mxu0 0
    %601 = vmatmul.mubr.bf16.gmra.mxu0 %v562
    %v602 = vpop.f32.mrf.mxu0
    %v603 = vadd.f32 0.0, %v602
    %v604 = vpop.f32.mrf.mxu0
    %v605 = vpop.f32.mrf.mxu0
    %v606 = vpop.f32.mrf.mxu0
    %607 = vdwg.mxu0
    %v609 = vsel %vm521, %v556, 0
    %v612 = vsel %vm564, %v559, 0
    %614 = vmatprep.subr.bf16.mxu0 0
    %615 = vmatpush1.bf16.msra.mxu0 0
    %616 = vmatprep.subr.bf16.mxu0 0
    %617 = vmatpush1.bf16.msra.mxu0 0
    %618 = vmatprep.subr.bf16.mxu0 0
    %619 = vmatpush1.bf16.msra.mxu0 0
    %620 = vmatprep.subr.bf16.mxu0 0
    %621 = vmatpush1.bf16.msra.mxu0 0
    %622 = vmatprep.subr.bf16.mxu0 0
    %623 = vmatpush1.bf16.msra.mxu0 0
    %624 = vmatprep.subr.bf16.mxu0 0
    %625 = vmatpush1.bf16.msra.mxu0 0
    %626 = vmatprep.subr.bf16.mxu0 0
    %627 = vmatpush1.bf16.msra.mxu0 0
    %628 = vmatprep.subr.bf16.mxu0 0
    %629 = vmatpush1.bf16.msra.mxu0 %v612
    %630 = vmatprep.subr.bf16.mxu0 0
    %631 = vmatpush2.bf16.msra.mxu0 0
    %632 = vmatprep.subr.bf16.mxu0 0
    %633 = vmatpush2.bf16.msra.mxu0 0
    %634 = vmatprep.subr.bf16.mxu0 0
    %635 = vmatpush2.bf16.msra.mxu0 0
    %636 = vmatprep.subr.bf16.mxu0 0
    %637 = vmatpush2.bf16.msra.mxu0 0
    %638 = vmatprep.subr.bf16.mxu0 0
    %639 = vmatpush2.bf16.msra.mxu0 0
    %640 = vmatprep.subr.bf16.mxu0 0
    %641 = vmatpush2.bf16.msra.mxu0 0
    %642 = vmatprep.subr.bf16.mxu0 0
    %643 = vmatpush2.bf16.msra.mxu0 0
    %644 = vmatprep.subr.bf16.mxu0 0
    %645 = vmatpush2.bf16.msra.mxu0 0
    %646 = vmatprep.mubr.bf16.mxu0 0
    %647 = vmatmul.mubr.bf16.gmra.mxu0 %v609
    %v648 = vpop.f32.mrf.mxu0
    %v649 = vadd.f32 0.0, %v648
    %v650 = vpop.f32.mrf.mxu0
    %v651 = vpop.f32.mrf.mxu0
    %v652 = vpop.f32.mrf.mxu0
    %653 = vdwg.mxu0
    %v655 = vsel %vm521, %v557, 0
    %v658 = vsel %vm564, %v560, 0
    %660 = vmatprep.subr.bf16.mxu0 0
    %661 = vmatpush1.bf16.msra.mxu0 0
    %662 = vmatprep.subr.bf16.mxu0 0
    %663 = vmatpush1.bf16.msra.mxu0 0
    %664 = vmatprep.subr.bf16.mxu0 0
    %665 = vmatpush1.bf16.msra.mxu0 0
    %666 = vmatprep.subr.bf16.mxu0 0
    %667 = vmatpush1.bf16.msra.mxu0 0
    %668 = vmatprep.subr.bf16.mxu0 0
    %669 = vmatpush1.bf16.msra.mxu0 0
    %670 = vmatprep.subr.bf16.mxu0 0
    %671 = vmatpush1.bf16.msra.mxu0 0
    %672 = vmatprep.subr.bf16.mxu0 0
    %673 = vmatpush1.bf16.msra.mxu0 0
    %674 = vmatprep.subr.bf16.mxu0 0
    %675 = vmatpush1.bf16.msra.mxu0 %v658
    %676 = vmatprep.subr.bf16.mxu0 0
    %677 = vmatpush2.bf16.msra.mxu0 0
    %678 = vmatprep.subr.bf16.mxu0 0
    %679 = vmatpush2.bf16.msra.mxu0 0
    %680 = vmatprep.subr.bf16.mxu0 0
    %681 = vmatpush2.bf16.msra.mxu0 0
    %682 = vmatprep.subr.bf16.mxu0 0
    %683 = vmatpush2.bf16.msra.mxu0 0
    %684 = vmatprep.subr.bf16.mxu0 0
    %685 = vmatpush2.bf16.msra.mxu0 0
    %686 = vmatprep.subr.bf16.mxu0 0
    %687 = vmatpush2.bf16.msra.mxu0 0
    %688 = vmatprep.subr.bf16.mxu0 0
    %689 = vmatpush2.bf16.msra.mxu0 0
    %690 = vmatprep.subr.bf16.mxu0 0
    %691 = vmatpush2.bf16.msra.mxu0 0
    %692 = vmatprep.mubr.bf16.mxu0 0
    %693 = vmatmul.mubr.bf16.gmra.mxu0 %v655
    %v694 = vpop.f32.mrf.mxu0
    %v695 = vadd.f32 0.0, %v694
    %v696 = vpop.f32.mrf.mxu0
    %v697 = vpop.f32.mrf.mxu0
    %v698 = vpop.f32.mrf.mxu0
    %699 = vdwg.mxu0
    %v700 = vld [vmem:[%s7] sm:$0xf]
    %v701 = vld [vmem:[%s7 + $0x4] sm:$0xf]
    %v702 = vpack.c.bf16 %v603, %v603
    %v703 = vpack.c.bf16 %v649, %v649
    %v704 = vpack.c.bf16 %v695, %v695
    %v708 = vunpack.c.l.b16 %v702
    %v709 = vunpack.c.l.b16 %v703
    %v710 = vunpack.c.l.b16 %v704
    %v711 = vpack.c.b16 %v709, %v708
    %v712 = vpack.c.b16 %v710, %v710
    %v715 = vunpack.c.l.b16 %v700
    %v716 = vunpack.c.l.b16 %v701
    %v717 = vpack.c.b16 %v716, %v715
    %v720 = vsel %vm376, %v711, 0
    %v723 = vsel %vm376, %v712, 0
    %725 = vmatprep.subr.bf16.mxu0 0
    %726 = vmatpush1.bf16.msra.mxu0 0
    %727 = vmatprep.subr.bf16.mxu0 0
    %728 = vmatpush1.bf16.msra.mxu0 0
    %729 = vmatprep.subr.bf16.mxu0 0
    %730 = vmatpush1.bf16.msra.mxu0 0
    %731 = vmatprep.subr.bf16.mxu0 0
    %732 = vmatpush1.bf16.msra.mxu0 0
    %733 = vmatprep.subr.bf16.mxu0 0
    %734 = vmatpush1.bf16.msra.mxu0 0
    %735 = vmatprep.subr.bf16.mxu0 0
    %736 = vmatpush1.bf16.msra.mxu0 0
    %737 = vmatprep.subr.bf16.mxu0 0
    %738 = vmatpush1.bf16.msra.mxu0 0
    %739 = vmatprep.subr.bf16.mxu0 0
    %740 = vmatpush1.bf16.msra.mxu0 %v717
    %741 = vmatprep.subr.bf16.mxu0 0
    %742 = vmatpush2.bf16.msra.mxu0 0
    %743 = vmatprep.subr.bf16.mxu0 0
    %744 = vmatpush2.bf16.msra.mxu0 0
    %745 = vmatprep.subr.bf16.mxu0 0
    %746 = vmatpush2.bf16.msra.mxu0 0
    %747 = vmatprep.subr.bf16.mxu0 0
    %748 = vmatpush2.bf16.msra.mxu0 0
    %749 = vmatprep.subr.bf16.mxu0 0
    %750 = vmatpush2.bf16.msra.mxu0 0
    %751 = vmatprep.subr.bf16.mxu0 0
    %752 = vmatpush2.bf16.msra.mxu0 0
    %753 = vmatprep.subr.bf16.mxu0 0
    %754 = vmatpush2.bf16.msra.mxu0 0
    %755 = vmatprep.subr.bf16.mxu0 0
    %756 = vmatpush2.bf16.msra.mxu0 0
    %757 = vmatprep.mubr.bf16.mxu0 0
    %758 = vmatmul.mubr.bf16.gmra.mxu0 %v720
    %v759 = vpop.f32.mrf.mxu0
    %v760 = vadd.f32 0.0, %v759
    %v761 = vpop.f32.mrf.mxu0
    %v762 = vpop.f32.mrf.mxu0
    %v763 = vadd.f32 0.0, %v762
    %v764 = vpop.f32.mrf.mxu0
    %765 = vmatprep.mubr.bf16.mxu0 0
    %766 = vmatmul.mubr.bf16.gmra.mxu0 %v723
    %v767 = vpop.f32.mrf.mxu0
    %v768 = vadd.f32 0.0, %v767
    %v769 = vpop.f32.mrf.mxu0
    %v770 = vpop.f32.mrf.mxu0
    %v771 = vpop.f32.mrf.mxu0
    %772 = vdwg.mxu0
    %v773 = vadd.f32 %v66, %v760
    %v774 = vadd.f32 %v67, %v763
    %v775 = vadd.f32 %v68, %v768
    %s776 = scalar_lea.vmem %s5, 16
    %v777 = vld [vmem:[%s776] sm:$0xf]
    %v778 = vld [vmem:[%s776 + $0x4] sm:$0xf]
    %v779 = vld [vmem:[%s776 + $0x8] sm:$0xf]
    %v780 = vld [vmem:[%s776 + $0xc] sm:$0xf]
    %s781 = scalar_lea.vmem %s6, 1
    %v782 = vld [vmem:[%s781] sm:$0x1]
    %v784 = vlaneseq
    %v785 = vshrl.u32 %v784, 7
    %v786 = vsub.s32 0, %v785
    %v787 = vrot.slane %v782, %v786
    %v793 = vunpack.c.l.b16 %v777
    %v794 = vunpack.c.l.b16 %v778
    %v795 = vunpack.c.l.b16 %v779
    %v796 = vunpack.c.l.b16 %v780
    %v797 = vpack.c.b16 %v794, %v793
    %v798 = vpack.c.b16 %v796, %v795
    %801 = vmatprep.subr.bf16.mxu0 0
    %802 = vmatpush1.bf16.msra.mxu0 0
    %803 = vmatprep.subr.bf16.mxu0 0
    %804 = vmatpush1.bf16.msra.mxu0 0
    %805 = vmatprep.subr.bf16.mxu0 0
    %806 = vmatpush1.bf16.msra.mxu0 0
    %807 = vmatprep.subr.bf16.mxu0 0
    %808 = vmatpush1.bf16.msra.mxu0 0
    %809 = vmatprep.subr.bf16.mxu0 0
    %810 = vmatpush1.bf16.msra.mxu0 0
    %811 = vmatprep.subr.bf16.mxu0 0
    %812 = vmatpush1.bf16.msra.mxu0 0
    %813 = vmatprep.subr.bf16.mxu0 0
    %814 = vmatpush1.bf16.msra.mxu0 %v798
    %815 = vmatprep.subr.bf16.mxu0 0
    %816 = vmatpush1.bf16.msra.mxu0 %v797
    %817 = vmatprep.subr.bf16.mxu0 0
    %818 = vmatpush2.bf16.msra.mxu0 0
    %819 = vmatprep.subr.bf16.mxu0 0
    %820 = vmatpush2.bf16.msra.mxu0 0
    %821 = vmatprep.subr.bf16.mxu0 0
    %822 = vmatpush2.bf16.msra.mxu0 0
    %823 = vmatprep.subr.bf16.mxu0 0
    %824 = vmatpush2.bf16.msra.mxu0 0
    %825 = vmatprep.subr.bf16.mxu0 0
    %826 = vmatpush2.bf16.msra.mxu0 0
    %827 = vmatprep.subr.bf16.mxu0 0
    %828 = vmatpush2.bf16.msra.mxu0 0
    %829 = vmatprep.subr.bf16.mxu0 0
    %830 = vmatpush2.bf16.msra.mxu0 0
    %831 = vmatprep.subr.bf16.mxu0 0
    %832 = vmatpush2.bf16.msra.mxu0 0
    %833 = vmatprep.mubr.bf16.mxu0 0
    %834 = vmatmul.mubr.bf16.gmra.mxu0 %v171
    %v835 = vpop.f32.mrf.mxu0
    %v836 = vadd.f32 %v787, %v835
    %v837 = vpop.f32.mrf.mxu0
    %v838 = vpop.f32.mrf.mxu0
    %v839 = vadd.f32 %v787, %v838
    %v840 = vpop.f32.mrf.mxu0
    %841 = vmatprep.mubr.bf16.mxu0 0
    %842 = vmatmul.mubr.bf16.gmra.mxu0 %v174
    %v843 = vpop.f32.mrf.mxu0
    %v844 = vadd.f32 %v787, %v843
    %v845 = vpop.f32.mrf.mxu0
    %v846 = vpop.f32.mrf.mxu0
    %v847 = vpop.f32.mrf.mxu0
    %848 = vdwg.mxu0
    %s849 = scalar_lea.vmem %s5, 48
    %v850 = vld [vmem:[%s849] sm:$0xf]
    %v851 = vld [vmem:[%s849 + $0x4] sm:$0xf]
    %v852 = vld [vmem:[%s849 + $0x8] sm:$0xf]
    %v853 = vld [vmem:[%s849 + $0xc] sm:$0xf]
    %s854 = scalar_lea.vmem %s6, 3
    %v855 = vld [vmem:[%s854] sm:$0x1]
    %v857 = vlaneseq
    %v858 = vshrl.u32 %v857, 7
    %v859 = vsub.s32 0, %v858
    %v860 = vrot.slane %v855, %v859
    %v866 = vunpack.c.l.b16 %v850
    %v867 = vunpack.c.l.b16 %v851
    %v868 = vunpack.c.l.b16 %v852
    %v869 = vunpack.c.l.b16 %v853
    %v870 = vpack.c.b16 %v867, %v866
    %v871 = vpack.c.b16 %v869, %v868
    %874 = vmatprep.subr.bf16.mxu0 0
    %875 = vmatpush1.bf16.msra.mxu0 0
    %876 = vmatprep.subr.bf16.mxu0 0
    %877 = vmatpush1.bf16.msra.mxu0 0
    %878 = vmatprep.subr.bf16.mxu0 0
    %879 = vmatpush1.bf16.msra.mxu0 0
    %880 = vmatprep.subr.bf16.mxu0 0
    %881 = vmatpush1.bf16.msra.mxu0 0
    %882 = vmatprep.subr.bf16.mxu0 0
    %883 = vmatpush1.bf16.msra.mxu0 0
    %884 = vmatprep.subr.bf16.mxu0 0
    %885 = vmatpush1.bf16.msra.mxu0 0
    %886 = vmatprep.subr.bf16.mxu0 0
    %887 = vmatpush1.bf16.msra.mxu0 %v871
    %888 = vmatprep.subr.bf16.mxu0 0
    %889 = vmatpush1.bf16.msra.mxu0 %v870
    %890 = vmatprep.subr.bf16.mxu0 0
    %891 = vmatpush2.bf16.msra.mxu0 0
    %892 = vmatprep.subr.bf16.mxu0 0
    %893 = vmatpush2.bf16.msra.mxu0 0
    %894 = vmatprep.subr.bf16.mxu0 0
    %895 = vmatpush2.bf16.msra.mxu0 0
    %896 = vmatprep.subr.bf16.mxu0 0
    %897 = vmatpush2.bf16.msra.mxu0 0
    %898 = vmatprep.subr.bf16.mxu0 0
    %899 = vmatpush2.bf16.msra.mxu0 0
    %900 = vmatprep.subr.bf16.mxu0 0
    %901 = vmatpush2.bf16.msra.mxu0 0
    %902 = vmatprep.subr.bf16.mxu0 0
    %903 = vmatpush2.bf16.msra.mxu0 0
    %904 = vmatprep.subr.bf16.mxu0 0
    %905 = vmatpush2.bf16.msra.mxu0 0
    %906 = vmatprep.mubr.bf16.mxu0 0
    %907 = vmatmul.mubr.bf16.gmra.mxu0 %v171
    %v908 = vpop.f32.mrf.mxu0
    %v909 = vadd.f32 %v860, %v908
    %v910 = vpop.f32.mrf.mxu0
    %v911 = vpop.f32.mrf.mxu0
    %v912 = vadd.f32 %v860, %v911
    %v913 = vpop.f32.mrf.mxu0
    %914 = vmatprep.mubr.bf16.mxu0 0
    %915 = vmatmul.mubr.bf16.gmra.mxu0 %v174
    %v916 = vpop.f32.mrf.mxu0
    %v917 = vadd.f32 %v860, %v916
    %v918 = vpop.f32.mrf.mxu0
    %v919 = vpop.f32.mrf.mxu0
    %v920 = vpop.f32.mrf.mxu0
    %921 = vdwg.mxu0
    %s922 = scalar_lea.vmem %s5, 80
    %v923 = vld [vmem:[%s922] sm:$0xf]
    %v924 = vld [vmem:[%s922 + $0x4] sm:$0xf]
    %v925 = vld [vmem:[%s922 + $0x8] sm:$0xf]
    %v926 = vld [vmem:[%s922 + $0xc] sm:$0xf]
    %s927 = scalar_lea.vmem %s6, 5
    %v928 = vld [vmem:[%s927] sm:$0x1]
    %v930 = vlaneseq
    %v931 = vshrl.u32 %v930, 7
    %v932 = vsub.s32 0, %v931
    %v933 = vrot.slane %v928, %v932
    %v939 = vunpack.c.l.b16 %v923
    %v940 = vunpack.c.l.b16 %v924
    %v941 = vunpack.c.l.b16 %v925
    %v942 = vunpack.c.l.b16 %v926
    %v943 = vpack.c.b16 %v940, %v939
    %v944 = vpack.c.b16 %v942, %v941
    %947 = vmatprep.subr.bf16.mxu0 0
    %948 = vmatpush1.bf16.msra.mxu0 0
    %949 = vmatprep.subr.bf16.mxu0 0
    %950 = vmatpush1.bf16.msra.mxu0 0
    %951 = vmatprep.subr.bf16.mxu0 0
    %952 = vmatpush1.bf16.msra.mxu0 0
    %953 = vmatprep.subr.bf16.mxu0 0
    %954 = vmatpush1.bf16.msra.mxu0 0
    %955 = vmatprep.subr.bf16.mxu0 0
    %956 = vmatpush1.bf16.msra.mxu0 0
    %957 = vmatprep.subr.bf16.mxu0 0
    %958 = vmatpush1.bf16.msra.mxu0 0
    %959 = vmatprep.subr.bf16.mxu0 0
    %960 = vmatpush1.bf16.msra.mxu0 %v944
    %961 = vmatprep.subr.bf16.mxu0 0
    %962 = vmatpush1.bf16.msra.mxu0 %v943
    %963 = vmatprep.subr.bf16.mxu0 0
    %964 = vmatpush2.bf16.msra.mxu0 0
    %965 = vmatprep.subr.bf16.mxu0 0
    %966 = vmatpush2.bf16.msra.mxu0 0
    %967 = vmatprep.subr.bf16.mxu0 0
    %968 = vmatpush2.bf16.msra.mxu0 0
    %969 = vmatprep.subr.bf16.mxu0 0
    %970 = vmatpush2.bf16.msra.mxu0 0
    %971 = vmatprep.subr.bf16.mxu0 0
    %972 = vmatpush2.bf16.msra.mxu0 0
    %973 = vmatprep.subr.bf16.mxu0 0
    %974 = vmatpush2.bf16.msra.mxu0 0
    %975 = vmatprep.subr.bf16.mxu0 0
    %976 = vmatpush2.bf16.msra.mxu0 0
    %977 = vmatprep.subr.bf16.mxu0 0
    %978 = vmatpush2.bf16.msra.mxu0 0
    %979 = vmatprep.mubr.bf16.mxu0 0
    %980 = vmatmul.mubr.bf16.gmra.mxu0 %v171
    %v981 = vpop.f32.mrf.mxu0
    %v982 = vadd.f32 %v933, %v981
    %v983 = vpop.f32.mrf.mxu0
    %v984 = vpop.f32.mrf.mxu0
    %v985 = vadd.f32 %v933, %v984
    %v986 = vpop.f32.mrf.mxu0
    %987 = vmatprep.mubr.bf16.mxu0 0
    %988 = vmatmul.mubr.bf16.gmra.mxu0 %v174
    %v989 = vpop.f32.mrf.mxu0
    %v990 = vadd.f32 %v933, %v989
    %v991 = vpop.f32.mrf.mxu0
    %v992 = vpop.f32.mrf.mxu0
    %v993 = vpop.f32.mrf.mxu0
    %994 = vdwg.mxu0
    %v995 = vpack.c.bf16 %v836, %v836
    %v996 = vpack.c.bf16 %v839, %v839
    %v997 = vpack.c.bf16 %v844, %v844
    %v998 = vpack.c.bf16 %v909, %v909
    %v999 = vpack.c.bf16 %v912, %v912
    %v1000 = vpack.c.bf16 %v917, %v917
    %v1002 = vsel %vm376, %v995, 0
    %v1005 = vsel %vm376, %v998, 0
    %1007 = vmatprep.subr.bf16.mxu0 0
    %1008 = vmatpush1.bf16.xpose.msra.mxu0 0
    %1009 = vmatprep.subr.bf16.mxu0 0
    %1010 = vmatpush1.bf16.xpose.msra.mxu0 0
    %1011 = vmatprep.subr.bf16.mxu0 0
    %1012 = vmatpush1.bf16.xpose.msra.mxu0 0
    %1013 = vmatprep.subr.bf16.mxu0 0
    %1014 = vmatpush1.bf16.xpose.msra.mxu0 0
    %1015 = vmatprep.subr.bf16.mxu0 0
    %1016 = vmatpush1.bf16.xpose.msra.mxu0 0
    %1017 = vmatprep.subr.bf16.mxu0 0
    %1018 = vmatpush1.bf16.xpose.msra.mxu0 0
    %1019 = vmatprep.subr.bf16.mxu0 0
    %1020 = vmatpush1.bf16.xpose.msra.mxu0 0
    %1021 = vmatprep.subr.bf16.mxu0 0
    %1022 = vmatpush1.bf16.xpose.msra.mxu0 %v1005
    %1023 = vmatprep.subr.bf16.mxu0 0
    %1024 = vmatpush2.bf16.xpose.msra.mxu0 0
    %1025 = vmatprep.subr.bf16.mxu0 0
    %1026 = vmatpush2.bf16.xpose.msra.mxu0 0
    %1027 = vmatprep.subr.bf16.mxu0 0
    %1028 = vmatpush2.bf16.xpose.msra.mxu0 0
    %1029 = vmatprep.subr.bf16.mxu0 0
    %1030 = vmatpush2.bf16.xpose.msra.mxu0 0
    %1031 = vmatprep.subr.bf16.mxu0 0
    %1032 = vmatpush2.bf16.xpose.msra.mxu0 0
    %1033 = vmatprep.subr.bf16.mxu0 0
    %1034 = vmatpush2.bf16.xpose.msra.mxu0 0
    %1035 = vmatprep.subr.bf16.mxu0 0
    %1036 = vmatpush2.bf16.xpose.msra.mxu0 0
    %1037 = vmatprep.subr.bf16.mxu0 0
    %1038 = vmatpush2.bf16.xpose.msra.mxu0 0
    %1039 = vmatprep.mubr.bf16.mxu0 0
    %1040 = vmatmul.mubr.bf16.gmra.mxu0 %v1002
    %v1041 = vpop.f32.mrf.mxu0
    %v1042 = vadd.f32 0.0, %v1041
    %v1043 = vpop.f32.mrf.mxu0
    %v1044 = vpop.f32.mrf.mxu0
    %v1045 = vpop.f32.mrf.mxu0
    %1046 = vdwg.mxu0
    %v1048 = vsel %vm376, %v996, 0
    %v1051 = vsel %vm376, %v999, 0
    %1053 = vmatprep.subr.bf16.mxu0 0
    %1054 = vmatpush1.bf16.xpose.msra.mxu0 0
    %1055 = vmatprep.subr.bf16.mxu0 0
    %1056 = vmatpush1.bf16.xpose.msra.mxu0 0
    %1057 = vmatprep.subr.bf16.mxu0 0
    %1058 = vmatpush1.bf16.xpose.msra.mxu0 0
    %1059 = vmatprep.subr.bf16.mxu0 0
    %1060 = vmatpush1.bf16.xpose.msra.mxu0 0
    %1061 = vmatprep.subr.bf16.mxu0 0
    %1062 = vmatpush1.bf16.xpose.msra.mxu0 0
    %1063 = vmatprep.subr.bf16.mxu0 0
    %1064 = vmatpush1.bf16.xpose.msra.mxu0 0
    %1065 = vmatprep.subr.bf16.mxu0 0
    %1066 = vmatpush1.bf16.xpose.msra.mxu0 0
    %1067 = vmatprep.subr.bf16.mxu0 0
    %1068 = vmatpush1.bf16.xpose.msra.mxu0 %v1051
    %1069 = vmatprep.subr.bf16.mxu0 0
    %1070 = vmatpush2.bf16.xpose.msra.mxu0 0
    %1071 = vmatprep.subr.bf16.mxu0 0
    %1072 = vmatpush2.bf16.xpose.msra.mxu0 0
    %1073 = vmatprep.subr.bf16.mxu0 0
    %1074 = vmatpush2.bf16.xpose.msra.mxu0 0
    %1075 = vmatprep.subr.bf16.mxu0 0
    %1076 = vmatpush2.bf16.xpose.msra.mxu0 0
    %1077 = vmatprep.subr.bf16.mxu0 0
    %1078 = vmatpush2.bf16.xpose.msra.mxu0 0
    %1079 = vmatprep.subr.bf16.mxu0 0
    %1080 = vmatpush2.bf16.xpose.msra.mxu0 0
    %1081 = vmatprep.subr.bf16.mxu0 0
    %1082 = vmatpush2.bf16.xpose.msra.mxu0 0
    %1083 = vmatprep.subr.bf16.mxu0 0
    %1084 = vmatpush2.bf16.xpose.msra.mxu0 0
    %1085 = vmatprep.mubr.bf16.mxu0 0
    %1086 = vmatmul.mubr.bf16.gmra.mxu0 %v1048
    %v1087 = vpop.f32.mrf.mxu0
    %v1088 = vadd.f32 0.0, %v1087
    %v1089 = vpop.f32.mrf.mxu0
    %v1090 = vpop.f32.mrf.mxu0
    %v1091 = vpop.f32.mrf.mxu0
    %1092 = vdwg.mxu0
    %v1094 = vsel %vm376, %v997, 0
    %v1097 = vsel %vm376, %v1000, 0
    %1099 = vmatprep.subr.bf16.mxu0 0
    %1100 = vmatpush1.bf16.xpose.msra.mxu0 0
    %1101 = vmatprep.subr.bf16.mxu0 0
    %1102 = vmatpush1.bf16.xpose.msra.mxu0 0
    %1103 = vmatprep.subr.bf16.mxu0 0
    %1104 = vmatpush1.bf16.xpose.msra.mxu0 0
    %1105 = vmatprep.subr.bf16.mxu0 0
    %1106 = vmatpush1.bf16.xpose.msra.mxu0 0
    %1107 = vmatprep.subr.bf16.mxu0 0
    %1108 = vmatpush1.bf16.xpose.msra.mxu0 0
    %1109 = vmatprep.subr.bf16.mxu0 0
    %1110 = vmatpush1.bf16.xpose.msra.mxu0 0
    %1111 = vmatprep.subr.bf16.mxu0 0
    %1112 = vmatpush1.bf16.xpose.msra.mxu0 0
    %1113 = vmatprep.subr.bf16.mxu0 0
    %1114 = vmatpush1.bf16.xpose.msra.mxu0 %v1097
    %1115 = vmatprep.subr.bf16.mxu0 0
    %1116 = vmatpush2.bf16.xpose.msra.mxu0 0
    %1117 = vmatprep.subr.bf16.mxu0 0
    %1118 = vmatpush2.bf16.xpose.msra.mxu0 0
    %1119 = vmatprep.subr.bf16.mxu0 0
    %1120 = vmatpush2.bf16.xpose.msra.mxu0 0
    %1121 = vmatprep.subr.bf16.mxu0 0
    %1122 = vmatpush2.bf16.xpose.msra.mxu0 0
    %1123 = vmatprep.subr.bf16.mxu0 0
    %1124 = vmatpush2.bf16.xpose.msra.mxu0 0
    %1125 = vmatprep.subr.bf16.mxu0 0
    %1126 = vmatpush2.bf16.xpose.msra.mxu0 0
    %1127 = vmatprep.subr.bf16.mxu0 0
    %1128 = vmatpush2.bf16.xpose.msra.mxu0 0
    %1129 = vmatprep.subr.bf16.mxu0 0
    %1130 = vmatpush2.bf16.xpose.msra.mxu0 0
    %1131 = vmatprep.mubr.bf16.mxu0 0
    %1132 = vmatmul.mubr.bf16.gmra.mxu0 %v1094
    %v1133 = vpop.f32.mrf.mxu0
    %v1134 = vadd.f32 0.0, %v1133
    %v1135 = vpop.f32.mrf.mxu0
    %v1136 = vpop.f32.mrf.mxu0
    %v1137 = vpop.f32.mrf.mxu0
    %1138 = vdwg.mxu0
    %v1139 = vmul.f32 %v1042, 0.25
    %v1140 = vmul.f32 %v1088, 0.25
    %v1141 = vmul.f32 %v1134, 0.25
    %v1142 = vadd.f32 %v1139, %v74
    %v1143 = vadd.f32 %v1140, %v74
    %v1144 = vadd.f32 %v1141, %v74
    %v1145 = vsel %vm521, %v1142, -inf
    %1146 = vmax.xlane.f32.xlu0 %v1145
    %v1147 = vpop.xlane.xlu0 %1146
    %v1148 = vsel %vm521, %v1143, -inf
    %1149 = vmax.xlane.f32.xlu0 %v1148
    %v1150 = vpop.xlane.xlu0 %1149
    %v1151 = vsel %vm521, %v1144, -inf
    %1152 = vmax.xlane.f32.xlu0 %v1151
    %v1153 = vpop.xlane.xlu0 %1152
    %v1154 = vsub.f32 %v1142, %v1147
    %v1155 = vsub.f32 %v1143, %v1150
    %v1156 = vsub.f32 %v1144, %v1153
    %v1157 = vmul.f32 %v1154, 1.442695
    %v1158 = vpow.pop %v1157
    %v1159 = vmul.f32 %v1155, 1.442695
    %v1160 = vpow.pop %v1159
    %v1161 = vmul.f32 %v1156, 1.442695
    %v1162 = vpow.pop %v1161
    %v1163 = vsel %vm521, %v1158, 0.0
    %1164 = vadd.xlane.f32.xlu0 %v1163
    %v1165 = vpop.xlane.xlu0 %1164
    %v1166 = vsel %vm521, %v1160, 0.0
    %1167 = vadd.xlane.f32.xlu0 %v1166
    %v1168 = vpop.xlane.xlu0 %1167
    %v1169 = vsel %vm521, %v1162, 0.0
    %1170 = vadd.xlane.f32.xlu0 %v1169
    %v1171 = vpop.xlane.xlu0 %1170
    %v1172 = vrcp.pop %v1165
    %v1173 = vrcp.pop %v1168
    %v1174 = vrcp.pop %v1171
    %v1175 = vmul.f32 %v1158, %v1172
    %v1176 = vmul.f32 %v1160, %v1173
    %v1177 = vmul.f32 %v1162, %v1174
    %v1178 = vpack.c.bf16 %v1175, %v1175
    %v1179 = vpack.c.bf16 %v1176, %v1176
    %v1180 = vpack.c.bf16 %v1177, %v1177
    %v1181 = vpack.c.bf16 %v982, %v982
    %v1182 = vpack.c.bf16 %v985, %v985
    %v1183 = vpack.c.bf16 %v990, %v990
    %v1185 = vsel %vm521, %v1178, 0
    %v1188 = vsel %vm564, %v1181, 0
    %1190 = vmatprep.subr.bf16.mxu0 0
    %1191 = vmatpush1.bf16.msra.mxu0 0
    %1192 = vmatprep.subr.bf16.mxu0 0
    %1193 = vmatpush1.bf16.msra.mxu0 0
    %1194 = vmatprep.subr.bf16.mxu0 0
    %1195 = vmatpush1.bf16.msra.mxu0 0
    %1196 = vmatprep.subr.bf16.mxu0 0
    %1197 = vmatpush1.bf16.msra.mxu0 0
    %1198 = vmatprep.subr.bf16.mxu0 0
    %1199 = vmatpush1.bf16.msra.mxu0 0
    %1200 = vmatprep.subr.bf16.mxu0 0
    %1201 = vmatpush1.bf16.msra.mxu0 0
    %1202 = vmatprep.subr.bf16.mxu0 0
    %1203 = vmatpush1.bf16.msra.mxu0 0
    %1204 = vmatprep.subr.bf16.mxu0 0
    %1205 = vmatpush1.bf16.msra.mxu0 %v1188
    %1206 = vmatprep.subr.bf16.mxu0 0
    %1207 = vmatpush2.bf16.msra.mxu0 0
    %1208 = vmatprep.subr.bf16.mxu0 0
    %1209 = vmatpush2.bf16.msra.mxu0 0
    %1210 = vmatprep.subr.bf16.mxu0 0
    %1211 = vmatpush2.bf16.msra.mxu0 0
    %1212 = vmatprep.subr.bf16.mxu0 0
    %1213 = vmatpush2.bf16.msra.mxu0 0
    %1214 = vmatprep.subr.bf16.mxu0 0
    %1215 = vmatpush2.bf16.msra.mxu0 0
    %1216 = vmatprep.subr.bf16.mxu0 0
    %1217 = vmatpush2.bf16.msra.mxu0 0
    %1218 = vmatprep.subr.bf16.mxu0 0
    %1219 = vmatpush2.bf16.msra.mxu0 0
    %1220 = vmatprep.subr.bf16.mxu0 0
    %1221 = vmatpush2.bf16.msra.mxu0 0
    %1222 = vmatprep.mubr.bf16.mxu0 0
    %1223 = vmatmul.mubr.bf16.gmra.mxu0 %v1185
    %v1224 = vpop.f32.mrf.mxu0
    %v1225 = vadd.f32 0.0, %v1224
    %v1226 = vpop.f32.mrf.mxu0
    %v1227 = vpop.f32.mrf.mxu0
    %v1228 = vpop.f32.mrf.mxu0
    %1229 = vdwg.mxu0
    %v1231 = vsel %vm521, %v1179, 0
    %v1234 = vsel %vm564, %v1182, 0
    %1236 = vmatprep.subr.bf16.mxu0 0
    %1237 = vmatpush1.bf16.msra.mxu0 0
    %1238 = vmatprep.subr.bf16.mxu0 0
    %1239 = vmatpush1.bf16.msra.mxu0 0
    %1240 = vmatprep.subr.bf16.mxu0 0
    %1241 = vmatpush1.bf16.msra.mxu0 0
    %1242 = vmatprep.subr.bf16.mxu0 0
    %1243 = vmatpush1.bf16.msra.mxu0 0
    %1244 = vmatprep.subr.bf16.mxu0 0
    %1245 = vmatpush1.bf16.msra.mxu0 0
    %1246 = vmatprep.subr.bf16.mxu0 0
    %1247 = vmatpush1.bf16.msra.mxu0 0
    %1248 = vmatprep.subr.bf16.mxu0 0
    %1249 = vmatpush1.bf16.msra.mxu0 0
    %1250 = vmatprep.subr.bf16.mxu0 0
    %1251 = vmatpush1.bf16.msra.mxu0 %v1234
    %1252 = vmatprep.subr.bf16.mxu0 0
    %1253 = vmatpush2.bf16.msra.mxu0 0
    %1254 = vmatprep.subr.bf16.mxu0 0
    %1255 = vmatpush2.bf16.msra.mxu0 0
    %1256 = vmatprep.subr.bf16.mxu0 0
    %1257 = vmatpush2.bf16.msra.mxu0 0
    %1258 = vmatprep.subr.bf16.mxu0 0
    %1259 = vmatpush2.bf16.msra.mxu0 0
    %1260 = vmatprep.subr.bf16.mxu0 0
    %1261 = vmatpush2.bf16.msra.mxu0 0
    %1262 = vmatprep.subr.bf16.mxu0 0
    %1263 = vmatpush2.bf16.msra.mxu0 0
    %1264 = vmatprep.subr.bf16.mxu0 0
    %1265 = vmatpush2.bf16.msra.mxu0 0
    %1266 = vmatprep.subr.bf16.mxu0 0
    %1267 = vmatpush2.bf16.msra.mxu0 0
    %1268 = vmatprep.mubr.bf16.mxu0 0
    %1269 = vmatmul.mubr.bf16.gmra.mxu0 %v1231
    %v1270 = vpop.f32.mrf.mxu0
    %v1271 = vadd.f32 0.0, %v1270
    %v1272 = vpop.f32.mrf.mxu0
    %v1273 = vpop.f32.mrf.mxu0
    %v1274 = vpop.f32.mrf.mxu0
    %1275 = vdwg.mxu0
    %v1277 = vsel %vm521, %v1180, 0
    %v1280 = vsel %vm564, %v1183, 0
    %1282 = vmatprep.subr.bf16.mxu0 0
    %1283 = vmatpush1.bf16.msra.mxu0 0
    %1284 = vmatprep.subr.bf16.mxu0 0
    %1285 = vmatpush1.bf16.msra.mxu0 0
    %1286 = vmatprep.subr.bf16.mxu0 0
    %1287 = vmatpush1.bf16.msra.mxu0 0
    %1288 = vmatprep.subr.bf16.mxu0 0
    %1289 = vmatpush1.bf16.msra.mxu0 0
    %1290 = vmatprep.subr.bf16.mxu0 0
    %1291 = vmatpush1.bf16.msra.mxu0 0
    %1292 = vmatprep.subr.bf16.mxu0 0
    %1293 = vmatpush1.bf16.msra.mxu0 0
    %1294 = vmatprep.subr.bf16.mxu0 0
    %1295 = vmatpush1.bf16.msra.mxu0 0
    %1296 = vmatprep.subr.bf16.mxu0 0
    %1297 = vmatpush1.bf16.msra.mxu0 %v1280
    %1298 = vmatprep.subr.bf16.mxu0 0
    %1299 = vmatpush2.bf16.msra.mxu0 0
    %1300 = vmatprep.subr.bf16.mxu0 0
    %1301 = vmatpush2.bf16.msra.mxu0 0
    %1302 = vmatprep.subr.bf16.mxu0 0
    %1303 = vmatpush2.bf16.msra.mxu0 0
    %1304 = vmatprep.subr.bf16.mxu0 0
    %1305 = vmatpush2.bf16.msra.mxu0 0
    %1306 = vmatprep.subr.bf16.mxu0 0
    %1307 = vmatpush2.bf16.msra.mxu0 0
    %1308 = vmatprep.subr.bf16.mxu0 0
    %1309 = vmatpush2.bf16.msra.mxu0 0
    %1310 = vmatprep.subr.bf16.mxu0 0
    %1311 = vmatpush2.bf16.msra.mxu0 0
    %1312 = vmatprep.subr.bf16.mxu0 0
    %1313 = vmatpush2.bf16.msra.mxu0 0
    %1314 = vmatprep.mubr.bf16.mxu0 0
    %1315 = vmatmul.mubr.bf16.gmra.mxu0 %v1277
    %v1316 = vpop.f32.mrf.mxu0
    %v1317 = vadd.f32 0.0, %v1316
    %v1318 = vpop.f32.mrf.mxu0
    %v1319 = vpop.f32.mrf.mxu0
    %v1320 = vpop.f32.mrf.mxu0
    %1321 = vdwg.mxu0
    %s1322 = scalar_lea.vmem %s7, 8
    %v1323 = vld [vmem:[%s1322] sm:$0xf]
    %v1324 = vld [vmem:[%s1322 + $0x4] sm:$0xf]
    %v1325 = vpack.c.bf16 %v1225, %v1225
    %v1326 = vpack.c.bf16 %v1271, %v1271
    %v1327 = vpack.c.bf16 %v1317, %v1317
    %v1331 = vunpack.c.l.b16 %v1325
    %v1332 = vunpack.c.l.b16 %v1326
    %v1333 = vunpack.c.l.b16 %v1327
    %v1334 = vpack.c.b16 %v1332, %v1331
    %v1335 = vpack.c.b16 %v1333, %v1333
    %v1338 = vunpack.c.l.b16 %v1323
    %v1339 = vunpack.c.l.b16 %v1324
    %v1340 = vpack.c.b16 %v1339, %v1338
    %v1343 = vsel %vm376, %v1334, 0
    %v1346 = vsel %vm376, %v1335, 0
    %1348 = vmatprep.subr.bf16.mxu0 0
    %1349 = vmatpush1.bf16.msra.mxu0 0
    %1350 = vmatprep.subr.bf16.mxu0 0
    %1351 = vmatpush1.bf16.msra.mxu0 0
    %1352 = vmatprep.subr.bf16.mxu0 0
    %1353 = vmatpush1.bf16.msra.mxu0 0
    %1354 = vmatprep.subr.bf16.mxu0 0
    %1355 = vmatpush1.bf16.msra.mxu0 0
    %1356 = vmatprep.subr.bf16.mxu0 0
    %1357 = vmatpush1.bf16.msra.mxu0 0
    %1358 = vmatprep.subr.bf16.mxu0 0
    %1359 = vmatpush1.bf16.msra.mxu0 0
    %1360 = vmatprep.subr.bf16.mxu0 0
    %1361 = vmatpush1.bf16.msra.mxu0 0
    %1362 = vmatprep.subr.bf16.mxu0 0
    %1363 = vmatpush1.bf16.msra.mxu0 %v1340
    %1364 = vmatprep.subr.bf16.mxu0 0
    %1365 = vmatpush2.bf16.msra.mxu0 0
    %1366 = vmatprep.subr.bf16.mxu0 0
    %1367 = vmatpush2.bf16.msra.mxu0 0
    %1368 = vmatprep.subr.bf16.mxu0 0
    %1369 = vmatpush2.bf16.msra.mxu0 0
    %1370 = vmatprep.subr.bf16.mxu0 0
    %1371 = vmatpush2.bf16.msra.mxu0 0
    %1372 = vmatprep.subr.bf16.mxu0 0
    %1373 = vmatpush2.bf16.msra.mxu0 0
    %1374 = vmatprep.subr.bf16.mxu0 0
    %1375 = vmatpush2.bf16.msra.mxu0 0
    %1376 = vmatprep.subr.bf16.mxu0 0
    %1377 = vmatpush2.bf16.msra.mxu0 0
    %1378 = vmatprep.subr.bf16.mxu0 0
    %1379 = vmatpush2.bf16.msra.mxu0 0
    %1380 = vmatprep.mubr.bf16.mxu0 0
    %1381 = vmatmul.mubr.bf16.gmra.mxu0 %v1343
    %v1382 = vpop.f32.mrf.mxu0
    %v1383 = vadd.f32 0.0, %v1382
    %v1384 = vpop.f32.mrf.mxu0
    %v1385 = vpop.f32.mrf.mxu0
    %v1386 = vadd.f32 0.0, %v1385
    %v1387 = vpop.f32.mrf.mxu0
    %1388 = vmatprep.mubr.bf16.mxu0 0
    %1389 = vmatmul.mubr.bf16.gmra.mxu0 %v1346
    %v1390 = vpop.f32.mrf.mxu0
    %v1391 = vadd.f32 0.0, %v1390
    %v1392 = vpop.f32.mrf.mxu0
    %v1393 = vpop.f32.mrf.mxu0
    %v1394 = vpop.f32.mrf.mxu0
    %1395 = vdwg.mxu0
    %v1396 = vadd.f32 %v773, %v1383
    %v1397 = vadd.f32 %v774, %v1386
    %v1398 = vadd.f32 %v775, %v1391
    %v1399 = vld [vmem:[%s8] sm:$0x1]
    %v1401 = vlaneseq
    %v1402 = vshrl.u32 %v1401, 7
    %v1403 = vsub.s32 0, %v1402
    %v1404 = vrot.slane %v1399, %v1403
    %v1406 = vadd.f32 %v1396, %v1404
    %v1407 = vadd.f32 %v1397, %v1404
    %v1408 = vadd.f32 %v1398, %v1404
    %v1409 = vld [vmem:[%s9] sm:$0x1]
    %v1410 = vld [vmem:[%s10] sm:$0x1]
    %v1411 = vsel %vm77, %v1406, 0.0
    %1412 = vadd.xlane.f32.xlu0 %v1411
    %v1413 = vpop.xlane.xlu0 %1412
    %v1414 = vsel %vm77, %v1407, 0.0
    %1415 = vadd.xlane.f32.xlu0 %v1414
    %v1416 = vpop.xlane.xlu0 %1415
    %v1417 = vsel %vm77, %v1408, 0.0
    %1418 = vadd.xlane.f32.xlu0 %v1417
    %v1419 = vpop.xlane.xlu0 %1418
    %v1420 = vmul.f32 %v1413, %v87
    %v1421 = vmul.f32 %v1416, %v87
    %v1422 = vmul.f32 %v1419, %v87
    %v1423 = vsub.f32 %v1406, %v1420
    %v1424 = vsub.f32 %v1407, %v1421
    %v1425 = vsub.f32 %v1408, %v1422
    %v1426 = vmul.f32 %v1423, %v1423
    %v1427 = vmul.f32 %v1424, %v1424
    %v1428 = vmul.f32 %v1425, %v1425
    %v1429 = vsel %vm77, %v1426, 0.0
    %1430 = vadd.xlane.f32.xlu0 %v1429
    %v1431 = vpop.xlane.xlu0 %1430
    %v1432 = vsel %vm77, %v1427, 0.0
    %1433 = vadd.xlane.f32.xlu0 %v1432
    %v1434 = vpop.xlane.xlu0 %1433
    %v1435 = vsel %vm77, %v1428, 0.0
    %1436 = vadd.xlane.f32.xlu0 %v1435
    %v1437 = vpop.xlane.xlu0 %1436
    %v1438 = vmul.f32 %v1431, %v87
    %v1439 = vmul.f32 %v1434, %v87
    %v1440 = vmul.f32 %v1437, %v87
    %v1441 = vadd.f32 %v1438, 1e-05
    %v1442 = vadd.f32 %v1439, 1e-05
    %v1443 = vadd.f32 %v1440, 1e-05
    %v1444 = vrsqrt.pop %v1441
    %v1445 = vrsqrt.pop %v1442
    %v1446 = vrsqrt.pop %v1443
    %v1447 = vmul.f32 %v1423, %v1444
    %v1448 = vmul.f32 %v1424, %v1445
    %v1449 = vmul.f32 %v1425, %v1446
    %v1451 = vlaneseq
    %v1452 = vshrl.u32 %v1451, 7
    %v1453 = vsub.s32 0, %v1452
    %v1454 = vrot.slane %v1409, %v1453
    %v1456 = vmul.f32 %v1447, %v1454
    %v1457 = vmul.f32 %v1448, %v1454
    %v1458 = vmul.f32 %v1449, %v1454
    %v1460 = vlaneseq
    %v1461 = vshrl.u32 %v1460, 7
    %v1462 = vsub.s32 0, %v1461
    %v1463 = vrot.slane %v1410, %v1462
    %v1465 = vadd.f32 %v1456, %v1463
    %v1466 = vadd.f32 %v1457, %v1463
    %v1467 = vadd.f32 %v1458, %v1463
    %v1468 = vld [vmem:[%s11] sm:$0xf]
    %v1469 = vld [vmem:[%s11 + $0x4] sm:$0xf]
    %v1470 = vld [vmem:[%s11 + $0x8] sm:$0xf]
    %v1471 = vld [vmem:[%s11 + $0xc] sm:$0xf]
    %v1472 = vpack.c.bf16 %v1465, %v1465
    %v1473 = vpack.c.bf16 %v1466, %v1466
    %v1474 = vpack.c.bf16 %v1467, %v1467
    %v1475 = vld [vmem:[%s12] sm:$0x1]
    %v1477 = vlaneseq
    %v1478 = vshrl.u32 %v1477, 7
    %v1479 = vsub.s32 0, %v1478
    %v1480 = vrot.slane %v1475, %v1479
    %v1485 = vunpack.c.l.b16 %v1472
    %v1486 = vunpack.c.l.b16 %v1473
    %v1487 = vunpack.c.l.b16 %v1474
    %v1488 = vpack.c.b16 %v1486, %v1485
    %v1489 = vpack.c.b16 %v1487, %v1487
    %v1494 = vunpack.c.l.b16 %v1468
    %v1495 = vunpack.c.l.b16 %v1469
    %v1496 = vunpack.c.l.b16 %v1470
    %v1497 = vunpack.c.l.b16 %v1471
    %v1498 = vpack.c.b16 %v1495, %v1494
    %v1499 = vpack.c.b16 %v1497, %v1496
    %v1503 = vsel %vm77, %v1488, 0
    %v1506 = vsel %vm77, %v1489, 0
    %1508 = vmatprep.subr.bf16.mxu0 0
    %1509 = vmatpush1.bf16.msra.mxu0 0
    %1510 = vmatprep.subr.bf16.mxu0 0
    %1511 = vmatpush1.bf16.msra.mxu0 0
    %1512 = vmatprep.subr.bf16.mxu0 0
    %1513 = vmatpush1.bf16.msra.mxu0 0
    %1514 = vmatprep.subr.bf16.mxu0 0
    %1515 = vmatpush1.bf16.msra.mxu0 0
    %1516 = vmatprep.subr.bf16.mxu0 0
    %1517 = vmatpush1.bf16.msra.mxu0 0
    %1518 = vmatprep.subr.bf16.mxu0 0
    %1519 = vmatpush1.bf16.msra.mxu0 0
    %1520 = vmatprep.subr.bf16.mxu0 0
    %1521 = vmatpush1.bf16.msra.mxu0 %v1499
    %1522 = vmatprep.subr.bf16.mxu0 0
    %1523 = vmatpush1.bf16.msra.mxu0 %v1498
    %1524 = vmatprep.subr.bf16.mxu0 0
    %1525 = vmatpush2.bf16.msra.mxu0 0
    %1526 = vmatprep.subr.bf16.mxu0 0
    %1527 = vmatpush2.bf16.msra.mxu0 0
    %1528 = vmatprep.subr.bf16.mxu0 0
    %1529 = vmatpush2.bf16.msra.mxu0 0
    %1530 = vmatprep.subr.bf16.mxu0 0
    %1531 = vmatpush2.bf16.msra.mxu0 0
    %1532 = vmatprep.subr.bf16.mxu0 0
    %1533 = vmatpush2.bf16.msra.mxu0 0
    %1534 = vmatprep.subr.bf16.mxu0 0
    %1535 = vmatpush2.bf16.msra.mxu0 0
    %1536 = vmatprep.subr.bf16.mxu0 0
    %1537 = vmatpush2.bf16.msra.mxu0 0
    %1538 = vmatprep.subr.bf16.mxu0 0
    %1539 = vmatpush2.bf16.msra.mxu0 0
    %1540 = vmatprep.mubr.bf16.mxu0 0
    %1541 = vmatmul.mubr.bf16.gmra.mxu0 %v1503
    %v1542 = vpop.f32.mrf.mxu0
    %v1543 = vadd.f32 %v1480, %v1542
    %v1544 = vpop.f32.mrf.mxu0
    %v1545 = vpop.f32.mrf.mxu0
    %v1546 = vadd.f32 %v1480, %v1545
    %v1547 = vpop.f32.mrf.mxu0
    %1548 = vmatprep.mubr.bf16.mxu0 0
    %1549 = vmatmul.mubr.bf16.gmra.mxu0 %v1506
    %v1550 = vpop.f32.mrf.mxu0
    %v1551 = vadd.f32 %v1480, %v1550
    %v1552 = vpop.f32.mrf.mxu0
    %v1553 = vpop.f32.mrf.mxu0
    %v1554 = vpop.f32.mrf.mxu0
    %1555 = vdwg.mxu0
    %v1556 = vmul.f32 %v1543, 1.702
    %v1557 = vmul.f32 %v1546, 1.702
    %v1558 = vmul.f32 %v1551, 1.702
    %v1559 = vxor.u32 %v1556, 2147483648
    %v1560 = vxor.u32 %v1557, 2147483648
    %v1561 = vxor.u32 %v1558, 2147483648
    %v1562 = vmul.f32 %v1559, 1.442695
    %v1563 = vpow.pop %v1562
    %v1564 = vmul.f32 %v1560, 1.442695
    %v1565 = vpow.pop %v1564
    %v1566 = vmul.f32 %v1561, 1.442695
    %v1567 = vpow.pop %v1566
    %v1568 = vadd.f32 %v1563, 1.0
    %v1569 = vadd.f32 %v1565, 1.0
    %v1570 = vadd.f32 %v1567, 1.0
    %v1571 = vrcp.pop %v1568
    %v1572 = vmul.f32 1.0, %v1571
    %v1573 = vrcp.pop %v1569
    %v1574 = vmul.f32 1.0, %v1573
    %v1575 = vrcp.pop %v1570
    %v1576 = vmul.f32 1.0, %v1575
    %v1577 = vmul.f32 %v1543, %v1572
    %v1578 = vmul.f32 %v1546, %v1574
    %v1579 = vmul.f32 %v1551, %v1576
    %v1580 = vld [vmem:[%s13] sm:$0xf]
    %v1581 = vld [vmem:[%s13 + $0x4] sm:$0xf]
    %v1582 = vld [vmem:[%s13 + $0x8] sm:$0xf]
    %v1583 = vld [vmem:[%s13 + $0xc] sm:$0xf]
    %v1584 = vld [vmem:[%s13 + $0x10] sm:$0xf]
    %v1585 = vld [vmem:[%s13 + $0x14] sm:$0xf]
    %v1586 = vld [vmem:[%s13 + $0x18] sm:$0xf]
    %v1587 = vld [vmem:[%s13 + $0x1c] sm:$0xf]
    %v1588 = vld [vmem:[%s13 + $0x20] sm:$0xf]
    %v1589 = vld [vmem:[%s13 + $0x24] sm:$0xf]
    %v1590 = vld [vmem:[%s13 + $0x28] sm:$0xf]
    %v1591 = vld [vmem:[%s13 + $0x2c] sm:$0xf]
    %v1592 = vld [vmem:[%s13 + $0x30] sm:$0xf]
    %v1593 = vld [vmem:[%s13 + $0x34] sm:$0xf]
    %v1594 = vld [vmem:[%s13 + $0x38] sm:$0xf]
    %v1595 = vld [vmem:[%s13 + $0x3c] sm:$0xf]
    %v1596 = vpack.c.bf16 %v1577, %v1577
    %v1597 = vpack.c.bf16 %v1578, %v1578
    %v1598 = vpack.c.bf16 %v1579, %v1579
    %v1602 = vunpack.c.l.b16 %v1596
    %v1603 = vunpack.c.l.b16 %v1597
    %v1604 = vunpack.c.l.b16 %v1598
    %v1605 = vpack.c.b16 %v1603, %v1602
    %v1606 = vpack.c.b16 %v1604, %v1604
    %v1625 = vunpack.c.l.b16 %v1580
    %v1626 = vunpack.c.l.b16 %v1581
    %v1627 = vunpack.c.l.b16 %v1582
    %v1628 = vunpack.c.l.b16 %v1583
    %v1629 = vunpack.c.l.b16 %v1584
    %v1630 = vunpack.c.l.b16 %v1585
    %v1631 = vunpack.c.l.b16 %v1586
    %v1632 = vunpack.c.l.b16 %v1587
    %v1633 = vunpack.c.l.b16 %v1588
    %v1634 = vunpack.c.l.b16 %v1589
    %v1635 = vunpack.c.l.b16 %v1590
    %v1636 = vunpack.c.l.b16 %v1591
    %v1637 = vunpack.c.l.b16 %v1592
    %v1638 = vunpack.c.l.b16 %v1593
    %v1639 = vunpack.c.l.b16 %v1594
    %v1640 = vunpack.c.l.b16 %v1595
    %v1641 = vpack.c.b16 %v1626, %v1625
    %v1642 = vpack.c.b16 %v1628, %v1627
    %v1643 = vpack.c.b16 %v1630, %v1629
    %v1644 = vpack.c.b16 %v1632, %v1631
    %v1645 = vpack.c.b16 %v1634, %v1633
    %v1646 = vpack.c.b16 %v1636, %v1635
    %v1647 = vpack.c.b16 %v1638, %v1637
    %v1648 = vpack.c.b16 %v1640, %v1639
    %1657 = vmatprep.subr.bf16.mxu0 0
    %1658 = vmatpush1.bf16.msra.mxu0 %v1648
    %1659 = vmatprep.subr.bf16.mxu0 0
    %1660 = vmatpush1.bf16.msra.mxu0 %v1647
    %1661 = vmatprep.subr.bf16.mxu0 0
    %1662 = vmatpush1.bf16.msra.mxu0 %v1646
    %1663 = vmatprep.subr.bf16.mxu0 0
    %1664 = vmatpush1.bf16.msra.mxu0 %v1645
    %1665 = vmatprep.subr.bf16.mxu0 0
    %1666 = vmatpush1.bf16.msra.mxu0 %v1644
    %1667 = vmatprep.subr.bf16.mxu0 0
    %1668 = vmatpush1.bf16.msra.mxu0 %v1643
    %1669 = vmatprep.subr.bf16.mxu0 0
    %1670 = vmatpush1.bf16.msra.mxu0 %v1642
    %1671 = vmatprep.subr.bf16.mxu0 0
    %1672 = vmatpush1.bf16.msra.mxu0 %v1641
    %1673 = vmatprep.subr.bf16.mxu0 0
    %1674 = vmatpush2.bf16.msra.mxu0 0
    %1675 = vmatprep.subr.bf16.mxu0 0
    %1676 = vmatpush2.bf16.msra.mxu0 0
    %1677 = vmatprep.subr.bf16.mxu0 0
    %1678 = vmatpush2.bf16.msra.mxu0 0
    %1679 = vmatprep.subr.bf16.mxu0 0
    %1680 = vmatpush2.bf16.msra.mxu0 0
    %1681 = vmatprep.subr.bf16.mxu0 0
    %1682 = vmatpush2.bf16.msra.mxu0 0
    %1683 = vmatprep.subr.bf16.mxu0 0
    %1684 = vmatpush2.bf16.msra.mxu0 0
    %1685 = vmatprep.subr.bf16.mxu0 0
    %1686 = vmatpush2.bf16.msra.mxu0 0
    %1687 = vmatprep.subr.bf16.mxu0 0
    %1688 = vmatpush2.bf16.msra.mxu0 0
    %1689 = vmatprep.mubr.bf16.mxu0 0
    %1690 = vmatmul.mubr.bf16.gmra.mxu0 %v1605
    %v1691 = vpop.f32.mrf.mxu0
    %v1692 = vadd.f32 0.0, %v1691
    %v1693 = vpop.f32.mrf.mxu0
    %v1694 = vpop.f32.mrf.mxu0
    %v1695 = vadd.f32 0.0, %v1694
    %v1696 = vpop.f32.mrf.mxu0
    %1697 = vmatprep.mubr.bf16.mxu0 0
    %1698 = vmatmul.mubr.bf16.gmra.mxu0 %v1606
    %v1699 = vpop.f32.mrf.mxu0
    %v1700 = vadd.f32 0.0, %v1699
    %v1701 = vpop.f32.mrf.mxu0
    %v1702 = vpop.f32.mrf.mxu0
    %v1703 = vpop.f32.mrf.mxu0
    %1704 = vdwg.mxu0
    %v1705 = vadd.f32 %v1406, %v1692
    %v1706 = vadd.f32 %v1407, %v1695
    %v1707 = vadd.f32 %v1408, %v1700
    %v1708 = vld [vmem:[%s14] sm:$0x1]
    %v1710 = vlaneseq
    %v1711 = vshrl.u32 %v1710, 7
    %v1712 = vsub.s32 0, %v1711
    %v1713 = vrot.slane %v1708, %v1712
    %v1715 = vadd.f32 %v1705, %v1713
    %v1716 = vadd.f32 %v1706, %v1713
    %v1717 = vadd.f32 %v1707, %v1713
    %s1718 = scalar_lea.vmem %s3, 1
    %v1719 = vld [vmem:[%s1718] sm:$0x1]
    %s1720 = scalar_lea.vmem %s4, 1
    %v1721 = vld [vmem:[%s1720] sm:$0x1]
    %v1722 = vsel %vm77, %v1715, 0.0
    %1723 = vadd.xlane.f32.xlu0 %v1722
    %v1724 = vpop.xlane.xlu0 %1723
    %v1725 = vsel %vm77, %v1716, 0.0
    %1726 = vadd.xlane.f32.xlu0 %v1725
    %v1727 = vpop.xlane.xlu0 %1726
    %v1728 = vsel %vm77, %v1717, 0.0
    %1729 = vadd.xlane.f32.xlu0 %v1728
    %v1730 = vpop.xlane.xlu0 %1729
    %v1731 = vmul.f32 %v1724, %v87
    %v1732 = vmul.f32 %v1727, %v87
    %v1733 = vmul.f32 %v1730, %v87
    %v1734 = vsub.f32 %v1715, %v1731
    %v1735 = vsub.f32 %v1716, %v1732
    %v1736 = vsub.f32 %v1717, %v1733
    %v1737 = vmul.f32 %v1734, %v1734
    %v1738 = vmul.f32 %v1735, %v1735
    %v1739 = vmul.f32 %v1736, %v1736
    %v1740 = vsel %vm77, %v1737, 0.0
    %1741 = vadd.xlane.f32.xlu0 %v1740
    %v1742 = vpop.xlane.xlu0 %1741
    %v1743 = vsel %vm77, %v1738, 0.0
    %1744 = vadd.xlane.f32.xlu0 %v1743
    %v1745 = vpop.xlane.xlu0 %1744
    %v1746 = vsel %vm77, %v1739, 0.0
    %1747 = vadd.xlane.f32.xlu0 %v1746
    %v1748 = vpop.xlane.xlu0 %1747
    %v1749 = vmul.f32 %v1742, %v87
    %v1750 = vmul.f32 %v1745, %v87
    %v1751 = vmul.f32 %v1748, %v87
    %v1752 = vadd.f32 %v1749, 1e-05
    %v1753 = vadd.f32 %v1750, 1e-05
    %v1754 = vadd.f32 %v1751, 1e-05
    %v1755 = vrsqrt.pop %v1752
    %v1756 = vrsqrt.pop %v1753
    %v1757 = vrsqrt.pop %v1754
    %v1758 = vmul.f32 %v1734, %v1755
    %v1759 = vmul.f32 %v1735, %v1756
    %v1760 = vmul.f32 %v1736, %v1757
    %v1762 = vlaneseq
    %v1763 = vshrl.u32 %v1762, 7
    %v1764 = vsub.s32 0, %v1763
    %v1765 = vrot.slane %v1719, %v1764
    %v1767 = vmul.f32 %v1758, %v1765
    %v1768 = vmul.f32 %v1759, %v1765
    %v1769 = vmul.f32 %v1760, %v1765
    %v1771 = vlaneseq
    %v1772 = vshrl.u32 %v1771, 7
    %v1773 = vsub.s32 0, %v1772
    %v1774 = vrot.slane %v1721, %v1773
    %v1776 = vadd.f32 %v1767, %v1774
    %v1777 = vadd.f32 %v1768, %v1774
    %v1778 = vadd.f32 %v1769, %v1774
    %s1779 = scalar_lea.vmem %s5, 96
    %v1780 = vld [vmem:[%s1779] sm:$0xf]
    %v1781 = vld [vmem:[%s1779 + $0x4] sm:$0xf]
    %v1782 = vld [vmem:[%s1779 + $0x8] sm:$0xf]
    %v1783 = vld [vmem:[%s1779 + $0xc] sm:$0xf]
    %v1784 = vpack.c.bf16 %v1776, %v1776
    %v1785 = vpack.c.bf16 %v1777, %v1777
    %v1786 = vpack.c.bf16 %v1778, %v1778
    %s1787 = scalar_lea.vmem %s6, 6
    %v1788 = vld [vmem:[%s1787] sm:$0x1]
    %v1790 = vlaneseq
    %v1791 = vshrl.u32 %v1790, 7
    %v1792 = vsub.s32 0, %v1791
    %v1793 = vrot.slane %v1788, %v1792
    %v1798 = vunpack.c.l.b16 %v1784
    %v1799 = vunpack.c.l.b16 %v1785
    %v1800 = vunpack.c.l.b16 %v1786
    %v1801 = vpack.c.b16 %v1799, %v1798
    %v1802 = vpack.c.b16 %v1800, %v1800
    %v1807 = vunpack.c.l.b16 %v1780
    %v1808 = vunpack.c.l.b16 %v1781
    %v1809 = vunpack.c.l.b16 %v1782
    %v1810 = vunpack.c.l.b16 %v1783
    %v1811 = vpack.c.b16 %v1808, %v1807
    %v1812 = vpack.c.b16 %v1810, %v1809
    %v1816 = vsel %vm77, %v1801, 0
    %v1819 = vsel %vm77, %v1802, 0
    %1821 = vmatprep.subr.bf16.mxu0 0
    %1822 = vmatpush1.bf16.msra.mxu0 0
    %1823 = vmatprep.subr.bf16.mxu0 0
    %1824 = vmatpush1.bf16.msra.mxu0 0
    %1825 = vmatprep.subr.bf16.mxu0 0
    %1826 = vmatpush1.bf16.msra.mxu0 0
    %1827 = vmatprep.subr.bf16.mxu0 0
    %1828 = vmatpush1.bf16.msra.mxu0 0
    %1829 = vmatprep.subr.bf16.mxu0 0
    %1830 = vmatpush1.bf16.msra.mxu0 0
    %1831 = vmatprep.subr.bf16.mxu0 0
    %1832 = vmatpush1.bf16.msra.mxu0 0
    %1833 = vmatprep.subr.bf16.mxu0 0
    %1834 = vmatpush1.bf16.msra.mxu0 %v1812
    %1835 = vmatprep.subr.bf16.mxu0 0
    %1836 = vmatpush1.bf16.msra.mxu0 %v1811
    %1837 = vmatprep.subr.bf16.mxu0 0
    %1838 = vmatpush2.bf16.msra.mxu0 0
    %1839 = vmatprep.subr.bf16.mxu0 0
    %1840 = vmatpush2.bf16.msra.mxu0 0
    %1841 = vmatprep.subr.bf16.mxu0 0
    %1842 = vmatpush2.bf16.msra.mxu0 0
    %1843 = vmatprep.subr.bf16.mxu0 0
    %1844 = vmatpush2.bf16.msra.mxu0 0
    %1845 = vmatprep.subr.bf16.mxu0 0
    %1846 = vmatpush2.bf16.msra.mxu0 0
    %1847 = vmatprep.subr.bf16.mxu0 0
    %1848 = vmatpush2.bf16.msra.mxu0 0
    %1849 = vmatprep.subr.bf16.mxu0 0
    %1850 = vmatpush2.bf16.msra.mxu0 0
    %1851 = vmatprep.subr.bf16.mxu0 0
    %1852 = vmatpush2.bf16.msra.mxu0 0
    %1853 = vmatprep.mubr.bf16.mxu0 0
    %1854 = vmatmul.mubr.bf16.gmra.mxu0 %v1816
    %v1855 = vpop.f32.mrf.mxu0
    %v1856 = vadd.f32 %v1793, %v1855
    %v1857 = vpop.f32.mrf.mxu0
    %v1858 = vpop.f32.mrf.mxu0
    %v1859 = vadd.f32 %v1793, %v1858
    %v1860 = vpop.f32.mrf.mxu0
    %1861 = vmatprep.mubr.bf16.mxu0 0
    %1862 = vmatmul.mubr.bf16.gmra.mxu0 %v1819
    %v1863 = vpop.f32.mrf.mxu0
    %v1864 = vadd.f32 %v1793, %v1863
    %v1865 = vpop.f32.mrf.mxu0
    %v1866 = vpop.f32.mrf.mxu0
    %v1867 = vpop.f32.mrf.mxu0
    %1868 = vdwg.mxu0
    %s1869 = scalar_lea.vmem %s5, 128
    %v1870 = vld [vmem:[%s1869] sm:$0xf]
    %v1871 = vld [vmem:[%s1869 + $0x4] sm:$0xf]
    %v1872 = vld [vmem:[%s1869 + $0x8] sm:$0xf]
    %v1873 = vld [vmem:[%s1869 + $0xc] sm:$0xf]
    %s1874 = scalar_lea.vmem %s6, 8
    %v1875 = vld [vmem:[%s1874] sm:$0x1]
    %v1877 = vlaneseq
    %v1878 = vshrl.u32 %v1877, 7
    %v1879 = vsub.s32 0, %v1878
    %v1880 = vrot.slane %v1875, %v1879
    %v1886 = vunpack.c.l.b16 %v1870
    %v1887 = vunpack.c.l.b16 %v1871
    %v1888 = vunpack.c.l.b16 %v1872
    %v1889 = vunpack.c.l.b16 %v1873
    %v1890 = vpack.c.b16 %v1887, %v1886
    %v1891 = vpack.c.b16 %v1889, %v1888
    %1894 = vmatprep.subr.bf16.mxu0 0
    %1895 = vmatpush1.bf16.msra.mxu0 0
    %1896 = vmatprep.subr.bf16.mxu0 0
    %1897 = vmatpush1.bf16.msra.mxu0 0
    %1898 = vmatprep.subr.bf16.mxu0 0
    %1899 = vmatpush1.bf16.msra.mxu0 0
    %1900 = vmatprep.subr.bf16.mxu0 0
    %1901 = vmatpush1.bf16.msra.mxu0 0
    %1902 = vmatprep.subr.bf16.mxu0 0
    %1903 = vmatpush1.bf16.msra.mxu0 0
    %1904 = vmatprep.subr.bf16.mxu0 0
    %1905 = vmatpush1.bf16.msra.mxu0 0
    %1906 = vmatprep.subr.bf16.mxu0 0
    %1907 = vmatpush1.bf16.msra.mxu0 %v1891
    %1908 = vmatprep.subr.bf16.mxu0 0
    %1909 = vmatpush1.bf16.msra.mxu0 %v1890
    %1910 = vmatprep.subr.bf16.mxu0 0
    %1911 = vmatpush2.bf16.msra.mxu0 0
    %1912 = vmatprep.subr.bf16.mxu0 0
    %1913 = vmatpush2.bf16.msra.mxu0 0
    %1914 = vmatprep.subr.bf16.mxu0 0
    %1915 = vmatpush2.bf16.msra.mxu0 0
    %1916 = vmatprep.subr.bf16.mxu0 0
    %1917 = vmatpush2.bf16.msra.mxu0 0
    %1918 = vmatprep.subr.bf16.mxu0 0
    %1919 = vmatpush2.bf16.msra.mxu0 0
    %1920 = vmatprep.subr.bf16.mxu0 0
    %1921 = vmatpush2.bf16.msra.mxu0 0
    %1922 = vmatprep.subr.bf16.mxu0 0
    %1923 = vmatpush2.bf16.msra.mxu0 0
    %1924 = vmatprep.subr.bf16.mxu0 0
    %1925 = vmatpush2.bf16.msra.mxu0 0
    %1926 = vmatprep.mubr.bf16.mxu0 0
    %1927 = vmatmul.mubr.bf16.gmra.mxu0 %v1816
    %v1928 = vpop.f32.mrf.mxu0
    %v1929 = vadd.f32 %v1880, %v1928
    %v1930 = vpop.f32.mrf.mxu0
    %v1931 = vpop.f32.mrf.mxu0
    %v1932 = vadd.f32 %v1880, %v1931
    %v1933 = vpop.f32.mrf.mxu0
    %1934 = vmatprep.mubr.bf16.mxu0 0
    %1935 = vmatmul.mubr.bf16.gmra.mxu0 %v1819
    %v1936 = vpop.f32.mrf.mxu0
    %v1937 = vadd.f32 %v1880, %v1936
    %v1938 = vpop.f32.mrf.mxu0
    %v1939 = vpop.f32.mrf.mxu0
    %v1940 = vpop.f32.mrf.mxu0
    %1941 = vdwg.mxu0
    %s1942 = scalar_lea.vmem %s5, 160
    %v1943 = vld [vmem:[%s1942] sm:$0xf]
    %v1944 = vld [vmem:[%s1942 + $0x4] sm:$0xf]
    %v1945 = vld [vmem:[%s1942 + $0x8] sm:$0xf]
    %v1946 = vld [vmem:[%s1942 + $0xc] sm:$0xf]
    %s1947 = scalar_lea.vmem %s6, 10
    %v1948 = vld [vmem:[%s1947] sm:$0x1]
    %v1950 = vlaneseq
    %v1951 = vshrl.u32 %v1950, 7
    %v1952 = vsub.s32 0, %v1951
    %v1953 = vrot.slane %v1948, %v1952
    %v1959 = vunpack.c.l.b16 %v1943
    %v1960 = vunpack.c.l.b16 %v1944
    %v1961 = vunpack.c.l.b16 %v1945
    %v1962 = vunpack.c.l.b16 %v1946
    %v1963 = vpack.c.b16 %v1960, %v1959
    %v1964 = vpack.c.b16 %v1962, %v1961
    %1967 = vmatprep.subr.bf16.mxu0 0
    %1968 = vmatpush1.bf16.msra.mxu0 0
    %1969 = vmatprep.subr.bf16.mxu0 0
    %1970 = vmatpush1.bf16.msra.mxu0 0
    %1971 = vmatprep.subr.bf16.mxu0 0
    %1972 = vmatpush1.bf16.msra.mxu0 0
    %1973 = vmatprep.subr.bf16.mxu0 0
    %1974 = vmatpush1.bf16.msra.mxu0 0
    %1975 = vmatprep.subr.bf16.mxu0 0
    %1976 = vmatpush1.bf16.msra.mxu0 0
    %1977 = vmatprep.subr.bf16.mxu0 0
    %1978 = vmatpush1.bf16.msra.mxu0 0
    %1979 = vmatprep.subr.bf16.mxu0 0
    %1980 = vmatpush1.bf16.msra.mxu0 %v1964
    %1981 = vmatprep.subr.bf16.mxu0 0
    %1982 = vmatpush1.bf16.msra.mxu0 %v1963
    %1983 = vmatprep.subr.bf16.mxu0 0
    %1984 = vmatpush2.bf16.msra.mxu0 0
    %1985 = vmatprep.subr.bf16.mxu0 0
    %1986 = vmatpush2.bf16.msra.mxu0 0
    %1987 = vmatprep.subr.bf16.mxu0 0
    %1988 = vmatpush2.bf16.msra.mxu0 0
    %1989 = vmatprep.subr.bf16.mxu0 0
    %1990 = vmatpush2.bf16.msra.mxu0 0
    %1991 = vmatprep.subr.bf16.mxu0 0
    %1992 = vmatpush2.bf16.msra.mxu0 0
    %1993 = vmatprep.subr.bf16.mxu0 0
    %1994 = vmatpush2.bf16.msra.mxu0 0
    %1995 = vmatprep.subr.bf16.mxu0 0
    %1996 = vmatpush2.bf16.msra.mxu0 0
    %1997 = vmatprep.subr.bf16.mxu0 0
    %1998 = vmatpush2.bf16.msra.mxu0 0
    %1999 = vmatprep.mubr.bf16.mxu0 0
    %2000 = vmatmul.mubr.bf16.gmra.mxu0 %v1816
    %v2001 = vpop.f32.mrf.mxu0
    %v2002 = vadd.f32 %v1953, %v2001
    %v2003 = vpop.f32.mrf.mxu0
    %v2004 = vpop.f32.mrf.mxu0
    %v2005 = vadd.f32 %v1953, %v2004
    %v2006 = vpop.f32.mrf.mxu0
    %2007 = vmatprep.mubr.bf16.mxu0 0
    %2008 = vmatmul.mubr.bf16.gmra.mxu0 %v1819
    %v2009 = vpop.f32.mrf.mxu0
    %v2010 = vadd.f32 %v1953, %v2009
    %v2011 = vpop.f32.mrf.mxu0
    %v2012 = vpop.f32.mrf.mxu0
    %v2013 = vpop.f32.mrf.mxu0
    %2014 = vdwg.mxu0
    %v2015 = vpack.c.bf16 %v1856, %v1856
    %v2016 = vpack.c.bf16 %v1859, %v1859
    %v2017 = vpack.c.bf16 %v1864, %v1864
    %v2018 = vpack.c.bf16 %v1929, %v1929
    %v2019 = vpack.c.bf16 %v1932, %v1932
    %v2020 = vpack.c.bf16 %v1937, %v1937
    %v2022 = vsel %vm376, %v2015, 0
    %v2025 = vsel %vm376, %v2018, 0
    %2027 = vmatprep.subr.bf16.mxu0 0
    %2028 = vmatpush1.bf16.xpose.msra.mxu0 0
    %2029 = vmatprep.subr.bf16.mxu0 0
    %2030 = vmatpush1.bf16.xpose.msra.mxu0 0
    %2031 = vmatprep.subr.bf16.mxu0 0
    %2032 = vmatpush1.bf16.xpose.msra.mxu0 0
    %2033 = vmatprep.subr.bf16.mxu0 0
    %2034 = vmatpush1.bf16.xpose.msra.mxu0 0
    %2035 = vmatprep.subr.bf16.mxu0 0
    %2036 = vmatpush1.bf16.xpose.msra.mxu0 0
    %2037 = vmatprep.subr.bf16.mxu0 0
    %2038 = vmatpush1.bf16.xpose.msra.mxu0 0
    %2039 = vmatprep.subr.bf16.mxu0 0
    %2040 = vmatpush1.bf16.xpose.msra.mxu0 0
    %2041 = vmatprep.subr.bf16.mxu0 0
    %2042 = vmatpush1.bf16.xpose.msra.mxu0 %v2025
    %2043 = vmatprep.subr.bf16.mxu0 0
    %2044 = vmatpush2.bf16.xpose.msra.mxu0 0
    %2045 = vmatprep.subr.bf16.mxu0 0
    %2046 = vmatpush2.bf16.xpose.msra.mxu0 0
    %2047 = vmatprep.subr.bf16.mxu0 0
    %2048 = vmatpush2.bf16.xpose.msra.mxu0 0
    %2049 = vmatprep.subr.bf16.mxu0 0
    %2050 = vmatpush2.bf16.xpose.msra.mxu0 0
    %2051 = vmatprep.subr.bf16.mxu0 0
    %2052 = vmatpush2.bf16.xpose.msra.mxu0 0
    %2053 = vmatprep.subr.bf16.mxu0 0
    %2054 = vmatpush2.bf16.xpose.msra.mxu0 0
    %2055 = vmatprep.subr.bf16.mxu0 0
    %2056 = vmatpush2.bf16.xpose.msra.mxu0 0
    %2057 = vmatprep.subr.bf16.mxu0 0
    %2058 = vmatpush2.bf16.xpose.msra.mxu0 0
    %2059 = vmatprep.mubr.bf16.mxu0 0
    %2060 = vmatmul.mubr.bf16.gmra.mxu0 %v2022
    %v2061 = vpop.f32.mrf.mxu0
    %v2062 = vadd.f32 0.0, %v2061
    %v2063 = vpop.f32.mrf.mxu0
    %v2064 = vpop.f32.mrf.mxu0
    %v2065 = vpop.f32.mrf.mxu0
    %2066 = vdwg.mxu0
    %v2068 = vsel %vm376, %v2016, 0
    %v2071 = vsel %vm376, %v2019, 0
    %2073 = vmatprep.subr.bf16.mxu0 0
    %2074 = vmatpush1.bf16.xpose.msra.mxu0 0
    %2075 = vmatprep.subr.bf16.mxu0 0
    %2076 = vmatpush1.bf16.xpose.msra.mxu0 0
    %2077 = vmatprep.subr.bf16.mxu0 0
    %2078 = vmatpush1.bf16.xpose.msra.mxu0 0
    %2079 = vmatprep.subr.bf16.mxu0 0
    %2080 = vmatpush1.bf16.xpose.msra.mxu0 0
    %2081 = vmatprep.subr.bf16.mxu0 0
    %2082 = vmatpush1.bf16.xpose.msra.mxu0 0
    %2083 = vmatprep.subr.bf16.mxu0 0
    %2084 = vmatpush1.bf16.xpose.msra.mxu0 0
    %2085 = vmatprep.subr.bf16.mxu0 0
    %2086 = vmatpush1.bf16.xpose.msra.mxu0 0
    %2087 = vmatprep.subr.bf16.mxu0 0
    %2088 = vmatpush1.bf16.xpose.msra.mxu0 %v2071
    %2089 = vmatprep.subr.bf16.mxu0 0
    %2090 = vmatpush2.bf16.xpose.msra.mxu0 0
    %2091 = vmatprep.subr.bf16.mxu0 0
    %2092 = vmatpush2.bf16.xpose.msra.mxu0 0
    %2093 = vmatprep.subr.bf16.mxu0 0
    %2094 = vmatpush2.bf16.xpose.msra.mxu0 0
    %2095 = vmatprep.subr.bf16.mxu0 0
    %2096 = vmatpush2.bf16.xpose.msra.mxu0 0
    %2097 = vmatprep.subr.bf16.mxu0 0
    %2098 = vmatpush2.bf16.xpose.msra.mxu0 0
    %2099 = vmatprep.subr.bf16.mxu0 0
    %2100 = vmatpush2.bf16.xpose.msra.mxu0 0
    %2101 = vmatprep.subr.bf16.mxu0 0
    %2102 = vmatpush2.bf16.xpose.msra.mxu0 0
    %2103 = vmatprep.subr.bf16.mxu0 0
    %2104 = vmatpush2.bf16.xpose.msra.mxu0 0
    %2105 = vmatprep.mubr.bf16.mxu0 0
    %2106 = vmatmul.mubr.bf16.gmra.mxu0 %v2068
    %v2107 = vpop.f32.mrf.mxu0
    %v2108 = vadd.f32 0.0, %v2107
    %v2109 = vpop.f32.mrf.mxu0
    %v2110 = vpop.f32.mrf.mxu0
    %v2111 = vpop.f32.mrf.mxu0
    %2112 = vdwg.mxu0
    %v2114 = vsel %vm376, %v2017, 0
    %v2117 = vsel %vm376, %v2020, 0
    %2119 = vmatprep.subr.bf16.mxu0 0
    %2120 = vmatpush1.bf16.xpose.msra.mxu0 0
    %2121 = vmatprep.subr.bf16.mxu0 0
    %2122 = vmatpush1.bf16.xpose.msra.mxu0 0
    %2123 = vmatprep.subr.bf16.mxu0 0
    %2124 = vmatpush1.bf16.xpose.msra.mxu0 0
    %2125 = vmatprep.subr.bf16.mxu0 0
    %2126 = vmatpush1.bf16.xpose.msra.mxu0 0
    %2127 = vmatprep.subr.bf16.mxu0 0
    %2128 = vmatpush1.bf16.xpose.msra.mxu0 0
    %2129 = vmatprep.subr.bf16.mxu0 0
    %2130 = vmatpush1.bf16.xpose.msra.mxu0 0
    %2131 = vmatprep.subr.bf16.mxu0 0
    %2132 = vmatpush1.bf16.xpose.msra.mxu0 0
    %2133 = vmatprep.subr.bf16.mxu0 0
    %2134 = vmatpush1.bf16.xpose.msra.mxu0 %v2117
    %2135 = vmatprep.subr.bf16.mxu0 0
    %2136 = vmatpush2.bf16.xpose.msra.mxu0 0
    %2137 = vmatprep.subr.bf16.mxu0 0
    %2138 = vmatpush2.bf16.xpose.msra.mxu0 0
    %2139 = vmatprep.subr.bf16.mxu0 0
    %2140 = vmatpush2.bf16.xpose.msra.mxu0 0
    %2141 = vmatprep.subr.bf16.mxu0 0
    %2142 = vmatpush2.bf16.xpose.msra.mxu0 0
    %2143 = vmatprep.subr.bf16.mxu0 0
    %2144 = vmatpush2.bf16.xpose.msra.mxu0 0
    %2145 = vmatprep.subr.bf16.mxu0 0
    %2146 = vmatpush2.bf16.xpose.msra.mxu0 0
    %2147 = vmatprep.subr.bf16.mxu0 0
    %2148 = vmatpush2.bf16.xpose.msra.mxu0 0
    %2149 = vmatprep.subr.bf16.mxu0 0
    %2150 = vmatpush2.bf16.xpose.msra.mxu0 0
    %2151 = vmatprep.mubr.bf16.mxu0 0
    %2152 = vmatmul.mubr.bf16.gmra.mxu0 %v2114
    %v2153 = vpop.f32.mrf.mxu0
    %v2154 = vadd.f32 0.0, %v2153
    %v2155 = vpop.f32.mrf.mxu0
    %v2156 = vpop.f32.mrf.mxu0
    %v2157 = vpop.f32.mrf.mxu0
    %2158 = vdwg.mxu0
    %v2159 = vmul.f32 %v2062, 0.25
    %v2160 = vmul.f32 %v2108, 0.25
    %v2161 = vmul.f32 %v2154, 0.25
    %v2162 = vadd.f32 %v2159, %v74
    %v2163 = vadd.f32 %v2160, %v74
    %v2164 = vadd.f32 %v2161, %v74
    %v2165 = vsel %vm521, %v2162, -inf
    %2166 = vmax.xlane.f32.xlu0 %v2165
    %v2167 = vpop.xlane.xlu0 %2166
    %v2168 = vsel %vm521, %v2163, -inf
    %2169 = vmax.xlane.f32.xlu0 %v2168
    %v2170 = vpop.xlane.xlu0 %2169
    %v2171 = vsel %vm521, %v2164, -inf
    %2172 = vmax.xlane.f32.xlu0 %v2171
    %v2173 = vpop.xlane.xlu0 %2172
    %v2174 = vsub.f32 %v2162, %v2167
    %v2175 = vsub.f32 %v2163, %v2170
    %v2176 = vsub.f32 %v2164, %v2173
    %v2177 = vmul.f32 %v2174, 1.442695
    %v2178 = vpow.pop %v2177
    %v2179 = vmul.f32 %v2175, 1.442695
    %v2180 = vpow.pop %v2179
    %v2181 = vmul.f32 %v2176, 1.442695
    %v2182 = vpow.pop %v2181
    %v2183 = vsel %vm521, %v2178, 0.0
    %2184 = vadd.xlane.f32.xlu0 %v2183
    %v2185 = vpop.xlane.xlu0 %2184
    %v2186 = vsel %vm521, %v2180, 0.0
    %2187 = vadd.xlane.f32.xlu0 %v2186
    %v2188 = vpop.xlane.xlu0 %2187
    %v2189 = vsel %vm521, %v2182, 0.0
    %2190 = vadd.xlane.f32.xlu0 %v2189
    %v2191 = vpop.xlane.xlu0 %2190
    %v2192 = vrcp.pop %v2185
    %v2193 = vrcp.pop %v2188
    %v2194 = vrcp.pop %v2191
    %v2195 = vmul.f32 %v2178, %v2192
    %v2196 = vmul.f32 %v2180, %v2193
    %v2197 = vmul.f32 %v2182, %v2194
    %v2198 = vpack.c.bf16 %v2195, %v2195
    %v2199 = vpack.c.bf16 %v2196, %v2196
    %v2200 = vpack.c.bf16 %v2197, %v2197
    %v2201 = vpack.c.bf16 %v2002, %v2002
    %v2202 = vpack.c.bf16 %v2005, %v2005
    %v2203 = vpack.c.bf16 %v2010, %v2010
    %v2205 = vsel %vm521, %v2198, 0
    %v2208 = vsel %vm564, %v2201, 0
    %2210 = vmatprep.subr.bf16.mxu0 0
    %2211 = vmatpush1.bf16.msra.mxu0 0
    %2212 = vmatprep.subr.bf16.mxu0 0
    %2213 = vmatpush1.bf16.msra.mxu0 0
    %2214 = vmatprep.subr.bf16.mxu0 0
    %2215 = vmatpush1.bf16.msra.mxu0 0
    %2216 = vmatprep.subr.bf16.mxu0 0
    %2217 = vmatpush1.bf16.msra.mxu0 0
    %2218 = vmatprep.subr.bf16.mxu0 0
    %2219 = vmatpush1.bf16.msra.mxu0 0
    %2220 = vmatprep.subr.bf16.mxu0 0
    %2221 = vmatpush1.bf16.msra.mxu0 0
    %2222 = vmatprep.subr.bf16.mxu0 0
    %2223 = vmatpush1.bf16.msra.mxu0 0
    %2224 = vmatprep.subr.bf16.mxu0 0
    %2225 = vmatpush1.bf16.msra.mxu0 %v2208
    %2226 = vmatprep.subr.bf16.mxu0 0
    %2227 = vmatpush2.bf16.msra.mxu0 0
    %2228 = vmatprep.subr.bf16.mxu0 0
    %2229 = vmatpush2.bf16.msra.mxu0 0
    %2230 = vmatprep.subr.bf16.mxu0 0
    %2231 = vmatpush2.bf16.msra.mxu0 0
    %2232 = vmatprep.subr.bf16.mxu0 0
    %2233 = vmatpush2.bf16.msra.mxu0 0
    %2234 = vmatprep.subr.bf16.mxu0 0
    %2235 = vmatpush2.bf16.msra.mxu0 0
    %2236 = vmatprep.subr.bf16.mxu0 0
    %2237 = vmatpush2.bf16.msra.mxu0 0
    %2238 = vmatprep.subr.bf16.mxu0 0
    %2239 = vmatpush2.bf16.msra.mxu0 0
    %2240 = vmatprep.subr.bf16.mxu0 0
    %2241 = vmatpush2.bf16.msra.mxu0 0
    %2242 = vmatprep.mubr.bf16.mxu0 0
    %2243 = vmatmul.mubr.bf16.gmra.mxu0 %v2205
    %v2244 = vpop.f32.mrf.mxu0
    %v2245 = vadd.f32 0.0, %v2244
    %v2246 = vpop.f32.mrf.mxu0
    %v2247 = vpop.f32.mrf.mxu0
    %v2248 = vpop.f32.mrf.mxu0
    %2249 = vdwg.mxu0
    %v2251 = vsel %vm521, %v2199, 0
    %v2254 = vsel %vm564, %v2202, 0
    %2256 = vmatprep.subr.bf16.mxu0 0
    %2257 = vmatpush1.bf16.msra.mxu0 0
    %2258 = vmatprep.subr.bf16.mxu0 0
    %2259 = vmatpush1.bf16.msra.mxu0 0
    %2260 = vmatprep.subr.bf16.mxu0 0
    %2261 = vmatpush1.bf16.msra.mxu0 0
    %2262 = vmatprep.subr.bf16.mxu0 0
    %2263 = vmatpush1.bf16.msra.mxu0 0
    %2264 = vmatprep.subr.bf16.mxu0 0
    %2265 = vmatpush1.bf16.msra.mxu0 0
    %2266 = vmatprep.subr.bf16.mxu0 0
    %2267 = vmatpush1.bf16.msra.mxu0 0
    %2268 = vmatprep.subr.bf16.mxu0 0
    %2269 = vmatpush1.bf16.msra.mxu0 0
    %2270 = vmatprep.subr.bf16.mxu0 0
    %2271 = vmatpush1.bf16.msra.mxu0 %v2254
    %2272 = vmatprep.subr.bf16.mxu0 0
    %2273 = vmatpush2.bf16.msra.mxu0 0
    %2274 = vmatprep.subr.bf16.mxu0 0
    %2275 = vmatpush2.bf16.msra.mxu0 0
    %2276 = vmatprep.subr.bf16.mxu0 0
    %2277 = vmatpush2.bf16.msra.mxu0 0
    %2278 = vmatprep.subr.bf16.mxu0 0
    %2279 = vmatpush2.bf16.msra.mxu0 0
    %2280 = vmatprep.subr.bf16.mxu0 0
    %2281 = vmatpush2.bf16.msra.mxu0 0
    %2282 = vmatprep.subr.bf16.mxu0 0
    %2283 = vmatpush2.bf16.msra.mxu0 0
    %2284 = vmatprep.subr.bf16.mxu0 0
    %2285 = vmatpush2.bf16.msra.mxu0 0
    %2286 = vmatprep.subr.bf16.mxu0 0
    %2287 = vmatpush2.bf16.msra.mxu0 0
    %2288 = vmatprep.mubr.bf16.mxu0 0
    %2289 = vmatmul.mubr.bf16.gmra.mxu0 %v2251
    %v2290 = vpop.f32.mrf.mxu0
    %v2291 = vadd.f32 0.0, %v2290
    %v2292 = vpop.f32.mrf.mxu0
    %v2293 = vpop.f32.mrf.mxu0
    %v2294 = vpop.f32.mrf.mxu0
    %2295 = vdwg.mxu0
    %v2297 = vsel %vm521, %v2200, 0
    %v2300 = vsel %vm564, %v2203, 0
    %2302 = vmatprep.subr.bf16.mxu0 0
    %2303 = vmatpush1.bf16.msra.mxu0 0
    %2304 = vmatprep.subr.bf16.mxu0 0
    %2305 = vmatpush1.bf16.msra.mxu0 0
    %2306 = vmatprep.subr.bf16.mxu0 0
    %2307 = vmatpush1.bf16.msra.mxu0 0
    %2308 = vmatprep.subr.bf16.mxu0 0
    %2309 = vmatpush1.bf16.msra.mxu0 0
    %2310 = vmatprep.subr.bf16.mxu0 0
    %2311 = vmatpush1.bf16.msra.mxu0 0
    %2312 = vmatprep.subr.bf16.mxu0 0
    %2313 = vmatpush1.bf16.msra.mxu0 0
    %2314 = vmatprep.subr.bf16.mxu0 0
    %2315 = vmatpush1.bf16.msra.mxu0 0
    %2316 = vmatprep.subr.bf16.mxu0 0
    %2317 = vmatpush1.bf16.msra.mxu0 %v2300
    %2318 = vmatprep.subr.bf16.mxu0 0
    %2319 = vmatpush2.bf16.msra.mxu0 0
    %2320 = vmatprep.subr.bf16.mxu0 0
    %2321 = vmatpush2.bf16.msra.mxu0 0
    %2322 = vmatprep.subr.bf16.mxu0 0
    %2323 = vmatpush2.bf16.msra.mxu0 0
    %2324 = vmatprep.subr.bf16.mxu0 0
    %2325 = vmatpush2.bf16.msra.mxu0 0
    %2326 = vmatprep.subr.bf16.mxu0 0
    %2327 = vmatpush2.bf16.msra.mxu0 0
    %2328 = vmatprep.subr.bf16.mxu0 0
    %2329 = vmatpush2.bf16.msra.mxu0 0
    %2330 = vmatprep.subr.bf16.mxu0 0
    %2331 = vmatpush2.bf16.msra.mxu0 0
    %2332 = vmatprep.subr.bf16.mxu0 0
    %2333 = vmatpush2.bf16.msra.mxu0 0
    %2334 = vmatprep.mubr.bf16.mxu0 0
    %2335 = vmatmul.mubr.bf16.gmra.mxu0 %v2297
    %v2336 = vpop.f32.mrf.mxu0
    %v2337 = vadd.f32 0.0, %v2336
    %v2338 = vpop.f32.mrf.mxu0
    %v2339 = vpop.f32.mrf.mxu0
    %v2340 = vpop.f32.mrf.mxu0
    %2341 = vdwg.mxu0
    %s2342 = scalar_lea.vmem %s7, 16
    %v2343 = vld [vmem:[%s2342] sm:$0xf]
    %v2344 = vld [vmem:[%s2342 + $0x4] sm:$0xf]
    %v2345 = vpack.c.bf16 %v2245, %v2245
    %v2346 = vpack.c.bf16 %v2291, %v2291
    %v2347 = vpack.c.bf16 %v2337, %v2337
    %v2351 = vunpack.c.l.b16 %v2345
    %v2352 = vunpack.c.l.b16 %v2346
    %v2353 = vunpack.c.l.b16 %v2347
    %v2354 = vpack.c.b16 %v2352, %v2351
    %v2355 = vpack.c.b16 %v2353, %v2353
    %v2358 = vunpack.c.l.b16 %v2343
    %v2359 = vunpack.c.l.b16 %v2344
    %v2360 = vpack.c.b16 %v2359, %v2358
    %v2363 = vsel %vm376, %v2354, 0
    %v2366 = vsel %vm376, %v2355, 0
    %2368 = vmatprep.subr.bf16.mxu0 0
    %2369 = vmatpush1.bf16.msra.mxu0 0
    %2370 = vmatprep.subr.bf16.mxu0 0
    %2371 = vmatpush1.bf16.msra.mxu0 0
    %2372 = vmatprep.subr.bf16.mxu0 0
    %2373 = vmatpush1.bf16.msra.mxu0 0
    %2374 = vmatprep.subr.bf16.mxu0 0
    %2375 = vmatpush1.bf16.msra.mxu0 0
    %2376 = vmatprep.subr.bf16.mxu0 0
    %2377 = vmatpush1.bf16.msra.mxu0 0
    %2378 = vmatprep.subr.bf16.mxu0 0
    %2379 = vmatpush1.bf16.msra.mxu0 0
    %2380 = vmatprep.subr.bf16.mxu0 0
    %2381 = vmatpush1.bf16.msra.mxu0 0
    %2382 = vmatprep.subr.bf16.mxu0 0
    %2383 = vmatpush1.bf16.msra.mxu0 %v2360
    %2384 = vmatprep.subr.bf16.mxu0 0
    %2385 = vmatpush2.bf16.msra.mxu0 0
    %2386 = vmatprep.subr.bf16.mxu0 0
    %2387 = vmatpush2.bf16.msra.mxu0 0
    %2388 = vmatprep.subr.bf16.mxu0 0
    %2389 = vmatpush2.bf16.msra.mxu0 0
    %2390 = vmatprep.subr.bf16.mxu0 0
    %2391 = vmatpush2.bf16.msra.mxu0 0
    %2392 = vmatprep.subr.bf16.mxu0 0
    %2393 = vmatpush2.bf16.msra.mxu0 0
    %2394 = vmatprep.subr.bf16.mxu0 0
    %2395 = vmatpush2.bf16.msra.mxu0 0
    %2396 = vmatprep.subr.bf16.mxu0 0
    %2397 = vmatpush2.bf16.msra.mxu0 0
    %2398 = vmatprep.subr.bf16.mxu0 0
    %2399 = vmatpush2.bf16.msra.mxu0 0
    %2400 = vmatprep.mubr.bf16.mxu0 0
    %2401 = vmatmul.mubr.bf16.gmra.mxu0 %v2363
    %v2402 = vpop.f32.mrf.mxu0
    %v2403 = vadd.f32 0.0, %v2402
    %v2404 = vpop.f32.mrf.mxu0
    %v2405 = vpop.f32.mrf.mxu0
    %v2406 = vadd.f32 0.0, %v2405
    %v2407 = vpop.f32.mrf.mxu0
    %2408 = vmatprep.mubr.bf16.mxu0 0
    %2409 = vmatmul.mubr.bf16.gmra.mxu0 %v2366
    %v2410 = vpop.f32.mrf.mxu0
    %v2411 = vadd.f32 0.0, %v2410
    %v2412 = vpop.f32.mrf.mxu0
    %v2413 = vpop.f32.mrf.mxu0
    %v2414 = vpop.f32.mrf.mxu0
    %2415 = vdwg.mxu0
    %v2416 = vadd.f32 %v1715, %v2403
    %v2417 = vadd.f32 %v1716, %v2406
    %v2418 = vadd.f32 %v1717, %v2411
    %s2419 = scalar_lea.vmem %s5, 112
    %v2420 = vld [vmem:[%s2419] sm:$0xf]
    %v2421 = vld [vmem:[%s2419 + $0x4] sm:$0xf]
    %v2422 = vld [vmem:[%s2419 + $0x8] sm:$0xf]
    %v2423 = vld [vmem:[%s2419 + $0xc] sm:$0xf]
    %s2424 = scalar_lea.vmem %s6, 7
    %v2425 = vld [vmem:[%s2424] sm:$0x1]
    %v2427 = vlaneseq
    %v2428 = vshrl.u32 %v2427, 7
    %v2429 = vsub.s32 0, %v2428
    %v2430 = vrot.slane %v2425, %v2429
    %v2436 = vunpack.c.l.b16 %v2420
    %v2437 = vunpack.c.l.b16 %v2421
    %v2438 = vunpack.c.l.b16 %v2422
    %v2439 = vunpack.c.l.b16 %v2423
    %v2440 = vpack.c.b16 %v2437, %v2436
    %v2441 = vpack.c.b16 %v2439, %v2438
    %2444 = vmatprep.subr.bf16.mxu0 0
    %2445 = vmatpush1.bf16.msra.mxu0 0
    %2446 = vmatprep.subr.bf16.mxu0 0
    %2447 = vmatpush1.bf16.msra.mxu0 0
    %2448 = vmatprep.subr.bf16.mxu0 0
    %2449 = vmatpush1.bf16.msra.mxu0 0
    %2450 = vmatprep.subr.bf16.mxu0 0
    %2451 = vmatpush1.bf16.msra.mxu0 0
    %2452 = vmatprep.subr.bf16.mxu0 0
    %2453 = vmatpush1.bf16.msra.mxu0 0
    %2454 = vmatprep.subr.bf16.mxu0 0
    %2455 = vmatpush1.bf16.msra.mxu0 0
    %2456 = vmatprep.subr.bf16.mxu0 0
    %2457 = vmatpush1.bf16.msra.mxu0 %v2441
    %2458 = vmatprep.subr.bf16.mxu0 0
    %2459 = vmatpush1.bf16.msra.mxu0 %v2440
    %2460 = vmatprep.subr.bf16.mxu0 0
    %2461 = vmatpush2.bf16.msra.mxu0 0
    %2462 = vmatprep.subr.bf16.mxu0 0
    %2463 = vmatpush2.bf16.msra.mxu0 0
    %2464 = vmatprep.subr.bf16.mxu0 0
    %2465 = vmatpush2.bf16.msra.mxu0 0
    %2466 = vmatprep.subr.bf16.mxu0 0
    %2467 = vmatpush2.bf16.msra.mxu0 0
    %2468 = vmatprep.subr.bf16.mxu0 0
    %2469 = vmatpush2.bf16.msra.mxu0 0
    %2470 = vmatprep.subr.bf16.mxu0 0
    %2471 = vmatpush2.bf16.msra.mxu0 0
    %2472 = vmatprep.subr.bf16.mxu0 0
    %2473 = vmatpush2.bf16.msra.mxu0 0
    %2474 = vmatprep.subr.bf16.mxu0 0
    %2475 = vmatpush2.bf16.msra.mxu0 0
    %2476 = vmatprep.mubr.bf16.mxu0 0
    %2477 = vmatmul.mubr.bf16.gmra.mxu0 %v1816
    %v2478 = vpop.f32.mrf.mxu0
    %v2479 = vadd.f32 %v2430, %v2478
    %v2480 = vpop.f32.mrf.mxu0
    %v2481 = vpop.f32.mrf.mxu0
    %v2482 = vadd.f32 %v2430, %v2481
    %v2483 = vpop.f32.mrf.mxu0
    %2484 = vmatprep.mubr.bf16.mxu0 0
    %2485 = vmatmul.mubr.bf16.gmra.mxu0 %v1819
    %v2486 = vpop.f32.mrf.mxu0
    %v2487 = vadd.f32 %v2430, %v2486
    %v2488 = vpop.f32.mrf.mxu0
    %v2489 = vpop.f32.mrf.mxu0
    %v2490 = vpop.f32.mrf.mxu0
    %2491 = vdwg.mxu0
    %s2492 = scalar_lea.vmem %s5, 144
    %v2493 = vld [vmem:[%s2492] sm:$0xf]
    %v2494 = vld [vmem:[%s2492 + $0x4] sm:$0xf]
    %v2495 = vld [vmem:[%s2492 + $0x8] sm:$0xf]
    %v2496 = vld [vmem:[%s2492 + $0xc] sm:$0xf]
    %s2497 = scalar_lea.vmem %s6, 9
    %v2498 = vld [vmem:[%s2497] sm:$0x1]
    %v2500 = vlaneseq
    %v2501 = vshrl.u32 %v2500, 7
    %v2502 = vsub.s32 0, %v2501
    %v2503 = vrot.slane %v2498, %v2502
    %v2509 = vunpack.c.l.b16 %v2493
    %v2510 = vunpack.c.l.b16 %v2494
    %v2511 = vunpack.c.l.b16 %v2495
    %v2512 = vunpack.c.l.b16 %v2496
    %v2513 = vpack.c.b16 %v2510, %v2509
    %v2514 = vpack.c.b16 %v2512, %v2511
    %2517 = vmatprep.subr.bf16.mxu0 0
    %2518 = vmatpush1.bf16.msra.mxu0 0
    %2519 = vmatprep.subr.bf16.mxu0 0
    %2520 = vmatpush1.bf16.msra.mxu0 0
    %2521 = vmatprep.subr.bf16.mxu0 0
    %2522 = vmatpush1.bf16.msra.mxu0 0
    %2523 = vmatprep.subr.bf16.mxu0 0
    %2524 = vmatpush1.bf16.msra.mxu0 0
    %2525 = vmatprep.subr.bf16.mxu0 0
    %2526 = vmatpush1.bf16.msra.mxu0 0
    %2527 = vmatprep.subr.bf16.mxu0 0
    %2528 = vmatpush1.bf16.msra.mxu0 0
    %2529 = vmatprep.subr.bf16.mxu0 0
    %2530 = vmatpush1.bf16.msra.mxu0 %v2514
    %2531 = vmatprep.subr.bf16.mxu0 0
    %2532 = vmatpush1.bf16.msra.mxu0 %v2513
    %2533 = vmatprep.subr.bf16.mxu0 0
    %2534 = vmatpush2.bf16.msra.mxu0 0
    %2535 = vmatprep.subr.bf16.mxu0 0
    %2536 = vmatpush2.bf16.msra.mxu0 0
    %2537 = vmatprep.subr.bf16.mxu0 0
    %2538 = vmatpush2.bf16.msra.mxu0 0
    %2539 = vmatprep.subr.bf16.mxu0 0
    %2540 = vmatpush2.bf16.msra.mxu0 0
    %2541 = vmatprep.subr.bf16.mxu0 0
    %2542 = vmatpush2.bf16.msra.mxu0 0
    %2543 = vmatprep.subr.bf16.mxu0 0
    %2544 = vmatpush2.bf16.msra.mxu0 0
    %2545 = vmatprep.subr.bf16.mxu0 0
    %2546 = vmatpush2.bf16.msra.mxu0 0
    %2547 = vmatprep.subr.bf16.mxu0 0
    %2548 = vmatpush2.bf16.msra.mxu0 0
    %2549 = vmatprep.mubr.bf16.mxu0 0
    %2550 = vmatmul.mubr.bf16.gmra.mxu0 %v1816
    %v2551 = vpop.f32.mrf.mxu0
    %v2552 = vadd.f32 %v2503, %v2551
    %v2553 = vpop.f32.mrf.mxu0
    %v2554 = vpop.f32.mrf.mxu0
    %v2555 = vadd.f32 %v2503, %v2554
    %v2556 = vpop.f32.mrf.mxu0
    %2557 = vmatprep.mubr.bf16.mxu0 0
    %2558 = vmatmul.mubr.bf16.gmra.mxu0 %v1819
    %v2559 = vpop.f32.mrf.mxu0
    %v2560 = vadd.f32 %v2503, %v2559
    %v2561 = vpop.f32.mrf.mxu0
    %v2562 = vpop.f32.mrf.mxu0
    %v2563 = vpop.f32.mrf.mxu0
    %2564 = vdwg.mxu0
    %s2565 = scalar_lea.vmem %s5, 176
    %v2566 = vld [vmem:[%s2565] sm:$0xf]
    %v2567 = vld [vmem:[%s2565 + $0x4] sm:$0xf]
    %v2568 = vld [vmem:[%s2565 + $0x8] sm:$0xf]
    %v2569 = vld [vmem:[%s2565 + $0xc] sm:$0xf]
    %s2570 = scalar_lea.vmem %s6, 11
    %v2571 = vld [vmem:[%s2570] sm:$0x1]
    %v2573 = vlaneseq
    %v2574 = vshrl.u32 %v2573, 7
    %v2575 = vsub.s32 0, %v2574
    %v2576 = vrot.slane %v2571, %v2575
    %v2582 = vunpack.c.l.b16 %v2566
    %v2583 = vunpack.c.l.b16 %v2567
    %v2584 = vunpack.c.l.b16 %v2568
    %v2585 = vunpack.c.l.b16 %v2569
    %v2586 = vpack.c.b16 %v2583, %v2582
    %v2587 = vpack.c.b16 %v2585, %v2584
    %2590 = vmatprep.subr.bf16.mxu0 0
    %2591 = vmatpush1.bf16.msra.mxu0 0
    %2592 = vmatprep.subr.bf16.mxu0 0
    %2593 = vmatpush1.bf16.msra.mxu0 0
    %2594 = vmatprep.subr.bf16.mxu0 0
    %2595 = vmatpush1.bf16.msra.mxu0 0
    %2596 = vmatprep.subr.bf16.mxu0 0
    %2597 = vmatpush1.bf16.msra.mxu0 0
    %2598 = vmatprep.subr.bf16.mxu0 0
    %2599 = vmatpush1.bf16.msra.mxu0 0
    %2600 = vmatprep.subr.bf16.mxu0 0
    %2601 = vmatpush1.bf16.msra.mxu0 0
    %2602 = vmatprep.subr.bf16.mxu0 0
    %2603 = vmatpush1.bf16.msra.mxu0 %v2587
    %2604 = vmatprep.subr.bf16.mxu0 0
    %2605 = vmatpush1.bf16.msra.mxu0 %v2586
    %2606 = vmatprep.subr.bf16.mxu0 0
    %2607 = vmatpush2.bf16.msra.mxu0 0
    %2608 = vmatprep.subr.bf16.mxu0 0
    %2609 = vmatpush2.bf16.msra.mxu0 0
    %2610 = vmatprep.subr.bf16.mxu0 0
    %2611 = vmatpush2.bf16.msra.mxu0 0
    %2612 = vmatprep.subr.bf16.mxu0 0
    %2613 = vmatpush2.bf16.msra.mxu0 0
    %2614 = vmatprep.subr.bf16.mxu0 0
    %2615 = vmatpush2.bf16.msra.mxu0 0
    %2616 = vmatprep.subr.bf16.mxu0 0
    %2617 = vmatpush2.bf16.msra.mxu0 0
    %2618 = vmatprep.subr.bf16.mxu0 0
    %2619 = vmatpush2.bf16.msra.mxu0 0
    %2620 = vmatprep.subr.bf16.mxu0 0
    %2621 = vmatpush2.bf16.msra.mxu0 0
    %2622 = vmatprep.mubr.bf16.mxu0 0
    %2623 = vmatmul.mubr.bf16.gmra.mxu0 %v1816
    %v2624 = vpop.f32.mrf.mxu0
    %v2625 = vadd.f32 %v2576, %v2624
    %v2626 = vpop.f32.mrf.mxu0
    %v2627 = vpop.f32.mrf.mxu0
    %v2628 = vadd.f32 %v2576, %v2627
    %v2629 = vpop.f32.mrf.mxu0
    %2630 = vmatprep.mubr.bf16.mxu0 0
    %2631 = vmatmul.mubr.bf16.gmra.mxu0 %v1819
    %v2632 = vpop.f32.mrf.mxu0
    %v2633 = vadd.f32 %v2576, %v2632
    %v2634 = vpop.f32.mrf.mxu0
    %v2635 = vpop.f32.mrf.mxu0
    %v2636 = vpop.f32.mrf.mxu0
    %2637 = vdwg.mxu0
    %v2638 = vpack.c.bf16 %v2479, %v2479
    %v2639 = vpack.c.bf16 %v2482, %v2482
    %v2640 = vpack.c.bf16 %v2487, %v2487
    %v2641 = vpack.c.bf16 %v2552, %v2552
    %v2642 = vpack.c.bf16 %v2555, %v2555
    %v2643 = vpack.c.bf16 %v2560, %v2560
    %v2645 = vsel %vm376, %v2638, 0
    %v2648 = vsel %vm376, %v2641, 0
    %2650 = vmatprep.subr.bf16.mxu0 0
    %2651 = vmatpush1.bf16.xpose.msra.mxu0 0
    %2652 = vmatprep.subr.bf16.mxu0 0
    %2653 = vmatpush1.bf16.xpose.msra.mxu0 0
    %2654 = vmatprep.subr.bf16.mxu0 0
    %2655 = vmatpush1.bf16.xpose.msra.mxu0 0
    %2656 = vmatprep.subr.bf16.mxu0 0
    %2657 = vmatpush1.bf16.xpose.msra.mxu0 0
    %2658 = vmatprep.subr.bf16.mxu0 0
    %2659 = vmatpush1.bf16.xpose.msra.mxu0 0
    %2660 = vmatprep.subr.bf16.mxu0 0
    %2661 = vmatpush1.bf16.xpose.msra.mxu0 0
    %2662 = vmatprep.subr.bf16.mxu0 0
    %2663 = vmatpush1.bf16.xpose.msra.mxu0 0
    %2664 = vmatprep.subr.bf16.mxu0 0
    %2665 = vmatpush1.bf16.xpose.msra.mxu0 %v2648
    %2666 = vmatprep.subr.bf16.mxu0 0
    %2667 = vmatpush2.bf16.xpose.msra.mxu0 0
    %2668 = vmatprep.subr.bf16.mxu0 0
    %2669 = vmatpush2.bf16.xpose.msra.mxu0 0
    %2670 = vmatprep.subr.bf16.mxu0 0
    %2671 = vmatpush2.bf16.xpose.msra.mxu0 0
    %2672 = vmatprep.subr.bf16.mxu0 0
    %2673 = vmatpush2.bf16.xpose.msra.mxu0 0
    %2674 = vmatprep.subr.bf16.mxu0 0
    %2675 = vmatpush2.bf16.xpose.msra.mxu0 0
    %2676 = vmatprep.subr.bf16.mxu0 0
    %2677 = vmatpush2.bf16.xpose.msra.mxu0 0
    %2678 = vmatprep.subr.bf16.mxu0 0
    %2679 = vmatpush2.bf16.xpose.msra.mxu0 0
    %2680 = vmatprep.subr.bf16.mxu0 0
    %2681 = vmatpush2.bf16.xpose.msra.mxu0 0
    %2682 = vmatprep.mubr.bf16.mxu0 0
    %2683 = vmatmul.mubr.bf16.gmra.mxu0 %v2645
    %v2684 = vpop.f32.mrf.mxu0
    %v2685 = vadd.f32 0.0, %v2684
    %v2686 = vpop.f32.mrf.mxu0
    %v2687 = vpop.f32.mrf.mxu0
    %v2688 = vpop.f32.mrf.mxu0
    %2689 = vdwg.mxu0
    %v2691 = vsel %vm376, %v2639, 0
    %v2694 = vsel %vm376, %v2642, 0
    %2696 = vmatprep.subr.bf16.mxu0 0
    %2697 = vmatpush1.bf16.xpose.msra.mxu0 0
    %2698 = vmatprep.subr.bf16.mxu0 0
    %2699 = vmatpush1.bf16.xpose.msra.mxu0 0
    %2700 = vmatprep.subr.bf16.mxu0 0
    %2701 = vmatpush1.bf16.xpose.msra.mxu0 0
    %2702 = vmatprep.subr.bf16.mxu0 0
    %2703 = vmatpush1.bf16.xpose.msra.mxu0 0
    %2704 = vmatprep.subr.bf16.mxu0 0
    %2705 = vmatpush1.bf16.xpose.msra.mxu0 0
    %2706 = vmatprep.subr.bf16.mxu0 0
    %2707 = vmatpush1.bf16.xpose.msra.mxu0 0
    %2708 = vmatprep.subr.bf16.mxu0 0
    %2709 = vmatpush1.bf16.xpose.msra.mxu0 0
    %2710 = vmatprep.subr.bf16.mxu0 0
    %2711 = vmatpush1.bf16.xpose.msra.mxu0 %v2694
    %2712 = vmatprep.subr.bf16.mxu0 0
    %2713 = vmatpush2.bf16.xpose.msra.mxu0 0
    %2714 = vmatprep.subr.bf16.mxu0 0
    %2715 = vmatpush2.bf16.xpose.msra.mxu0 0
    %2716 = vmatprep.subr.bf16.mxu0 0
    %2717 = vmatpush2.bf16.xpose.msra.mxu0 0
    %2718 = vmatprep.subr.bf16.mxu0 0
    %2719 = vmatpush2.bf16.xpose.msra.mxu0 0
    %2720 = vmatprep.subr.bf16.mxu0 0
    %2721 = vmatpush2.bf16.xpose.msra.mxu0 0
    %2722 = vmatprep.subr.bf16.mxu0 0
    %2723 = vmatpush2.bf16.xpose.msra.mxu0 0
    %2724 = vmatprep.subr.bf16.mxu0 0
    %2725 = vmatpush2.bf16.xpose.msra.mxu0 0
    %2726 = vmatprep.subr.bf16.mxu0 0
    %2727 = vmatpush2.bf16.xpose.msra.mxu0 0
    %2728 = vmatprep.mubr.bf16.mxu0 0
    %2729 = vmatmul.mubr.bf16.gmra.mxu0 %v2691
    %v2730 = vpop.f32.mrf.mxu0
    %v2731 = vadd.f32 0.0, %v2730
    %v2732 = vpop.f32.mrf.mxu0
    %v2733 = vpop.f32.mrf.mxu0
    %v2734 = vpop.f32.mrf.mxu0
    %2735 = vdwg.mxu0
    %v2737 = vsel %vm376, %v2640, 0
    %v2740 = vsel %vm376, %v2643, 0
    %2742 = vmatprep.subr.bf16.mxu0 0
    %2743 = vmatpush1.bf16.xpose.msra.mxu0 0
    %2744 = vmatprep.subr.bf16.mxu0 0
    %2745 = vmatpush1.bf16.xpose.msra.mxu0 0
    %2746 = vmatprep.subr.bf16.mxu0 0
    %2747 = vmatpush1.bf16.xpose.msra.mxu0 0
    %2748 = vmatprep.subr.bf16.mxu0 0
    %2749 = vmatpush1.bf16.xpose.msra.mxu0 0
    %2750 = vmatprep.subr.bf16.mxu0 0
    %2751 = vmatpush1.bf16.xpose.msra.mxu0 0
    %2752 = vmatprep.subr.bf16.mxu0 0
    %2753 = vmatpush1.bf16.xpose.msra.mxu0 0
    %2754 = vmatprep.subr.bf16.mxu0 0
    %2755 = vmatpush1.bf16.xpose.msra.mxu0 0
    %2756 = vmatprep.subr.bf16.mxu0 0
    %2757 = vmatpush1.bf16.xpose.msra.mxu0 %v2740
    %2758 = vmatprep.subr.bf16.mxu0 0
    %2759 = vmatpush2.bf16.xpose.msra.mxu0 0
    %2760 = vmatprep.subr.bf16.mxu0 0
    %2761 = vmatpush2.bf16.xpose.msra.mxu0 0
    %2762 = vmatprep.subr.bf16.mxu0 0
    %2763 = vmatpush2.bf16.xpose.msra.mxu0 0
    %2764 = vmatprep.subr.bf16.mxu0 0
    %2765 = vmatpush2.bf16.xpose.msra.mxu0 0
    %2766 = vmatprep.subr.bf16.mxu0 0
    %2767 = vmatpush2.bf16.xpose.msra.mxu0 0
    %2768 = vmatprep.subr.bf16.mxu0 0
    %2769 = vmatpush2.bf16.xpose.msra.mxu0 0
    %2770 = vmatprep.subr.bf16.mxu0 0
    %2771 = vmatpush2.bf16.xpose.msra.mxu0 0
    %2772 = vmatprep.subr.bf16.mxu0 0
    %2773 = vmatpush2.bf16.xpose.msra.mxu0 0
    %2774 = vmatprep.mubr.bf16.mxu0 0
    %2775 = vmatmul.mubr.bf16.gmra.mxu0 %v2737
    %v2776 = vpop.f32.mrf.mxu0
    %v2777 = vadd.f32 0.0, %v2776
    %v2778 = vpop.f32.mrf.mxu0
    %v2779 = vpop.f32.mrf.mxu0
    %v2780 = vpop.f32.mrf.mxu0
    %2781 = vdwg.mxu0
    %v2782 = vmul.f32 %v2685, 0.25
    %v2783 = vmul.f32 %v2731, 0.25
    %v2784 = vmul.f32 %v2777, 0.25
    %v2785 = vadd.f32 %v2782, %v74
    %v2786 = vadd.f32 %v2783, %v74
    %v2787 = vadd.f32 %v2784, %v74
    %v2788 = vsel %vm521, %v2785, -inf
    %2789 = vmax.xlane.f32.xlu0 %v2788
    %v2790 = vpop.xlane.xlu0 %2789
    %v2791 = vsel %vm521, %v2786, -inf
    %2792 = vmax.xlane.f32.xlu0 %v2791
    %v2793 = vpop.xlane.xlu0 %2792
    %v2794 = vsel %vm521, %v2787, -inf
    %2795 = vmax.xlane.f32.xlu0 %v2794
    %v2796 = vpop.xlane.xlu0 %2795
    %v2797 = vsub.f32 %v2785, %v2790
    %v2798 = vsub.f32 %v2786, %v2793
    %v2799 = vsub.f32 %v2787, %v2796
    %v2800 = vmul.f32 %v2797, 1.442695
    %v2801 = vpow.pop %v2800
    %v2802 = vmul.f32 %v2798, 1.442695
    %v2803 = vpow.pop %v2802
    %v2804 = vmul.f32 %v2799, 1.442695
    %v2805 = vpow.pop %v2804
    %v2806 = vsel %vm521, %v2801, 0.0
    %2807 = vadd.xlane.f32.xlu0 %v2806
    %v2808 = vpop.xlane.xlu0 %2807
    %v2809 = vsel %vm521, %v2803, 0.0
    %2810 = vadd.xlane.f32.xlu0 %v2809
    %v2811 = vpop.xlane.xlu0 %2810
    %v2812 = vsel %vm521, %v2805, 0.0
    %2813 = vadd.xlane.f32.xlu0 %v2812
    %v2814 = vpop.xlane.xlu0 %2813
    %v2815 = vrcp.pop %v2808
    %v2816 = vrcp.pop %v2811
    %v2817 = vrcp.pop %v2814
    %v2818 = vmul.f32 %v2801, %v2815
    %v2819 = vmul.f32 %v2803, %v2816
    %v2820 = vmul.f32 %v2805, %v2817
    %v2821 = vpack.c.bf16 %v2818, %v2818
    %v2822 = vpack.c.bf16 %v2819, %v2819
    %v2823 = vpack.c.bf16 %v2820, %v2820
    %v2824 = vpack.c.bf16 %v2625, %v2625
    %v2825 = vpack.c.bf16 %v2628, %v2628
    %v2826 = vpack.c.bf16 %v2633, %v2633
    %v2828 = vsel %vm521, %v2821, 0
    %v2831 = vsel %vm564, %v2824, 0
    %2833 = vmatprep.subr.bf16.mxu0 0
    %2834 = vmatpush1.bf16.msra.mxu0 0
    %2835 = vmatprep.subr.bf16.mxu0 0
    %2836 = vmatpush1.bf16.msra.mxu0 0
    %2837 = vmatprep.subr.bf16.mxu0 0
    %2838 = vmatpush1.bf16.msra.mxu0 0
    %2839 = vmatprep.subr.bf16.mxu0 0
    %2840 = vmatpush1.bf16.msra.mxu0 0
    %2841 = vmatprep.subr.bf16.mxu0 0
    %2842 = vmatpush1.bf16.msra.mxu0 0
    %2843 = vmatprep.subr.bf16.mxu0 0
    %2844 = vmatpush1.bf16.msra.mxu0 0
    %2845 = vmatprep.subr.bf16.mxu0 0
    %2846 = vmatpush1.bf16.msra.mxu0 0
    %2847 = vmatprep.subr.bf16.mxu0 0
    %2848 = vmatpush1.bf16.msra.mxu0 %v2831
    %2849 = vmatprep.subr.bf16.mxu0 0
    %2850 = vmatpush2.bf16.msra.mxu0 0
    %2851 = vmatprep.subr.bf16.mxu0 0
    %2852 = vmatpush2.bf16.msra.mxu0 0
    %2853 = vmatprep.subr.bf16.mxu0 0
    %2854 = vmatpush2.bf16.msra.mxu0 0
    %2855 = vmatprep.subr.bf16.mxu0 0
    %2856 = vmatpush2.bf16.msra.mxu0 0
    %2857 = vmatprep.subr.bf16.mxu0 0
    %2858 = vmatpush2.bf16.msra.mxu0 0
    %2859 = vmatprep.subr.bf16.mxu0 0
    %2860 = vmatpush2.bf16.msra.mxu0 0
    %2861 = vmatprep.subr.bf16.mxu0 0
    %2862 = vmatpush2.bf16.msra.mxu0 0
    %2863 = vmatprep.subr.bf16.mxu0 0
    %2864 = vmatpush2.bf16.msra.mxu0 0
    %2865 = vmatprep.mubr.bf16.mxu0 0
    %2866 = vmatmul.mubr.bf16.gmra.mxu0 %v2828
    %v2867 = vpop.f32.mrf.mxu0
    %v2868 = vadd.f32 0.0, %v2867
    %v2869 = vpop.f32.mrf.mxu0
    %v2870 = vpop.f32.mrf.mxu0
    %v2871 = vpop.f32.mrf.mxu0
    %2872 = vdwg.mxu0
    %v2874 = vsel %vm521, %v2822, 0
    %v2877 = vsel %vm564, %v2825, 0
    %2879 = vmatprep.subr.bf16.mxu0 0
    %2880 = vmatpush1.bf16.msra.mxu0 0
    %2881 = vmatprep.subr.bf16.mxu0 0
    %2882 = vmatpush1.bf16.msra.mxu0 0
    %2883 = vmatprep.subr.bf16.mxu0 0
    %2884 = vmatpush1.bf16.msra.mxu0 0
    %2885 = vmatprep.subr.bf16.mxu0 0
    %2886 = vmatpush1.bf16.msra.mxu0 0
    %2887 = vmatprep.subr.bf16.mxu0 0
    %2888 = vmatpush1.bf16.msra.mxu0 0
    %2889 = vmatprep.subr.bf16.mxu0 0
    %2890 = vmatpush1.bf16.msra.mxu0 0
    %2891 = vmatprep.subr.bf16.mxu0 0
    %2892 = vmatpush1.bf16.msra.mxu0 0
    %2893 = vmatprep.subr.bf16.mxu0 0
    %2894 = vmatpush1.bf16.msra.mxu0 %v2877
    %2895 = vmatprep.subr.bf16.mxu0 0
    %2896 = vmatpush2.bf16.msra.mxu0 0
    %2897 = vmatprep.subr.bf16.mxu0 0
    %2898 = vmatpush2.bf16.msra.mxu0 0
    %2899 = vmatprep.subr.bf16.mxu0 0
    %2900 = vmatpush2.bf16.msra.mxu0 0
    %2901 = vmatprep.subr.bf16.mxu0 0
    %2902 = vmatpush2.bf16.msra.mxu0 0
    %2903 = vmatprep.subr.bf16.mxu0 0
    %2904 = vmatpush2.bf16.msra.mxu0 0
    %2905 = vmatprep.subr.bf16.mxu0 0
    %2906 = vmatpush2.bf16.msra.mxu0 0
    %2907 = vmatprep.subr.bf16.mxu0 0
    %2908 = vmatpush2.bf16.msra.mxu0 0
    %2909 = vmatprep.subr.bf16.mxu0 0
    %2910 = vmatpush2.bf16.msra.mxu0 0
    %2911 = vmatprep.mubr.bf16.mxu0 0
    %2912 = vmatmul.mubr.bf16.gmra.mxu0 %v2874
    %v2913 = vpop.f32.mrf.mxu0
    %v2914 = vadd.f32 0.0, %v2913
    %v2915 = vpop.f32.mrf.mxu0
    %v2916 = vpop.f32.mrf.mxu0
    %v2917 = vpop.f32.mrf.mxu0
    %2918 = vdwg.mxu0
    %v2920 = vsel %vm521, %v2823, 0
    %v2923 = vsel %vm564, %v2826, 0
    %2925 = vmatprep.subr.bf16.mxu0 0
    %2926 = vmatpush1.bf16.msra.mxu0 0
    %2927 = vmatprep.subr.bf16.mxu0 0
    %2928 = vmatpush1.bf16.msra.mxu0 0
    %2929 = vmatprep.subr.bf16.mxu0 0
    %2930 = vmatpush1.bf16.msra.mxu0 0
    %2931 = vmatprep.subr.bf16.mxu0 0
    %2932 = vmatpush1.bf16.msra.mxu0 0
    %2933 = vmatprep.subr.bf16.mxu0 0
    %2934 = vmatpush1.bf16.msra.mxu0 0
    %2935 = vmatprep.subr.bf16.mxu0 0
    %2936 = vmatpush1.bf16.msra.mxu0 0
    %2937 = vmatprep.subr.bf16.mxu0 0
    %2938 = vmatpush1.bf16.msra.mxu0 0
    %2939 = vmatprep.subr.bf16.mxu0 0
    %2940 = vmatpush1.bf16.msra.mxu0 %v2923
    %2941 = vmatprep.subr.bf16.mxu0 0
    %2942 = vmatpush2.bf16.msra.mxu0 0
    %2943 = vmatprep.subr.bf16.mxu0 0
    %2944 = vmatpush2.bf16.msra.mxu0 0
    %2945 = vmatprep.subr.bf16.mxu0 0
    %2946 = vmatpush2.bf16.msra.mxu0 0
    %2947 = vmatprep.subr.bf16.mxu0 0
    %2948 = vmatpush2.bf16.msra.mxu0 0
    %2949 = vmatprep.subr.bf16.mxu0 0
    %2950 = vmatpush2.bf16.msra.mxu0 0
    %2951 = vmatprep.subr.bf16.mxu0 0
    %2952 = vmatpush2.bf16.msra.mxu0 0
    %2953 = vmatprep.subr.bf16.mxu0 0
    %2954 = vmatpush2.bf16.msra.mxu0 0
    %2955 = vmatprep.subr.bf16.mxu0 0
    %2956 = vmatpush2.bf16.msra.mxu0 0
    %2957 = vmatprep.mubr.bf16.mxu0 0
    %2958 = vmatmul.mubr.bf16.gmra.mxu0 %v2920
    %v2959 = vpop.f32.mrf.mxu0
    %v2960 = vadd.f32 0.0, %v2959
    %v2961 = vpop.f32.mrf.mxu0
    %v2962 = vpop.f32.mrf.mxu0
    %v2963 = vpop.f32.mrf.mxu0
    %2964 = vdwg.mxu0
    %s2965 = scalar_lea.vmem %s7, 24
    %v2966 = vld [vmem:[%s2965] sm:$0xf]
    %v2967 = vld [vmem:[%s2965 + $0x4] sm:$0xf]
    %v2968 = vpack.c.bf16 %v2868, %v2868
    %v2969 = vpack.c.bf16 %v2914, %v2914
    %v2970 = vpack.c.bf16 %v2960, %v2960
    %v2974 = vunpack.c.l.b16 %v2968
    %v2975 = vunpack.c.l.b16 %v2969
    %v2976 = vunpack.c.l.b16 %v2970
    %v2977 = vpack.c.b16 %v2975, %v2974
    %v2978 = vpack.c.b16 %v2976, %v2976
    %v2981 = vunpack.c.l.b16 %v2966
    %v2982 = vunpack.c.l.b16 %v2967
    %v2983 = vpack.c.b16 %v2982, %v2981
    %v2986 = vsel %vm376, %v2977, 0
    %v2989 = vsel %vm376, %v2978, 0
    %2991 = vmatprep.subr.bf16.mxu0 0
    %2992 = vmatpush1.bf16.msra.mxu0 0
    %2993 = vmatprep.subr.bf16.mxu0 0
    %2994 = vmatpush1.bf16.msra.mxu0 0
    %2995 = vmatprep.subr.bf16.mxu0 0
    %2996 = vmatpush1.bf16.msra.mxu0 0
    %2997 = vmatprep.subr.bf16.mxu0 0
    %2998 = vmatpush1.bf16.msra.mxu0 0
    %2999 = vmatprep.subr.bf16.mxu0 0
    %3000 = vmatpush1.bf16.msra.mxu0 0
    %3001 = vmatprep.subr.bf16.mxu0 0
    %3002 = vmatpush1.bf16.msra.mxu0 0
    %3003 = vmatprep.subr.bf16.mxu0 0
    %3004 = vmatpush1.bf16.msra.mxu0 0
    %3005 = vmatprep.subr.bf16.mxu0 0
    %3006 = vmatpush1.bf16.msra.mxu0 %v2983
    %3007 = vmatprep.subr.bf16.mxu0 0
    %3008 = vmatpush2.bf16.msra.mxu0 0
    %3009 = vmatprep.subr.bf16.mxu0 0
    %3010 = vmatpush2.bf16.msra.mxu0 0
    %3011 = vmatprep.subr.bf16.mxu0 0
    %3012 = vmatpush2.bf16.msra.mxu0 0
    %3013 = vmatprep.subr.bf16.mxu0 0
    %3014 = vmatpush2.bf16.msra.mxu0 0
    %3015 = vmatprep.subr.bf16.mxu0 0
    %3016 = vmatpush2.bf16.msra.mxu0 0
    %3017 = vmatprep.subr.bf16.mxu0 0
    %3018 = vmatpush2.bf16.msra.mxu0 0
    %3019 = vmatprep.subr.bf16.mxu0 0
    %3020 = vmatpush2.bf16.msra.mxu0 0
    %3021 = vmatprep.subr.bf16.mxu0 0
    %3022 = vmatpush2.bf16.msra.mxu0 0
    %3023 = vmatprep.mubr.bf16.mxu0 0
    %3024 = vmatmul.mubr.bf16.gmra.mxu0 %v2986
    %v3025 = vpop.f32.mrf.mxu0
    %v3026 = vadd.f32 0.0, %v3025
    %v3027 = vpop.f32.mrf.mxu0
    %v3028 = vpop.f32.mrf.mxu0
    %v3029 = vadd.f32 0.0, %v3028
    %v3030 = vpop.f32.mrf.mxu0
    %3031 = vmatprep.mubr.bf16.mxu0 0
    %3032 = vmatmul.mubr.bf16.gmra.mxu0 %v2989
    %v3033 = vpop.f32.mrf.mxu0
    %v3034 = vadd.f32 0.0, %v3033
    %v3035 = vpop.f32.mrf.mxu0
    %v3036 = vpop.f32.mrf.mxu0
    %v3037 = vpop.f32.mrf.mxu0
    %3038 = vdwg.mxu0
    %v3039 = vadd.f32 %v2416, %v3026
    %v3040 = vadd.f32 %v2417, %v3029
    %v3041 = vadd.f32 %v2418, %v3034
    %s3042 = scalar_lea.vmem %s8, 1
    %v3043 = vld [vmem:[%s3042] sm:$0x1]
    %v3045 = vlaneseq
    %v3046 = vshrl.u32 %v3045, 7
    %v3047 = vsub.s32 0, %v3046
    %v3048 = vrot.slane %v3043, %v3047
    %v3050 = vadd.f32 %v3039, %v3048
    %v3051 = vadd.f32 %v3040, %v3048
    %v3052 = vadd.f32 %v3041, %v3048
    %s3053 = scalar_lea.vmem %s9, 1
    %v3054 = vld [vmem:[%s3053] sm:$0x1]
    %s3055 = scalar_lea.vmem %s10, 1
    %v3056 = vld [vmem:[%s3055] sm:$0x1]
    %v3057 = vsel %vm77, %v3050, 0.0
    %3058 = vadd.xlane.f32.xlu0 %v3057
    %v3059 = vpop.xlane.xlu0 %3058
    %v3060 = vsel %vm77, %v3051, 0.0
    %3061 = vadd.xlane.f32.xlu0 %v3060
    %v3062 = vpop.xlane.xlu0 %3061
    %v3063 = vsel %vm77, %v3052, 0.0
    %3064 = vadd.xlane.f32.xlu0 %v3063
    %v3065 = vpop.xlane.xlu0 %3064
    %v3066 = vmul.f32 %v3059, %v87
    %v3067 = vmul.f32 %v3062, %v87
    %v3068 = vmul.f32 %v3065, %v87
    %v3069 = vsub.f32 %v3050, %v3066
    %v3070 = vsub.f32 %v3051, %v3067
    %v3071 = vsub.f32 %v3052, %v3068
    %v3072 = vmul.f32 %v3069, %v3069
    %v3073 = vmul.f32 %v3070, %v3070
    %v3074 = vmul.f32 %v3071, %v3071
    %v3075 = vsel %vm77, %v3072, 0.0
    %3076 = vadd.xlane.f32.xlu0 %v3075
    %v3077 = vpop.xlane.xlu0 %3076
    %v3078 = vsel %vm77, %v3073, 0.0
    %3079 = vadd.xlane.f32.xlu0 %v3078
    %v3080 = vpop.xlane.xlu0 %3079
    %v3081 = vsel %vm77, %v3074, 0.0
    %3082 = vadd.xlane.f32.xlu0 %v3081
    %v3083 = vpop.xlane.xlu0 %3082
    %v3084 = vmul.f32 %v3077, %v87
    %v3085 = vmul.f32 %v3080, %v87
    %v3086 = vmul.f32 %v3083, %v87
    %v3087 = vadd.f32 %v3084, 1e-05
    %v3088 = vadd.f32 %v3085, 1e-05
    %v3089 = vadd.f32 %v3086, 1e-05
    %v3090 = vrsqrt.pop %v3087
    %v3091 = vrsqrt.pop %v3088
    %v3092 = vrsqrt.pop %v3089
    %v3093 = vmul.f32 %v3069, %v3090
    %v3094 = vmul.f32 %v3070, %v3091
    %v3095 = vmul.f32 %v3071, %v3092
    %v3097 = vlaneseq
    %v3098 = vshrl.u32 %v3097, 7
    %v3099 = vsub.s32 0, %v3098
    %v3100 = vrot.slane %v3054, %v3099
    %v3102 = vmul.f32 %v3093, %v3100
    %v3103 = vmul.f32 %v3094, %v3100
    %v3104 = vmul.f32 %v3095, %v3100
    %v3106 = vlaneseq
    %v3107 = vshrl.u32 %v3106, 7
    %v3108 = vsub.s32 0, %v3107
    %v3109 = vrot.slane %v3056, %v3108
    %v3111 = vadd.f32 %v3102, %v3109
    %v3112 = vadd.f32 %v3103, %v3109
    %v3113 = vadd.f32 %v3104, %v3109
    %s3114 = scalar_lea.vmem %s11, 16
    %v3115 = vld [vmem:[%s3114] sm:$0xf]
    %v3116 = vld [vmem:[%s3114 + $0x4] sm:$0xf]
    %v3117 = vld [vmem:[%s3114 + $0x8] sm:$0xf]
    %v3118 = vld [vmem:[%s3114 + $0xc] sm:$0xf]
    %v3119 = vpack.c.bf16 %v3111, %v3111
    %v3120 = vpack.c.bf16 %v3112, %v3112
    %v3121 = vpack.c.bf16 %v3113, %v3113
    %s3122 = scalar_lea.vmem %s12, 1
    %v3123 = vld [vmem:[%s3122] sm:$0x1]
    %v3125 = vlaneseq
    %v3126 = vshrl.u32 %v3125, 7
    %v3127 = vsub.s32 0, %v3126
    %v3128 = vrot.slane %v3123, %v3127
    %v3133 = vunpack.c.l.b16 %v3119
    %v3134 = vunpack.c.l.b16 %v3120
    %v3135 = vunpack.c.l.b16 %v3121
    %v3136 = vpack.c.b16 %v3134, %v3133
    %v3137 = vpack.c.b16 %v3135, %v3135
    %v3142 = vunpack.c.l.b16 %v3115
    %v3143 = vunpack.c.l.b16 %v3116
    %v3144 = vunpack.c.l.b16 %v3117
    %v3145 = vunpack.c.l.b16 %v3118
    %v3146 = vpack.c.b16 %v3143, %v3142
    %v3147 = vpack.c.b16 %v3145, %v3144
    %v3151 = vsel %vm77, %v3136, 0
    %v3154 = vsel %vm77, %v3137, 0
    %3156 = vmatprep.subr.bf16.mxu0 0
    %3157 = vmatpush1.bf16.msra.mxu0 0
    %3158 = vmatprep.subr.bf16.mxu0 0
    %3159 = vmatpush1.bf16.msra.mxu0 0
    %3160 = vmatprep.subr.bf16.mxu0 0
    %3161 = vmatpush1.bf16.msra.mxu0 0
    %3162 = vmatprep.subr.bf16.mxu0 0
    %3163 = vmatpush1.bf16.msra.mxu0 0
    %3164 = vmatprep.subr.bf16.mxu0 0
    %3165 = vmatpush1.bf16.msra.mxu0 0
    %3166 = vmatprep.subr.bf16.mxu0 0
    %3167 = vmatpush1.bf16.msra.mxu0 0
    %3168 = vmatprep.subr.bf16.mxu0 0
    %3169 = vmatpush1.bf16.msra.mxu0 %v3147
    %3170 = vmatprep.subr.bf16.mxu0 0
    %3171 = vmatpush1.bf16.msra.mxu0 %v3146
    %3172 = vmatprep.subr.bf16.mxu0 0
    %3173 = vmatpush2.bf16.msra.mxu0 0
    %3174 = vmatprep.subr.bf16.mxu0 0
    %3175 = vmatpush2.bf16.msra.mxu0 0
    %3176 = vmatprep.subr.bf16.mxu0 0
    %3177 = vmatpush2.bf16.msra.mxu0 0
    %3178 = vmatprep.subr.bf16.mxu0 0
    %3179 = vmatpush2.bf16.msra.mxu0 0
    %3180 = vmatprep.subr.bf16.mxu0 0
    %3181 = vmatpush2.bf16.msra.mxu0 0
    %3182 = vmatprep.subr.bf16.mxu0 0
    %3183 = vmatpush2.bf16.msra.mxu0 0
    %3184 = vmatprep.subr.bf16.mxu0 0
    %3185 = vmatpush2.bf16.msra.mxu0 0
    %3186 = vmatprep.subr.bf16.mxu0 0
    %3187 = vmatpush2.bf16.msra.mxu0 0
    %3188 = vmatprep.mubr.bf16.mxu0 0
    %3189 = vmatmul.mubr.bf16.gmra.mxu0 %v3151
    %v3190 = vpop.f32.mrf.mxu0
    %v3191 = vadd.f32 %v3128, %v3190
    %v3192 = vpop.f32.mrf.mxu0
    %v3193 = vpop.f32.mrf.mxu0
    %v3194 = vadd.f32 %v3128, %v3193
    %v3195 = vpop.f32.mrf.mxu0
    %3196 = vmatprep.mubr.bf16.mxu0 0
    %3197 = vmatmul.mubr.bf16.gmra.mxu0 %v3154
    %v3198 = vpop.f32.mrf.mxu0
    %v3199 = vadd.f32 %v3128, %v3198
    %v3200 = vpop.f32.mrf.mxu0
    %v3201 = vpop.f32.mrf.mxu0
    %v3202 = vpop.f32.mrf.mxu0
    %3203 = vdwg.mxu0
    %v3204 = vmul.f32 %v3191, 1.702
    %v3205 = vmul.f32 %v3194, 1.702
    %v3206 = vmul.f32 %v3199, 1.702
    %v3207 = vxor.u32 %v3204, 2147483648
    %v3208 = vxor.u32 %v3205, 2147483648
    %v3209 = vxor.u32 %v3206, 2147483648
    %v3210 = vmul.f32 %v3207, 1.442695
    %v3211 = vpow.pop %v3210
    %v3212 = vmul.f32 %v3208, 1.442695
    %v3213 = vpow.pop %v3212
    %v3214 = vmul.f32 %v3209, 1.442695
    %v3215 = vpow.pop %v3214
    %v3216 = vadd.f32 %v3211, 1.0
    %v3217 = vadd.f32 %v3213, 1.0
    %v3218 = vadd.f32 %v3215, 1.0
    %v3219 = vrcp.pop %v3216
    %v3220 = vmul.f32 1.0, %v3219
    %v3221 = vrcp.pop %v3217
    %v3222 = vmul.f32 1.0, %v3221
    %v3223 = vrcp.pop %v3218
    %v3224 = vmul.f32 1.0, %v3223
    %v3225 = vmul.f32 %v3191, %v3220
    %v3226 = vmul.f32 %v3194, %v3222
    %v3227 = vmul.f32 %v3199, %v3224
    %s3228 = scalar_lea.vmem %s13, 64
    %v3229 = vld [vmem:[%s3228] sm:$0xf]
    %v3230 = vld [vmem:[%s3228 + $0x4] sm:$0xf]
    %v3231 = vld [vmem:[%s3228 + $0x8] sm:$0xf]
    %v3232 = vld [vmem:[%s3228 + $0xc] sm:$0xf]
    %v3233 = vld [vmem:[%s3228 + $0x10] sm:$0xf]
    %v3234 = vld [vmem:[%s3228 + $0x14] sm:$0xf]
    %v3235 = vld [vmem:[%s3228 + $0x18] sm:$0xf]
    %v3236 = vld [vmem:[%s3228 + $0x1c] sm:$0xf]
    %v3237 = vld [vmem:[%s3228 + $0x20] sm:$0xf]
    %v3238 = vld [vmem:[%s3228 + $0x24] sm:$0xf]
    %v3239 = vld [vmem:[%s3228 + $0x28] sm:$0xf]
    %v3240 = vld [vmem:[%s3228 + $0x2c] sm:$0xf]
    %v3241 = vld [vmem:[%s3228 + $0x30] sm:$0xf]
    %v3242 = vld [vmem:[%s3228 + $0x34] sm:$0xf]
    %v3243 = vld [vmem:[%s3228 + $0x38] sm:$0xf]
    %v3244 = vld [vmem:[%s3228 + $0x3c] sm:$0xf]
    %v3245 = vpack.c.bf16 %v3225, %v3225
    %v3246 = vpack.c.bf16 %v3226, %v3226
    %v3247 = vpack.c.bf16 %v3227, %v3227
    %v3251 = vunpack.c.l.b16 %v3245
    %v3252 = vunpack.c.l.b16 %v3246
    %v3253 = vunpack.c.l.b16 %v3247
    %v3254 = vpack.c.b16 %v3252, %v3251
    %v3255 = vpack.c.b16 %v3253, %v3253
    %v3274 = vunpack.c.l.b16 %v3229
    %v3275 = vunpack.c.l.b16 %v3230
    %v3276 = vunpack.c.l.b16 %v3231
    %v3277 = vunpack.c.l.b16 %v3232
    %v3278 = vunpack.c.l.b16 %v3233
    %v3279 = vunpack.c.l.b16 %v3234
    %v3280 = vunpack.c.l.b16 %v3235
    %v3281 = vunpack.c.l.b16 %v3236
    %v3282 = vunpack.c.l.b16 %v3237
    %v3283 = vunpack.c.l.b16 %v3238
    %v3284 = vunpack.c.l.b16 %v3239
    %v3285 = vunpack.c.l.b16 %v3240
    %v3286 = vunpack.c.l.b16 %v3241
    %v3287 = vunpack.c.l.b16 %v3242
    %v3288 = vunpack.c.l.b16 %v3243
    %v3289 = vunpack.c.l.b16 %v3244
    %v3290 = vpack.c.b16 %v3275, %v3274
    %v3291 = vpack.c.b16 %v3277, %v3276
    %v3292 = vpack.c.b16 %v3279, %v3278
    %v3293 = vpack.c.b16 %v3281, %v3280
    %v3294 = vpack.c.b16 %v3283, %v3282
    %v3295 = vpack.c.b16 %v3285, %v3284
    %v3296 = vpack.c.b16 %v3287, %v3286
    %v3297 = vpack.c.b16 %v3289, %v3288
    %3306 = vmatprep.subr.bf16.mxu0 0
    %3307 = vmatpush1.bf16.msra.mxu0 %v3297
    %3308 = vmatprep.subr.bf16.mxu0 0
    %3309 = vmatpush1.bf16.msra.mxu0 %v3296
    %3310 = vmatprep.subr.bf16.mxu0 0
    %3311 = vmatpush1.bf16.msra.mxu0 %v3295
    %3312 = vmatprep.subr.bf16.mxu0 0
    %3313 = vmatpush1.bf16.msra.mxu0 %v3294
    %3314 = vmatprep.subr.bf16.mxu0 0
    %3315 = vmatpush1.bf16.msra.mxu0 %v3293
    %3316 = vmatprep.subr.bf16.mxu0 0
    %3317 = vmatpush1.bf16.msra.mxu0 %v3292
    %3318 = vmatprep.subr.bf16.mxu0 0
    %3319 = vmatpush1.bf16.msra.mxu0 %v3291
    %3320 = vmatprep.subr.bf16.mxu0 0
    %3321 = vmatpush1.bf16.msra.mxu0 %v3290
    %3322 = vmatprep.subr.bf16.mxu0 0
    %3323 = vmatpush2.bf16.msra.mxu0 0
    %3324 = vmatprep.subr.bf16.mxu0 0
    %3325 = vmatpush2.bf16.msra.mxu0 0
    %3326 = vmatprep.subr.bf16.mxu0 0
    %3327 = vmatpush2.bf16.msra.mxu0 0
    %3328 = vmatprep.subr.bf16.mxu0 0
    %3329 = vmatpush2.bf16.msra.mxu0 0
    %3330 = vmatprep.subr.bf16.mxu0 0
    %3331 = vmatpush2.bf16.msra.mxu0 0
    %3332 = vmatprep.subr.bf16.mxu0 0
    %3333 = vmatpush2.bf16.msra.mxu0 0
    %3334 = vmatprep.subr.bf16.mxu0 0
    %3335 = vmatpush2.bf16.msra.mxu0 0
    %3336 = vmatprep.subr.bf16.mxu0 0
    %3337 = vmatpush2.bf16.msra.mxu0 0
    %3338 = vmatprep.mubr.bf16.mxu0 0
    %3339 = vmatmul.mubr.bf16.gmra.mxu0 %v3254
    %v3340 = vpop.f32.mrf.mxu0
    %v3341 = vadd.f32 0.0, %v3340
    %v3342 = vpop.f32.mrf.mxu0
    %v3343 = vpop.f32.mrf.mxu0
    %v3344 = vadd.f32 0.0, %v3343
    %v3345 = vpop.f32.mrf.mxu0
    %3346 = vmatprep.mubr.bf16.mxu0 0
    %3347 = vmatmul.mubr.bf16.gmra.mxu0 %v3255
    %v3348 = vpop.f32.mrf.mxu0
    %v3349 = vadd.f32 0.0, %v3348
    %v3350 = vpop.f32.mrf.mxu0
    %v3351 = vpop.f32.mrf.mxu0
    %v3352 = vpop.f32.mrf.mxu0
    %3353 = vdwg.mxu0
    %v3354 = vadd.f32 %v3050, %v3341
    %v3355 = vadd.f32 %v3051, %v3344
    %v3356 = vadd.f32 %v3052, %v3349
    %s3357 = scalar_lea.vmem %s14, 1
    %v3358 = vld [vmem:[%s3357] sm:$0x1]
    %v3360 = vlaneseq
    %v3361 = vshrl.u32 %v3360, 7
    %v3362 = vsub.s32 0, %v3361
    %v3363 = vrot.slane %v3358, %v3362
    %v3365 = vadd.f32 %v3354, %v3363
    %v3366 = vadd.f32 %v3355, %v3363
    %v3367 = vadd.f32 %v3356, %v3363
    %v3368 = vld [vmem:[%s15] sm:$0x1]
    %v3369 = vld [vmem:[%s16] sm:$0x1]
    %v3370 = vsel %vm77, %v3365, 0.0
    %3371 = vadd.xlane.f32.xlu0 %v3370
    %v3372 = vpop.xlane.xlu0 %3371
    %v3373 = vsel %vm77, %v3366, 0.0
    %3374 = vadd.xlane.f32.xlu0 %v3373
    %v3375 = vpop.xlane.xlu0 %3374
    %v3376 = vsel %vm77, %v3367, 0.0
    %3377 = vadd.xlane.f32.xlu0 %v3376
    %v3378 = vpop.xlane.xlu0 %3377
    %v3379 = vmul.f32 %v3372, %v87
    %v3380 = vmul.f32 %v3375, %v87
    %v3381 = vmul.f32 %v3378, %v87
    %v3382 = vsub.f32 %v3365, %v3379
    %v3383 = vsub.f32 %v3366, %v3380
    %v3384 = vsub.f32 %v3367, %v3381
    %v3385 = vmul.f32 %v3382, %v3382
    %v3386 = vmul.f32 %v3383, %v3383
    %v3387 = vmul.f32 %v3384, %v3384
    %v3388 = vsel %vm77, %v3385, 0.0
    %3389 = vadd.xlane.f32.xlu0 %v3388
    %v3390 = vpop.xlane.xlu0 %3389
    %v3391 = vsel %vm77, %v3386, 0.0
    %3392 = vadd.xlane.f32.xlu0 %v3391
    %v3393 = vpop.xlane.xlu0 %3392
    %v3394 = vsel %vm77, %v3387, 0.0
    %3395 = vadd.xlane.f32.xlu0 %v3394
    %v3396 = vpop.xlane.xlu0 %3395
    %v3397 = vmul.f32 %v3390, %v87
    %v3398 = vmul.f32 %v3393, %v87
    %v3399 = vmul.f32 %v3396, %v87
    %v3400 = vadd.f32 %v3397, 1e-05
    %v3401 = vadd.f32 %v3398, 1e-05
    %v3402 = vadd.f32 %v3399, 1e-05
    %v3403 = vrsqrt.pop %v3400
    %v3404 = vrsqrt.pop %v3401
    %v3405 = vrsqrt.pop %v3402
    %v3406 = vmul.f32 %v3382, %v3403
    %v3407 = vmul.f32 %v3383, %v3404
    %v3408 = vmul.f32 %v3384, %v3405
    %v3410 = vlaneseq
    %v3411 = vshrl.u32 %v3410, 7
    %v3412 = vsub.s32 0, %v3411
    %v3413 = vrot.slane %v3368, %v3412
    %v3415 = vmul.f32 %v3406, %v3413
    %v3416 = vmul.f32 %v3407, %v3413
    %v3417 = vmul.f32 %v3408, %v3413
    %v3419 = vlaneseq
    %v3420 = vshrl.u32 %v3419, 7
    %v3421 = vsub.s32 0, %v3420
    %v3422 = vrot.slane %v3369, %v3421
    %v3424 = vadd.f32 %v3415, %v3422
    %v3425 = vadd.f32 %v3416, %v3422
    %v3426 = vadd.f32 %v3417, %v3422
    %v3427 = vld [vmem:[%s18] sm:$0x7]
    %vm3428 = vcmask 195584
    %v3430 = vsel %vm3428, %v3427, 0
    %3432 = vmatprep.subr.mxu0 0.0
    %3433 = vmatpush1.msra.mxu0 0.0
    %3434 = vmatprep.subr.mxu0 0.0
    %3435 = vmatpush1.msra.mxu0 0.0
    %3436 = vmatprep.subr.mxu0 0.0
    %3437 = vmatpush1.msra.mxu0 0.0
    %3438 = vmatprep.subr.mxu0 0.0
    %3439 = vmatpush1.msra.mxu0 0.0
    %3440 = vmatprep.subr.mxu0 0.0
    %3441 = vmatpush1.msra.mxu0 0.0
    %3442 = vmatprep.subr.mxu0 0.0
    %3443 = vmatpush1.msra.mxu0 0.0
    %3444 = vmatprep.subr.mxu0 0.0
    %3445 = vmatpush1.msra.mxu0 0.0
    %3446 = vmatprep.subr.mxu0 0.0
    %3447 = vmatpush1.msra.mxu0 0.0
    %3448 = vmatprep.subr.mxu0 0.0
    %3449 = vmatpush1.msra.mxu0 0.0
    %3450 = vmatprep.subr.mxu0 0.0
    %3451 = vmatpush1.msra.mxu0 0.0
    %3452 = vmatprep.subr.mxu0 0.0
    %3453 = vmatpush1.msra.mxu0 0.0
    %3454 = vmatprep.subr.mxu0 0.0
    %3455 = vmatpush1.msra.mxu0 0.0
    %3456 = vmatprep.subr.mxu0 0.0
    %3457 = vmatpush1.msra.mxu0 0.0
    %3458 = vmatprep.subr.mxu0 0.0
    %3459 = vmatpush1.msra.mxu0 %v3426
    %3460 = vmatprep.subr.mxu0 0.0
    %3461 = vmatpush1.msra.mxu0 %v3425
    %3462 = vmatprep.subr.mxu0 0.0
    %3463 = vmatpush1.msra.mxu0 %v3424
    %3464 = vmatprep.subr.mxu0 0.0
    %3465 = vmatpush2.msra.mxu0 0.0
    %3466 = vmatprep.subr.mxu0 0.0
    %3467 = vmatpush2.msra.mxu0 0.0
    %3468 = vmatprep.subr.mxu0 0.0
    %3469 = vmatpush2.msra.mxu0 0.0
    %3470 = vmatprep.subr.mxu0 0.0
    %3471 = vmatpush2.msra.mxu0 0.0
    %3472 = vmatprep.subr.mxu0 0.0
    %3473 = vmatpush2.msra.mxu0 0.0
    %3474 = vmatprep.subr.mxu0 0.0
    %3475 = vmatpush2.msra.mxu0 0.0
    %3476 = vmatprep.subr.mxu0 0.0
    %3477 = vmatpush2.msra.mxu0 0.0
    %3478 = vmatprep.subr.mxu0 0.0
    %3479 = vmatpush2.msra.mxu0 0.0
    %3480 = vmatprep.subr.mxu0 0.0
    %3481 = vmatpush2.msra.mxu0 0.0
    %3482 = vmatprep.subr.mxu0 0.0
    %3483 = vmatpush2.msra.mxu0 0.0
    %3484 = vmatprep.subr.mxu0 0.0
    %3485 = vmatpush2.msra.mxu0 0.0
    %3486 = vmatprep.subr.mxu0 0.0
    %3487 = vmatpush2.msra.mxu0 0.0
    %3488 = vmatprep.subr.mxu0 0.0
    %3489 = vmatpush2.msra.mxu0 0.0
    %3490 = vmatprep.subr.mxu0 0.0
    %3491 = vmatpush2.msra.mxu0 0.0
    %3492 = vmatprep.subr.mxu0 0.0
    %3493 = vmatpush2.msra.mxu0 0.0
    %3494 = vmatprep.subr.mxu0 0.0
    %3495 = vmatpush2.msra.mxu0 0.0
    %3496 = vmatprep.mubr.f32.mxu0 0.0
    %3497 = vmatmul.mubr.f32.gmra.mxu0 %v3430
    %v3498 = vpop.f32.mrf.mxu0
    %v3499 = vadd.f32 0.0, %v3498
    %v3500 = vpop.f32.mrf.mxu0
    %3501 = vdwg.mxu0
    %v3502 = vld [vmem:[%s17] sm:$0xf]
    %v3503 = vld [vmem:[%s17 + $0x4] sm:$0xf]
    %v3504 = vld [vmem:[%s17 + $0x8] sm:$0xf]
    %v3505 = vld [vmem:[%s17 + $0xc] sm:$0xf]
    %v3506 = vpack.c.bf16 %v3499, %v3499
    %v3511 = vunpack.c.l.b16 %v3502
    %v3512 = vunpack.c.l.b16 %v3503
    %v3513 = vunpack.c.l.b16 %v3504
    %v3514 = vunpack.c.l.b16 %v3505
    %v3515 = vpack.c.b16 %v3512, %v3511
    %v3516 = vpack.c.b16 %v3514, %v3513
    %v3520 = vsel %vm77, %v3506, 0
    %3522 = vmatprep.subr.bf16.mxu0 0
    %3523 = vmatpush1.bf16.msra.mxu0 0
    %3524 = vmatprep.subr.bf16.mxu0 0
    %3525 = vmatpush1.bf16.msra.mxu0 0
    %3526 = vmatprep.subr.bf16.mxu0 0
    %3527 = vmatpush1.bf16.msra.mxu0 0
    %3528 = vmatprep.subr.bf16.mxu0 0
    %3529 = vmatpush1.bf16.msra.mxu0 0
    %3530 = vmatprep.subr.bf16.mxu0 0
    %3531 = vmatpush1.bf16.msra.mxu0 0
    %3532 = vmatprep.subr.bf16.mxu0 0
    %3533 = vmatpush1.bf16.msra.mxu0 0
    %3534 = vmatprep.subr.bf16.mxu0 0
    %3535 = vmatpush1.bf16.msra.mxu0 %v3516
    %3536 = vmatprep.subr.bf16.mxu0 0
    %3537 = vmatpush1.bf16.msra.mxu0 %v3515
    %3538 = vmatprep.subr.bf16.mxu0 0
    %3539 = vmatpush2.bf16.msra.mxu0 0
    %3540 = vmatprep.subr.bf16.mxu0 0
    %3541 = vmatpush2.bf16.msra.mxu0 0
    %3542 = vmatprep.subr.bf16.mxu0 0
    %3543 = vmatpush2.bf16.msra.mxu0 0
    %3544 = vmatprep.subr.bf16.mxu0 0
    %3545 = vmatpush2.bf16.msra.mxu0 0
    %3546 = vmatprep.subr.bf16.mxu0 0
    %3547 = vmatpush2.bf16.msra.mxu0 0
    %3548 = vmatprep.subr.bf16.mxu0 0
    %3549 = vmatpush2.bf16.msra.mxu0 0
    %3550 = vmatprep.subr.bf16.mxu0 0
    %3551 = vmatpush2.bf16.msra.mxu0 0
    %3552 = vmatprep.subr.bf16.mxu0 0
    %3553 = vmatpush2.bf16.msra.mxu0 0
    %3554 = vmatprep.mubr.bf16.mxu0 0
    %3555 = vmatmul.mubr.bf16.gmra.mxu0 %v3520
    %v3556 = vpop.f32.mrf.mxu0
    %v3557 = vadd.f32 0.0, %v3556
    %v3558 = vpop.f32.mrf.mxu0
    %v3559 = vpop.f32.mrf.mxu0
    %v3560 = vpop.f32.mrf.mxu0
    %3561 = vdwg.mxu0
    %v3562 = vld [vmem:[%s1] sm:$0x3]
    %v3563 = vmul.f32 %v3562, %v3562
    %vm3564 = vcmask 254976
    %v3565 = vsel %vm3564, %v3563, 0.0
    %3566 = vadd.xlane.f32.xlu0 %v3565
    %v3567 = vpop.xlane.xlu0 %3566
    %v3568 = vrsqrt.pop %v3567
    %v3569 = vmul.f32 %v3562, %v3568
    %v3570 = vmul.f32 %v3557, %v3557
    %vm3571 = vcmask 256000
    %v3572 = vsel %vm3571, %v3570, 0.0
    %3573 = vadd.xlane.f32.xlu0 %v3572
    %v3574 = vpop.xlane.xlu0 %3573
    %v3575 = vrsqrt.pop %v3574
    %v3576 = vmul.f32 %v3557, %v3575
    %v3578 = vsel %vm77, %v3569, 0
    %v3581 = vsel %vm77, %v3576, 0
    %3583 = vmatprep.subr.mxu0 0.0
    %3584 = vmatpush1.xpose.msra.mxu0 0.0
    %3585 = vmatprep.subr.mxu0 0.0
    %3586 = vmatpush1.xpose.msra.mxu0 0.0
    %3587 = vmatprep.subr.mxu0 0.0
    %3588 = vmatpush1.xpose.msra.mxu0 0.0
    %3589 = vmatprep.subr.mxu0 0.0
    %3590 = vmatpush1.xpose.msra.mxu0 0.0
    %3591 = vmatprep.subr.mxu0 0.0
    %3592 = vmatpush1.xpose.msra.mxu0 0.0
    %3593 = vmatprep.subr.mxu0 0.0
    %3594 = vmatpush1.xpose.msra.mxu0 0.0
    %3595 = vmatprep.subr.mxu0 0.0
    %3596 = vmatpush1.xpose.msra.mxu0 0.0
    %3597 = vmatprep.subr.mxu0 0.0
    %3598 = vmatpush1.xpose.msra.mxu0 0.0
    %3599 = vmatprep.subr.mxu0 0.0
    %3600 = vmatpush1.xpose.msra.mxu0 0.0
    %3601 = vmatprep.subr.mxu0 0.0
    %3602 = vmatpush1.xpose.msra.mxu0 0.0
    %3603 = vmatprep.subr.mxu0 0.0
    %3604 = vmatpush1.xpose.msra.mxu0 0.0
    %3605 = vmatprep.subr.mxu0 0.0
    %3606 = vmatpush1.xpose.msra.mxu0 0.0
    %3607 = vmatprep.subr.mxu0 0.0
    %3608 = vmatpush1.xpose.msra.mxu0 0.0
    %3609 = vmatprep.subr.mxu0 0.0
    %3610 = vmatpush1.xpose.msra.mxu0 0.0
    %3611 = vmatprep.subr.mxu0 0.0
    %3612 = vmatpush1.xpose.msra.mxu0 0.0
    %3613 = vmatprep.subr.mxu0 0.0
    %3614 = vmatpush1.xpose.msra.mxu0 %v3581
    %3615 = vmatprep.subr.mxu0 0.0
    %3616 = vmatpush2.xpose.msra.mxu0 0.0
    %3617 = vmatprep.subr.mxu0 0.0
    %3618 = vmatpush2.xpose.msra.mxu0 0.0
    %3619 = vmatprep.subr.mxu0 0.0
    %3620 = vmatpush2.xpose.msra.mxu0 0.0
    %3621 = vmatprep.subr.mxu0 0.0
    %3622 = vmatpush2.xpose.msra.mxu0 0.0
    %3623 = vmatprep.subr.mxu0 0.0
    %3624 = vmatpush2.xpose.msra.mxu0 0.0
    %3625 = vmatprep.subr.mxu0 0.0
    %3626 = vmatpush2.xpose.msra.mxu0 0.0
    %3627 = vmatprep.subr.mxu0 0.0
    %3628 = vmatpush2.xpose.msra.mxu0 0.0
    %3629 = vmatprep.subr.mxu0 0.0
    %3630 = vmatpush2.xpose.msra.mxu0 0.0
    %3631 = vmatprep.subr.mxu0 0.0
    %3632 = vmatpush2.xpose.msra.mxu0 0.0
    %3633 = vmatprep.subr.mxu0 0.0
    %3634 = vmatpush2.xpose.msra.mxu0 0.0
    %3635 = vmatprep.subr.mxu0 0.0
    %3636 = vmatpush2.xpose.msra.mxu0 0.0
    %3637 = vmatprep.subr.mxu0 0.0
    %3638 = vmatpush2.xpose.msra.mxu0 0.0
    %3639 = vmatprep.subr.mxu0 0.0
    %3640 = vmatpush2.xpose.msra.mxu0 0.0
    %3641 = vmatprep.subr.mxu0 0.0
    %3642 = vmatpush2.xpose.msra.mxu0 0.0
    %3643 = vmatprep.subr.mxu0 0.0
    %3644 = vmatpush2.xpose.msra.mxu0 0.0
    %3645 = vmatprep.subr.mxu0 0.0
    %3646 = vmatpush2.xpose.msra.mxu0 0.0
    %3647 = vmatprep.mubr.f32.mxu0 0.0
    %3648 = vmatmul.mubr.f32.gmra.mxu0 %v3578
    %v3649 = vpop.f32.mrf.mxu0
    %v3650 = vadd.f32 0.0, %v3649
    %v3651 = vpop.f32.mrf.mxu0
    %3652 = vdwg.mxu0
    %v3653 = vld [vmem:[#allocation2] sm:$0x1]
    %v3655 = vlaneseq
    %v3656 = vshrl.u32 %v3655, 7
    %v3657 = vsub.s32 0, %v3656
    %v3658 = vrot.slane %v3653, %v3657
    %3659 = vset.pattern.permute.xlu0 0
    %3660 = vperm.xlu0 %3659, %v3658
    %v3661 = vpop.permute.xlu0 %3660
    %v3663 = vmul.f32 %v3661, %v3650
    %vm3664 = vcmask 17408
    %3665 = vst.msk [vmem:[#allocation3] sm:$0x3] %vm3664, %v3663
    // Predicated region
    $region78: #{custom_clip_forward.3} parent=1 // pred_check
      _
    $region79: #{custom_clip_forward.3} parent=1 // pred_check_branch
      %3667 = sbr.rel (0) target = $region81
    $region80: #{custom_clip_forward.3} parent=1 // pred_region
      %s3669 = ssub.s32 32, 32
      %3670 = vsyncadd [#allocation4], %s3669
      %s3672 = sshll.u32 [#allocation3], 4
      %s3673 = int_to_ptr.vmem [resolvable:$true] %s3672
      %3675 = dma.vmem_to_hbm [thread:$0]  %s3673, 32, %s19, [#allocation4]
    $region81: #{custom_clip_forward.3} parent=1 // pred_fallthru
      _
    // Predicated region
    $region82: #{custom_clip_forward.3} parent=1 // pred_check
      _
    $region83: #{custom_clip_forward.3} parent=1 // pred_check_branch
      %3677 = sbr.rel (0) target = $region85
    $region84: #{custom_clip_forward.3} parent=1 // pred_region
      %3678 = dma.done [#allocation4], 32
    $region85: #{custom_clip_forward.3} parent=1 // pred_fallthru
      _
    %3679 = vsyncpa [#allocation4], 1

</llo_original>
